<compile_context>
chip_gen: v7x
topology: tpu7x:2x2x1
jax: 0.10.0
libtpu: 0.0.40
codegen_flags: <defaults>
</compile_context>

<pallas_src>
import functools

import jax
import jax.numpy as jnp
from jax import lax
from jax.experimental import pallas as pl
from jax.experimental.pallas import tpu as pltpu  # noqa: F401

NC = 3            # input image channels (nc)
NDF = 8           # ndf
IMAGE_SIZE = 16   # opt.imageSize
BATCH = 2         # opt.batchSize
BN_EPS = 1e-5
LRELU_SLOPE = 0.2
KSIZE = 4


def _leaky(x):
    return jnp.where(x > 0, x, LRELU_SLOPE * x)


def _split_pixid(m, hout):
    """pixel id m = b*hout*hout + oh*hout + ow -> (b, oh, ow); hout power of 2."""
    lg = hout.bit_length() - 1
    assert (1 << lg) == hout, "spatial sizes must be powers of two"
    ow = m & (hout - 1)
    oh = (m >> lg) & (hout - 1)
    b = m >> (2 * lg)
    return b, oh, ow


def _conv4x4_s2_p1(act_bf, w_ref, *, batch, hin, hout, cout):
    """Conv2d(cin, cout, 4, stride=2, pad=1, bias=False) on a channel-major
    (cin, batch*hin*hin) bf16 activation; returns (cout, batch*hout*hout) f32."""
    m_out = batch * hout * hout
    m_in = batch * hin * hin
    m = lax.broadcasted_iota(jnp.int32, (1, m_out), 1)
    b, oh, ow = _split_pixid(m, hout)
    src_rows = lax.broadcasted_iota(jnp.int32, (m_in, m_out), 0)

    acc = jnp.zeros((cout, m_out), jnp.float32)
    for ki in range(KSIZE):
        for kj in range(KSIZE):
            h = 2 * oh + (ki - 1)                      # stride 2, padding 1
            w = 2 * ow + (kj - 1)
            valid = (h >= 0) & (h < hin) & (w >= 0) & (w < hin)
            src = b * (hin * hin) + h * hin + w
            tgt = jnp.where(valid, src, -1)            # -1 matches no source row
            sel = jnp.where(src_rows == tgt, 1.0, 0.0).astype(jnp.bfloat16)
            # (cin, m_in) @ (m_in, m_out) -> (cin, m_out): lane-dense output.
            patch = jnp.dot(act_bf, sel, preferred_element_type=jnp.float32)
            # (cout, cin) @ (cin, m_out) -> (cout, m_out)
            acc = acc + jnp.dot(w_ref[ki * KSIZE + kj],
                                patch.astype(jnp.bfloat16),
                                preferred_element_type=jnp.float32)
    return acc


def _netd_kernel(*refs, cfgs, batch):
    o_ref = refs[-1]
    act_bf = refs[0][...]                              # (nc, batch*S*S) bf16
    act_f32 = None
    idx = 1
    for cfg in cfgs:
        w_ref = refs[idx]                              # (16, cout, cin) bf16
        idx += 1
        acc = _conv4x4_s2_p1(act_bf, w_ref, batch=batch, hin=cfg["hin"],
                             hout=cfg["hout"], cout=cfg["cout"])
        if cfg["use_bn"]:
            gamma = refs[idx][...]                     # (cout, 1) f32
            beta = refs[idx + 1][...]
            idx += 2
            # training-mode batch statistics (per channel over all pixels)
            mean = jnp.mean(acc, axis=1, keepdims=True)
            var = jnp.mean(jnp.square(acc - mean), axis=1, keepdims=True)
            acc = (acc - mean) * lax.rsqrt(var + BN_EPS) * gamma + beta
        act_f32 = _leaky(acc)
        act_bf = act_f32.astype(jnp.bfloat16)

    # Final Conv2d(cf, 1, 4, 1, 0) + Sigmoid.  The remaining feature map is
    # exactly 4x4, so each pixel is touched by exactly one weight tap:
    # elementwise product with the lane-tiled weight + per-image reductions.
    wf = refs[idx][...]                                # (cf, batch*16) f32
    prod = act_f32 * wf                                # (cf, m_f)
    m_f = prod.shape[1]
    rows_per_img = m_f // batch                        # == 16
    shift = rows_per_img.bit_length() - 1
    assert (1 << shift) == rows_per_img
    colsum = jnp.sum(prod, axis=0, keepdims=True)      # (1, m_f)
    lane = lax.broadcasted_iota(jnp.int32, (batch, m_f), 1)
    img = lax.broadcasted_iota(jnp.int32, (batch, m_f), 0)
    in_img = (lane >> shift) == img
    logit = jnp.sum(jnp.where(in_img, colsum, 0.0), axis=1, keepdims=True)
    # sigmoid = 1 / (1 + exp(-x)): exp + approximate reciprocal, both on the EUP
    o_ref[...] = pl.reciprocal(1.0 + jnp.exp(-logit), approx=True)


def netD_forward(x_nchw, params):
    """_netD forward: one fused Pallas kernel for the whole network."""
    n, c, h, w = x_nchw.shape
    assert h == w
    # Layout glue only: NCHW -> rows=channels, lanes=(n, y, x) pixels, bf16.
    x_cm = (jnp.transpose(x_nchw, (1, 0, 2, 3))
            .reshape(c, n * h * w).astype(jnp.bfloat16))

    cfgs, inputs, hin = [], [x_cm], h
    for (wgt, gamma, beta, use_bn) in params["body"]:
        kh, kw, cin, cout = wgt.shape
        cfgs.append(dict(cin=cin, cout=cout, hin=hin, hout=hin // 2,
                         use_bn=use_bn))
        # (4,4,cin,cout) -> per-tap transposed weight (16, cout, cin)
        w_t = jnp.transpose(wgt.reshape(kh * kw, cin, cout), (0, 2, 1))
        inputs.append(w_t.astype(jnp.bfloat16))
        if use_bn:                    # no dummy gamma/beta for BN-free layers
            inputs.append(gamma.reshape(cout, 1).astype(jnp.float32))
            inputs.append(beta.reshape(cout, 1).astype(jnp.float32))
        hin //= 2

    wf = params["final"]                               # (4, 4, cf, 1)
    cf = wf.shape[2]
    assert hin == 4 and wf.shape[0] == wf.shape[1] == KSIZE
    wf_cm = jnp.transpose(wf.reshape(KSIZE * KSIZE, cf), (1, 0))   # (cf, 16)
    inputs.append(jnp.tile(wf_cm, (1, n)).astype(jnp.float32))     # (cf, n*16)

    kernel = functools.partial(_netd_kernel, cfgs=cfgs, batch=n)
    return pl.pallas_call(
        kernel,
        out_shape=jax.ShapeDtypeStruct((n, 1), jnp.float32),
        # No grid / BlockSpecs: every operand is a whole-array VMEM block.
    )(*inputs)


def build_netD_params(key, nsize=IMAGE_SIZE, nc=NC, ndf=NDF):
    """Deterministic synthetic parameters mirroring buildNet()'s shapes."""
    params = {"body": [], "final": None}
    depth_in, depth_out, size_map = nc, ndf, nsize
    while size_map > 4:
        key, wk, gk, bk = jax.random.split(key, 4)
        wgt = jax.random.normal(wk, (KSIZE, KSIZE, depth_in, depth_out),
                                jnp.float32) * 0.02
        use_bn = size_map < nsize                      # first conv has no BN
        gamma = 1.0 + 0.1 * jax.random.normal(gk, (depth_out,), jnp.float32)
        beta = 0.1 * jax.random.normal(bk, (depth_out,), jnp.float32)
        params["body"].append((wgt, gamma, beta, use_bn))
        depth_in, depth_out = depth_out, 2 * depth_out
        size_map //= 2
    key, wk = jax.random.split(key)
    params["final"] = jax.random.normal(
        wk, (KSIZE, KSIZE, depth_in, 1), jnp.float32) * 0.02
    return params


def netD_reference(x_nchw, params):
    """Pure-JAX reference (lax.conv) of the same forward pass, in float32."""
    dn = ("NHWC", "HWIO", "NHWC")
    x = jnp.transpose(x_nchw, (0, 2, 3, 1)).astype(jnp.float32)
    for (wgt, gamma, beta, use_bn) in params["body"]:
        x = lax.conv_general_dilated(x, wgt, (2, 2), ((1, 1), (1, 1)),
                                     dimension_numbers=dn)
        if use_bn:
            mean = jnp.mean(x, axis=(0, 1, 2), keepdims=True)
            var = jnp.mean(jnp.square(x - mean), axis=(0, 1, 2), keepdims=True)
            x = (x - mean) * lax.rsqrt(var + BN_EPS)
            x = x * gamma.reshape(1, 1, 1, -1) + beta.reshape(1, 1, 1, -1)
        x = _leaky(x)
    x = lax.conv_general_dilated(x, params["final"], (1, 1), "VALID",
                                 dimension_numbers=dn)
    return jax.nn.sigmoid(x).reshape(-1, 1)


if __name__ == "__main__":
    key = jax.random.PRNGKey(0)
    key, pkey, xkey = jax.random.split(key, 3)
    params = build_netD_params(pkey)
    x = jax.random.normal(xkey, (BATCH, NC, IMAGE_SIZE, IMAGE_SIZE),
                          jnp.float32)

    fwd = jax.jit(lambda inp: netD_forward(inp, params))
    out = jax.block_until_ready(fwd(x))
    assert out.shape == (BATCH, 1), out.shape

    ref = jax.block_until_ready(netD_reference(x, params))
    max_err = float(jnp.max(jnp.abs(out - ref)))
    assert max_err < 5e-2, f"mismatch vs pure-JAX reference: {max_err}"
    print("KERNEL_OK")
</pallas_src>

<mosaic_0001>
module attributes {stable_mosaic.version = 11 : i64} {
  func.func @_netd_kernel(%arg0: memref<3x512xbf16, #tpu.memory_space<vmem>>, %arg1: memref<16x8x3xbf16, #tpu.memory_space<vmem>>, %arg2: memref<16x16x8xbf16, #tpu.memory_space<vmem>>, %arg3: memref<16x1xf32, #tpu.memory_space<vmem>>, %arg4: memref<16x1xf32, #tpu.memory_space<vmem>>, %arg5: memref<16x32xf32, #tpu.memory_space<vmem>>, %arg6: memref<2x1xf32, #tpu.memory_space<vmem>>) attributes {dimension_semantics = [], scalar_prefetch = 0 : i64, scratch_operands = 0 : i64, tpu.core_type = #tpu.core_type<tc>} {
    %c0 = arith.constant 0 : index
    %c0_0 = arith.constant 0 : index
    %0 = vector.load %arg0[%c0, %c0_0] : memref<3x512xbf16, #tpu.memory_space<vmem>>, vector<3x512xbf16>
    %1 = tpu.iota {dimensions = array<i32: 1>} : vector<1x128xi32>
    %c7_i32 = arith.constant 7 : i32
    %2 = vector.broadcast %c7_i32 : i32 to vector<1x128xi32>
    %3 = arith.andi %1, %2 : vector<1x128xi32>
    %c3_i32 = arith.constant 3 : i32
    %4 = vector.broadcast %c3_i32 : i32 to vector<1x128xi32>
    %5 = arith.shrsi %1, %4 : vector<1x128xi32>
    %c7_i32_1 = arith.constant 7 : i32
    %6 = vector.broadcast %c7_i32_1 : i32 to vector<1x128xi32>
    %7 = arith.andi %5, %6 : vector<1x128xi32>
    %c6_i32 = arith.constant 6 : i32
    %8 = vector.broadcast %c6_i32 : i32 to vector<1x128xi32>
    %9 = arith.shrsi %1, %8 : vector<1x128xi32>
    %10 = tpu.iota {dimensions = array<i32: 0>} : vector<512x128xi32>
    %cst = arith.constant 0.000000e+00 : f32
    %11 = vector.broadcast %cst : f32 to vector<8x128xf32>
    %c2_i32 = arith.constant 2 : i32
    %12 = vector.broadcast %c2_i32 : i32 to vector<1x128xi32>
    %13 = arith.muli %12, %7 : vector<1x128xi32>
    %c-1_i32 = arith.constant -1 : i32
    %14 = vector.broadcast %c-1_i32 : i32 to vector<1x128xi32>
    %15 = arith.addi %13, %14 : vector<1x128xi32>
    %c2_i32_2 = arith.constant 2 : i32
    %16 = vector.broadcast %c2_i32_2 : i32 to vector<1x128xi32>
    %17 = arith.muli %16, %3 : vector<1x128xi32>
    %c-1_i32_3 = arith.constant -1 : i32
    %18 = vector.broadcast %c-1_i32_3 : i32 to vector<1x128xi32>
    %19 = arith.addi %17, %18 : vector<1x128xi32>
    %c0_i32 = arith.constant 0 : i32
    %20 = vector.broadcast %c0_i32 : i32 to vector<1x128xi32>
    %21 = arith.cmpi sge, %15, %20 : vector<1x128xi32>
    %c16_i32 = arith.constant 16 : i32
    %22 = vector.broadcast %c16_i32 : i32 to vector<1x128xi32>
    %23 = arith.cmpi slt, %15, %22 : vector<1x128xi32>
    %24 = arith.andi %21, %23 : vector<1x128xi1>
    %c0_i32_4 = arith.constant 0 : i32
    %25 = vector.broadcast %c0_i32_4 : i32 to vector<1x128xi32>
    %26 = arith.cmpi sge, %19, %25 : vector<1x128xi32>
    %27 = arith.andi %24, %26 : vector<1x128xi1>
    %c16_i32_5 = arith.constant 16 : i32
    %28 = vector.broadcast %c16_i32_5 : i32 to vector<1x128xi32>
    %29 = arith.cmpi slt, %19, %28 : vector<1x128xi32>
    %30 = arith.andi %27, %29 : vector<1x128xi1>
    %c256_i32 = arith.constant 256 : i32
    %31 = vector.broadcast %c256_i32 : i32 to vector<1x128xi32>
    %32 = arith.muli %9, %31 : vector<1x128xi32>
    %c16_i32_6 = arith.constant 16 : i32
    %33 = vector.broadcast %c16_i32_6 : i32 to vector<1x128xi32>
    %34 = arith.muli %15, %33 : vector<1x128xi32>
    %35 = arith.addi %32, %34 : vector<1x128xi32>
    %36 = arith.addi %35, %19 : vector<1x128xi32>
    %c-1_i32_7 = arith.constant -1 : i32
    %37 = vector.broadcast %c-1_i32_7 : i32 to vector<1x128xi32>
    %38 = arith.select %30, %36, %37 : vector<1x128xi1>, vector<1x128xi32>
    %39 = vector.broadcast %38 : vector<1x128xi32> to vector<512x128xi32>
    %40 = arith.cmpi eq, %10, %39 : vector<512x128xi32>
    %cst_8 = arith.constant 1.000000e+00 : f32
    %cst_9 = arith.constant 0.000000e+00 : f32
    %41 = vector.broadcast %cst_8 : f32 to vector<512x128xf32>
    %42 = vector.broadcast %cst_9 : f32 to vector<512x128xf32>
    %43 = arith.select %40, %41, %42 : vector<512x128xi1>, vector<512x128xf32>
    %44 = arith.truncf %43 : vector<512x128xf32> to vector<512x128xbf16>
    %cst_10 = arith.constant dense<0.000000e+00> : vector<3x128xf32>
    %45 = tpu.matmul %0, %44, %cst_10 {dimension_numbers = #tpu.dot_dimension_numbers<[1], [0], [0], [1], [0, 0, 1, 1], [], []>} : vector<3x512xbf16>, vector<512x128xbf16>, vector<3x128xf32> -> vector<3x128xf32>
    %c0_11 = arith.constant 0 : index
    %c0_12 = arith.constant 0 : index
    %c0_13 = arith.constant 0 : index
    %46 = vector.load %arg1[%c0_11, %c0_12, %c0_13] : memref<16x8x3xbf16, #tpu.memory_space<vmem>>, vector<1x8x3xbf16>
    %47 = vector.shape_cast %46 : vector<1x8x3xbf16> to vector<8x3xbf16>
    %48 = arith.truncf %45 : vector<3x128xf32> to vector<3x128xbf16>
    %cst_14 = arith.constant dense<0.000000e+00> : vector<8x128xf32>
    %49 = tpu.matmul %47, %48, %cst_14 {dimension_numbers = #tpu.dot_dimension_numbers<[1], [0], [0], [1], [0, 0, 1, 1], [], []>} : vector<8x3xbf16>, vector<3x128xbf16>, vector<8x128xf32> -> vector<8x128xf32>
    %50 = arith.addf %11, %49 : vector<8x128xf32>
    %c2_i32_15 = arith.constant 2 : i32
    %51 = vector.broadcast %c2_i32_15 : i32 to vector<1x128xi32>
    %52 = arith.muli %51, %7 : vector<1x128xi32>
    %c-1_i32_16 = arith.constant -1 : i32
    %53 = vector.broadcast %c-1_i32_16 : i32 to vector<1x128xi32>
    %54 = arith.addi %52, %53 : vector<1x128xi32>
    %c2_i32_17 = arith.constant 2 : i32
    %55 = vector.broadcast %c2_i32_17 : i32 to vector<1x128xi32>
    %56 = arith.muli %55, %3 : vector<1x128xi32>
    %c0_i32_18 = arith.constant 0 : i32
    %57 = vector.broadcast %c0_i32_18 : i32 to vector<1x128xi32>
    %58 = arith.addi %56, %57 : vector<1x128xi32>
    %c0_i32_19 = arith.constant 0 : i32
    %59 = vector.broadcast %c0_i32_19 : i32 to vector<1x128xi32>
    %60 = arith.cmpi sge, %54, %59 : vector<1x128xi32>
    %c16_i32_20 = arith.constant 16 : i32
    %61 = vector.broadcast %c16_i32_20 : i32 to vector<1x128xi32>
    %62 = arith.cmpi slt, %54, %61 : vector<1x128xi32>
    %63 = arith.andi %60, %62 : vector<1x128xi1>
    %c0_i32_21 = arith.constant 0 : i32
    %64 = vector.broadcast %c0_i32_21 : i32 to vector<1x128xi32>
    %65 = arith.cmpi sge, %58, %64 : vector<1x128xi32>
    %66 = arith.andi %63, %65 : vector<1x128xi1>
    %c16_i32_22 = arith.constant 16 : i32
    %67 = vector.broadcast %c16_i32_22 : i32 to vector<1x128xi32>
    %68 = arith.cmpi slt, %58, %67 : vector<1x128xi32>
    %69 = arith.andi %66, %68 : vector<1x128xi1>
    %c256_i32_23 = arith.constant 256 : i32
    %70 = vector.broadcast %c256_i32_23 : i32 to vector<1x128xi32>
    %71 = arith.muli %9, %70 : vector<1x128xi32>
    %c16_i32_24 = arith.constant 16 : i32
    %72 = vector.broadcast %c16_i32_24 : i32 to vector<1x128xi32>
    %73 = arith.muli %54, %72 : vector<1x128xi32>
    %74 = arith.addi %71, %73 : vector<1x128xi32>
    %75 = arith.addi %74, %58 : vector<1x128xi32>
    %c-1_i32_25 = arith.constant -1 : i32
    %76 = vector.broadcast %c-1_i32_25 : i32 to vector<1x128xi32>
    %77 = arith.select %69, %75, %76 : vector<1x128xi1>, vector<1x128xi32>
    %78 = vector.broadcast %77 : vector<1x128xi32> to vector<512x128xi32>
    %79 = arith.cmpi eq, %10, %78 : vector<512x128xi32>
    %cst_26 = arith.constant 1.000000e+00 : f32
    %cst_27 = arith.constant 0.000000e+00 : f32
    %80 = vector.broadcast %cst_26 : f32 to vector<512x128xf32>
    %81 = vector.broadcast %cst_27 : f32 to vector<512x128xf32>
    %82 = arith.select %79, %80, %81 : vector<512x128xi1>, vector<512x128xf32>
    %83 = arith.truncf %82 : vector<512x128xf32> to vector<512x128xbf16>
    %cst_28 = arith.constant dense<0.000000e+00> : vector<3x128xf32>
    %84 = tpu.matmul %0, %83, %cst_28 {dimension_numbers = #tpu.dot_dimension_numbers<[1], [0], [0], [1], [0, 0, 1, 1], [], []>} : vector<3x512xbf16>, vector<512x128xbf16>, vector<3x128xf32> -> vector<3x128xf32>
    %c1 = arith.constant 1 : index
    %c0_29 = arith.constant 0 : index
    %c0_30 = arith.constant 0 : index
    %85 = vector.load %arg1[%c1, %c0_29, %c0_30] : memref<16x8x3xbf16, #tpu.memory_space<vmem>>, vector<1x8x3xbf16>
    %86 = vector.shape_cast %85 : vector<1x8x3xbf16> to vector<8x3xbf16>
    %87 = arith.truncf %84 : vector<3x128xf32> to vector<3x128xbf16>
    %cst_31 = arith.constant dense<0.000000e+00> : vector<8x128xf32>
    %88 = tpu.matmul %86, %87, %cst_31 {dimension_numbers = #tpu.dot_dimension_numbers<[1], [0], [0], [1], [0, 0, 1, 1], [], []>} : vector<8x3xbf16>, vector<3x128xbf16>, vector<8x128xf32> -> vector<8x128xf32>
    %89 = arith.addf %50, %88 : vector<8x128xf32>
    %c2_i32_32 = arith.constant 2 : i32
    %90 = vector.broadcast %c2_i32_32 : i32 to vector<1x128xi32>
    %91 = arith.muli %90, %7 : vector<1x128xi32>
    %c-1_i32_33 = arith.constant -1 : i32
    %92 = vector.broadcast %c-1_i32_33 : i32 to vector<1x128xi32>
    %93 = arith.addi %91, %92 : vector<1x128xi32>
    %c2_i32_34 = arith.constant 2 : i32
    %94 = vector.broadcast %c2_i32_34 : i32 to vector<1x128xi32>
    %95 = arith.muli %94, %3 : vector<1x128xi32>
    %c1_i32 = arith.constant 1 : i32
    %96 = vector.broadcast %c1_i32 : i32 to vector<1x128xi32>
    %97 = arith.addi %95, %96 : vector<1x128xi32>
    %c0_i32_35 = arith.constant 0 : i32
    %98 = vector.broadcast %c0_i32_35 : i32 to vector<1x128xi32>
    %99 = arith.cmpi sge, %93, %98 : vector<1x128xi32>
    %c16_i32_36 = arith.constant 16 : i32
    %100 = vector.broadcast %c16_i32_36 : i32 to vector<1x128xi32>
    %101 = arith.cmpi slt, %93, %100 : vector<1x128xi32>
    %102 = arith.andi %99, %101 : vector<1x128xi1>
    %c0_i32_37 = arith.constant 0 : i32
    %103 = vector.broadcast %c0_i32_37 : i32 to vector<1x128xi32>
    %104 = arith.cmpi sge, %97, %103 : vector<1x128xi32>
    %105 = arith.andi %102, %104 : vector<1x128xi1>
    %c16_i32_38 = arith.constant 16 : i32
    %106 = vector.broadcast %c16_i32_38 : i32 to vector<1x128xi32>
    %107 = arith.cmpi slt, %97, %106 : vector<1x128xi32>
    %108 = arith.andi %105, %107 : vector<1x128xi1>
    %c256_i32_39 = arith.constant 256 : i32
    %109 = vector.broadcast %c256_i32_39 : i32 to vector<1x128xi32>
    %110 = arith.muli %9, %109 : vector<1x128xi32>
    %c16_i32_40 = arith.constant 16 : i32
    %111 = vector.broadcast %c16_i32_40 : i32 to vector<1x128xi32>
    %112 = arith.muli %93, %111 : vector<1x128xi32>
    %113 = arith.addi %110, %112 : vector<1x128xi32>
    %114 = arith.addi %113, %97 : vector<1x128xi32>
    %c-1_i32_41 = arith.constant -1 : i32
    %115 = vector.broadcast %c-1_i32_41 : i32 to vector<1x128xi32>
    %116 = arith.select %108, %114, %115 : vector<1x128xi1>, vector<1x128xi32>
    %117 = vector.broadcast %116 : vector<1x128xi32> to vector<512x128xi32>
    %118 = arith.cmpi eq, %10, %117 : vector<512x128xi32>
    %cst_42 = arith.constant 1.000000e+00 : f32
    %cst_43 = arith.constant 0.000000e+00 : f32
    %119 = vector.broadcast %cst_42 : f32 to vector<512x128xf32>
    %120 = vector.broadcast %cst_43 : f32 to vector<512x128xf32>
    %121 = arith.select %118, %119, %120 : vector<512x128xi1>, vector<512x128xf32>
    %122 = arith.truncf %121 : vector<512x128xf32> to vector<512x128xbf16>
    %cst_44 = arith.constant dense<0.000000e+00> : vector<3x128xf32>
    %123 = tpu.matmul %0, %122, %cst_44 {dimension_numbers = #tpu.dot_dimension_numbers<[1], [0], [0], [1], [0, 0, 1, 1], [], []>} : vector<3x512xbf16>, vector<512x128xbf16>, vector<3x128xf32> -> vector<3x128xf32>
    %c2 = arith.constant 2 : index
    %c0_45 = arith.constant 0 : index
    %c0_46 = arith.constant 0 : index
    %124 = vector.load %arg1[%c2, %c0_45, %c0_46] : memref<16x8x3xbf16, #tpu.memory_space<vmem>>, vector<1x8x3xbf16>
    %125 = vector.shape_cast %124 : vector<1x8x3xbf16> to vector<8x3xbf16>
    %126 = arith.truncf %123 : vector<3x128xf32> to vector<3x128xbf16>
    %cst_47 = arith.constant dense<0.000000e+00> : vector<8x128xf32>
    %127 = tpu.matmul %125, %126, %cst_47 {dimension_numbers = #tpu.dot_dimension_numbers<[1], [0], [0], [1], [0, 0, 1, 1], [], []>} : vector<8x3xbf16>, vector<3x128xbf16>, vector<8x128xf32> -> vector<8x128xf32>
    %128 = arith.addf %89, %127 : vector<8x128xf32>
    %c2_i32_48 = arith.constant 2 : i32
    %129 = vector.broadcast %c2_i32_48 : i32 to vector<1x128xi32>
    %130 = arith.muli %129, %7 : vector<1x128xi32>
    %c-1_i32_49 = arith.constant -1 : i32
    %131 = vector.broadcast %c-1_i32_49 : i32 to vector<1x128xi32>
    %132 = arith.addi %130, %131 : vector<1x128xi32>
    %c2_i32_50 = arith.constant 2 : i32
    %133 = vector.broadcast %c2_i32_50 : i32 to vector<1x128xi32>
    %134 = arith.muli %133, %3 : vector<1x128xi32>
    %c2_i32_51 = arith.constant 2 : i32
    %135 = vector.broadcast %c2_i32_51 : i32 to vector<1x128xi32>
    %136 = arith.addi %134, %135 : vector<1x128xi32>
    %c0_i32_52 = arith.constant 0 : i32
    %137 = vector.broadcast %c0_i32_52 : i32 to vector<1x128xi32>
    %138 = arith.cmpi sge, %132, %137 : vector<1x128xi32>
    %c16_i32_53 = arith.constant 16 : i32
    %139 = vector.broadcast %c16_i32_53 : i32 to vector<1x128xi32>
    %140 = arith.cmpi slt, %132, %139 : vector<1x128xi32>
    %141 = arith.andi %138, %140 : vector<1x128xi1>
    %c0_i32_54 = arith.constant 0 : i32
    %142 = vector.broadcast %c0_i32_54 : i32 to vector<1x128xi32>
    %143 = arith.cmpi sge, %136, %142 : vector<1x128xi32>
    %144 = arith.andi %141, %143 : vector<1x128xi1>
    %c16_i32_55 = arith.constant 16 : i32
    %145 = vector.broadcast %c16_i32_55 : i32 to vector<1x128xi32>
    %146 = arith.cmpi slt, %136, %145 : vector<1x128xi32>
    %147 = arith.andi %144, %146 : vector<1x128xi1>
    %c256_i32_56 = arith.constant 256 : i32
    %148 = vector.broadcast %c256_i32_56 : i32 to vector<1x128xi32>
    %149 = arith.muli %9, %148 : vector<1x128xi32>
    %c16_i32_57 = arith.constant 16 : i32
    %150 = vector.broadcast %c16_i32_57 : i32 to vector<1x128xi32>
    %151 = arith.muli %132, %150 : vector<1x128xi32>
    %152 = arith.addi %149, %151 : vector<1x128xi32>
    %153 = arith.addi %152, %136 : vector<1x128xi32>
    %c-1_i32_58 = arith.constant -1 : i32
    %154 = vector.broadcast %c-1_i32_58 : i32 to vector<1x128xi32>
    %155 = arith.select %147, %153, %154 : vector<1x128xi1>, vector<1x128xi32>
    %156 = vector.broadcast %155 : vector<1x128xi32> to vector<512x128xi32>
    %157 = arith.cmpi eq, %10, %156 : vector<512x128xi32>
    %cst_59 = arith.constant 1.000000e+00 : f32
    %cst_60 = arith.constant 0.000000e+00 : f32
    %158 = vector.broadcast %cst_59 : f32 to vector<512x128xf32>
    %159 = vector.broadcast %cst_60 : f32 to vector<512x128xf32>
    %160 = arith.select %157, %158, %159 : vector<512x128xi1>, vector<512x128xf32>
    %161 = arith.truncf %160 : vector<512x128xf32> to vector<512x128xbf16>
    %cst_61 = arith.constant dense<0.000000e+00> : vector<3x128xf32>
    %162 = tpu.matmul %0, %161, %cst_61 {dimension_numbers = #tpu.dot_dimension_numbers<[1], [0], [0], [1], [0, 0, 1, 1], [], []>} : vector<3x512xbf16>, vector<512x128xbf16>, vector<3x128xf32> -> vector<3x128xf32>
    %c3 = arith.constant 3 : index
    %c0_62 = arith.constant 0 : index
    %c0_63 = arith.constant 0 : index
    %163 = vector.load %arg1[%c3, %c0_62, %c0_63] : memref<16x8x3xbf16, #tpu.memory_space<vmem>>, vector<1x8x3xbf16>
    %164 = vector.shape_cast %163 : vector<1x8x3xbf16> to vector<8x3xbf16>
    %165 = arith.truncf %162 : vector<3x128xf32> to vector<3x128xbf16>
    %cst_64 = arith.constant dense<0.000000e+00> : vector<8x128xf32>
    %166 = tpu.matmul %164, %165, %cst_64 {dimension_numbers = #tpu.dot_dimension_numbers<[1], [0], [0], [1], [0, 0, 1, 1], [], []>} : vector<8x3xbf16>, vector<3x128xbf16>, vector<8x128xf32> -> vector<8x128xf32>
    %167 = arith.addf %128, %166 : vector<8x128xf32>
    %c2_i32_65 = arith.constant 2 : i32
    %168 = vector.broadcast %c2_i32_65 : i32 to vector<1x128xi32>
    %169 = arith.muli %168, %7 : vector<1x128xi32>
    %c0_i32_66 = arith.constant 0 : i32
    %170 = vector.broadcast %c0_i32_66 : i32 to vector<1x128xi32>
    %171 = arith.addi %169, %170 : vector<1x128xi32>
    %c2_i32_67 = arith.constant 2 : i32
    %172 = vector.broadcast %c2_i32_67 : i32 to vector<1x128xi32>
    %173 = arith.muli %172, %3 : vector<1x128xi32>
    %c-1_i32_68 = arith.constant -1 : i32
    %174 = vector.broadcast %c-1_i32_68 : i32 to vector<1x128xi32>
    %175 = arith.addi %173, %174 : vector<1x128xi32>
    %c0_i32_69 = arith.constant 0 : i32
    %176 = vector.broadcast %c0_i32_69 : i32 to vector<1x128xi32>
    %177 = arith.cmpi sge, %171, %176 : vector<1x128xi32>
    %c16_i32_70 = arith.constant 16 : i32
    %178 = vector.broadcast %c16_i32_70 : i32 to vector<1x128xi32>
    %179 = arith.cmpi slt, %171, %178 : vector<1x128xi32>
    %180 = arith.andi %177, %179 : vector<1x128xi1>
    %c0_i32_71 = arith.constant 0 : i32
    %181 = vector.broadcast %c0_i32_71 : i32 to vector<1x128xi32>
    %182 = arith.cmpi sge, %175, %181 : vector<1x128xi32>
    %183 = arith.andi %180, %182 : vector<1x128xi1>
    %c16_i32_72 = arith.constant 16 : i32
    %184 = vector.broadcast %c16_i32_72 : i32 to vector<1x128xi32>
    %185 = arith.cmpi slt, %175, %184 : vector<1x128xi32>
    %186 = arith.andi %183, %185 : vector<1x128xi1>
    %c256_i32_73 = arith.constant 256 : i32
    %187 = vector.broadcast %c256_i32_73 : i32 to vector<1x128xi32>
    %188 = arith.muli %9, %187 : vector<1x128xi32>
    %c16_i32_74 = arith.constant 16 : i32
    %189 = vector.broadcast %c16_i32_74 : i32 to vector<1x128xi32>
    %190 = arith.muli %171, %189 : vector<1x128xi32>
    %191 = arith.addi %188, %190 : vector<1x128xi32>
    %192 = arith.addi %191, %175 : vector<1x128xi32>
    %c-1_i32_75 = arith.constant -1 : i32
    %193 = vector.broadcast %c-1_i32_75 : i32 to vector<1x128xi32>
    %194 = arith.select %186, %192, %193 : vector<1x128xi1>, vector<1x128xi32>
    %195 = vector.broadcast %194 : vector<1x128xi32> to vector<512x128xi32>
    %196 = arith.cmpi eq, %10, %195 : vector<512x128xi32>
    %cst_76 = arith.constant 1.000000e+00 : f32
    %cst_77 = arith.constant 0.000000e+00 : f32
    %197 = vector.broadcast %cst_76 : f32 to vector<512x128xf32>
    %198 = vector.broadcast %cst_77 : f32 to vector<512x128xf32>
    %199 = arith.select %196, %197, %198 : vector<512x128xi1>, vector<512x128xf32>
    %200 = arith.truncf %199 : vector<512x128xf32> to vector<512x128xbf16>
    %cst_78 = arith.constant dense<0.000000e+00> : vector<3x128xf32>
    %201 = tpu.matmul %0, %200, %cst_78 {dimension_numbers = #tpu.dot_dimension_numbers<[1], [0], [0], [1], [0, 0, 1, 1], [], []>} : vector<3x512xbf16>, vector<512x128xbf16>, vector<3x128xf32> -> vector<3x128xf32>
    %c4 = arith.constant 4 : index
    %c0_79 = arith.constant 0 : index
    %c0_80 = arith.constant 0 : index
    %202 = vector.load %arg1[%c4, %c0_79, %c0_80] : memref<16x8x3xbf16, #tpu.memory_space<vmem>>, vector<1x8x3xbf16>
    %203 = vector.shape_cast %202 : vector<1x8x3xbf16> to vector<8x3xbf16>
    %204 = arith.truncf %201 : vector<3x128xf32> to vector<3x128xbf16>
    %cst_81 = arith.constant dense<0.000000e+00> : vector<8x128xf32>
    %205 = tpu.matmul %203, %204, %cst_81 {dimension_numbers = #tpu.dot_dimension_numbers<[1], [0], [0], [1], [0, 0, 1, 1], [], []>} : vector<8x3xbf16>, vector<3x128xbf16>, vector<8x128xf32> -> vector<8x128xf32>
    %206 = arith.addf %167, %205 : vector<8x128xf32>
    %c2_i32_82 = arith.constant 2 : i32
    %207 = vector.broadcast %c2_i32_82 : i32 to vector<1x128xi32>
    %208 = arith.muli %207, %7 : vector<1x128xi32>
    %c0_i32_83 = arith.constant 0 : i32
    %209 = vector.broadcast %c0_i32_83 : i32 to vector<1x128xi32>
    %210 = arith.addi %208, %209 : vector<1x128xi32>
    %c2_i32_84 = arith.constant 2 : i32
    %211 = vector.broadcast %c2_i32_84 : i32 to vector<1x128xi32>
    %212 = arith.muli %211, %3 : vector<1x128xi32>
    %c0_i32_85 = arith.constant 0 : i32
    %213 = vector.broadcast %c0_i32_85 : i32 to vector<1x128xi32>
    %214 = arith.addi %212, %213 : vector<1x128xi32>
    %c0_i32_86 = arith.constant 0 : i32
    %215 = vector.broadcast %c0_i32_86 : i32 to vector<1x128xi32>
    %216 = arith.cmpi sge, %210, %215 : vector<1x128xi32>
    %c16_i32_87 = arith.constant 16 : i32
    %217 = vector.broadcast %c16_i32_87 : i32 to vector<1x128xi32>
    %218 = arith.cmpi slt, %210, %217 : vector<1x128xi32>
    %219 = arith.andi %216, %218 : vector<1x128xi1>
    %c0_i32_88 = arith.constant 0 : i32
    %220 = vector.broadcast %c0_i32_88 : i32 to vector<1x128xi32>
    %221 = arith.cmpi sge, %214, %220 : vector<1x128xi32>
    %222 = arith.andi %219, %221 : vector<1x128xi1>
    %c16_i32_89 = arith.constant 16 : i32
    %223 = vector.broadcast %c16_i32_89 : i32 to vector<1x128xi32>
    %224 = arith.cmpi slt, %214, %223 : vector<1x128xi32>
    %225 = arith.andi %222, %224 : vector<1x128xi1>
    %c256_i32_90 = arith.constant 256 : i32
    %226 = vector.broadcast %c256_i32_90 : i32 to vector<1x128xi32>
    %227 = arith.muli %9, %226 : vector<1x128xi32>
    %c16_i32_91 = arith.constant 16 : i32
    %228 = vector.broadcast %c16_i32_91 : i32 to vector<1x128xi32>
    %229 = arith.muli %210, %228 : vector<1x128xi32>
    %230 = arith.addi %227, %229 : vector<1x128xi32>
    %231 = arith.addi %230, %214 : vector<1x128xi32>
    %c-1_i32_92 = arith.constant -1 : i32
    %232 = vector.broadcast %c-1_i32_92 : i32 to vector<1x128xi32>
    %233 = arith.select %225, %231, %232 : vector<1x128xi1>, vector<1x128xi32>
    %234 = vector.broadcast %233 : vector<1x128xi32> to vector<512x128xi32>
    %235 = arith.cmpi eq, %10, %234 : vector<512x128xi32>
    %cst_93 = arith.constant 1.000000e+00 : f32
    %cst_94 = arith.constant 0.000000e+00 : f32
    %236 = vector.broadcast %cst_93 : f32 to vector<512x128xf32>
    %237 = vector.broadcast %cst_94 : f32 to vector<512x128xf32>
    %238 = arith.select %235, %236, %237 : vector<512x128xi1>, vector<512x128xf32>
    %239 = arith.truncf %238 : vector<512x128xf32> to vector<512x128xbf16>
    %cst_95 = arith.constant dense<0.000000e+00> : vector<3x128xf32>
    %240 = tpu.matmul %0, %239, %cst_95 {dimension_numbers = #tpu.dot_dimension_numbers<[1], [0], [0], [1], [0, 0, 1, 1], [], []>} : vector<3x512xbf16>, vector<512x128xbf16>, vector<3x128xf32> -> vector<3x128xf32>
    %c5 = arith.constant 5 : index
    %c0_96 = arith.constant 0 : index
    %c0_97 = arith.constant 0 : index
    %241 = vector.load %arg1[%c5, %c0_96, %c0_97] : memref<16x8x3xbf16, #tpu.memory_space<vmem>>, vector<1x8x3xbf16>
    %242 = vector.shape_cast %241 : vector<1x8x3xbf16> to vector<8x3xbf16>
    %243 = arith.truncf %240 : vector<3x128xf32> to vector<3x128xbf16>
    %cst_98 = arith.constant dense<0.000000e+00> : vector<8x128xf32>
    %244 = tpu.matmul %242, %243, %cst_98 {dimension_numbers = #tpu.dot_dimension_numbers<[1], [0], [0], [1], [0, 0, 1, 1], [], []>} : vector<8x3xbf16>, vector<3x128xbf16>, vector<8x128xf32> -> vector<8x128xf32>
    %245 = arith.addf %206, %244 : vector<8x128xf32>
    %c2_i32_99 = arith.constant 2 : i32
    %246 = vector.broadcast %c2_i32_99 : i32 to vector<1x128xi32>
    %247 = arith.muli %246, %7 : vector<1x128xi32>
    %c0_i32_100 = arith.constant 0 : i32
    %248 = vector.broadcast %c0_i32_100 : i32 to vector<1x128xi32>
    %249 = arith.addi %247, %248 : vector<1x128xi32>
    %c2_i32_101 = arith.constant 2 : i32
    %250 = vector.broadcast %c2_i32_101 : i32 to vector<1x128xi32>
    %251 = arith.muli %250, %3 : vector<1x128xi32>
    %c1_i32_102 = arith.constant 1 : i32
    %252 = vector.broadcast %c1_i32_102 : i32 to vector<1x128xi32>
    %253 = arith.addi %251, %252 : vector<1x128xi32>
    %c0_i32_103 = arith.constant 0 : i32
    %254 = vector.broadcast %c0_i32_103 : i32 to vector<1x128xi32>
    %255 = arith.cmpi sge, %249, %254 : vector<1x128xi32>
    %c16_i32_104 = arith.constant 16 : i32
    %256 = vector.broadcast %c16_i32_104 : i32 to vector<1x128xi32>
    %257 = arith.cmpi slt, %249, %256 : vector<1x128xi32>
    %258 = arith.andi %255, %257 : vector<1x128xi1>
    %c0_i32_105 = arith.constant 0 : i32
    %259 = vector.broadcast %c0_i32_105 : i32 to vector<1x128xi32>
    %260 = arith.cmpi sge, %253, %259 : vector<1x128xi32>
    %261 = arith.andi %258, %260 : vector<1x128xi1>
    %c16_i32_106 = arith.constant 16 : i32
    %262 = vector.broadcast %c16_i32_106 : i32 to vector<1x128xi32>
    %263 = arith.cmpi slt, %253, %262 : vector<1x128xi32>
    %264 = arith.andi %261, %263 : vector<1x128xi1>
    %c256_i32_107 = arith.constant 256 : i32
    %265 = vector.broadcast %c256_i32_107 : i32 to vector<1x128xi32>
    %266 = arith.muli %9, %265 : vector<1x128xi32>
    %c16_i32_108 = arith.constant 16 : i32
    %267 = vector.broadcast %c16_i32_108 : i32 to vector<1x128xi32>
    %268 = arith.muli %249, %267 : vector<1x128xi32>
    %269 = arith.addi %266, %268 : vector<1x128xi32>
    %270 = arith.addi %269, %253 : vector<1x128xi32>
    %c-1_i32_109 = arith.constant -1 : i32
    %271 = vector.broadcast %c-1_i32_109 : i32 to vector<1x128xi32>
    %272 = arith.select %264, %270, %271 : vector<1x128xi1>, vector<1x128xi32>
    %273 = vector.broadcast %272 : vector<1x128xi32> to vector<512x128xi32>
    %274 = arith.cmpi eq, %10, %273 : vector<512x128xi32>
    %cst_110 = arith.constant 1.000000e+00 : f32
    %cst_111 = arith.constant 0.000000e+00 : f32
    %275 = vector.broadcast %cst_110 : f32 to vector<512x128xf32>
    %276 = vector.broadcast %cst_111 : f32 to vector<512x128xf32>
    %277 = arith.select %274, %275, %276 : vector<512x128xi1>, vector<512x128xf32>
    %278 = arith.truncf %277 : vector<512x128xf32> to vector<512x128xbf16>
    %cst_112 = arith.constant dense<0.000000e+00> : vector<3x128xf32>
    %279 = tpu.matmul %0, %278, %cst_112 {dimension_numbers = #tpu.dot_dimension_numbers<[1], [0], [0], [1], [0, 0, 1, 1], [], []>} : vector<3x512xbf16>, vector<512x128xbf16>, vector<3x128xf32> -> vector<3x128xf32>
    %c6 = arith.constant 6 : index
    %c0_113 = arith.constant 0 : index
    %c0_114 = arith.constant 0 : index
    %280 = vector.load %arg1[%c6, %c0_113, %c0_114] : memref<16x8x3xbf16, #tpu.memory_space<vmem>>, vector<1x8x3xbf16>
    %281 = vector.shape_cast %280 : vector<1x8x3xbf16> to vector<8x3xbf16>
    %282 = arith.truncf %279 : vector<3x128xf32> to vector<3x128xbf16>
    %cst_115 = arith.constant dense<0.000000e+00> : vector<8x128xf32>
    %283 = tpu.matmul %281, %282, %cst_115 {dimension_numbers = #tpu.dot_dimension_numbers<[1], [0], [0], [1], [0, 0, 1, 1], [], []>} : vector<8x3xbf16>, vector<3x128xbf16>, vector<8x128xf32> -> vector<8x128xf32>
    %284 = arith.addf %245, %283 : vector<8x128xf32>
    %c2_i32_116 = arith.constant 2 : i32
    %285 = vector.broadcast %c2_i32_116 : i32 to vector<1x128xi32>
    %286 = arith.muli %285, %7 : vector<1x128xi32>
    %c0_i32_117 = arith.constant 0 : i32
    %287 = vector.broadcast %c0_i32_117 : i32 to vector<1x128xi32>
    %288 = arith.addi %286, %287 : vector<1x128xi32>
    %c2_i32_118 = arith.constant 2 : i32
    %289 = vector.broadcast %c2_i32_118 : i32 to vector<1x128xi32>
    %290 = arith.muli %289, %3 : vector<1x128xi32>
    %c2_i32_119 = arith.constant 2 : i32
    %291 = vector.broadcast %c2_i32_119 : i32 to vector<1x128xi32>
    %292 = arith.addi %290, %291 : vector<1x128xi32>
    %c0_i32_120 = arith.constant 0 : i32
    %293 = vector.broadcast %c0_i32_120 : i32 to vector<1x128xi32>
    %294 = arith.cmpi sge, %288, %293 : vector<1x128xi32>
    %c16_i32_121 = arith.constant 16 : i32
    %295 = vector.broadcast %c16_i32_121 : i32 to vector<1x128xi32>
    %296 = arith.cmpi slt, %288, %295 : vector<1x128xi32>
    %297 = arith.andi %294, %296 : vector<1x128xi1>
    %c0_i32_122 = arith.constant 0 : i32
    %298 = vector.broadcast %c0_i32_122 : i32 to vector<1x128xi32>
    %299 = arith.cmpi sge, %292, %298 : vector<1x128xi32>
    %300 = arith.andi %297, %299 : vector<1x128xi1>
    %c16_i32_123 = arith.constant 16 : i32
    %301 = vector.broadcast %c16_i32_123 : i32 to vector<1x128xi32>
    %302 = arith.cmpi slt, %292, %301 : vector<1x128xi32>
    %303 = arith.andi %300, %302 : vector<1x128xi1>
    %c256_i32_124 = arith.constant 256 : i32
    %304 = vector.broadcast %c256_i32_124 : i32 to vector<1x128xi32>
    %305 = arith.muli %9, %304 : vector<1x128xi32>
    %c16_i32_125 = arith.constant 16 : i32
    %306 = vector.broadcast %c16_i32_125 : i32 to vector<1x128xi32>
    %307 = arith.muli %288, %306 : vector<1x128xi32>
    %308 = arith.addi %305, %307 : vector<1x128xi32>
    %309 = arith.addi %308, %292 : vector<1x128xi32>
    %c-1_i32_126 = arith.constant -1 : i32
    %310 = vector.broadcast %c-1_i32_126 : i32 to vector<1x128xi32>
    %311 = arith.select %303, %309, %310 : vector<1x128xi1>, vector<1x128xi32>
    %312 = vector.broadcast %311 : vector<1x128xi32> to vector<512x128xi32>
    %313 = arith.cmpi eq, %10, %312 : vector<512x128xi32>
    %cst_127 = arith.constant 1.000000e+00 : f32
    %cst_128 = arith.constant 0.000000e+00 : f32
    %314 = vector.broadcast %cst_127 : f32 to vector<512x128xf32>
    %315 = vector.broadcast %cst_128 : f32 to vector<512x128xf32>
    %316 = arith.select %313, %314, %315 : vector<512x128xi1>, vector<512x128xf32>
    %317 = arith.truncf %316 : vector<512x128xf32> to vector<512x128xbf16>
    %cst_129 = arith.constant dense<0.000000e+00> : vector<3x128xf32>
    %318 = tpu.matmul %0, %317, %cst_129 {dimension_numbers = #tpu.dot_dimension_numbers<[1], [0], [0], [1], [0, 0, 1, 1], [], []>} : vector<3x512xbf16>, vector<512x128xbf16>, vector<3x128xf32> -> vector<3x128xf32>
    %c7 = arith.constant 7 : index
    %c0_130 = arith.constant 0 : index
    %c0_131 = arith.constant 0 : index
    %319 = vector.load %arg1[%c7, %c0_130, %c0_131] : memref<16x8x3xbf16, #tpu.memory_space<vmem>>, vector<1x8x3xbf16>
    %320 = vector.shape_cast %319 : vector<1x8x3xbf16> to vector<8x3xbf16>
    %321 = arith.truncf %318 : vector<3x128xf32> to vector<3x128xbf16>
    %cst_132 = arith.constant dense<0.000000e+00> : vector<8x128xf32>
    %322 = tpu.matmul %320, %321, %cst_132 {dimension_numbers = #tpu.dot_dimension_numbers<[1], [0], [0], [1], [0, 0, 1, 1], [], []>} : vector<8x3xbf16>, vector<3x128xbf16>, vector<8x128xf32> -> vector<8x128xf32>
    %323 = arith.addf %284, %322 : vector<8x128xf32>
    %c2_i32_133 = arith.constant 2 : i32
    %324 = vector.broadcast %c2_i32_133 : i32 to vector<1x128xi32>
    %325 = arith.muli %324, %7 : vector<1x128xi32>
    %c1_i32_134 = arith.constant 1 : i32
    %326 = vector.broadcast %c1_i32_134 : i32 to vector<1x128xi32>
    %327 = arith.addi %325, %326 : vector<1x128xi32>
    %c2_i32_135 = arith.constant 2 : i32
    %328 = vector.broadcast %c2_i32_135 : i32 to vector<1x128xi32>
    %329 = arith.muli %328, %3 : vector<1x128xi32>
    %c-1_i32_136 = arith.constant -1 : i32
    %330 = vector.broadcast %c-1_i32_136 : i32 to vector<1x128xi32>
    %331 = arith.addi %329, %330 : vector<1x128xi32>
    %c0_i32_137 = arith.constant 0 : i32
    %332 = vector.broadcast %c0_i32_137 : i32 to vector<1x128xi32>
    %333 = arith.cmpi sge, %327, %332 : vector<1x128xi32>
    %c16_i32_138 = arith.constant 16 : i32
    %334 = vector.broadcast %c16_i32_138 : i32 to vector<1x128xi32>
    %335 = arith.cmpi slt, %327, %334 : vector<1x128xi32>
    %336 = arith.andi %333, %335 : vector<1x128xi1>
    %c0_i32_139 = arith.constant 0 : i32
    %337 = vector.broadcast %c0_i32_139 : i32 to vector<1x128xi32>
    %338 = arith.cmpi sge, %331, %337 : vector<1x128xi32>
    %339 = arith.andi %336, %338 : vector<1x128xi1>
    %c16_i32_140 = arith.constant 16 : i32
    %340 = vector.broadcast %c16_i32_140 : i32 to vector<1x128xi32>
    %341 = arith.cmpi slt, %331, %340 : vector<1x128xi32>
    %342 = arith.andi %339, %341 : vector<1x128xi1>
    %c256_i32_141 = arith.constant 256 : i32
    %343 = vector.broadcast %c256_i32_141 : i32 to vector<1x128xi32>
    %344 = arith.muli %9, %343 : vector<1x128xi32>
    %c16_i32_142 = arith.constant 16 : i32
    %345 = vector.broadcast %c16_i32_142 : i32 to vector<1x128xi32>
    %346 = arith.muli %327, %345 : vector<1x128xi32>
    %347 = arith.addi %344, %346 : vector<1x128xi32>
    %348 = arith.addi %347, %331 : vector<1x128xi32>
    %c-1_i32_143 = arith.constant -1 : i32
    %349 = vector.broadcast %c-1_i32_143 : i32 to vector<1x128xi32>
    %350 = arith.select %342, %348, %349 : vector<1x128xi1>, vector<1x128xi32>
    %351 = vector.broadcast %350 : vector<1x128xi32> to vector<512x128xi32>
    %352 = arith.cmpi eq, %10, %351 : vector<512x128xi32>
    %cst_144 = arith.constant 1.000000e+00 : f32
    %cst_145 = arith.constant 0.000000e+00 : f32
    %353 = vector.broadcast %cst_144 : f32 to vector<512x128xf32>
    %354 = vector.broadcast %cst_145 : f32 to vector<512x128xf32>
    %355 = arith.select %352, %353, %354 : vector<512x128xi1>, vector<512x128xf32>
    %356 = arith.truncf %355 : vector<512x128xf32> to vector<512x128xbf16>
    %cst_146 = arith.constant dense<0.000000e+00> : vector<3x128xf32>
    %357 = tpu.matmul %0, %356, %cst_146 {dimension_numbers = #tpu.dot_dimension_numbers<[1], [0], [0], [1], [0, 0, 1, 1], [], []>} : vector<3x512xbf16>, vector<512x128xbf16>, vector<3x128xf32> -> vector<3x128xf32>
    %c8 = arith.constant 8 : index
    %c0_147 = arith.constant 0 : index
    %c0_148 = arith.constant 0 : index
    %358 = vector.load %arg1[%c8, %c0_147, %c0_148] : memref<16x8x3xbf16, #tpu.memory_space<vmem>>, vector<1x8x3xbf16>
    %359 = vector.shape_cast %358 : vector<1x8x3xbf16> to vector<8x3xbf16>
    %360 = arith.truncf %357 : vector<3x128xf32> to vector<3x128xbf16>
    %cst_149 = arith.constant dense<0.000000e+00> : vector<8x128xf32>
    %361 = tpu.matmul %359, %360, %cst_149 {dimension_numbers = #tpu.dot_dimension_numbers<[1], [0], [0], [1], [0, 0, 1, 1], [], []>} : vector<8x3xbf16>, vector<3x128xbf16>, vector<8x128xf32> -> vector<8x128xf32>
    %362 = arith.addf %323, %361 : vector<8x128xf32>
    %c2_i32_150 = arith.constant 2 : i32
    %363 = vector.broadcast %c2_i32_150 : i32 to vector<1x128xi32>
    %364 = arith.muli %363, %7 : vector<1x128xi32>
    %c1_i32_151 = arith.constant 1 : i32
    %365 = vector.broadcast %c1_i32_151 : i32 to vector<1x128xi32>
    %366 = arith.addi %364, %365 : vector<1x128xi32>
    %c2_i32_152 = arith.constant 2 : i32
    %367 = vector.broadcast %c2_i32_152 : i32 to vector<1x128xi32>
    %368 = arith.muli %367, %3 : vector<1x128xi32>
    %c0_i32_153 = arith.constant 0 : i32
    %369 = vector.broadcast %c0_i32_153 : i32 to vector<1x128xi32>
    %370 = arith.addi %368, %369 : vector<1x128xi32>
    %c0_i32_154 = arith.constant 0 : i32
    %371 = vector.broadcast %c0_i32_154 : i32 to vector<1x128xi32>
    %372 = arith.cmpi sge, %366, %371 : vector<1x128xi32>
    %c16_i32_155 = arith.constant 16 : i32
    %373 = vector.broadcast %c16_i32_155 : i32 to vector<1x128xi32>
    %374 = arith.cmpi slt, %366, %373 : vector<1x128xi32>
    %375 = arith.andi %372, %374 : vector<1x128xi1>
    %c0_i32_156 = arith.constant 0 : i32
    %376 = vector.broadcast %c0_i32_156 : i32 to vector<1x128xi32>
    %377 = arith.cmpi sge, %370, %376 : vector<1x128xi32>
    %378 = arith.andi %375, %377 : vector<1x128xi1>
    %c16_i32_157 = arith.constant 16 : i32
    %379 = vector.broadcast %c16_i32_157 : i32 to vector<1x128xi32>
    %380 = arith.cmpi slt, %370, %379 : vector<1x128xi32>
    %381 = arith.andi %378, %380 : vector<1x128xi1>
    %c256_i32_158 = arith.constant 256 : i32
    %382 = vector.broadcast %c256_i32_158 : i32 to vector<1x128xi32>
    %383 = arith.muli %9, %382 : vector<1x128xi32>
    %c16_i32_159 = arith.constant 16 : i32
    %384 = vector.broadcast %c16_i32_159 : i32 to vector<1x128xi32>
    %385 = arith.muli %366, %384 : vector<1x128xi32>
    %386 = arith.addi %383, %385 : vector<1x128xi32>
    %387 = arith.addi %386, %370 : vector<1x128xi32>
    %c-1_i32_160 = arith.constant -1 : i32
    %388 = vector.broadcast %c-1_i32_160 : i32 to vector<1x128xi32>
    %389 = arith.select %381, %387, %388 : vector<1x128xi1>, vector<1x128xi32>
    %390 = vector.broadcast %389 : vector<1x128xi32> to vector<512x128xi32>
    %391 = arith.cmpi eq, %10, %390 : vector<512x128xi32>
    %cst_161 = arith.constant 1.000000e+00 : f32
    %cst_162 = arith.constant 0.000000e+00 : f32
    %392 = vector.broadcast %cst_161 : f32 to vector<512x128xf32>
    %393 = vector.broadcast %cst_162 : f32 to vector<512x128xf32>
    %394 = arith.select %391, %392, %393 : vector<512x128xi1>, vector<512x128xf32>
    %395 = arith.truncf %394 : vector<512x128xf32> to vector<512x128xbf16>
    %cst_163 = arith.constant dense<0.000000e+00> : vector<3x128xf32>
    %396 = tpu.matmul %0, %395, %cst_163 {dimension_numbers = #tpu.dot_dimension_numbers<[1], [0], [0], [1], [0, 0, 1, 1], [], []>} : vector<3x512xbf16>, vector<512x128xbf16>, vector<3x128xf32> -> vector<3x128xf32>
    %c9 = arith.constant 9 : index
    %c0_164 = arith.constant 0 : index
    %c0_165 = arith.constant 0 : index
    %397 = vector.load %arg1[%c9, %c0_164, %c0_165] : memref<16x8x3xbf16, #tpu.memory_space<vmem>>, vector<1x8x3xbf16>
    %398 = vector.shape_cast %397 : vector<1x8x3xbf16> to vector<8x3xbf16>
    %399 = arith.truncf %396 : vector<3x128xf32> to vector<3x128xbf16>
    %cst_166 = arith.constant dense<0.000000e+00> : vector<8x128xf32>
    %400 = tpu.matmul %398, %399, %cst_166 {dimension_numbers = #tpu.dot_dimension_numbers<[1], [0], [0], [1], [0, 0, 1, 1], [], []>} : vector<8x3xbf16>, vector<3x128xbf16>, vector<8x128xf32> -> vector<8x128xf32>
    %401 = arith.addf %362, %400 : vector<8x128xf32>
    %c2_i32_167 = arith.constant 2 : i32
    %402 = vector.broadcast %c2_i32_167 : i32 to vector<1x128xi32>
    %403 = arith.muli %402, %7 : vector<1x128xi32>
    %c1_i32_168 = arith.constant 1 : i32
    %404 = vector.broadcast %c1_i32_168 : i32 to vector<1x128xi32>
    %405 = arith.addi %403, %404 : vector<1x128xi32>
    %c2_i32_169 = arith.constant 2 : i32
    %406 = vector.broadcast %c2_i32_169 : i32 to vector<1x128xi32>
    %407 = arith.muli %406, %3 : vector<1x128xi32>
    %c1_i32_170 = arith.constant 1 : i32
    %408 = vector.broadcast %c1_i32_170 : i32 to vector<1x128xi32>
    %409 = arith.addi %407, %408 : vector<1x128xi32>
    %c0_i32_171 = arith.constant 0 : i32
    %410 = vector.broadcast %c0_i32_171 : i32 to vector<1x128xi32>
    %411 = arith.cmpi sge, %405, %410 : vector<1x128xi32>
    %c16_i32_172 = arith.constant 16 : i32
    %412 = vector.broadcast %c16_i32_172 : i32 to vector<1x128xi32>
    %413 = arith.cmpi slt, %405, %412 : vector<1x128xi32>
    %414 = arith.andi %411, %413 : vector<1x128xi1>
    %c0_i32_173 = arith.constant 0 : i32
    %415 = vector.broadcast %c0_i32_173 : i32 to vector<1x128xi32>
    %416 = arith.cmpi sge, %409, %415 : vector<1x128xi32>
    %417 = arith.andi %414, %416 : vector<1x128xi1>
    %c16_i32_174 = arith.constant 16 : i32
    %418 = vector.broadcast %c16_i32_174 : i32 to vector<1x128xi32>
    %419 = arith.cmpi slt, %409, %418 : vector<1x128xi32>
    %420 = arith.andi %417, %419 : vector<1x128xi1>
    %c256_i32_175 = arith.constant 256 : i32
    %421 = vector.broadcast %c256_i32_175 : i32 to vector<1x128xi32>
    %422 = arith.muli %9, %421 : vector<1x128xi32>
    %c16_i32_176 = arith.constant 16 : i32
    %423 = vector.broadcast %c16_i32_176 : i32 to vector<1x128xi32>
    %424 = arith.muli %405, %423 : vector<1x128xi32>
    %425 = arith.addi %422, %424 : vector<1x128xi32>
    %426 = arith.addi %425, %409 : vector<1x128xi32>
    %c-1_i32_177 = arith.constant -1 : i32
    %427 = vector.broadcast %c-1_i32_177 : i32 to vector<1x128xi32>
    %428 = arith.select %420, %426, %427 : vector<1x128xi1>, vector<1x128xi32>
    %429 = vector.broadcast %428 : vector<1x128xi32> to vector<512x128xi32>
    %430 = arith.cmpi eq, %10, %429 : vector<512x128xi32>
    %cst_178 = arith.constant 1.000000e+00 : f32
    %cst_179 = arith.constant 0.000000e+00 : f32
    %431 = vector.broadcast %cst_178 : f32 to vector<512x128xf32>
    %432 = vector.broadcast %cst_179 : f32 to vector<512x128xf32>
    %433 = arith.select %430, %431, %432 : vector<512x128xi1>, vector<512x128xf32>
    %434 = arith.truncf %433 : vector<512x128xf32> to vector<512x128xbf16>
    %cst_180 = arith.constant dense<0.000000e+00> : vector<3x128xf32>
    %435 = tpu.matmul %0, %434, %cst_180 {dimension_numbers = #tpu.dot_dimension_numbers<[1], [0], [0], [1], [0, 0, 1, 1], [], []>} : vector<3x512xbf16>, vector<512x128xbf16>, vector<3x128xf32> -> vector<3x128xf32>
    %c10 = arith.constant 10 : index
    %c0_181 = arith.constant 0 : index
    %c0_182 = arith.constant 0 : index
    %436 = vector.load %arg1[%c10, %c0_181, %c0_182] : memref<16x8x3xbf16, #tpu.memory_space<vmem>>, vector<1x8x3xbf16>
    %437 = vector.shape_cast %436 : vector<1x8x3xbf16> to vector<8x3xbf16>
    %438 = arith.truncf %435 : vector<3x128xf32> to vector<3x128xbf16>
    %cst_183 = arith.constant dense<0.000000e+00> : vector<8x128xf32>
    %439 = tpu.matmul %437, %438, %cst_183 {dimension_numbers = #tpu.dot_dimension_numbers<[1], [0], [0], [1], [0, 0, 1, 1], [], []>} : vector<8x3xbf16>, vector<3x128xbf16>, vector<8x128xf32> -> vector<8x128xf32>
    %440 = arith.addf %401, %439 : vector<8x128xf32>
    %c2_i32_184 = arith.constant 2 : i32
    %441 = vector.broadcast %c2_i32_184 : i32 to vector<1x128xi32>
    %442 = arith.muli %441, %7 : vector<1x128xi32>
    %c1_i32_185 = arith.constant 1 : i32
    %443 = vector.broadcast %c1_i32_185 : i32 to vector<1x128xi32>
    %444 = arith.addi %442, %443 : vector<1x128xi32>
    %c2_i32_186 = arith.constant 2 : i32
    %445 = vector.broadcast %c2_i32_186 : i32 to vector<1x128xi32>
    %446 = arith.muli %445, %3 : vector<1x128xi32>
    %c2_i32_187 = arith.constant 2 : i32
    %447 = vector.broadcast %c2_i32_187 : i32 to vector<1x128xi32>
    %448 = arith.addi %446, %447 : vector<1x128xi32>
    %c0_i32_188 = arith.constant 0 : i32
    %449 = vector.broadcast %c0_i32_188 : i32 to vector<1x128xi32>
    %450 = arith.cmpi sge, %444, %449 : vector<1x128xi32>
    %c16_i32_189 = arith.constant 16 : i32
    %451 = vector.broadcast %c16_i32_189 : i32 to vector<1x128xi32>
    %452 = arith.cmpi slt, %444, %451 : vector<1x128xi32>
    %453 = arith.andi %450, %452 : vector<1x128xi1>
    %c0_i32_190 = arith.constant 0 : i32
    %454 = vector.broadcast %c0_i32_190 : i32 to vector<1x128xi32>
    %455 = arith.cmpi sge, %448, %454 : vector<1x128xi32>
    %456 = arith.andi %453, %455 : vector<1x128xi1>
    %c16_i32_191 = arith.constant 16 : i32
    %457 = vector.broadcast %c16_i32_191 : i32 to vector<1x128xi32>
    %458 = arith.cmpi slt, %448, %457 : vector<1x128xi32>
    %459 = arith.andi %456, %458 : vector<1x128xi1>
    %c256_i32_192 = arith.constant 256 : i32
    %460 = vector.broadcast %c256_i32_192 : i32 to vector<1x128xi32>
    %461 = arith.muli %9, %460 : vector<1x128xi32>
    %c16_i32_193 = arith.constant 16 : i32
    %462 = vector.broadcast %c16_i32_193 : i32 to vector<1x128xi32>
    %463 = arith.muli %444, %462 : vector<1x128xi32>
    %464 = arith.addi %461, %463 : vector<1x128xi32>
    %465 = arith.addi %464, %448 : vector<1x128xi32>
    %c-1_i32_194 = arith.constant -1 : i32
    %466 = vector.broadcast %c-1_i32_194 : i32 to vector<1x128xi32>
    %467 = arith.select %459, %465, %466 : vector<1x128xi1>, vector<1x128xi32>
    %468 = vector.broadcast %467 : vector<1x128xi32> to vector<512x128xi32>
    %469 = arith.cmpi eq, %10, %468 : vector<512x128xi32>
    %cst_195 = arith.constant 1.000000e+00 : f32
    %cst_196 = arith.constant 0.000000e+00 : f32
    %470 = vector.broadcast %cst_195 : f32 to vector<512x128xf32>
    %471 = vector.broadcast %cst_196 : f32 to vector<512x128xf32>
    %472 = arith.select %469, %470, %471 : vector<512x128xi1>, vector<512x128xf32>
    %473 = arith.truncf %472 : vector<512x128xf32> to vector<512x128xbf16>
    %cst_197 = arith.constant dense<0.000000e+00> : vector<3x128xf32>
    %474 = tpu.matmul %0, %473, %cst_197 {dimension_numbers = #tpu.dot_dimension_numbers<[1], [0], [0], [1], [0, 0, 1, 1], [], []>} : vector<3x512xbf16>, vector<512x128xbf16>, vector<3x128xf32> -> vector<3x128xf32>
    %c11 = arith.constant 11 : index
    %c0_198 = arith.constant 0 : index
    %c0_199 = arith.constant 0 : index
    %475 = vector.load %arg1[%c11, %c0_198, %c0_199] : memref<16x8x3xbf16, #tpu.memory_space<vmem>>, vector<1x8x3xbf16>
    %476 = vector.shape_cast %475 : vector<1x8x3xbf16> to vector<8x3xbf16>
    %477 = arith.truncf %474 : vector<3x128xf32> to vector<3x128xbf16>
    %cst_200 = arith.constant dense<0.000000e+00> : vector<8x128xf32>
    %478 = tpu.matmul %476, %477, %cst_200 {dimension_numbers = #tpu.dot_dimension_numbers<[1], [0], [0], [1], [0, 0, 1, 1], [], []>} : vector<8x3xbf16>, vector<3x128xbf16>, vector<8x128xf32> -> vector<8x128xf32>
    %479 = arith.addf %440, %478 : vector<8x128xf32>
    %c2_i32_201 = arith.constant 2 : i32
    %480 = vector.broadcast %c2_i32_201 : i32 to vector<1x128xi32>
    %481 = arith.muli %480, %7 : vector<1x128xi32>
    %c2_i32_202 = arith.constant 2 : i32
    %482 = vector.broadcast %c2_i32_202 : i32 to vector<1x128xi32>
    %483 = arith.addi %481, %482 : vector<1x128xi32>
    %c2_i32_203 = arith.constant 2 : i32
    %484 = vector.broadcast %c2_i32_203 : i32 to vector<1x128xi32>
    %485 = arith.muli %484, %3 : vector<1x128xi32>
    %c-1_i32_204 = arith.constant -1 : i32
    %486 = vector.broadcast %c-1_i32_204 : i32 to vector<1x128xi32>
    %487 = arith.addi %485, %486 : vector<1x128xi32>
    %c0_i32_205 = arith.constant 0 : i32
    %488 = vector.broadcast %c0_i32_205 : i32 to vector<1x128xi32>
    %489 = arith.cmpi sge, %483, %488 : vector<1x128xi32>
    %c16_i32_206 = arith.constant 16 : i32
    %490 = vector.broadcast %c16_i32_206 : i32 to vector<1x128xi32>
    %491 = arith.cmpi slt, %483, %490 : vector<1x128xi32>
    %492 = arith.andi %489, %491 : vector<1x128xi1>
    %c0_i32_207 = arith.constant 0 : i32
    %493 = vector.broadcast %c0_i32_207 : i32 to vector<1x128xi32>
    %494 = arith.cmpi sge, %487, %493 : vector<1x128xi32>
    %495 = arith.andi %492, %494 : vector<1x128xi1>
    %c16_i32_208 = arith.constant 16 : i32
    %496 = vector.broadcast %c16_i32_208 : i32 to vector<1x128xi32>
    %497 = arith.cmpi slt, %487, %496 : vector<1x128xi32>
    %498 = arith.andi %495, %497 : vector<1x128xi1>
    %c256_i32_209 = arith.constant 256 : i32
    %499 = vector.broadcast %c256_i32_209 : i32 to vector<1x128xi32>
    %500 = arith.muli %9, %499 : vector<1x128xi32>
    %c16_i32_210 = arith.constant 16 : i32
    %501 = vector.broadcast %c16_i32_210 : i32 to vector<1x128xi32>
    %502 = arith.muli %483, %501 : vector<1x128xi32>
    %503 = arith.addi %500, %502 : vector<1x128xi32>
    %504 = arith.addi %503, %487 : vector<1x128xi32>
    %c-1_i32_211 = arith.constant -1 : i32
    %505 = vector.broadcast %c-1_i32_211 : i32 to vector<1x128xi32>
    %506 = arith.select %498, %504, %505 : vector<1x128xi1>, vector<1x128xi32>
    %507 = vector.broadcast %506 : vector<1x128xi32> to vector<512x128xi32>
    %508 = arith.cmpi eq, %10, %507 : vector<512x128xi32>
    %cst_212 = arith.constant 1.000000e+00 : f32
    %cst_213 = arith.constant 0.000000e+00 : f32
    %509 = vector.broadcast %cst_212 : f32 to vector<512x128xf32>
    %510 = vector.broadcast %cst_213 : f32 to vector<512x128xf32>
    %511 = arith.select %508, %509, %510 : vector<512x128xi1>, vector<512x128xf32>
    %512 = arith.truncf %511 : vector<512x128xf32> to vector<512x128xbf16>
    %cst_214 = arith.constant dense<0.000000e+00> : vector<3x128xf32>
    %513 = tpu.matmul %0, %512, %cst_214 {dimension_numbers = #tpu.dot_dimension_numbers<[1], [0], [0], [1], [0, 0, 1, 1], [], []>} : vector<3x512xbf16>, vector<512x128xbf16>, vector<3x128xf32> -> vector<3x128xf32>
    %c12 = arith.constant 12 : index
    %c0_215 = arith.constant 0 : index
    %c0_216 = arith.constant 0 : index
    %514 = vector.load %arg1[%c12, %c0_215, %c0_216] : memref<16x8x3xbf16, #tpu.memory_space<vmem>>, vector<1x8x3xbf16>
    %515 = vector.shape_cast %514 : vector<1x8x3xbf16> to vector<8x3xbf16>
    %516 = arith.truncf %513 : vector<3x128xf32> to vector<3x128xbf16>
    %cst_217 = arith.constant dense<0.000000e+00> : vector<8x128xf32>
    %517 = tpu.matmul %515, %516, %cst_217 {dimension_numbers = #tpu.dot_dimension_numbers<[1], [0], [0], [1], [0, 0, 1, 1], [], []>} : vector<8x3xbf16>, vector<3x128xbf16>, vector<8x128xf32> -> vector<8x128xf32>
    %518 = arith.addf %479, %517 : vector<8x128xf32>
    %c2_i32_218 = arith.constant 2 : i32
    %519 = vector.broadcast %c2_i32_218 : i32 to vector<1x128xi32>
    %520 = arith.muli %519, %7 : vector<1x128xi32>
    %c2_i32_219 = arith.constant 2 : i32
    %521 = vector.broadcast %c2_i32_219 : i32 to vector<1x128xi32>
    %522 = arith.addi %520, %521 : vector<1x128xi32>
    %c2_i32_220 = arith.constant 2 : i32
    %523 = vector.broadcast %c2_i32_220 : i32 to vector<1x128xi32>
    %524 = arith.muli %523, %3 : vector<1x128xi32>
    %c0_i32_221 = arith.constant 0 : i32
    %525 = vector.broadcast %c0_i32_221 : i32 to vector<1x128xi32>
    %526 = arith.addi %524, %525 : vector<1x128xi32>
    %c0_i32_222 = arith.constant 0 : i32
    %527 = vector.broadcast %c0_i32_222 : i32 to vector<1x128xi32>
    %528 = arith.cmpi sge, %522, %527 : vector<1x128xi32>
    %c16_i32_223 = arith.constant 16 : i32
    %529 = vector.broadcast %c16_i32_223 : i32 to vector<1x128xi32>
    %530 = arith.cmpi slt, %522, %529 : vector<1x128xi32>
    %531 = arith.andi %528, %530 : vector<1x128xi1>
    %c0_i32_224 = arith.constant 0 : i32
    %532 = vector.broadcast %c0_i32_224 : i32 to vector<1x128xi32>
    %533 = arith.cmpi sge, %526, %532 : vector<1x128xi32>
    %534 = arith.andi %531, %533 : vector<1x128xi1>
    %c16_i32_225 = arith.constant 16 : i32
    %535 = vector.broadcast %c16_i32_225 : i32 to vector<1x128xi32>
    %536 = arith.cmpi slt, %526, %535 : vector<1x128xi32>
    %537 = arith.andi %534, %536 : vector<1x128xi1>
    %c256_i32_226 = arith.constant 256 : i32
    %538 = vector.broadcast %c256_i32_226 : i32 to vector<1x128xi32>
    %539 = arith.muli %9, %538 : vector<1x128xi32>
    %c16_i32_227 = arith.constant 16 : i32
    %540 = vector.broadcast %c16_i32_227 : i32 to vector<1x128xi32>
    %541 = arith.muli %522, %540 : vector<1x128xi32>
    %542 = arith.addi %539, %541 : vector<1x128xi32>
    %543 = arith.addi %542, %526 : vector<1x128xi32>
    %c-1_i32_228 = arith.constant -1 : i32
    %544 = vector.broadcast %c-1_i32_228 : i32 to vector<1x128xi32>
    %545 = arith.select %537, %543, %544 : vector<1x128xi1>, vector<1x128xi32>
    %546 = vector.broadcast %545 : vector<1x128xi32> to vector<512x128xi32>
    %547 = arith.cmpi eq, %10, %546 : vector<512x128xi32>
    %cst_229 = arith.constant 1.000000e+00 : f32
    %cst_230 = arith.constant 0.000000e+00 : f32
    %548 = vector.broadcast %cst_229 : f32 to vector<512x128xf32>
    %549 = vector.broadcast %cst_230 : f32 to vector<512x128xf32>
    %550 = arith.select %547, %548, %549 : vector<512x128xi1>, vector<512x128xf32>
    %551 = arith.truncf %550 : vector<512x128xf32> to vector<512x128xbf16>
    %cst_231 = arith.constant dense<0.000000e+00> : vector<3x128xf32>
    %552 = tpu.matmul %0, %551, %cst_231 {dimension_numbers = #tpu.dot_dimension_numbers<[1], [0], [0], [1], [0, 0, 1, 1], [], []>} : vector<3x512xbf16>, vector<512x128xbf16>, vector<3x128xf32> -> vector<3x128xf32>
    %c13 = arith.constant 13 : index
    %c0_232 = arith.constant 0 : index
    %c0_233 = arith.constant 0 : index
    %553 = vector.load %arg1[%c13, %c0_232, %c0_233] : memref<16x8x3xbf16, #tpu.memory_space<vmem>>, vector<1x8x3xbf16>
    %554 = vector.shape_cast %553 : vector<1x8x3xbf16> to vector<8x3xbf16>
    %555 = arith.truncf %552 : vector<3x128xf32> to vector<3x128xbf16>
    %cst_234 = arith.constant dense<0.000000e+00> : vector<8x128xf32>
    %556 = tpu.matmul %554, %555, %cst_234 {dimension_numbers = #tpu.dot_dimension_numbers<[1], [0], [0], [1], [0, 0, 1, 1], [], []>} : vector<8x3xbf16>, vector<3x128xbf16>, vector<8x128xf32> -> vector<8x128xf32>
    %557 = arith.addf %518, %556 : vector<8x128xf32>
    %c2_i32_235 = arith.constant 2 : i32
    %558 = vector.broadcast %c2_i32_235 : i32 to vector<1x128xi32>
    %559 = arith.muli %558, %7 : vector<1x128xi32>
    %c2_i32_236 = arith.constant 2 : i32
    %560 = vector.broadcast %c2_i32_236 : i32 to vector<1x128xi32>
    %561 = arith.addi %559, %560 : vector<1x128xi32>
    %c2_i32_237 = arith.constant 2 : i32
    %562 = vector.broadcast %c2_i32_237 : i32 to vector<1x128xi32>
    %563 = arith.muli %562, %3 : vector<1x128xi32>
    %c1_i32_238 = arith.constant 1 : i32
    %564 = vector.broadcast %c1_i32_238 : i32 to vector<1x128xi32>
    %565 = arith.addi %563, %564 : vector<1x128xi32>
    %c0_i32_239 = arith.constant 0 : i32
    %566 = vector.broadcast %c0_i32_239 : i32 to vector<1x128xi32>
    %567 = arith.cmpi sge, %561, %566 : vector<1x128xi32>
    %c16_i32_240 = arith.constant 16 : i32
    %568 = vector.broadcast %c16_i32_240 : i32 to vector<1x128xi32>
    %569 = arith.cmpi slt, %561, %568 : vector<1x128xi32>
    %570 = arith.andi %567, %569 : vector<1x128xi1>
    %c0_i32_241 = arith.constant 0 : i32
    %571 = vector.broadcast %c0_i32_241 : i32 to vector<1x128xi32>
    %572 = arith.cmpi sge, %565, %571 : vector<1x128xi32>
    %573 = arith.andi %570, %572 : vector<1x128xi1>
    %c16_i32_242 = arith.constant 16 : i32
    %574 = vector.broadcast %c16_i32_242 : i32 to vector<1x128xi32>
    %575 = arith.cmpi slt, %565, %574 : vector<1x128xi32>
    %576 = arith.andi %573, %575 : vector<1x128xi1>
    %c256_i32_243 = arith.constant 256 : i32
    %577 = vector.broadcast %c256_i32_243 : i32 to vector<1x128xi32>
    %578 = arith.muli %9, %577 : vector<1x128xi32>
    %c16_i32_244 = arith.constant 16 : i32
    %579 = vector.broadcast %c16_i32_244 : i32 to vector<1x128xi32>
    %580 = arith.muli %561, %579 : vector<1x128xi32>
    %581 = arith.addi %578, %580 : vector<1x128xi32>
    %582 = arith.addi %581, %565 : vector<1x128xi32>
    %c-1_i32_245 = arith.constant -1 : i32
    %583 = vector.broadcast %c-1_i32_245 : i32 to vector<1x128xi32>
    %584 = arith.select %576, %582, %583 : vector<1x128xi1>, vector<1x128xi32>
    %585 = vector.broadcast %584 : vector<1x128xi32> to vector<512x128xi32>
    %586 = arith.cmpi eq, %10, %585 : vector<512x128xi32>
    %cst_246 = arith.constant 1.000000e+00 : f32
    %cst_247 = arith.constant 0.000000e+00 : f32
    %587 = vector.broadcast %cst_246 : f32 to vector<512x128xf32>
    %588 = vector.broadcast %cst_247 : f32 to vector<512x128xf32>
    %589 = arith.select %586, %587, %588 : vector<512x128xi1>, vector<512x128xf32>
    %590 = arith.truncf %589 : vector<512x128xf32> to vector<512x128xbf16>
    %cst_248 = arith.constant dense<0.000000e+00> : vector<3x128xf32>
    %591 = tpu.matmul %0, %590, %cst_248 {dimension_numbers = #tpu.dot_dimension_numbers<[1], [0], [0], [1], [0, 0, 1, 1], [], []>} : vector<3x512xbf16>, vector<512x128xbf16>, vector<3x128xf32> -> vector<3x128xf32>
    %c14 = arith.constant 14 : index
    %c0_249 = arith.constant 0 : index
    %c0_250 = arith.constant 0 : index
    %592 = vector.load %arg1[%c14, %c0_249, %c0_250] : memref<16x8x3xbf16, #tpu.memory_space<vmem>>, vector<1x8x3xbf16>
    %593 = vector.shape_cast %592 : vector<1x8x3xbf16> to vector<8x3xbf16>
    %594 = arith.truncf %591 : vector<3x128xf32> to vector<3x128xbf16>
    %cst_251 = arith.constant dense<0.000000e+00> : vector<8x128xf32>
    %595 = tpu.matmul %593, %594, %cst_251 {dimension_numbers = #tpu.dot_dimension_numbers<[1], [0], [0], [1], [0, 0, 1, 1], [], []>} : vector<8x3xbf16>, vector<3x128xbf16>, vector<8x128xf32> -> vector<8x128xf32>
    %596 = arith.addf %557, %595 : vector<8x128xf32>
    %c2_i32_252 = arith.constant 2 : i32
    %597 = vector.broadcast %c2_i32_252 : i32 to vector<1x128xi32>
    %598 = arith.muli %597, %7 : vector<1x128xi32>
    %c2_i32_253 = arith.constant 2 : i32
    %599 = vector.broadcast %c2_i32_253 : i32 to vector<1x128xi32>
    %600 = arith.addi %598, %599 : vector<1x128xi32>
    %c2_i32_254 = arith.constant 2 : i32
    %601 = vector.broadcast %c2_i32_254 : i32 to vector<1x128xi32>
    %602 = arith.muli %601, %3 : vector<1x128xi32>
    %c2_i32_255 = arith.constant 2 : i32
    %603 = vector.broadcast %c2_i32_255 : i32 to vector<1x128xi32>
    %604 = arith.addi %602, %603 : vector<1x128xi32>
    %c0_i32_256 = arith.constant 0 : i32
    %605 = vector.broadcast %c0_i32_256 : i32 to vector<1x128xi32>
    %606 = arith.cmpi sge, %600, %605 : vector<1x128xi32>
    %c16_i32_257 = arith.constant 16 : i32
    %607 = vector.broadcast %c16_i32_257 : i32 to vector<1x128xi32>
    %608 = arith.cmpi slt, %600, %607 : vector<1x128xi32>
    %609 = arith.andi %606, %608 : vector<1x128xi1>
    %c0_i32_258 = arith.constant 0 : i32
    %610 = vector.broadcast %c0_i32_258 : i32 to vector<1x128xi32>
    %611 = arith.cmpi sge, %604, %610 : vector<1x128xi32>
    %612 = arith.andi %609, %611 : vector<1x128xi1>
    %c16_i32_259 = arith.constant 16 : i32
    %613 = vector.broadcast %c16_i32_259 : i32 to vector<1x128xi32>
    %614 = arith.cmpi slt, %604, %613 : vector<1x128xi32>
    %615 = arith.andi %612, %614 : vector<1x128xi1>
    %c256_i32_260 = arith.constant 256 : i32
    %616 = vector.broadcast %c256_i32_260 : i32 to vector<1x128xi32>
    %617 = arith.muli %9, %616 : vector<1x128xi32>
    %c16_i32_261 = arith.constant 16 : i32
    %618 = vector.broadcast %c16_i32_261 : i32 to vector<1x128xi32>
    %619 = arith.muli %600, %618 : vector<1x128xi32>
    %620 = arith.addi %617, %619 : vector<1x128xi32>
    %621 = arith.addi %620, %604 : vector<1x128xi32>
    %c-1_i32_262 = arith.constant -1 : i32
    %622 = vector.broadcast %c-1_i32_262 : i32 to vector<1x128xi32>
    %623 = arith.select %615, %621, %622 : vector<1x128xi1>, vector<1x128xi32>
    %624 = vector.broadcast %623 : vector<1x128xi32> to vector<512x128xi32>
    %625 = arith.cmpi eq, %10, %624 : vector<512x128xi32>
    %cst_263 = arith.constant 1.000000e+00 : f32
    %cst_264 = arith.constant 0.000000e+00 : f32
    %626 = vector.broadcast %cst_263 : f32 to vector<512x128xf32>
    %627 = vector.broadcast %cst_264 : f32 to vector<512x128xf32>
    %628 = arith.select %625, %626, %627 : vector<512x128xi1>, vector<512x128xf32>
    %629 = arith.truncf %628 : vector<512x128xf32> to vector<512x128xbf16>
    %cst_265 = arith.constant dense<0.000000e+00> : vector<3x128xf32>
    %630 = tpu.matmul %0, %629, %cst_265 {dimension_numbers = #tpu.dot_dimension_numbers<[1], [0], [0], [1], [0, 0, 1, 1], [], []>} : vector<3x512xbf16>, vector<512x128xbf16>, vector<3x128xf32> -> vector<3x128xf32>
    %c15 = arith.constant 15 : index
    %c0_266 = arith.constant 0 : index
    %c0_267 = arith.constant 0 : index
    %631 = vector.load %arg1[%c15, %c0_266, %c0_267] : memref<16x8x3xbf16, #tpu.memory_space<vmem>>, vector<1x8x3xbf16>
    %632 = vector.shape_cast %631 : vector<1x8x3xbf16> to vector<8x3xbf16>
    %633 = arith.truncf %630 : vector<3x128xf32> to vector<3x128xbf16>
    %cst_268 = arith.constant dense<0.000000e+00> : vector<8x128xf32>
    %634 = tpu.matmul %632, %633, %cst_268 {dimension_numbers = #tpu.dot_dimension_numbers<[1], [0], [0], [1], [0, 0, 1, 1], [], []>} : vector<8x3xbf16>, vector<3x128xbf16>, vector<8x128xf32> -> vector<8x128xf32>
    %635 = arith.addf %596, %634 : vector<8x128xf32>
    %cst_269 = arith.constant 0.000000e+00 : f32
    %636 = vector.broadcast %cst_269 : f32 to vector<8x128xf32>
    %637 = arith.cmpf ogt, %635, %636 : vector<8x128xf32>
    %cst_270 = arith.constant 2.000000e-01 : f32
    %638 = vector.broadcast %cst_270 : f32 to vector<8x128xf32>
    %639 = arith.mulf %638, %635 : vector<8x128xf32>
    %640 = arith.select %637, %635, %639 : vector<8x128xi1>, vector<8x128xf32>
    %641 = arith.truncf %640 : vector<8x128xf32> to vector<8x128xbf16>
    %642 = tpu.iota {dimensions = array<i32: 1>} : vector<1x32xi32>
    %c3_i32_271 = arith.constant 3 : i32
    %643 = vector.broadcast %c3_i32_271 : i32 to vector<1x32xi32>
    %644 = arith.andi %642, %643 : vector<1x32xi32>
    %c2_i32_272 = arith.constant 2 : i32
    %645 = vector.broadcast %c2_i32_272 : i32 to vector<1x32xi32>
    %646 = arith.shrsi %642, %645 : vector<1x32xi32>
    %c3_i32_273 = arith.constant 3 : i32
    %647 = vector.broadcast %c3_i32_273 : i32 to vector<1x32xi32>
    %648 = arith.andi %646, %647 : vector<1x32xi32>
    %c4_i32 = arith.constant 4 : i32
    %649 = vector.broadcast %c4_i32 : i32 to vector<1x32xi32>
    %650 = arith.shrsi %642, %649 : vector<1x32xi32>
    %651 = tpu.iota {dimensions = array<i32: 0>} : vector<128x32xi32>
    %cst_274 = arith.constant 0.000000e+00 : f32
    %652 = vector.broadcast %cst_274 : f32 to vector<16x32xf32>
    %c2_i32_275 = arith.constant 2 : i32
    %653 = vector.broadcast %c2_i32_275 : i32 to vector<1x32xi32>
    %654 = arith.muli %653, %648 : vector<1x32xi32>
    %c-1_i32_276 = arith.constant -1 : i32
    %655 = vector.broadcast %c-1_i32_276 : i32 to vector<1x32xi32>
    %656 = arith.addi %654, %655 : vector<1x32xi32>
    %c2_i32_277 = arith.constant 2 : i32
    %657 = vector.broadcast %c2_i32_277 : i32 to vector<1x32xi32>
    %658 = arith.muli %657, %644 : vector<1x32xi32>
    %c-1_i32_278 = arith.constant -1 : i32
    %659 = vector.broadcast %c-1_i32_278 : i32 to vector<1x32xi32>
    %660 = arith.addi %658, %659 : vector<1x32xi32>
    %c0_i32_279 = arith.constant 0 : i32
    %661 = vector.broadcast %c0_i32_279 : i32 to vector<1x32xi32>
    %662 = arith.cmpi sge, %656, %661 : vector<1x32xi32>
    %c8_i32 = arith.constant 8 : i32
    %663 = vector.broadcast %c8_i32 : i32 to vector<1x32xi32>
    %664 = arith.cmpi slt, %656, %663 : vector<1x32xi32>
    %665 = arith.andi %662, %664 : vector<1x32xi1>
    %c0_i32_280 = arith.constant 0 : i32
    %666 = vector.broadcast %c0_i32_280 : i32 to vector<1x32xi32>
    %667 = arith.cmpi sge, %660, %666 : vector<1x32xi32>
    %668 = arith.andi %665, %667 : vector<1x32xi1>
    %c8_i32_281 = arith.constant 8 : i32
    %669 = vector.broadcast %c8_i32_281 : i32 to vector<1x32xi32>
    %670 = arith.cmpi slt, %660, %669 : vector<1x32xi32>
    %671 = arith.andi %668, %670 : vector<1x32xi1>
    %c64_i32 = arith.constant 64 : i32
    %672 = vector.broadcast %c64_i32 : i32 to vector<1x32xi32>
    %673 = arith.muli %650, %672 : vector<1x32xi32>
    %c8_i32_282 = arith.constant 8 : i32
    %674 = vector.broadcast %c8_i32_282 : i32 to vector<1x32xi32>
    %675 = arith.muli %656, %674 : vector<1x32xi32>
    %676 = arith.addi %673, %675 : vector<1x32xi32>
    %677 = arith.addi %676, %660 : vector<1x32xi32>
    %c-1_i32_283 = arith.constant -1 : i32
    %678 = vector.broadcast %c-1_i32_283 : i32 to vector<1x32xi32>
    %679 = arith.select %671, %677, %678 : vector<1x32xi1>, vector<1x32xi32>
    %680 = vector.broadcast %679 : vector<1x32xi32> to vector<128x32xi32>
    %681 = arith.cmpi eq, %651, %680 : vector<128x32xi32>
    %cst_284 = arith.constant 1.000000e+00 : f32
    %cst_285 = arith.constant 0.000000e+00 : f32
    %682 = vector.broadcast %cst_284 : f32 to vector<128x32xf32>
    %683 = vector.broadcast %cst_285 : f32 to vector<128x32xf32>
    %684 = arith.select %681, %682, %683 : vector<128x32xi1>, vector<128x32xf32>
    %685 = arith.truncf %684 : vector<128x32xf32> to vector<128x32xbf16>
    %cst_286 = arith.constant dense<0.000000e+00> : vector<8x32xf32>
    %686 = tpu.matmul %641, %685, %cst_286 {dimension_numbers = #tpu.dot_dimension_numbers<[1], [0], [0], [1], [0, 0, 1, 1], [], []>} : vector<8x128xbf16>, vector<128x32xbf16>, vector<8x32xf32> -> vector<8x32xf32>
    %c0_287 = arith.constant 0 : index
    %c0_288 = arith.constant 0 : index
    %c0_289 = arith.constant 0 : index
    %687 = vector.load %arg2[%c0_287, %c0_288, %c0_289] : memref<16x16x8xbf16, #tpu.memory_space<vmem>>, vector<1x16x8xbf16>
    %688 = vector.shape_cast %687 : vector<1x16x8xbf16> to vector<16x8xbf16>
    %689 = arith.truncf %686 : vector<8x32xf32> to vector<8x32xbf16>
    %cst_290 = arith.constant dense<0.000000e+00> : vector<16x32xf32>
    %690 = tpu.matmul %688, %689, %cst_290 {dimension_numbers = #tpu.dot_dimension_numbers<[1], [0], [0], [1], [0, 0, 1, 1], [], []>} : vector<16x8xbf16>, vector<8x32xbf16>, vector<16x32xf32> -> vector<16x32xf32>
    %691 = arith.addf %652, %690 : vector<16x32xf32>
    %c2_i32_291 = arith.constant 2 : i32
    %692 = vector.broadcast %c2_i32_291 : i32 to vector<1x32xi32>
    %693 = arith.muli %692, %648 : vector<1x32xi32>
    %c-1_i32_292 = arith.constant -1 : i32
    %694 = vector.broadcast %c-1_i32_292 : i32 to vector<1x32xi32>
    %695 = arith.addi %693, %694 : vector<1x32xi32>
    %c2_i32_293 = arith.constant 2 : i32
    %696 = vector.broadcast %c2_i32_293 : i32 to vector<1x32xi32>
    %697 = arith.muli %696, %644 : vector<1x32xi32>
    %c0_i32_294 = arith.constant 0 : i32
    %698 = vector.broadcast %c0_i32_294 : i32 to vector<1x32xi32>
    %699 = arith.addi %697, %698 : vector<1x32xi32>
    %c0_i32_295 = arith.constant 0 : i32
    %700 = vector.broadcast %c0_i32_295 : i32 to vector<1x32xi32>
    %701 = arith.cmpi sge, %695, %700 : vector<1x32xi32>
    %c8_i32_296 = arith.constant 8 : i32
    %702 = vector.broadcast %c8_i32_296 : i32 to vector<1x32xi32>
    %703 = arith.cmpi slt, %695, %702 : vector<1x32xi32>
    %704 = arith.andi %701, %703 : vector<1x32xi1>
    %c0_i32_297 = arith.constant 0 : i32
    %705 = vector.broadcast %c0_i32_297 : i32 to vector<1x32xi32>
    %706 = arith.cmpi sge, %699, %705 : vector<1x32xi32>
    %707 = arith.andi %704, %706 : vector<1x32xi1>
    %c8_i32_298 = arith.constant 8 : i32
    %708 = vector.broadcast %c8_i32_298 : i32 to vector<1x32xi32>
    %709 = arith.cmpi slt, %699, %708 : vector<1x32xi32>
    %710 = arith.andi %707, %709 : vector<1x32xi1>
    %c64_i32_299 = arith.constant 64 : i32
    %711 = vector.broadcast %c64_i32_299 : i32 to vector<1x32xi32>
    %712 = arith.muli %650, %711 : vector<1x32xi32>
    %c8_i32_300 = arith.constant 8 : i32
    %713 = vector.broadcast %c8_i32_300 : i32 to vector<1x32xi32>
    %714 = arith.muli %695, %713 : vector<1x32xi32>
    %715 = arith.addi %712, %714 : vector<1x32xi32>
    %716 = arith.addi %715, %699 : vector<1x32xi32>
    %c-1_i32_301 = arith.constant -1 : i32
    %717 = vector.broadcast %c-1_i32_301 : i32 to vector<1x32xi32>
    %718 = arith.select %710, %716, %717 : vector<1x32xi1>, vector<1x32xi32>
    %719 = vector.broadcast %718 : vector<1x32xi32> to vector<128x32xi32>
    %720 = arith.cmpi eq, %651, %719 : vector<128x32xi32>
    %cst_302 = arith.constant 1.000000e+00 : f32
    %cst_303 = arith.constant 0.000000e+00 : f32
    %721 = vector.broadcast %cst_302 : f32 to vector<128x32xf32>
    %722 = vector.broadcast %cst_303 : f32 to vector<128x32xf32>
    %723 = arith.select %720, %721, %722 : vector<128x32xi1>, vector<128x32xf32>
    %724 = arith.truncf %723 : vector<128x32xf32> to vector<128x32xbf16>
    %cst_304 = arith.constant dense<0.000000e+00> : vector<8x32xf32>
    %725 = tpu.matmul %641, %724, %cst_304 {dimension_numbers = #tpu.dot_dimension_numbers<[1], [0], [0], [1], [0, 0, 1, 1], [], []>} : vector<8x128xbf16>, vector<128x32xbf16>, vector<8x32xf32> -> vector<8x32xf32>
    %c1_305 = arith.constant 1 : index
    %c0_306 = arith.constant 0 : index
    %c0_307 = arith.constant 0 : index
    %726 = vector.load %arg2[%c1_305, %c0_306, %c0_307] : memref<16x16x8xbf16, #tpu.memory_space<vmem>>, vector<1x16x8xbf16>
    %727 = vector.shape_cast %726 : vector<1x16x8xbf16> to vector<16x8xbf16>
    %728 = arith.truncf %725 : vector<8x32xf32> to vector<8x32xbf16>
    %cst_308 = arith.constant dense<0.000000e+00> : vector<16x32xf32>
    %729 = tpu.matmul %727, %728, %cst_308 {dimension_numbers = #tpu.dot_dimension_numbers<[1], [0], [0], [1], [0, 0, 1, 1], [], []>} : vector<16x8xbf16>, vector<8x32xbf16>, vector<16x32xf32> -> vector<16x32xf32>
    %730 = arith.addf %691, %729 : vector<16x32xf32>
    %c2_i32_309 = arith.constant 2 : i32
    %731 = vector.broadcast %c2_i32_309 : i32 to vector<1x32xi32>
    %732 = arith.muli %731, %648 : vector<1x32xi32>
    %c-1_i32_310 = arith.constant -1 : i32
    %733 = vector.broadcast %c-1_i32_310 : i32 to vector<1x32xi32>
    %734 = arith.addi %732, %733 : vector<1x32xi32>
    %c2_i32_311 = arith.constant 2 : i32
    %735 = vector.broadcast %c2_i32_311 : i32 to vector<1x32xi32>
    %736 = arith.muli %735, %644 : vector<1x32xi32>
    %c1_i32_312 = arith.constant 1 : i32
    %737 = vector.broadcast %c1_i32_312 : i32 to vector<1x32xi32>
    %738 = arith.addi %736, %737 : vector<1x32xi32>
    %c0_i32_313 = arith.constant 0 : i32
    %739 = vector.broadcast %c0_i32_313 : i32 to vector<1x32xi32>
    %740 = arith.cmpi sge, %734, %739 : vector<1x32xi32>
    %c8_i32_314 = arith.constant 8 : i32
    %741 = vector.broadcast %c8_i32_314 : i32 to vector<1x32xi32>
    %742 = arith.cmpi slt, %734, %741 : vector<1x32xi32>
    %743 = arith.andi %740, %742 : vector<1x32xi1>
    %c0_i32_315 = arith.constant 0 : i32
    %744 = vector.broadcast %c0_i32_315 : i32 to vector<1x32xi32>
    %745 = arith.cmpi sge, %738, %744 : vector<1x32xi32>
    %746 = arith.andi %743, %745 : vector<1x32xi1>
    %c8_i32_316 = arith.constant 8 : i32
    %747 = vector.broadcast %c8_i32_316 : i32 to vector<1x32xi32>
    %748 = arith.cmpi slt, %738, %747 : vector<1x32xi32>
    %749 = arith.andi %746, %748 : vector<1x32xi1>
    %c64_i32_317 = arith.constant 64 : i32
    %750 = vector.broadcast %c64_i32_317 : i32 to vector<1x32xi32>
    %751 = arith.muli %650, %750 : vector<1x32xi32>
    %c8_i32_318 = arith.constant 8 : i32
    %752 = vector.broadcast %c8_i32_318 : i32 to vector<1x32xi32>
    %753 = arith.muli %734, %752 : vector<1x32xi32>
    %754 = arith.addi %751, %753 : vector<1x32xi32>
    %755 = arith.addi %754, %738 : vector<1x32xi32>
    %c-1_i32_319 = arith.constant -1 : i32
    %756 = vector.broadcast %c-1_i32_319 : i32 to vector<1x32xi32>
    %757 = arith.select %749, %755, %756 : vector<1x32xi1>, vector<1x32xi32>
    %758 = vector.broadcast %757 : vector<1x32xi32> to vector<128x32xi32>
    %759 = arith.cmpi eq, %651, %758 : vector<128x32xi32>
    %cst_320 = arith.constant 1.000000e+00 : f32
    %cst_321 = arith.constant 0.000000e+00 : f32
    %760 = vector.broadcast %cst_320 : f32 to vector<128x32xf32>
    %761 = vector.broadcast %cst_321 : f32 to vector<128x32xf32>
    %762 = arith.select %759, %760, %761 : vector<128x32xi1>, vector<128x32xf32>
    %763 = arith.truncf %762 : vector<128x32xf32> to vector<128x32xbf16>
    %cst_322 = arith.constant dense<0.000000e+00> : vector<8x32xf32>
    %764 = tpu.matmul %641, %763, %cst_322 {dimension_numbers = #tpu.dot_dimension_numbers<[1], [0], [0], [1], [0, 0, 1, 1], [], []>} : vector<8x128xbf16>, vector<128x32xbf16>, vector<8x32xf32> -> vector<8x32xf32>
    %c2_323 = arith.constant 2 : index
    %c0_324 = arith.constant 0 : index
    %c0_325 = arith.constant 0 : index
    %765 = vector.load %arg2[%c2_323, %c0_324, %c0_325] : memref<16x16x8xbf16, #tpu.memory_space<vmem>>, vector<1x16x8xbf16>
    %766 = vector.shape_cast %765 : vector<1x16x8xbf16> to vector<16x8xbf16>
    %767 = arith.truncf %764 : vector<8x32xf32> to vector<8x32xbf16>
    %cst_326 = arith.constant dense<0.000000e+00> : vector<16x32xf32>
    %768 = tpu.matmul %766, %767, %cst_326 {dimension_numbers = #tpu.dot_dimension_numbers<[1], [0], [0], [1], [0, 0, 1, 1], [], []>} : vector<16x8xbf16>, vector<8x32xbf16>, vector<16x32xf32> -> vector<16x32xf32>
    %769 = arith.addf %730, %768 : vector<16x32xf32>
    %c2_i32_327 = arith.constant 2 : i32
    %770 = vector.broadcast %c2_i32_327 : i32 to vector<1x32xi32>
    %771 = arith.muli %770, %648 : vector<1x32xi32>
    %c-1_i32_328 = arith.constant -1 : i32
    %772 = vector.broadcast %c-1_i32_328 : i32 to vector<1x32xi32>
    %773 = arith.addi %771, %772 : vector<1x32xi32>
    %c2_i32_329 = arith.constant 2 : i32
    %774 = vector.broadcast %c2_i32_329 : i32 to vector<1x32xi32>
    %775 = arith.muli %774, %644 : vector<1x32xi32>
    %c2_i32_330 = arith.constant 2 : i32
    %776 = vector.broadcast %c2_i32_330 : i32 to vector<1x32xi32>
    %777 = arith.addi %775, %776 : vector<1x32xi32>
    %c0_i32_331 = arith.constant 0 : i32
    %778 = vector.broadcast %c0_i32_331 : i32 to vector<1x32xi32>
    %779 = arith.cmpi sge, %773, %778 : vector<1x32xi32>
    %c8_i32_332 = arith.constant 8 : i32
    %780 = vector.broadcast %c8_i32_332 : i32 to vector<1x32xi32>
    %781 = arith.cmpi slt, %773, %780 : vector<1x32xi32>
    %782 = arith.andi %779, %781 : vector<1x32xi1>
    %c0_i32_333 = arith.constant 0 : i32
    %783 = vector.broadcast %c0_i32_333 : i32 to vector<1x32xi32>
    %784 = arith.cmpi sge, %777, %783 : vector<1x32xi32>
    %785 = arith.andi %782, %784 : vector<1x32xi1>
    %c8_i32_334 = arith.constant 8 : i32
    %786 = vector.broadcast %c8_i32_334 : i32 to vector<1x32xi32>
    %787 = arith.cmpi slt, %777, %786 : vector<1x32xi32>
    %788 = arith.andi %785, %787 : vector<1x32xi1>
    %c64_i32_335 = arith.constant 64 : i32
    %789 = vector.broadcast %c64_i32_335 : i32 to vector<1x32xi32>
    %790 = arith.muli %650, %789 : vector<1x32xi32>
    %c8_i32_336 = arith.constant 8 : i32
    %791 = vector.broadcast %c8_i32_336 : i32 to vector<1x32xi32>
    %792 = arith.muli %773, %791 : vector<1x32xi32>
    %793 = arith.addi %790, %792 : vector<1x32xi32>
    %794 = arith.addi %793, %777 : vector<1x32xi32>
    %c-1_i32_337 = arith.constant -1 : i32
    %795 = vector.broadcast %c-1_i32_337 : i32 to vector<1x32xi32>
    %796 = arith.select %788, %794, %795 : vector<1x32xi1>, vector<1x32xi32>
    %797 = vector.broadcast %796 : vector<1x32xi32> to vector<128x32xi32>
    %798 = arith.cmpi eq, %651, %797 : vector<128x32xi32>
    %cst_338 = arith.constant 1.000000e+00 : f32
    %cst_339 = arith.constant 0.000000e+00 : f32
    %799 = vector.broadcast %cst_338 : f32 to vector<128x32xf32>
    %800 = vector.broadcast %cst_339 : f32 to vector<128x32xf32>
    %801 = arith.select %798, %799, %800 : vector<128x32xi1>, vector<128x32xf32>
    %802 = arith.truncf %801 : vector<128x32xf32> to vector<128x32xbf16>
    %cst_340 = arith.constant dense<0.000000e+00> : vector<8x32xf32>
    %803 = tpu.matmul %641, %802, %cst_340 {dimension_numbers = #tpu.dot_dimension_numbers<[1], [0], [0], [1], [0, 0, 1, 1], [], []>} : vector<8x128xbf16>, vector<128x32xbf16>, vector<8x32xf32> -> vector<8x32xf32>
    %c3_341 = arith.constant 3 : index
    %c0_342 = arith.constant 0 : index
    %c0_343 = arith.constant 0 : index
    %804 = vector.load %arg2[%c3_341, %c0_342, %c0_343] : memref<16x16x8xbf16, #tpu.memory_space<vmem>>, vector<1x16x8xbf16>
    %805 = vector.shape_cast %804 : vector<1x16x8xbf16> to vector<16x8xbf16>
    %806 = arith.truncf %803 : vector<8x32xf32> to vector<8x32xbf16>
    %cst_344 = arith.constant dense<0.000000e+00> : vector<16x32xf32>
    %807 = tpu.matmul %805, %806, %cst_344 {dimension_numbers = #tpu.dot_dimension_numbers<[1], [0], [0], [1], [0, 0, 1, 1], [], []>} : vector<16x8xbf16>, vector<8x32xbf16>, vector<16x32xf32> -> vector<16x32xf32>
    %808 = arith.addf %769, %807 : vector<16x32xf32>
    %c2_i32_345 = arith.constant 2 : i32
    %809 = vector.broadcast %c2_i32_345 : i32 to vector<1x32xi32>
    %810 = arith.muli %809, %648 : vector<1x32xi32>
    %c0_i32_346 = arith.constant 0 : i32
    %811 = vector.broadcast %c0_i32_346 : i32 to vector<1x32xi32>
    %812 = arith.addi %810, %811 : vector<1x32xi32>
    %c2_i32_347 = arith.constant 2 : i32
    %813 = vector.broadcast %c2_i32_347 : i32 to vector<1x32xi32>
    %814 = arith.muli %813, %644 : vector<1x32xi32>
    %c-1_i32_348 = arith.constant -1 : i32
    %815 = vector.broadcast %c-1_i32_348 : i32 to vector<1x32xi32>
    %816 = arith.addi %814, %815 : vector<1x32xi32>
    %c0_i32_349 = arith.constant 0 : i32
    %817 = vector.broadcast %c0_i32_349 : i32 to vector<1x32xi32>
    %818 = arith.cmpi sge, %812, %817 : vector<1x32xi32>
    %c8_i32_350 = arith.constant 8 : i32
    %819 = vector.broadcast %c8_i32_350 : i32 to vector<1x32xi32>
    %820 = arith.cmpi slt, %812, %819 : vector<1x32xi32>
    %821 = arith.andi %818, %820 : vector<1x32xi1>
    %c0_i32_351 = arith.constant 0 : i32
    %822 = vector.broadcast %c0_i32_351 : i32 to vector<1x32xi32>
    %823 = arith.cmpi sge, %816, %822 : vector<1x32xi32>
    %824 = arith.andi %821, %823 : vector<1x32xi1>
    %c8_i32_352 = arith.constant 8 : i32
    %825 = vector.broadcast %c8_i32_352 : i32 to vector<1x32xi32>
    %826 = arith.cmpi slt, %816, %825 : vector<1x32xi32>
    %827 = arith.andi %824, %826 : vector<1x32xi1>
    %c64_i32_353 = arith.constant 64 : i32
    %828 = vector.broadcast %c64_i32_353 : i32 to vector<1x32xi32>
    %829 = arith.muli %650, %828 : vector<1x32xi32>
    %c8_i32_354 = arith.constant 8 : i32
    %830 = vector.broadcast %c8_i32_354 : i32 to vector<1x32xi32>
    %831 = arith.muli %812, %830 : vector<1x32xi32>
    %832 = arith.addi %829, %831 : vector<1x32xi32>
    %833 = arith.addi %832, %816 : vector<1x32xi32>
    %c-1_i32_355 = arith.constant -1 : i32
    %834 = vector.broadcast %c-1_i32_355 : i32 to vector<1x32xi32>
    %835 = arith.select %827, %833, %834 : vector<1x32xi1>, vector<1x32xi32>
    %836 = vector.broadcast %835 : vector<1x32xi32> to vector<128x32xi32>
    %837 = arith.cmpi eq, %651, %836 : vector<128x32xi32>
    %cst_356 = arith.constant 1.000000e+00 : f32
    %cst_357 = arith.constant 0.000000e+00 : f32
    %838 = vector.broadcast %cst_356 : f32 to vector<128x32xf32>
    %839 = vector.broadcast %cst_357 : f32 to vector<128x32xf32>
    %840 = arith.select %837, %838, %839 : vector<128x32xi1>, vector<128x32xf32>
    %841 = arith.truncf %840 : vector<128x32xf32> to vector<128x32xbf16>
    %cst_358 = arith.constant dense<0.000000e+00> : vector<8x32xf32>
    %842 = tpu.matmul %641, %841, %cst_358 {dimension_numbers = #tpu.dot_dimension_numbers<[1], [0], [0], [1], [0, 0, 1, 1], [], []>} : vector<8x128xbf16>, vector<128x32xbf16>, vector<8x32xf32> -> vector<8x32xf32>
    %c4_359 = arith.constant 4 : index
    %c0_360 = arith.constant 0 : index
    %c0_361 = arith.constant 0 : index
    %843 = vector.load %arg2[%c4_359, %c0_360, %c0_361] : memref<16x16x8xbf16, #tpu.memory_space<vmem>>, vector<1x16x8xbf16>
    %844 = vector.shape_cast %843 : vector<1x16x8xbf16> to vector<16x8xbf16>
    %845 = arith.truncf %842 : vector<8x32xf32> to vector<8x32xbf16>
    %cst_362 = arith.constant dense<0.000000e+00> : vector<16x32xf32>
    %846 = tpu.matmul %844, %845, %cst_362 {dimension_numbers = #tpu.dot_dimension_numbers<[1], [0], [0], [1], [0, 0, 1, 1], [], []>} : vector<16x8xbf16>, vector<8x32xbf16>, vector<16x32xf32> -> vector<16x32xf32>
    %847 = arith.addf %808, %846 : vector<16x32xf32>
    %c2_i32_363 = arith.constant 2 : i32
    %848 = vector.broadcast %c2_i32_363 : i32 to vector<1x32xi32>
    %849 = arith.muli %848, %648 : vector<1x32xi32>
    %c0_i32_364 = arith.constant 0 : i32
    %850 = vector.broadcast %c0_i32_364 : i32 to vector<1x32xi32>
    %851 = arith.addi %849, %850 : vector<1x32xi32>
    %c2_i32_365 = arith.constant 2 : i32
    %852 = vector.broadcast %c2_i32_365 : i32 to vector<1x32xi32>
    %853 = arith.muli %852, %644 : vector<1x32xi32>
    %c0_i32_366 = arith.constant 0 : i32
    %854 = vector.broadcast %c0_i32_366 : i32 to vector<1x32xi32>
    %855 = arith.addi %853, %854 : vector<1x32xi32>
    %c0_i32_367 = arith.constant 0 : i32
    %856 = vector.broadcast %c0_i32_367 : i32 to vector<1x32xi32>
    %857 = arith.cmpi sge, %851, %856 : vector<1x32xi32>
    %c8_i32_368 = arith.constant 8 : i32
    %858 = vector.broadcast %c8_i32_368 : i32 to vector<1x32xi32>
    %859 = arith.cmpi slt, %851, %858 : vector<1x32xi32>
    %860 = arith.andi %857, %859 : vector<1x32xi1>
    %c0_i32_369 = arith.constant 0 : i32
    %861 = vector.broadcast %c0_i32_369 : i32 to vector<1x32xi32>
    %862 = arith.cmpi sge, %855, %861 : vector<1x32xi32>
    %863 = arith.andi %860, %862 : vector<1x32xi1>
    %c8_i32_370 = arith.constant 8 : i32
    %864 = vector.broadcast %c8_i32_370 : i32 to vector<1x32xi32>
    %865 = arith.cmpi slt, %855, %864 : vector<1x32xi32>
    %866 = arith.andi %863, %865 : vector<1x32xi1>
    %c64_i32_371 = arith.constant 64 : i32
    %867 = vector.broadcast %c64_i32_371 : i32 to vector<1x32xi32>
    %868 = arith.muli %650, %867 : vector<1x32xi32>
    %c8_i32_372 = arith.constant 8 : i32
    %869 = vector.broadcast %c8_i32_372 : i32 to vector<1x32xi32>
    %870 = arith.muli %851, %869 : vector<1x32xi32>
    %871 = arith.addi %868, %870 : vector<1x32xi32>
    %872 = arith.addi %871, %855 : vector<1x32xi32>
    %c-1_i32_373 = arith.constant -1 : i32
    %873 = vector.broadcast %c-1_i32_373 : i32 to vector<1x32xi32>
    %874 = arith.select %866, %872, %873 : vector<1x32xi1>, vector<1x32xi32>
    %875 = vector.broadcast %874 : vector<1x32xi32> to vector<128x32xi32>
    %876 = arith.cmpi eq, %651, %875 : vector<128x32xi32>
    %cst_374 = arith.constant 1.000000e+00 : f32
    %cst_375 = arith.constant 0.000000e+00 : f32
    %877 = vector.broadcast %cst_374 : f32 to vector<128x32xf32>
    %878 = vector.broadcast %cst_375 : f32 to vector<128x32xf32>
    %879 = arith.select %876, %877, %878 : vector<128x32xi1>, vector<128x32xf32>
    %880 = arith.truncf %879 : vector<128x32xf32> to vector<128x32xbf16>
    %cst_376 = arith.constant dense<0.000000e+00> : vector<8x32xf32>
    %881 = tpu.matmul %641, %880, %cst_376 {dimension_numbers = #tpu.dot_dimension_numbers<[1], [0], [0], [1], [0, 0, 1, 1], [], []>} : vector<8x128xbf16>, vector<128x32xbf16>, vector<8x32xf32> -> vector<8x32xf32>
    %c5_377 = arith.constant 5 : index
    %c0_378 = arith.constant 0 : index
    %c0_379 = arith.constant 0 : index
    %882 = vector.load %arg2[%c5_377, %c0_378, %c0_379] : memref<16x16x8xbf16, #tpu.memory_space<vmem>>, vector<1x16x8xbf16>
    %883 = vector.shape_cast %882 : vector<1x16x8xbf16> to vector<16x8xbf16>
    %884 = arith.truncf %881 : vector<8x32xf32> to vector<8x32xbf16>
    %cst_380 = arith.constant dense<0.000000e+00> : vector<16x32xf32>
    %885 = tpu.matmul %883, %884, %cst_380 {dimension_numbers = #tpu.dot_dimension_numbers<[1], [0], [0], [1], [0, 0, 1, 1], [], []>} : vector<16x8xbf16>, vector<8x32xbf16>, vector<16x32xf32> -> vector<16x32xf32>
    %886 = arith.addf %847, %885 : vector<16x32xf32>
    %c2_i32_381 = arith.constant 2 : i32
    %887 = vector.broadcast %c2_i32_381 : i32 to vector<1x32xi32>
    %888 = arith.muli %887, %648 : vector<1x32xi32>
    %c0_i32_382 = arith.constant 0 : i32
    %889 = vector.broadcast %c0_i32_382 : i32 to vector<1x32xi32>
    %890 = arith.addi %888, %889 : vector<1x32xi32>
    %c2_i32_383 = arith.constant 2 : i32
    %891 = vector.broadcast %c2_i32_383 : i32 to vector<1x32xi32>
    %892 = arith.muli %891, %644 : vector<1x32xi32>
    %c1_i32_384 = arith.constant 1 : i32
    %893 = vector.broadcast %c1_i32_384 : i32 to vector<1x32xi32>
    %894 = arith.addi %892, %893 : vector<1x32xi32>
    %c0_i32_385 = arith.constant 0 : i32
    %895 = vector.broadcast %c0_i32_385 : i32 to vector<1x32xi32>
    %896 = arith.cmpi sge, %890, %895 : vector<1x32xi32>
    %c8_i32_386 = arith.constant 8 : i32
    %897 = vector.broadcast %c8_i32_386 : i32 to vector<1x32xi32>
    %898 = arith.cmpi slt, %890, %897 : vector<1x32xi32>
    %899 = arith.andi %896, %898 : vector<1x32xi1>
    %c0_i32_387 = arith.constant 0 : i32
    %900 = vector.broadcast %c0_i32_387 : i32 to vector<1x32xi32>
    %901 = arith.cmpi sge, %894, %900 : vector<1x32xi32>
    %902 = arith.andi %899, %901 : vector<1x32xi1>
    %c8_i32_388 = arith.constant 8 : i32
    %903 = vector.broadcast %c8_i32_388 : i32 to vector<1x32xi32>
    %904 = arith.cmpi slt, %894, %903 : vector<1x32xi32>
    %905 = arith.andi %902, %904 : vector<1x32xi1>
    %c64_i32_389 = arith.constant 64 : i32
    %906 = vector.broadcast %c64_i32_389 : i32 to vector<1x32xi32>
    %907 = arith.muli %650, %906 : vector<1x32xi32>
    %c8_i32_390 = arith.constant 8 : i32
    %908 = vector.broadcast %c8_i32_390 : i32 to vector<1x32xi32>
    %909 = arith.muli %890, %908 : vector<1x32xi32>
    %910 = arith.addi %907, %909 : vector<1x32xi32>
    %911 = arith.addi %910, %894 : vector<1x32xi32>
    %c-1_i32_391 = arith.constant -1 : i32
    %912 = vector.broadcast %c-1_i32_391 : i32 to vector<1x32xi32>
    %913 = arith.select %905, %911, %912 : vector<1x32xi1>, vector<1x32xi32>
    %914 = vector.broadcast %913 : vector<1x32xi32> to vector<128x32xi32>
    %915 = arith.cmpi eq, %651, %914 : vector<128x32xi32>
    %cst_392 = arith.constant 1.000000e+00 : f32
    %cst_393 = arith.constant 0.000000e+00 : f32
    %916 = vector.broadcast %cst_392 : f32 to vector<128x32xf32>
    %917 = vector.broadcast %cst_393 : f32 to vector<128x32xf32>
    %918 = arith.select %915, %916, %917 : vector<128x32xi1>, vector<128x32xf32>
    %919 = arith.truncf %918 : vector<128x32xf32> to vector<128x32xbf16>
    %cst_394 = arith.constant dense<0.000000e+00> : vector<8x32xf32>
    %920 = tpu.matmul %641, %919, %cst_394 {dimension_numbers = #tpu.dot_dimension_numbers<[1], [0], [0], [1], [0, 0, 1, 1], [], []>} : vector<8x128xbf16>, vector<128x32xbf16>, vector<8x32xf32> -> vector<8x32xf32>
    %c6_395 = arith.constant 6 : index
    %c0_396 = arith.constant 0 : index
    %c0_397 = arith.constant 0 : index
    %921 = vector.load %arg2[%c6_395, %c0_396, %c0_397] : memref<16x16x8xbf16, #tpu.memory_space<vmem>>, vector<1x16x8xbf16>
    %922 = vector.shape_cast %921 : vector<1x16x8xbf16> to vector<16x8xbf16>
    %923 = arith.truncf %920 : vector<8x32xf32> to vector<8x32xbf16>
    %cst_398 = arith.constant dense<0.000000e+00> : vector<16x32xf32>
    %924 = tpu.matmul %922, %923, %cst_398 {dimension_numbers = #tpu.dot_dimension_numbers<[1], [0], [0], [1], [0, 0, 1, 1], [], []>} : vector<16x8xbf16>, vector<8x32xbf16>, vector<16x32xf32> -> vector<16x32xf32>
    %925 = arith.addf %886, %924 : vector<16x32xf32>
    %c2_i32_399 = arith.constant 2 : i32
    %926 = vector.broadcast %c2_i32_399 : i32 to vector<1x32xi32>
    %927 = arith.muli %926, %648 : vector<1x32xi32>
    %c0_i32_400 = arith.constant 0 : i32
    %928 = vector.broadcast %c0_i32_400 : i32 to vector<1x32xi32>
    %929 = arith.addi %927, %928 : vector<1x32xi32>
    %c2_i32_401 = arith.constant 2 : i32
    %930 = vector.broadcast %c2_i32_401 : i32 to vector<1x32xi32>
    %931 = arith.muli %930, %644 : vector<1x32xi32>
    %c2_i32_402 = arith.constant 2 : i32
    %932 = vector.broadcast %c2_i32_402 : i32 to vector<1x32xi32>
    %933 = arith.addi %931, %932 : vector<1x32xi32>
    %c0_i32_403 = arith.constant 0 : i32
    %934 = vector.broadcast %c0_i32_403 : i32 to vector<1x32xi32>
    %935 = arith.cmpi sge, %929, %934 : vector<1x32xi32>
    %c8_i32_404 = arith.constant 8 : i32
    %936 = vector.broadcast %c8_i32_404 : i32 to vector<1x32xi32>
    %937 = arith.cmpi slt, %929, %936 : vector<1x32xi32>
    %938 = arith.andi %935, %937 : vector<1x32xi1>
    %c0_i32_405 = arith.constant 0 : i32
    %939 = vector.broadcast %c0_i32_405 : i32 to vector<1x32xi32>
    %940 = arith.cmpi sge, %933, %939 : vector<1x32xi32>
    %941 = arith.andi %938, %940 : vector<1x32xi1>
    %c8_i32_406 = arith.constant 8 : i32
    %942 = vector.broadcast %c8_i32_406 : i32 to vector<1x32xi32>
    %943 = arith.cmpi slt, %933, %942 : vector<1x32xi32>
    %944 = arith.andi %941, %943 : vector<1x32xi1>
    %c64_i32_407 = arith.constant 64 : i32
    %945 = vector.broadcast %c64_i32_407 : i32 to vector<1x32xi32>
    %946 = arith.muli %650, %945 : vector<1x32xi32>
    %c8_i32_408 = arith.constant 8 : i32
    %947 = vector.broadcast %c8_i32_408 : i32 to vector<1x32xi32>
    %948 = arith.muli %929, %947 : vector<1x32xi32>
    %949 = arith.addi %946, %948 : vector<1x32xi32>
    %950 = arith.addi %949, %933 : vector<1x32xi32>
    %c-1_i32_409 = arith.constant -1 : i32
    %951 = vector.broadcast %c-1_i32_409 : i32 to vector<1x32xi32>
    %952 = arith.select %944, %950, %951 : vector<1x32xi1>, vector<1x32xi32>
    %953 = vector.broadcast %952 : vector<1x32xi32> to vector<128x32xi32>
    %954 = arith.cmpi eq, %651, %953 : vector<128x32xi32>
    %cst_410 = arith.constant 1.000000e+00 : f32
    %cst_411 = arith.constant 0.000000e+00 : f32
    %955 = vector.broadcast %cst_410 : f32 to vector<128x32xf32>
    %956 = vector.broadcast %cst_411 : f32 to vector<128x32xf32>
    %957 = arith.select %954, %955, %956 : vector<128x32xi1>, vector<128x32xf32>
    %958 = arith.truncf %957 : vector<128x32xf32> to vector<128x32xbf16>
    %cst_412 = arith.constant dense<0.000000e+00> : vector<8x32xf32>
    %959 = tpu.matmul %641, %958, %cst_412 {dimension_numbers = #tpu.dot_dimension_numbers<[1], [0], [0], [1], [0, 0, 1, 1], [], []>} : vector<8x128xbf16>, vector<128x32xbf16>, vector<8x32xf32> -> vector<8x32xf32>
    %c7_413 = arith.constant 7 : index
    %c0_414 = arith.constant 0 : index
    %c0_415 = arith.constant 0 : index
    %960 = vector.load %arg2[%c7_413, %c0_414, %c0_415] : memref<16x16x8xbf16, #tpu.memory_space<vmem>>, vector<1x16x8xbf16>
    %961 = vector.shape_cast %960 : vector<1x16x8xbf16> to vector<16x8xbf16>
    %962 = arith.truncf %959 : vector<8x32xf32> to vector<8x32xbf16>
    %cst_416 = arith.constant dense<0.000000e+00> : vector<16x32xf32>
    %963 = tpu.matmul %961, %962, %cst_416 {dimension_numbers = #tpu.dot_dimension_numbers<[1], [0], [0], [1], [0, 0, 1, 1], [], []>} : vector<16x8xbf16>, vector<8x32xbf16>, vector<16x32xf32> -> vector<16x32xf32>
    %964 = arith.addf %925, %963 : vector<16x32xf32>
    %c2_i32_417 = arith.constant 2 : i32
    %965 = vector.broadcast %c2_i32_417 : i32 to vector<1x32xi32>
    %966 = arith.muli %965, %648 : vector<1x32xi32>
    %c1_i32_418 = arith.constant 1 : i32
    %967 = vector.broadcast %c1_i32_418 : i32 to vector<1x32xi32>
    %968 = arith.addi %966, %967 : vector<1x32xi32>
    %c2_i32_419 = arith.constant 2 : i32
    %969 = vector.broadcast %c2_i32_419 : i32 to vector<1x32xi32>
    %970 = arith.muli %969, %644 : vector<1x32xi32>
    %c-1_i32_420 = arith.constant -1 : i32
    %971 = vector.broadcast %c-1_i32_420 : i32 to vector<1x32xi32>
    %972 = arith.addi %970, %971 : vector<1x32xi32>
    %c0_i32_421 = arith.constant 0 : i32
    %973 = vector.broadcast %c0_i32_421 : i32 to vector<1x32xi32>
    %974 = arith.cmpi sge, %968, %973 : vector<1x32xi32>
    %c8_i32_422 = arith.constant 8 : i32
    %975 = vector.broadcast %c8_i32_422 : i32 to vector<1x32xi32>
    %976 = arith.cmpi slt, %968, %975 : vector<1x32xi32>
    %977 = arith.andi %974, %976 : vector<1x32xi1>
    %c0_i32_423 = arith.constant 0 : i32
    %978 = vector.broadcast %c0_i32_423 : i32 to vector<1x32xi32>
    %979 = arith.cmpi sge, %972, %978 : vector<1x32xi32>
    %980 = arith.andi %977, %979 : vector<1x32xi1>
    %c8_i32_424 = arith.constant 8 : i32
    %981 = vector.broadcast %c8_i32_424 : i32 to vector<1x32xi32>
    %982 = arith.cmpi slt, %972, %981 : vector<1x32xi32>
    %983 = arith.andi %980, %982 : vector<1x32xi1>
    %c64_i32_425 = arith.constant 64 : i32
    %984 = vector.broadcast %c64_i32_425 : i32 to vector<1x32xi32>
    %985 = arith.muli %650, %984 : vector<1x32xi32>
    %c8_i32_426 = arith.constant 8 : i32
    %986 = vector.broadcast %c8_i32_426 : i32 to vector<1x32xi32>
    %987 = arith.muli %968, %986 : vector<1x32xi32>
    %988 = arith.addi %985, %987 : vector<1x32xi32>
    %989 = arith.addi %988, %972 : vector<1x32xi32>
    %c-1_i32_427 = arith.constant -1 : i32
    %990 = vector.broadcast %c-1_i32_427 : i32 to vector<1x32xi32>
    %991 = arith.select %983, %989, %990 : vector<1x32xi1>, vector<1x32xi32>
    %992 = vector.broadcast %991 : vector<1x32xi32> to vector<128x32xi32>
    %993 = arith.cmpi eq, %651, %992 : vector<128x32xi32>
    %cst_428 = arith.constant 1.000000e+00 : f32
    %cst_429 = arith.constant 0.000000e+00 : f32
    %994 = vector.broadcast %cst_428 : f32 to vector<128x32xf32>
    %995 = vector.broadcast %cst_429 : f32 to vector<128x32xf32>
    %996 = arith.select %993, %994, %995 : vector<128x32xi1>, vector<128x32xf32>
    %997 = arith.truncf %996 : vector<128x32xf32> to vector<128x32xbf16>
    %cst_430 = arith.constant dense<0.000000e+00> : vector<8x32xf32>
    %998 = tpu.matmul %641, %997, %cst_430 {dimension_numbers = #tpu.dot_dimension_numbers<[1], [0], [0], [1], [0, 0, 1, 1], [], []>} : vector<8x128xbf16>, vector<128x32xbf16>, vector<8x32xf32> -> vector<8x32xf32>
    %c8_431 = arith.constant 8 : index
    %c0_432 = arith.constant 0 : index
    %c0_433 = arith.constant 0 : index
    %999 = vector.load %arg2[%c8_431, %c0_432, %c0_433] : memref<16x16x8xbf16, #tpu.memory_space<vmem>>, vector<1x16x8xbf16>
    %1000 = vector.shape_cast %999 : vector<1x16x8xbf16> to vector<16x8xbf16>
    %1001 = arith.truncf %998 : vector<8x32xf32> to vector<8x32xbf16>
    %cst_434 = arith.constant dense<0.000000e+00> : vector<16x32xf32>
    %1002 = tpu.matmul %1000, %1001, %cst_434 {dimension_numbers = #tpu.dot_dimension_numbers<[1], [0], [0], [1], [0, 0, 1, 1], [], []>} : vector<16x8xbf16>, vector<8x32xbf16>, vector<16x32xf32> -> vector<16x32xf32>
    %1003 = arith.addf %964, %1002 : vector<16x32xf32>
    %c2_i32_435 = arith.constant 2 : i32
    %1004 = vector.broadcast %c2_i32_435 : i32 to vector<1x32xi32>
    %1005 = arith.muli %1004, %648 : vector<1x32xi32>
    %c1_i32_436 = arith.constant 1 : i32
    %1006 = vector.broadcast %c1_i32_436 : i32 to vector<1x32xi32>
    %1007 = arith.addi %1005, %1006 : vector<1x32xi32>
    %c2_i32_437 = arith.constant 2 : i32
    %1008 = vector.broadcast %c2_i32_437 : i32 to vector<1x32xi32>
    %1009 = arith.muli %1008, %644 : vector<1x32xi32>
    %c0_i32_438 = arith.constant 0 : i32
    %1010 = vector.broadcast %c0_i32_438 : i32 to vector<1x32xi32>
    %1011 = arith.addi %1009, %1010 : vector<1x32xi32>
    %c0_i32_439 = arith.constant 0 : i32
    %1012 = vector.broadcast %c0_i32_439 : i32 to vector<1x32xi32>
    %1013 = arith.cmpi sge, %1007, %1012 : vector<1x32xi32>
    %c8_i32_440 = arith.constant 8 : i32
    %1014 = vector.broadcast %c8_i32_440 : i32 to vector<1x32xi32>
    %1015 = arith.cmpi slt, %1007, %1014 : vector<1x32xi32>
    %1016 = arith.andi %1013, %1015 : vector<1x32xi1>
    %c0_i32_441 = arith.constant 0 : i32
    %1017 = vector.broadcast %c0_i32_441 : i32 to vector<1x32xi32>
    %1018 = arith.cmpi sge, %1011, %1017 : vector<1x32xi32>
    %1019 = arith.andi %1016, %1018 : vector<1x32xi1>
    %c8_i32_442 = arith.constant 8 : i32
    %1020 = vector.broadcast %c8_i32_442 : i32 to vector<1x32xi32>
    %1021 = arith.cmpi slt, %1011, %1020 : vector<1x32xi32>
    %1022 = arith.andi %1019, %1021 : vector<1x32xi1>
    %c64_i32_443 = arith.constant 64 : i32
    %1023 = vector.broadcast %c64_i32_443 : i32 to vector<1x32xi32>
    %1024 = arith.muli %650, %1023 : vector<1x32xi32>
    %c8_i32_444 = arith.constant 8 : i32
    %1025 = vector.broadcast %c8_i32_444 : i32 to vector<1x32xi32>
    %1026 = arith.muli %1007, %1025 : vector<1x32xi32>
    %1027 = arith.addi %1024, %1026 : vector<1x32xi32>
    %1028 = arith.addi %1027, %1011 : vector<1x32xi32>
    %c-1_i32_445 = arith.constant -1 : i32
    %1029 = vector.broadcast %c-1_i32_445 : i32 to vector<1x32xi32>
    %1030 = arith.select %1022, %1028, %1029 : vector<1x32xi1>, vector<1x32xi32>
    %1031 = vector.broadcast %1030 : vector<1x32xi32> to vector<128x32xi32>
    %1032 = arith.cmpi eq, %651, %1031 : vector<128x32xi32>
    %cst_446 = arith.constant 1.000000e+00 : f32
    %cst_447 = arith.constant 0.000000e+00 : f32
    %1033 = vector.broadcast %cst_446 : f32 to vector<128x32xf32>
    %1034 = vector.broadcast %cst_447 : f32 to vector<128x32xf32>
    %1035 = arith.select %1032, %1033, %1034 : vector<128x32xi1>, vector<128x32xf32>
    %1036 = arith.truncf %1035 : vector<128x32xf32> to vector<128x32xbf16>
    %cst_448 = arith.constant dense<0.000000e+00> : vector<8x32xf32>
    %1037 = tpu.matmul %641, %1036, %cst_448 {dimension_numbers = #tpu.dot_dimension_numbers<[1], [0], [0], [1], [0, 0, 1, 1], [], []>} : vector<8x128xbf16>, vector<128x32xbf16>, vector<8x32xf32> -> vector<8x32xf32>
    %c9_449 = arith.constant 9 : index
    %c0_450 = arith.constant 0 : index
    %c0_451 = arith.constant 0 : index
    %1038 = vector.load %arg2[%c9_449, %c0_450, %c0_451] : memref<16x16x8xbf16, #tpu.memory_space<vmem>>, vector<1x16x8xbf16>
    %1039 = vector.shape_cast %1038 : vector<1x16x8xbf16> to vector<16x8xbf16>
    %1040 = arith.truncf %1037 : vector<8x32xf32> to vector<8x32xbf16>
    %cst_452 = arith.constant dense<0.000000e+00> : vector<16x32xf32>
    %1041 = tpu.matmul %1039, %1040, %cst_452 {dimension_numbers = #tpu.dot_dimension_numbers<[1], [0], [0], [1], [0, 0, 1, 1], [], []>} : vector<16x8xbf16>, vector<8x32xbf16>, vector<16x32xf32> -> vector<16x32xf32>
    %1042 = arith.addf %1003, %1041 : vector<16x32xf32>
    %c2_i32_453 = arith.constant 2 : i32
    %1043 = vector.broadcast %c2_i32_453 : i32 to vector<1x32xi32>
    %1044 = arith.muli %1043, %648 : vector<1x32xi32>
    %c1_i32_454 = arith.constant 1 : i32
    %1045 = vector.broadcast %c1_i32_454 : i32 to vector<1x32xi32>
    %1046 = arith.addi %1044, %1045 : vector<1x32xi32>
    %c2_i32_455 = arith.constant 2 : i32
    %1047 = vector.broadcast %c2_i32_455 : i32 to vector<1x32xi32>
    %1048 = arith.muli %1047, %644 : vector<1x32xi32>
    %c1_i32_456 = arith.constant 1 : i32
    %1049 = vector.broadcast %c1_i32_456 : i32 to vector<1x32xi32>
    %1050 = arith.addi %1048, %1049 : vector<1x32xi32>
    %c0_i32_457 = arith.constant 0 : i32
    %1051 = vector.broadcast %c0_i32_457 : i32 to vector<1x32xi32>
    %1052 = arith.cmpi sge, %1046, %1051 : vector<1x32xi32>
    %c8_i32_458 = arith.constant 8 : i32
    %1053 = vector.broadcast %c8_i32_458 : i32 to vector<1x32xi32>
    %1054 = arith.cmpi slt, %1046, %1053 : vector<1x32xi32>
    %1055 = arith.andi %1052, %1054 : vector<1x32xi1>
    %c0_i32_459 = arith.constant 0 : i32
    %1056 = vector.broadcast %c0_i32_459 : i32 to vector<1x32xi32>
    %1057 = arith.cmpi sge, %1050, %1056 : vector<1x32xi32>
    %1058 = arith.andi %1055, %1057 : vector<1x32xi1>
    %c8_i32_460 = arith.constant 8 : i32
    %1059 = vector.broadcast %c8_i32_460 : i32 to vector<1x32xi32>
    %1060 = arith.cmpi slt, %1050, %1059 : vector<1x32xi32>
    %1061 = arith.andi %1058, %1060 : vector<1x32xi1>
    %c64_i32_461 = arith.constant 64 : i32
    %1062 = vector.broadcast %c64_i32_461 : i32 to vector<1x32xi32>
    %1063 = arith.muli %650, %1062 : vector<1x32xi32>
    %c8_i32_462 = arith.constant 8 : i32
    %1064 = vector.broadcast %c8_i32_462 : i32 to vector<1x32xi32>
    %1065 = arith.muli %1046, %1064 : vector<1x32xi32>
    %1066 = arith.addi %1063, %1065 : vector<1x32xi32>
    %1067 = arith.addi %1066, %1050 : vector<1x32xi32>
    %c-1_i32_463 = arith.constant -1 : i32
    %1068 = vector.broadcast %c-1_i32_463 : i32 to vector<1x32xi32>
    %1069 = arith.select %1061, %1067, %1068 : vector<1x32xi1>, vector<1x32xi32>
    %1070 = vector.broadcast %1069 : vector<1x32xi32> to vector<128x32xi32>
    %1071 = arith.cmpi eq, %651, %1070 : vector<128x32xi32>
    %cst_464 = arith.constant 1.000000e+00 : f32
    %cst_465 = arith.constant 0.000000e+00 : f32
    %1072 = vector.broadcast %cst_464 : f32 to vector<128x32xf32>
    %1073 = vector.broadcast %cst_465 : f32 to vector<128x32xf32>
    %1074 = arith.select %1071, %1072, %1073 : vector<128x32xi1>, vector<128x32xf32>
    %1075 = arith.truncf %1074 : vector<128x32xf32> to vector<128x32xbf16>
    %cst_466 = arith.constant dense<0.000000e+00> : vector<8x32xf32>
    %1076 = tpu.matmul %641, %1075, %cst_466 {dimension_numbers = #tpu.dot_dimension_numbers<[1], [0], [0], [1], [0, 0, 1, 1], [], []>} : vector<8x128xbf16>, vector<128x32xbf16>, vector<8x32xf32> -> vector<8x32xf32>
    %c10_467 = arith.constant 10 : index
    %c0_468 = arith.constant 0 : index
    %c0_469 = arith.constant 0 : index
    %1077 = vector.load %arg2[%c10_467, %c0_468, %c0_469] : memref<16x16x8xbf16, #tpu.memory_space<vmem>>, vector<1x16x8xbf16>
    %1078 = vector.shape_cast %1077 : vector<1x16x8xbf16> to vector<16x8xbf16>
    %1079 = arith.truncf %1076 : vector<8x32xf32> to vector<8x32xbf16>
    %cst_470 = arith.constant dense<0.000000e+00> : vector<16x32xf32>
    %1080 = tpu.matmul %1078, %1079, %cst_470 {dimension_numbers = #tpu.dot_dimension_numbers<[1], [0], [0], [1], [0, 0, 1, 1], [], []>} : vector<16x8xbf16>, vector<8x32xbf16>, vector<16x32xf32> -> vector<16x32xf32>
    %1081 = arith.addf %1042, %1080 : vector<16x32xf32>
    %c2_i32_471 = arith.constant 2 : i32
    %1082 = vector.broadcast %c2_i32_471 : i32 to vector<1x32xi32>
    %1083 = arith.muli %1082, %648 : vector<1x32xi32>
    %c1_i32_472 = arith.constant 1 : i32
    %1084 = vector.broadcast %c1_i32_472 : i32 to vector<1x32xi32>
    %1085 = arith.addi %1083, %1084 : vector<1x32xi32>
    %c2_i32_473 = arith.constant 2 : i32
    %1086 = vector.broadcast %c2_i32_473 : i32 to vector<1x32xi32>
    %1087 = arith.muli %1086, %644 : vector<1x32xi32>
    %c2_i32_474 = arith.constant 2 : i32
    %1088 = vector.broadcast %c2_i32_474 : i32 to vector<1x32xi32>
    %1089 = arith.addi %1087, %1088 : vector<1x32xi32>
    %c0_i32_475 = arith.constant 0 : i32
    %1090 = vector.broadcast %c0_i32_475 : i32 to vector<1x32xi32>
    %1091 = arith.cmpi sge, %1085, %1090 : vector<1x32xi32>
    %c8_i32_476 = arith.constant 8 : i32
    %1092 = vector.broadcast %c8_i32_476 : i32 to vector<1x32xi32>
    %1093 = arith.cmpi slt, %1085, %1092 : vector<1x32xi32>
    %1094 = arith.andi %1091, %1093 : vector<1x32xi1>
    %c0_i32_477 = arith.constant 0 : i32
    %1095 = vector.broadcast %c0_i32_477 : i32 to vector<1x32xi32>
    %1096 = arith.cmpi sge, %1089, %1095 : vector<1x32xi32>
    %1097 = arith.andi %1094, %1096 : vector<1x32xi1>
    %c8_i32_478 = arith.constant 8 : i32
    %1098 = vector.broadcast %c8_i32_478 : i32 to vector<1x32xi32>
    %1099 = arith.cmpi slt, %1089, %1098 : vector<1x32xi32>
    %1100 = arith.andi %1097, %1099 : vector<1x32xi1>
    %c64_i32_479 = arith.constant 64 : i32
    %1101 = vector.broadcast %c64_i32_479 : i32 to vector<1x32xi32>
    %1102 = arith.muli %650, %1101 : vector<1x32xi32>
    %c8_i32_480 = arith.constant 8 : i32
    %1103 = vector.broadcast %c8_i32_480 : i32 to vector<1x32xi32>
    %1104 = arith.muli %1085, %1103 : vector<1x32xi32>
    %1105 = arith.addi %1102, %1104 : vector<1x32xi32>
    %1106 = arith.addi %1105, %1089 : vector<1x32xi32>
    %c-1_i32_481 = arith.constant -1 : i32
    %1107 = vector.broadcast %c-1_i32_481 : i32 to vector<1x32xi32>
    %1108 = arith.select %1100, %1106, %1107 : vector<1x32xi1>, vector<1x32xi32>
    %1109 = vector.broadcast %1108 : vector<1x32xi32> to vector<128x32xi32>
    %1110 = arith.cmpi eq, %651, %1109 : vector<128x32xi32>
    %cst_482 = arith.constant 1.000000e+00 : f32
    %cst_483 = arith.constant 0.000000e+00 : f32
    %1111 = vector.broadcast %cst_482 : f32 to vector<128x32xf32>
    %1112 = vector.broadcast %cst_483 : f32 to vector<128x32xf32>
    %1113 = arith.select %1110, %1111, %1112 : vector<128x32xi1>, vector<128x32xf32>
    %1114 = arith.truncf %1113 : vector<128x32xf32> to vector<128x32xbf16>
    %cst_484 = arith.constant dense<0.000000e+00> : vector<8x32xf32>
    %1115 = tpu.matmul %641, %1114, %cst_484 {dimension_numbers = #tpu.dot_dimension_numbers<[1], [0], [0], [1], [0, 0, 1, 1], [], []>} : vector<8x128xbf16>, vector<128x32xbf16>, vector<8x32xf32> -> vector<8x32xf32>
    %c11_485 = arith.constant 11 : index
    %c0_486 = arith.constant 0 : index
    %c0_487 = arith.constant 0 : index
    %1116 = vector.load %arg2[%c11_485, %c0_486, %c0_487] : memref<16x16x8xbf16, #tpu.memory_space<vmem>>, vector<1x16x8xbf16>
    %1117 = vector.shape_cast %1116 : vector<1x16x8xbf16> to vector<16x8xbf16>
    %1118 = arith.truncf %1115 : vector<8x32xf32> to vector<8x32xbf16>
    %cst_488 = arith.constant dense<0.000000e+00> : vector<16x32xf32>
    %1119 = tpu.matmul %1117, %1118, %cst_488 {dimension_numbers = #tpu.dot_dimension_numbers<[1], [0], [0], [1], [0, 0, 1, 1], [], []>} : vector<16x8xbf16>, vector<8x32xbf16>, vector<16x32xf32> -> vector<16x32xf32>
    %1120 = arith.addf %1081, %1119 : vector<16x32xf32>
    %c2_i32_489 = arith.constant 2 : i32
    %1121 = vector.broadcast %c2_i32_489 : i32 to vector<1x32xi32>
    %1122 = arith.muli %1121, %648 : vector<1x32xi32>
    %c2_i32_490 = arith.constant 2 : i32
    %1123 = vector.broadcast %c2_i32_490 : i32 to vector<1x32xi32>
    %1124 = arith.addi %1122, %1123 : vector<1x32xi32>
    %c2_i32_491 = arith.constant 2 : i32
    %1125 = vector.broadcast %c2_i32_491 : i32 to vector<1x32xi32>
    %1126 = arith.muli %1125, %644 : vector<1x32xi32>
    %c-1_i32_492 = arith.constant -1 : i32
    %1127 = vector.broadcast %c-1_i32_492 : i32 to vector<1x32xi32>
    %1128 = arith.addi %1126, %1127 : vector<1x32xi32>
    %c0_i32_493 = arith.constant 0 : i32
    %1129 = vector.broadcast %c0_i32_493 : i32 to vector<1x32xi32>
    %1130 = arith.cmpi sge, %1124, %1129 : vector<1x32xi32>
    %c8_i32_494 = arith.constant 8 : i32
    %1131 = vector.broadcast %c8_i32_494 : i32 to vector<1x32xi32>
    %1132 = arith.cmpi slt, %1124, %1131 : vector<1x32xi32>
    %1133 = arith.andi %1130, %1132 : vector<1x32xi1>
    %c0_i32_495 = arith.constant 0 : i32
    %1134 = vector.broadcast %c0_i32_495 : i32 to vector<1x32xi32>
    %1135 = arith.cmpi sge, %1128, %1134 : vector<1x32xi32>
    %1136 = arith.andi %1133, %1135 : vector<1x32xi1>
    %c8_i32_496 = arith.constant 8 : i32
    %1137 = vector.broadcast %c8_i32_496 : i32 to vector<1x32xi32>
    %1138 = arith.cmpi slt, %1128, %1137 : vector<1x32xi32>
    %1139 = arith.andi %1136, %1138 : vector<1x32xi1>
    %c64_i32_497 = arith.constant 64 : i32
    %1140 = vector.broadcast %c64_i32_497 : i32 to vector<1x32xi32>
    %1141 = arith.muli %650, %1140 : vector<1x32xi32>
    %c8_i32_498 = arith.constant 8 : i32
    %1142 = vector.broadcast %c8_i32_498 : i32 to vector<1x32xi32>
    %1143 = arith.muli %1124, %1142 : vector<1x32xi32>
    %1144 = arith.addi %1141, %1143 : vector<1x32xi32>
    %1145 = arith.addi %1144, %1128 : vector<1x32xi32>
    %c-1_i32_499 = arith.constant -1 : i32
    %1146 = vector.broadcast %c-1_i32_499 : i32 to vector<1x32xi32>
    %1147 = arith.select %1139, %1145, %1146 : vector<1x32xi1>, vector<1x32xi32>
    %1148 = vector.broadcast %1147 : vector<1x32xi32> to vector<128x32xi32>
    %1149 = arith.cmpi eq, %651, %1148 : vector<128x32xi32>
    %cst_500 = arith.constant 1.000000e+00 : f32
    %cst_501 = arith.constant 0.000000e+00 : f32
    %1150 = vector.broadcast %cst_500 : f32 to vector<128x32xf32>
    %1151 = vector.broadcast %cst_501 : f32 to vector<128x32xf32>
    %1152 = arith.select %1149, %1150, %1151 : vector<128x32xi1>, vector<128x32xf32>
    %1153 = arith.truncf %1152 : vector<128x32xf32> to vector<128x32xbf16>
    %cst_502 = arith.constant dense<0.000000e+00> : vector<8x32xf32>
    %1154 = tpu.matmul %641, %1153, %cst_502 {dimension_numbers = #tpu.dot_dimension_numbers<[1], [0], [0], [1], [0, 0, 1, 1], [], []>} : vector<8x128xbf16>, vector<128x32xbf16>, vector<8x32xf32> -> vector<8x32xf32>
    %c12_503 = arith.constant 12 : index
    %c0_504 = arith.constant 0 : index
    %c0_505 = arith.constant 0 : index
    %1155 = vector.load %arg2[%c12_503, %c0_504, %c0_505] : memref<16x16x8xbf16, #tpu.memory_space<vmem>>, vector<1x16x8xbf16>
    %1156 = vector.shape_cast %1155 : vector<1x16x8xbf16> to vector<16x8xbf16>
    %1157 = arith.truncf %1154 : vector<8x32xf32> to vector<8x32xbf16>
    %cst_506 = arith.constant dense<0.000000e+00> : vector<16x32xf32>
    %1158 = tpu.matmul %1156, %1157, %cst_506 {dimension_numbers = #tpu.dot_dimension_numbers<[1], [0], [0], [1], [0, 0, 1, 1], [], []>} : vector<16x8xbf16>, vector<8x32xbf16>, vector<16x32xf32> -> vector<16x32xf32>
    %1159 = arith.addf %1120, %1158 : vector<16x32xf32>
    %c2_i32_507 = arith.constant 2 : i32
    %1160 = vector.broadcast %c2_i32_507 : i32 to vector<1x32xi32>
    %1161 = arith.muli %1160, %648 : vector<1x32xi32>
    %c2_i32_508 = arith.constant 2 : i32
    %1162 = vector.broadcast %c2_i32_508 : i32 to vector<1x32xi32>
    %1163 = arith.addi %1161, %1162 : vector<1x32xi32>
    %c2_i32_509 = arith.constant 2 : i32
    %1164 = vector.broadcast %c2_i32_509 : i32 to vector<1x32xi32>
    %1165 = arith.muli %1164, %644 : vector<1x32xi32>
    %c0_i32_510 = arith.constant 0 : i32
    %1166 = vector.broadcast %c0_i32_510 : i32 to vector<1x32xi32>
    %1167 = arith.addi %1165, %1166 : vector<1x32xi32>
    %c0_i32_511 = arith.constant 0 : i32
    %1168 = vector.broadcast %c0_i32_511 : i32 to vector<1x32xi32>
    %1169 = arith.cmpi sge, %1163, %1168 : vector<1x32xi32>
    %c8_i32_512 = arith.constant 8 : i32
    %1170 = vector.broadcast %c8_i32_512 : i32 to vector<1x32xi32>
    %1171 = arith.cmpi slt, %1163, %1170 : vector<1x32xi32>
    %1172 = arith.andi %1169, %1171 : vector<1x32xi1>
    %c0_i32_513 = arith.constant 0 : i32
    %1173 = vector.broadcast %c0_i32_513 : i32 to vector<1x32xi32>
    %1174 = arith.cmpi sge, %1167, %1173 : vector<1x32xi32>
    %1175 = arith.andi %1172, %1174 : vector<1x32xi1>
    %c8_i32_514 = arith.constant 8 : i32
    %1176 = vector.broadcast %c8_i32_514 : i32 to vector<1x32xi32>
    %1177 = arith.cmpi slt, %1167, %1176 : vector<1x32xi32>
    %1178 = arith.andi %1175, %1177 : vector<1x32xi1>
    %c64_i32_515 = arith.constant 64 : i32
    %1179 = vector.broadcast %c64_i32_515 : i32 to vector<1x32xi32>
    %1180 = arith.muli %650, %1179 : vector<1x32xi32>
    %c8_i32_516 = arith.constant 8 : i32
    %1181 = vector.broadcast %c8_i32_516 : i32 to vector<1x32xi32>
    %1182 = arith.muli %1163, %1181 : vector<1x32xi32>
    %1183 = arith.addi %1180, %1182 : vector<1x32xi32>
    %1184 = arith.addi %1183, %1167 : vector<1x32xi32>
    %c-1_i32_517 = arith.constant -1 : i32
    %1185 = vector.broadcast %c-1_i32_517 : i32 to vector<1x32xi32>
    %1186 = arith.select %1178, %1184, %1185 : vector<1x32xi1>, vector<1x32xi32>
    %1187 = vector.broadcast %1186 : vector<1x32xi32> to vector<128x32xi32>
    %1188 = arith.cmpi eq, %651, %1187 : vector<128x32xi32>
    %cst_518 = arith.constant 1.000000e+00 : f32
    %cst_519 = arith.constant 0.000000e+00 : f32
    %1189 = vector.broadcast %cst_518 : f32 to vector<128x32xf32>
    %1190 = vector.broadcast %cst_519 : f32 to vector<128x32xf32>
    %1191 = arith.select %1188, %1189, %1190 : vector<128x32xi1>, vector<128x32xf32>
    %1192 = arith.truncf %1191 : vector<128x32xf32> to vector<128x32xbf16>
    %cst_520 = arith.constant dense<0.000000e+00> : vector<8x32xf32>
    %1193 = tpu.matmul %641, %1192, %cst_520 {dimension_numbers = #tpu.dot_dimension_numbers<[1], [0], [0], [1], [0, 0, 1, 1], [], []>} : vector<8x128xbf16>, vector<128x32xbf16>, vector<8x32xf32> -> vector<8x32xf32>
    %c13_521 = arith.constant 13 : index
    %c0_522 = arith.constant 0 : index
    %c0_523 = arith.constant 0 : index
    %1194 = vector.load %arg2[%c13_521, %c0_522, %c0_523] : memref<16x16x8xbf16, #tpu.memory_space<vmem>>, vector<1x16x8xbf16>
    %1195 = vector.shape_cast %1194 : vector<1x16x8xbf16> to vector<16x8xbf16>
    %1196 = arith.truncf %1193 : vector<8x32xf32> to vector<8x32xbf16>
    %cst_524 = arith.constant dense<0.000000e+00> : vector<16x32xf32>
    %1197 = tpu.matmul %1195, %1196, %cst_524 {dimension_numbers = #tpu.dot_dimension_numbers<[1], [0], [0], [1], [0, 0, 1, 1], [], []>} : vector<16x8xbf16>, vector<8x32xbf16>, vector<16x32xf32> -> vector<16x32xf32>
    %1198 = arith.addf %1159, %1197 : vector<16x32xf32>
    %c2_i32_525 = arith.constant 2 : i32
    %1199 = vector.broadcast %c2_i32_525 : i32 to vector<1x32xi32>
    %1200 = arith.muli %1199, %648 : vector<1x32xi32>
    %c2_i32_526 = arith.constant 2 : i32
    %1201 = vector.broadcast %c2_i32_526 : i32 to vector<1x32xi32>
    %1202 = arith.addi %1200, %1201 : vector<1x32xi32>
    %c2_i32_527 = arith.constant 2 : i32
    %1203 = vector.broadcast %c2_i32_527 : i32 to vector<1x32xi32>
    %1204 = arith.muli %1203, %644 : vector<1x32xi32>
    %c1_i32_528 = arith.constant 1 : i32
    %1205 = vector.broadcast %c1_i32_528 : i32 to vector<1x32xi32>
    %1206 = arith.addi %1204, %1205 : vector<1x32xi32>
    %c0_i32_529 = arith.constant 0 : i32
    %1207 = vector.broadcast %c0_i32_529 : i32 to vector<1x32xi32>
    %1208 = arith.cmpi sge, %1202, %1207 : vector<1x32xi32>
    %c8_i32_530 = arith.constant 8 : i32
    %1209 = vector.broadcast %c8_i32_530 : i32 to vector<1x32xi32>
    %1210 = arith.cmpi slt, %1202, %1209 : vector<1x32xi32>
    %1211 = arith.andi %1208, %1210 : vector<1x32xi1>
    %c0_i32_531 = arith.constant 0 : i32
    %1212 = vector.broadcast %c0_i32_531 : i32 to vector<1x32xi32>
    %1213 = arith.cmpi sge, %1206, %1212 : vector<1x32xi32>
    %1214 = arith.andi %1211, %1213 : vector<1x32xi1>
    %c8_i32_532 = arith.constant 8 : i32
    %1215 = vector.broadcast %c8_i32_532 : i32 to vector<1x32xi32>
    %1216 = arith.cmpi slt, %1206, %1215 : vector<1x32xi32>
    %1217 = arith.andi %1214, %1216 : vector<1x32xi1>
    %c64_i32_533 = arith.constant 64 : i32
    %1218 = vector.broadcast %c64_i32_533 : i32 to vector<1x32xi32>
    %1219 = arith.muli %650, %1218 : vector<1x32xi32>
    %c8_i32_534 = arith.constant 8 : i32
    %1220 = vector.broadcast %c8_i32_534 : i32 to vector<1x32xi32>
    %1221 = arith.muli %1202, %1220 : vector<1x32xi32>
    %1222 = arith.addi %1219, %1221 : vector<1x32xi32>
    %1223 = arith.addi %1222, %1206 : vector<1x32xi32>
    %c-1_i32_535 = arith.constant -1 : i32
    %1224 = vector.broadcast %c-1_i32_535 : i32 to vector<1x32xi32>
    %1225 = arith.select %1217, %1223, %1224 : vector<1x32xi1>, vector<1x32xi32>
    %1226 = vector.broadcast %1225 : vector<1x32xi32> to vector<128x32xi32>
    %1227 = arith.cmpi eq, %651, %1226 : vector<128x32xi32>
    %cst_536 = arith.constant 1.000000e+00 : f32
    %cst_537 = arith.constant 0.000000e+00 : f32
    %1228 = vector.broadcast %cst_536 : f32 to vector<128x32xf32>
    %1229 = vector.broadcast %cst_537 : f32 to vector<128x32xf32>
    %1230 = arith.select %1227, %1228, %1229 : vector<128x32xi1>, vector<128x32xf32>
    %1231 = arith.truncf %1230 : vector<128x32xf32> to vector<128x32xbf16>
    %cst_538 = arith.constant dense<0.000000e+00> : vector<8x32xf32>
    %1232 = tpu.matmul %641, %1231, %cst_538 {dimension_numbers = #tpu.dot_dimension_numbers<[1], [0], [0], [1], [0, 0, 1, 1], [], []>} : vector<8x128xbf16>, vector<128x32xbf16>, vector<8x32xf32> -> vector<8x32xf32>
    %c14_539 = arith.constant 14 : index
    %c0_540 = arith.constant 0 : index
    %c0_541 = arith.constant 0 : index
    %1233 = vector.load %arg2[%c14_539, %c0_540, %c0_541] : memref<16x16x8xbf16, #tpu.memory_space<vmem>>, vector<1x16x8xbf16>
    %1234 = vector.shape_cast %1233 : vector<1x16x8xbf16> to vector<16x8xbf16>
    %1235 = arith.truncf %1232 : vector<8x32xf32> to vector<8x32xbf16>
    %cst_542 = arith.constant dense<0.000000e+00> : vector<16x32xf32>
    %1236 = tpu.matmul %1234, %1235, %cst_542 {dimension_numbers = #tpu.dot_dimension_numbers<[1], [0], [0], [1], [0, 0, 1, 1], [], []>} : vector<16x8xbf16>, vector<8x32xbf16>, vector<16x32xf32> -> vector<16x32xf32>
    %1237 = arith.addf %1198, %1236 : vector<16x32xf32>
    %c2_i32_543 = arith.constant 2 : i32
    %1238 = vector.broadcast %c2_i32_543 : i32 to vector<1x32xi32>
    %1239 = arith.muli %1238, %648 : vector<1x32xi32>
    %c2_i32_544 = arith.constant 2 : i32
    %1240 = vector.broadcast %c2_i32_544 : i32 to vector<1x32xi32>
    %1241 = arith.addi %1239, %1240 : vector<1x32xi32>
    %c2_i32_545 = arith.constant 2 : i32
    %1242 = vector.broadcast %c2_i32_545 : i32 to vector<1x32xi32>
    %1243 = arith.muli %1242, %644 : vector<1x32xi32>
    %c2_i32_546 = arith.constant 2 : i32
    %1244 = vector.broadcast %c2_i32_546 : i32 to vector<1x32xi32>
    %1245 = arith.addi %1243, %1244 : vector<1x32xi32>
    %c0_i32_547 = arith.constant 0 : i32
    %1246 = vector.broadcast %c0_i32_547 : i32 to vector<1x32xi32>
    %1247 = arith.cmpi sge, %1241, %1246 : vector<1x32xi32>
    %c8_i32_548 = arith.constant 8 : i32
    %1248 = vector.broadcast %c8_i32_548 : i32 to vector<1x32xi32>
    %1249 = arith.cmpi slt, %1241, %1248 : vector<1x32xi32>
    %1250 = arith.andi %1247, %1249 : vector<1x32xi1>
    %c0_i32_549 = arith.constant 0 : i32
    %1251 = vector.broadcast %c0_i32_549 : i32 to vector<1x32xi32>
    %1252 = arith.cmpi sge, %1245, %1251 : vector<1x32xi32>
    %1253 = arith.andi %1250, %1252 : vector<1x32xi1>
    %c8_i32_550 = arith.constant 8 : i32
    %1254 = vector.broadcast %c8_i32_550 : i32 to vector<1x32xi32>
    %1255 = arith.cmpi slt, %1245, %1254 : vector<1x32xi32>
    %1256 = arith.andi %1253, %1255 : vector<1x32xi1>
    %c64_i32_551 = arith.constant 64 : i32
    %1257 = vector.broadcast %c64_i32_551 : i32 to vector<1x32xi32>
    %1258 = arith.muli %650, %1257 : vector<1x32xi32>
    %c8_i32_552 = arith.constant 8 : i32
    %1259 = vector.broadcast %c8_i32_552 : i32 to vector<1x32xi32>
    %1260 = arith.muli %1241, %1259 : vector<1x32xi32>
    %1261 = arith.addi %1258, %1260 : vector<1x32xi32>
    %1262 = arith.addi %1261, %1245 : vector<1x32xi32>
    %c-1_i32_553 = arith.constant -1 : i32
    %1263 = vector.broadcast %c-1_i32_553 : i32 to vector<1x32xi32>
    %1264 = arith.select %1256, %1262, %1263 : vector<1x32xi1>, vector<1x32xi32>
    %1265 = vector.broadcast %1264 : vector<1x32xi32> to vector<128x32xi32>
    %1266 = arith.cmpi eq, %651, %1265 : vector<128x32xi32>
    %cst_554 = arith.constant 1.000000e+00 : f32
    %cst_555 = arith.constant 0.000000e+00 : f32
    %1267 = vector.broadcast %cst_554 : f32 to vector<128x32xf32>
    %1268 = vector.broadcast %cst_555 : f32 to vector<128x32xf32>
    %1269 = arith.select %1266, %1267, %1268 : vector<128x32xi1>, vector<128x32xf32>
    %1270 = arith.truncf %1269 : vector<128x32xf32> to vector<128x32xbf16>
    %cst_556 = arith.constant dense<0.000000e+00> : vector<8x32xf32>
    %1271 = tpu.matmul %641, %1270, %cst_556 {dimension_numbers = #tpu.dot_dimension_numbers<[1], [0], [0], [1], [0, 0, 1, 1], [], []>} : vector<8x128xbf16>, vector<128x32xbf16>, vector<8x32xf32> -> vector<8x32xf32>
    %c15_557 = arith.constant 15 : index
    %c0_558 = arith.constant 0 : index
    %c0_559 = arith.constant 0 : index
    %1272 = vector.load %arg2[%c15_557, %c0_558, %c0_559] : memref<16x16x8xbf16, #tpu.memory_space<vmem>>, vector<1x16x8xbf16>
    %1273 = vector.shape_cast %1272 : vector<1x16x8xbf16> to vector<16x8xbf16>
    %1274 = arith.truncf %1271 : vector<8x32xf32> to vector<8x32xbf16>
    %cst_560 = arith.constant dense<0.000000e+00> : vector<16x32xf32>
    %1275 = tpu.matmul %1273, %1274, %cst_560 {dimension_numbers = #tpu.dot_dimension_numbers<[1], [0], [0], [1], [0, 0, 1, 1], [], []>} : vector<16x8xbf16>, vector<8x32xbf16>, vector<16x32xf32> -> vector<16x32xf32>
    %1276 = arith.addf %1237, %1275 : vector<16x32xf32>
    %c0_561 = arith.constant 0 : index
    %c0_562 = arith.constant 0 : index
    %1277 = vector.load %arg3[%c0_561, %c0_562] : memref<16x1xf32, #tpu.memory_space<vmem>>, vector<16x1xf32>
    %c0_563 = arith.constant 0 : index
    %c0_564 = arith.constant 0 : index
    %1278 = vector.load %arg4[%c0_563, %c0_564] : memref<16x1xf32, #tpu.memory_space<vmem>>, vector<16x1xf32>
    %cst_565 = arith.constant dense<0.000000e+00> : vector<16xf32>
    %1279 = vector.multi_reduction <add>, %1276, %cst_565 [1] : vector<16x32xf32> to vector<16xf32>
    %1280 = vector.shape_cast %1279 : vector<16xf32> to vector<16x1xf32>
    %cst_566 = arith.constant 3.200000e+01 : f32
    %1281 = vector.broadcast %cst_566 : f32 to vector<16x1xf32>
    %1282 = arith.divf %1280, %1281 : vector<16x1xf32>
    %1283 = vector.broadcast %1282 : vector<16x1xf32> to vector<16x32xf32>
    %1284 = arith.subf %1276, %1283 : vector<16x32xf32>
    %1285 = arith.mulf %1284, %1284 : vector<16x32xf32>
    %cst_567 = arith.constant dense<0.000000e+00> : vector<16xf32>
    %1286 = vector.multi_reduction <add>, %1285, %cst_567 [1] : vector<16x32xf32> to vector<16xf32>
    %1287 = vector.shape_cast %1286 : vector<16xf32> to vector<16x1xf32>
    %cst_568 = arith.constant 3.200000e+01 : f32
    %1288 = vector.broadcast %cst_568 : f32 to vector<16x1xf32>
    %1289 = arith.divf %1287, %1288 : vector<16x1xf32>
    %1290 = vector.broadcast %1282 : vector<16x1xf32> to vector<16x32xf32>
    %1291 = arith.subf %1276, %1290 : vector<16x32xf32>
    %cst_569 = arith.constant 9.99999974E-6 : f32
    %1292 = vector.broadcast %cst_569 : f32 to vector<16x1xf32>
    %1293 = arith.addf %1289, %1292 : vector<16x1xf32>
    %1294 = math.rsqrt %1293 : vector<16x1xf32>
    %1295 = vector.broadcast %1294 : vector<16x1xf32> to vector<16x32xf32>
    %1296 = arith.mulf %1291, %1295 : vector<16x32xf32>
    %1297 = vector.broadcast %1277 : vector<16x1xf32> to vector<16x32xf32>
    %1298 = arith.mulf %1296, %1297 : vector<16x32xf32>
    %1299 = vector.broadcast %1278 : vector<16x1xf32> to vector<16x32xf32>
    %1300 = arith.addf %1298, %1299 : vector<16x32xf32>
    %cst_570 = arith.constant 0.000000e+00 : f32
    %1301 = vector.broadcast %cst_570 : f32 to vector<16x32xf32>
    %1302 = arith.cmpf ogt, %1300, %1301 : vector<16x32xf32>
    %cst_571 = arith.constant 2.000000e-01 : f32
    %1303 = vector.broadcast %cst_571 : f32 to vector<16x32xf32>
    %1304 = arith.mulf %1303, %1300 : vector<16x32xf32>
    %1305 = arith.select %1302, %1300, %1304 : vector<16x32xi1>, vector<16x32xf32>
    %c0_572 = arith.constant 0 : index
    %c0_573 = arith.constant 0 : index
    %1306 = vector.load %arg5[%c0_572, %c0_573] : memref<16x32xf32, #tpu.memory_space<vmem>>, vector<16x32xf32>
    %1307 = arith.mulf %1305, %1306 : vector<16x32xf32>
    %cst_574 = arith.constant dense<0.000000e+00> : vector<32xf32>
    %1308 = vector.multi_reduction <add>, %1307, %cst_574 [0] : vector<16x32xf32> to vector<32xf32>
    %1309 = vector.shape_cast %1308 : vector<32xf32> to vector<1x32xf32>
    %1310 = tpu.iota {dimensions = array<i32: 1>} : vector<2x32xi32>
    %1311 = tpu.iota {dimensions = array<i32: 0>} : vector<2x32xi32>
    %c4_i32_575 = arith.constant 4 : i32
    %1312 = vector.broadcast %c4_i32_575 : i32 to vector<2x32xi32>
    %1313 = arith.shrsi %1310, %1312 : vector<2x32xi32>
    %1314 = arith.cmpi eq, %1313, %1311 : vector<2x32xi32>
    %cst_576 = arith.constant 0.000000e+00 : f32
    %1315 = vector.shape_cast %1309 : vector<1x32xf32> to vector<1x32xf32>
    %1316 = vector.broadcast %1315 : vector<1x32xf32> to vector<2x32xf32>
    %1317 = vector.broadcast %cst_576 : f32 to vector<2x32xf32>
    %1318 = arith.select %1314, %1316, %1317 : vector<2x32xi1>, vector<2x32xf32>
    %cst_577 = arith.constant dense<0.000000e+00> : vector<2xf32>
    %1319 = vector.multi_reduction <add>, %1318, %cst_577 [1] : vector<2x32xf32> to vector<2xf32>
    %1320 = vector.shape_cast %1319 : vector<2xf32> to vector<2x1xf32>
    %cst_578 = arith.constant 0.000000e+00 : f32
    %1321 = vector.broadcast %cst_578 : f32 to vector<2x1xf32>
    %1322 = arith.subf %1321, %1320 : vector<2x1xf32>
    %1323 = math.exp %1322 : vector<2x1xf32>
    %cst_579 = arith.constant 1.000000e+00 : f32
    %1324 = vector.broadcast %cst_579 : f32 to vector<2x1xf32>
    %1325 = arith.addf %1324, %1323 : vector<2x1xf32>
    %1326 = tpu.reciprocal %1325 {approx = true} : vector<2x1xf32> -> vector<2x1xf32>
    %c0_580 = arith.constant 0 : index
    %c0_581 = arith.constant 0 : index
    %1327 = vector.load %arg6[%c0_580, %c0_581] : memref<2x1xf32, #tpu.memory_space<vmem>>, vector<2x1xf32>
    tpu.vector_store %arg6[%c0_580, %c0_581], %1326 {strides = array<i32>} : memref<2x1xf32, #tpu.memory_space<vmem>>, vector<2x1xf32>,
    return
  }
}

</mosaic_0001>

<llo_original>
// kernel: tile.7
$region0: #{tile.7}
  %s0 = inlined_call_operand.vmem [shape: f32[16,2,16], index: 0, kind: input, shape index: {}]
  %s1 = inlined_call_operand.vmem [shape: f32[16,32], index: 1, kind: output, shape index: {}]
  $region1: #{tile.7} parent=0
    #allocation0 [shape = 'u8[65536]{0}', space=vmem, size = 0x10000, scoped, tag = 'scoped mem for input reshape']
    %s3 = sshllo.u32 0, 2
    %s4 = smul.addr 2, 15
    %s5 = scalar_lea.vmem %s0, %s4
    %v6 = vld [vmem:[%s5] sm:%s3]
    %s7 = scalar_lea.vmem [#allocation0], 120
    %8 = vst [vmem:[%s7] sm:%s3] %v6
    %s9 = smul.addr 2, 14
    %s10 = scalar_lea.vmem %s0, %s9
    %v11 = vld [vmem:[%s10] sm:%s3]
    %s12 = scalar_lea.vmem [#allocation0], 112
    %13 = vst [vmem:[%s12] sm:%s3] %v11
    %s14 = smul.addr 2, 13
    %s15 = scalar_lea.vmem %s0, %s14
    %v16 = vld [vmem:[%s15] sm:%s3]
    %s17 = scalar_lea.vmem [#allocation0], 104
    %18 = vst [vmem:[%s17] sm:%s3] %v16
    %s19 = smul.addr 2, 12
    %s20 = scalar_lea.vmem %s0, %s19
    %v21 = vld [vmem:[%s20] sm:%s3]
    %s22 = scalar_lea.vmem [#allocation0], 96
    %23 = vst [vmem:[%s22] sm:%s3] %v21
    %s24 = smul.addr 2, 11
    %s25 = scalar_lea.vmem %s0, %s24
    %v26 = vld [vmem:[%s25] sm:%s3]
    %s27 = scalar_lea.vmem [#allocation0], 88
    %28 = vst [vmem:[%s27] sm:%s3] %v26
    %s29 = smul.addr 2, 10
    %s30 = scalar_lea.vmem %s0, %s29
    %v31 = vld [vmem:[%s30] sm:%s3]
    %s32 = scalar_lea.vmem [#allocation0], 80
    %33 = vst [vmem:[%s32] sm:%s3] %v31
    %s34 = smul.addr 2, 9
    %s35 = scalar_lea.vmem %s0, %s34
    %v36 = vld [vmem:[%s35] sm:%s3]
    %s37 = scalar_lea.vmem [#allocation0], 72
    %38 = vst [vmem:[%s37] sm:%s3] %v36
    %s39 = smul.addr 2, 8
    %s40 = scalar_lea.vmem %s0, %s39
    %v41 = vld [vmem:[%s40] sm:%s3]
    %s42 = scalar_lea.vmem [#allocation0], 64
    %43 = vst [vmem:[%s42] sm:%s3] %v41
    %s44 = smul.addr 2, 7
    %s45 = scalar_lea.vmem %s0, %s44
    %v46 = vld [vmem:[%s45] sm:%s3]
    %s47 = scalar_lea.vmem [#allocation0], 56
    %48 = vst [vmem:[%s47] sm:%s3] %v46
    %s49 = smul.addr 2, 6
    %s50 = scalar_lea.vmem %s0, %s49
    %v51 = vld [vmem:[%s50] sm:%s3]
    %s52 = scalar_lea.vmem [#allocation0], 48
    %53 = vst [vmem:[%s52] sm:%s3] %v51
    %s54 = smul.addr 2, 5
    %s55 = scalar_lea.vmem %s0, %s54
    %v56 = vld [vmem:[%s55] sm:%s3]
    %s57 = scalar_lea.vmem [#allocation0], 40
    %58 = vst [vmem:[%s57] sm:%s3] %v56
    %s59 = smul.addr 2, 4
    %s60 = scalar_lea.vmem %s0, %s59
    %v61 = vld [vmem:[%s60] sm:%s3]
    %s62 = scalar_lea.vmem [#allocation0], 32
    %63 = vst [vmem:[%s62] sm:%s3] %v61
    %s64 = smul.addr 2, 3
    %s65 = scalar_lea.vmem %s0, %s64
    %v66 = vld [vmem:[%s65] sm:%s3]
    %s67 = scalar_lea.vmem [#allocation0], 24
    %68 = vst [vmem:[%s67] sm:%s3] %v66
    %s69 = smul.addr 2, 2
    %s70 = scalar_lea.vmem %s0, %s69
    %v71 = vld [vmem:[%s70] sm:%s3]
    %s72 = scalar_lea.vmem [#allocation0], 16
    %73 = vst [vmem:[%s72] sm:%s3] %v71
    %s74 = scalar_lea.vmem %s0, 2
    %v75 = vld [vmem:[%s74] sm:%s3]
    %s76 = scalar_lea.vmem [#allocation0], 8
    %77 = vst [vmem:[%s76] sm:%s3] %v75
    %v78 = vld [vmem:[%s0] sm:%s3]
    %79 = vst [vmem:[#allocation0] sm:%s3] %v78
    %v80 = vld [vmem:[#allocation0] ss:$8 sm:$0xf]
    %v81 = vld [vmem:[#allocation0] ss:$8 sm:$0xf0]
    %vm82 = vcmask 1047556
    %v83 = vsel %vm82, %v81, %v80
    %vm84 = vcmask 130048
    %85 = vst.msk [vmem:[%s1] sm:$0xff] %vm84, %v83
    %s86 = scalar_lea.vmem [#allocation0], 64
    %v87 = vld [vmem:[%s86] ss:$8 sm:$0xf]
    %s88 = scalar_lea.vmem [#allocation0], 64
    %v89 = vld [vmem:[%s88] ss:$8 sm:$0xf0]
    %vm90 = vcmask 1047556
    %v91 = vsel %vm90, %v89, %v87
    %vm92 = vcmask 130048
    %s93 = scalar_lea.vmem %s1, 8
    %94 = vst.msk [vmem:[%s93] sm:$0xff] %vm92, %v91
    %s95 = scalar_lea.vmem [#allocation0], 1
    %v96 = vld [vmem:[%s95] ss:$8 sm:$0xf]
    %s97 = scalar_lea.vmem [#allocation0], 1
    %v98 = vld [vmem:[%s97] ss:$8 sm:$0xf0]
    %vm99 = vcmask 1047556
    %v100 = vsel %vm99, %v98, %v96
    %101 = vrot.lane.b32.xlu0 %v100, 16
    %v102 = vpop.permute.xlu0 %101
    %vm103 = vcmask 261248
    %104 = vst.msk [vmem:[%s1] sm:$0xff] %vm103, %v102
    %s105 = scalar_lea.vmem [#allocation0], 65
    %v106 = vld [vmem:[%s105] ss:$8 sm:$0xf]
    %s107 = scalar_lea.vmem [#allocation0], 65
    %v108 = vld [vmem:[%s107] ss:$8 sm:$0xf0]
    %vm109 = vcmask 1047556
    %v110 = vsel %vm109, %v108, %v106
    %111 = vrot.lane.b32.xlu0 %v110, 16
    %v112 = vpop.permute.xlu0 %111
    %vm113 = vcmask 261248
    %s114 = scalar_lea.vmem %s1, 8
    %115 = vst.msk [vmem:[%s114] sm:$0xff] %vm113, %v112

// kernel: _lambda_.1
$region0: #{_lambda_.1}
  #allocation0 [shape = 'u32[]', space=smem, size = 0x4, offset = 0x4, fixed_abs, tag = 'smem constant byte address 0x4 - core index']
  #allocation1 [shape = 'u32[144,128]{1,0:T(1,128)}', space=vmem, size = 0x12000, scoped, tag = 'internal scratch']
  %s0 = inlined_call_operand.vmem [shape: bf16[3,512], index: 0, kind: input, shape index: {}]
  %s1 = inlined_call_operand.vmem [shape: bf16[16,8,3], index: 1, kind: input, shape index: {}]
  %s2 = inlined_call_operand.vmem [shape: bf16[16,16,8], index: 2, kind: input, shape index: {}]
  %s3 = inlined_call_operand.vmem [shape: f32[16,1], index: 3, kind: input, shape index: {}]
  %s4 = inlined_call_operand.vmem [shape: f32[16,1], index: 4, kind: input, shape index: {}]
  %s5 = inlined_call_operand.vmem [shape: f32[16,32], index: 5, kind: input, shape index: {}]
  %s6 = inlined_call_operand.vmem [shape: f32[2,1], index: 6, kind: output, shape index: {}]
  %s7 = sld [smem:[#allocation0]]
  $region34: #{_lambda_.1} parent=0
    _
  %s9 = ssub.s32 1, %s7
  %s10 = scalar_select 0, %s9, %s7
  // Predicated region
  $region2: #{_lambda_.1} parent=0 // pred_check
    _
  $region3: #{_lambda_.1} parent=0 // pred_check_branch
    %12 = sbr.rel (0) target = $region5
  $region4: #{_lambda_.1} parent=0 // pred_region
    _
  $region5: #{_lambda_.1} parent=0 // pred_fallthru
    _
  // Predicated region
  $region6: #{_lambda_.1} parent=0 // pred_check
    _
  $region7: #{_lambda_.1} parent=0 // pred_check_branch
    %14 = sbr.rel (0) target = $region9
  $region8: #{_lambda_.1} parent=0 // pred_region
    _
  $region9: #{_lambda_.1} parent=0 // pred_fallthru
    _
  // Predicated region
  $region10: #{_lambda_.1} parent=0 // pred_check
    _
  $region11: #{_lambda_.1} parent=0 // pred_check_branch
    %16 = sbr.rel (0) target = $region13
  $region12: #{_lambda_.1} parent=0 // pred_region
    _
  $region13: #{_lambda_.1} parent=0 // pred_fallthru
    _
  // Predicated region
  $region14: #{_lambda_.1} parent=0 // pred_check
    _
  $region15: #{_lambda_.1} parent=0 // pred_check_branch
    %18 = sbr.rel (0) target = $region17
  $region16: #{_lambda_.1} parent=0 // pred_region
    _
  $region17: #{_lambda_.1} parent=0 // pred_fallthru
    _
  // Predicated region
  $region18: #{_lambda_.1} parent=0 // pred_check
    _
  $region19: #{_lambda_.1} parent=0 // pred_check_branch
    %20 = sbr.rel (0) target = $region21
  $region20: #{_lambda_.1} parent=0 // pred_region
    _
  $region21: #{_lambda_.1} parent=0 // pred_fallthru
    _
  // Predicated region
  $region22: #{_lambda_.1} parent=0 // pred_check
    _
  $region23: #{_lambda_.1} parent=0 // pred_check_branch
    %22 = sbr.rel (0) target = $region25
  $region24: #{_lambda_.1} parent=0 // pred_region
    _
  $region25: #{_lambda_.1} parent=0 // pred_fallthru
    _
  %v24 = vld [vmem:[%s0] sm:$0xff]
  %v25 = vlaneseq
  %v26 = vand.u32 %v25, 127
  %v27 = vand.u32 %v26, 7
  %v28 = vshra.s32 %v26, 3
  %v29 = vand.u32 %v28, 7
  %v30 = vshra.s32 %v26, 6
  %v31 = vlaneseq
  %v32 = vshrl.u32 %v31, 7
  %v33 = vadd.s32 %v32, 8
  %v34 = vadd.s32 %v32, 16
  %v35 = vadd.s32 %v32, 24
  %v36 = vadd.s32 %v32, 32
  %v37 = vadd.s32 %v32, 40
  %v38 = vadd.s32 %v32, 48
  %v39 = vadd.s32 %v32, 56
  %v40 = vadd.s32 %v32, 64
  %v41 = vadd.s32 %v32, 72
  %v42 = vadd.s32 %v32, 80
  %v43 = vadd.s32 %v32, 88
  %v44 = vadd.s32 %v32, 96
  %v45 = vadd.s32 %v32, 104
  %v46 = vadd.s32 %v32, 112
  %v47 = vadd.s32 %v32, 120
  %v48 = vadd.s32 %v32, 128
  %v49 = vadd.s32 %v32, 136
  %v50 = vadd.s32 %v32, 144
  %v51 = vadd.s32 %v32, 152
  %v52 = vadd.s32 %v32, 160
  %v53 = vadd.s32 %v32, 168
  %v54 = vadd.s32 %v32, 176
  %v55 = vadd.s32 %v32, 184
  %v56 = vadd.s32 %v32, 192
  %v57 = vadd.s32 %v32, 200
  %v58 = vadd.s32 %v32, 208
  %v59 = vadd.s32 %v32, 216
  %v60 = vadd.s32 %v32, 224
  %v61 = vadd.s32 %v32, 232
  %v62 = vadd.s32 %v32, 240
  %v63 = vadd.s32 %v32, 248
  %v64 = vadd.s32 %v32, 256
  %v65 = vadd.s32 %v32, 264
  %v66 = vadd.s32 %v32, 272
  %v67 = vadd.s32 %v32, 280
  %v68 = vadd.s32 %v32, 288
  %v69 = vadd.s32 %v32, 296
  %v70 = vadd.s32 %v32, 304
  %v71 = vadd.s32 %v32, 312
  %v72 = vadd.s32 %v32, 320
  %v73 = vadd.s32 %v32, 328
  %v74 = vadd.s32 %v32, 336
  %v75 = vadd.s32 %v32, 344
  %v76 = vadd.s32 %v32, 352
  %v77 = vadd.s32 %v32, 360
  %v78 = vadd.s32 %v32, 368
  %v79 = vadd.s32 %v32, 376
  %v80 = vadd.s32 %v32, 384
  %v81 = vadd.s32 %v32, 392
  %v82 = vadd.s32 %v32, 400
  %v83 = vadd.s32 %v32, 408
  %v84 = vadd.s32 %v32, 416
  %v85 = vadd.s32 %v32, 424
  %v86 = vadd.s32 %v32, 432
  %v87 = vadd.s32 %v32, 440
  %v88 = vadd.s32 %v32, 448
  %v89 = vadd.s32 %v32, 456
  %v90 = vadd.s32 %v32, 464
  %v91 = vadd.s32 %v32, 472
  %v92 = vadd.s32 %v32, 480
  %v93 = vadd.s32 %v32, 488
  %v94 = vadd.s32 %v32, 496
  %v95 = vadd.s32 %v32, 504
  %v96 = vmul.u32 %v29, 2
  %v97 = vadd.s32 %v96, 4294967295
  %v98 = vmul.u32 %v27, 2
  %v99 = vadd.s32 %v98, 4294967295
  %vm100 = vcmp.ge.s32.totalorder %v97, 0
  %vm101 = vcmp.lt.s32.totalorder %v97, 16
  %vm102 = vmand %vm100, %vm101
  %vm103 = vcmp.ge.s32.totalorder %v99, 0
  %vm104 = vmand %vm102, %vm103
  %vm105 = vcmp.lt.s32.totalorder %v99, 16
  %vm106 = vmand %vm104, %vm105
  %v107 = vmul.u32 %v30, 256
  %v108 = vmul.u32 %v97, 16
  %v109 = vadd.s32 %v107, %v108
  %v110 = vadd.s32 %v109, %v99
  %v111 = vsel %vm106, %v110, 4294967295
  %vm112 = vcmp.eq.s32.totalorder %v32, %v111
  %vm113 = vcmp.eq.s32.totalorder %v33, %v111
  %vm114 = vcmp.eq.s32.totalorder %v34, %v111
  %vm115 = vcmp.eq.s32.totalorder %v35, %v111
  %vm116 = vcmp.eq.s32.totalorder %v36, %v111
  %vm117 = vcmp.eq.s32.totalorder %v37, %v111
  %vm118 = vcmp.eq.s32.totalorder %v38, %v111
  %vm119 = vcmp.eq.s32.totalorder %v39, %v111
  %vm120 = vcmp.eq.s32.totalorder %v40, %v111
  %vm121 = vcmp.eq.s32.totalorder %v41, %v111
  %vm122 = vcmp.eq.s32.totalorder %v42, %v111
  %vm123 = vcmp.eq.s32.totalorder %v43, %v111
  %vm124 = vcmp.eq.s32.totalorder %v44, %v111
  %vm125 = vcmp.eq.s32.totalorder %v45, %v111
  %vm126 = vcmp.eq.s32.totalorder %v46, %v111
  %vm127 = vcmp.eq.s32.totalorder %v47, %v111
  %vm128 = vcmp.eq.s32.totalorder %v48, %v111
  %vm129 = vcmp.eq.s32.totalorder %v49, %v111
  %vm130 = vcmp.eq.s32.totalorder %v50, %v111
  %vm131 = vcmp.eq.s32.totalorder %v51, %v111
  %vm132 = vcmp.eq.s32.totalorder %v52, %v111
  %vm133 = vcmp.eq.s32.totalorder %v53, %v111
  %vm134 = vcmp.eq.s32.totalorder %v54, %v111
  %vm135 = vcmp.eq.s32.totalorder %v55, %v111
  %vm136 = vcmp.eq.s32.totalorder %v56, %v111
  %vm137 = vcmp.eq.s32.totalorder %v57, %v111
  %vm138 = vcmp.eq.s32.totalorder %v58, %v111
  %vm139 = vcmp.eq.s32.totalorder %v59, %v111
  %vm140 = vcmp.eq.s32.totalorder %v60, %v111
  %vm141 = vcmp.eq.s32.totalorder %v61, %v111
  %vm142 = vcmp.eq.s32.totalorder %v62, %v111
  %vm143 = vcmp.eq.s32.totalorder %v63, %v111
  %vm144 = vcmp.eq.s32.totalorder %v64, %v111
  %vm145 = vcmp.eq.s32.totalorder %v65, %v111
  %vm146 = vcmp.eq.s32.totalorder %v66, %v111
  %vm147 = vcmp.eq.s32.totalorder %v67, %v111
  %vm148 = vcmp.eq.s32.totalorder %v68, %v111
  %vm149 = vcmp.eq.s32.totalorder %v69, %v111
  %vm150 = vcmp.eq.s32.totalorder %v70, %v111
  %vm151 = vcmp.eq.s32.totalorder %v71, %v111
  %vm152 = vcmp.eq.s32.totalorder %v72, %v111
  %vm153 = vcmp.eq.s32.totalorder %v73, %v111
  %vm154 = vcmp.eq.s32.totalorder %v74, %v111
  %vm155 = vcmp.eq.s32.totalorder %v75, %v111
  %vm156 = vcmp.eq.s32.totalorder %v76, %v111
  %vm157 = vcmp.eq.s32.totalorder %v77, %v111
  %vm158 = vcmp.eq.s32.totalorder %v78, %v111
  %vm159 = vcmp.eq.s32.totalorder %v79, %v111
  %vm160 = vcmp.eq.s32.totalorder %v80, %v111
  %vm161 = vcmp.eq.s32.totalorder %v81, %v111
  %vm162 = vcmp.eq.s32.totalorder %v82, %v111
  %vm163 = vcmp.eq.s32.totalorder %v83, %v111
  %vm164 = vcmp.eq.s32.totalorder %v84, %v111
  %vm165 = vcmp.eq.s32.totalorder %v85, %v111
  %vm166 = vcmp.eq.s32.totalorder %v86, %v111
  %vm167 = vcmp.eq.s32.totalorder %v87, %v111
  %vm168 = vcmp.eq.s32.totalorder %v88, %v111
  %vm169 = vcmp.eq.s32.totalorder %v89, %v111
  %vm170 = vcmp.eq.s32.totalorder %v90, %v111
  %vm171 = vcmp.eq.s32.totalorder %v91, %v111
  %vm172 = vcmp.eq.s32.totalorder %v92, %v111
  %vm173 = vcmp.eq.s32.totalorder %v93, %v111
  %vm174 = vcmp.eq.s32.totalorder %v94, %v111
  %vm175 = vcmp.eq.s32.totalorder %v95, %v111
  %v176 = vsel %vm112, 1.0, 0.0
  %v177 = vsel %vm113, 1.0, 0.0
  %v178 = vsel %vm114, 1.0, 0.0
  %v179 = vsel %vm115, 1.0, 0.0
  %v180 = vsel %vm116, 1.0, 0.0
  %v181 = vsel %vm117, 1.0, 0.0
  %v182 = vsel %vm118, 1.0, 0.0
  %v183 = vsel %vm119, 1.0, 0.0
  %v184 = vsel %vm120, 1.0, 0.0
  %v185 = vsel %vm121, 1.0, 0.0
  %v186 = vsel %vm122, 1.0, 0.0
  %v187 = vsel %vm123, 1.0, 0.0
  %v188 = vsel %vm124, 1.0, 0.0
  %v189 = vsel %vm125, 1.0, 0.0
  %v190 = vsel %vm126, 1.0, 0.0
  %v191 = vsel %vm127, 1.0, 0.0
  %v192 = vsel %vm128, 1.0, 0.0
  %v193 = vsel %vm129, 1.0, 0.0
  %v194 = vsel %vm130, 1.0, 0.0
  %v195 = vsel %vm131, 1.0, 0.0
  %v196 = vsel %vm132, 1.0, 0.0
  %v197 = vsel %vm133, 1.0, 0.0
  %v198 = vsel %vm134, 1.0, 0.0
  %v199 = vsel %vm135, 1.0, 0.0
  %v200 = vsel %vm136, 1.0, 0.0
  %v201 = vsel %vm137, 1.0, 0.0
  %v202 = vsel %vm138, 1.0, 0.0
  %v203 = vsel %vm139, 1.0, 0.0
  %v204 = vsel %vm140, 1.0, 0.0
  %v205 = vsel %vm141, 1.0, 0.0
  %v206 = vsel %vm142, 1.0, 0.0
  %v207 = vsel %vm143, 1.0, 0.0
  %v208 = vsel %vm144, 1.0, 0.0
  %v209 = vsel %vm145, 1.0, 0.0
  %v210 = vsel %vm146, 1.0, 0.0
  %v211 = vsel %vm147, 1.0, 0.0
  %v212 = vsel %vm148, 1.0, 0.0
  %v213 = vsel %vm149, 1.0, 0.0
  %v214 = vsel %vm150, 1.0, 0.0
  %v215 = vsel %vm151, 1.0, 0.0
  %v216 = vsel %vm152, 1.0, 0.0
  %v217 = vsel %vm153, 1.0, 0.0
  %v218 = vsel %vm154, 1.0, 0.0
  %v219 = vsel %vm155, 1.0, 0.0
  %v220 = vsel %vm156, 1.0, 0.0
  %v221 = vsel %vm157, 1.0, 0.0
  %v222 = vsel %vm158, 1.0, 0.0
  %v223 = vsel %vm159, 1.0, 0.0
  %v224 = vsel %vm160, 1.0, 0.0
  %v225 = vsel %vm161, 1.0, 0.0
  %v226 = vsel %vm162, 1.0, 0.0
  %v227 = vsel %vm163, 1.0, 0.0
  %v228 = vsel %vm164, 1.0, 0.0
  %v229 = vsel %vm165, 1.0, 0.0
  %v230 = vsel %vm166, 1.0, 0.0
  %v231 = vsel %vm167, 1.0, 0.0
  %v232 = vsel %vm168, 1.0, 0.0
  %v233 = vsel %vm169, 1.0, 0.0
  %v234 = vsel %vm170, 1.0, 0.0
  %v235 = vsel %vm171, 1.0, 0.0
  %v236 = vsel %vm172, 1.0, 0.0
  %v237 = vsel %vm173, 1.0, 0.0
  %v238 = vsel %vm174, 1.0, 0.0
  %v239 = vsel %vm175, 1.0, 0.0
  %v240 = vpack.c.bf16 %v177, %v176
  %v241 = vpack.c.bf16 %v179, %v178
  %v242 = vpack.c.bf16 %v181, %v180
  %v243 = vpack.c.bf16 %v183, %v182
  %v244 = vpack.c.bf16 %v185, %v184
  %v245 = vpack.c.bf16 %v187, %v186
  %v246 = vpack.c.bf16 %v189, %v188
  %v247 = vpack.c.bf16 %v191, %v190
  %v248 = vpack.c.bf16 %v193, %v192
  %v249 = vpack.c.bf16 %v195, %v194
  %v250 = vpack.c.bf16 %v197, %v196
  %v251 = vpack.c.bf16 %v199, %v198
  %v252 = vpack.c.bf16 %v201, %v200
  %v253 = vpack.c.bf16 %v203, %v202
  %v254 = vpack.c.bf16 %v205, %v204
  %v255 = vpack.c.bf16 %v207, %v206
  %v256 = vpack.c.bf16 %v209, %v208
  %v257 = vpack.c.bf16 %v211, %v210
  %v258 = vpack.c.bf16 %v213, %v212
  %v259 = vpack.c.bf16 %v215, %v214
  %v260 = vpack.c.bf16 %v217, %v216
  %v261 = vpack.c.bf16 %v219, %v218
  %v262 = vpack.c.bf16 %v221, %v220
  %v263 = vpack.c.bf16 %v223, %v222
  %v264 = vpack.c.bf16 %v225, %v224
  %v265 = vpack.c.bf16 %v227, %v226
  %v266 = vpack.c.bf16 %v229, %v228
  %v267 = vpack.c.bf16 %v231, %v230
  %v268 = vpack.c.bf16 %v233, %v232
  %v269 = vpack.c.bf16 %v235, %v234
  %v270 = vpack.c.bf16 %v237, %v236
  %v271 = vpack.c.bf16 %v239, %v238
  %v273 = vcombine.high %v24, %v24
  %v275 = vunpack.c.l.s4 1983009808
  %v276 = vunpack.c.0.s8 %v275
  %v277 = vlaneseq
  %v278 = vshrl.u32 %v277, 7
  %v279 = vsub.s32 %v276, %v278
  %v280 = vrot.slane %v24, %v279
  %v282 = vunpack.c.l.s4 1983009808
  %v283 = vunpack.c.0.s8 %v282
  %v284 = vlaneseq
  %v285 = vshrl.u32 %v284, 7
  %v286 = vsub.s32 %v283, %v285
  %v287 = vrot.slane %v273, %v286
  %v288 = vcombine.high %v280, %v280
  %v289 = vcombine.high %v287, %v287
  %294 = vmatprep.subr.bf16.mxu0 0
  %295 = vmatpush1.bf16.msra.mxu0 %v240
  %296 = vmatprep.subr.bf16.mxu0 0
  %297 = vmatpush1.bf16.msra.mxu0 %v241
  %298 = vmatprep.subr.bf16.mxu0 0
  %299 = vmatpush1.bf16.msra.mxu0 %v242
  %300 = vmatprep.subr.bf16.mxu0 0
  %301 = vmatpush1.bf16.msra.mxu0 %v243
  %302 = vmatprep.subr.bf16.mxu0 0
  %303 = vmatpush1.bf16.msra.mxu0 %v244
  %304 = vmatprep.subr.bf16.mxu0 0
  %305 = vmatpush1.bf16.msra.mxu0 %v245
  %306 = vmatprep.subr.bf16.mxu0 0
  %307 = vmatpush1.bf16.msra.mxu0 %v246
  %308 = vmatprep.subr.bf16.mxu0 0
  %309 = vmatpush1.bf16.msra.mxu0 %v247
  %310 = vmatprep.subr.bf16.mxu0 0
  %311 = vmatpush1.bf16.msra.mxu0 %v248
  %312 = vmatprep.subr.bf16.mxu0 0
  %313 = vmatpush1.bf16.msra.mxu0 %v249
  %314 = vmatprep.subr.bf16.mxu0 0
  %315 = vmatpush1.bf16.msra.mxu0 %v250
  %316 = vmatprep.subr.bf16.mxu0 0
  %317 = vmatpush1.bf16.msra.mxu0 %v251
  %318 = vmatprep.subr.bf16.mxu0 0
  %319 = vmatpush1.bf16.msra.mxu0 %v252
  %320 = vmatprep.subr.bf16.mxu0 0
  %321 = vmatpush1.bf16.msra.mxu0 %v253
  %322 = vmatprep.subr.bf16.mxu0 0
  %323 = vmatpush1.bf16.msra.mxu0 %v254
  %324 = vmatprep.subr.bf16.mxu0 0
  %325 = vmatpush1.bf16.msra.mxu0 %v255
  %326 = vmatprep.mubr.bf16.mxu0 %v288
  %327 = vmatmul.mubr.bf16.gmra.mrb[0].mxu0 %v280
  %v328 = vpop.f32.mrb[0].mxu0
  %v329 = vadd.f32 0.0, %v328
  %v330 = vpop.f32.mrb[0].mxu0
  %v331 = vpop.f32.mrb[0].mxu0
  %v332 = vpop.f32.mrb[0].mxu0
  %333 = vdwg.mxu0
  %334 = vmatprep.subr.bf16.mxu0 0
  %335 = vmatpush1.bf16.msra.mxu0 %v256
  %336 = vmatprep.subr.bf16.mxu0 0
  %337 = vmatpush1.bf16.msra.mxu0 %v257
  %338 = vmatprep.subr.bf16.mxu0 0
  %339 = vmatpush1.bf16.msra.mxu0 %v258
  %340 = vmatprep.subr.bf16.mxu0 0
  %341 = vmatpush1.bf16.msra.mxu0 %v259
  %342 = vmatprep.subr.bf16.mxu0 0
  %343 = vmatpush1.bf16.msra.mxu0 %v260
  %344 = vmatprep.subr.bf16.mxu0 0
  %345 = vmatpush1.bf16.msra.mxu0 %v261
  %346 = vmatprep.subr.bf16.mxu0 0
  %347 = vmatpush1.bf16.msra.mxu0 %v262
  %348 = vmatprep.subr.bf16.mxu0 0
  %349 = vmatpush1.bf16.msra.mxu0 %v263
  %350 = vmatprep.subr.bf16.mxu0 0
  %351 = vmatpush1.bf16.msra.mxu0 %v264
  %352 = vmatprep.subr.bf16.mxu0 0
  %353 = vmatpush1.bf16.msra.mxu0 %v265
  %354 = vmatprep.subr.bf16.mxu0 0
  %355 = vmatpush1.bf16.msra.mxu0 %v266
  %356 = vmatprep.subr.bf16.mxu0 0
  %357 = vmatpush1.bf16.msra.mxu0 %v267
  %358 = vmatprep.subr.bf16.mxu0 0
  %359 = vmatpush1.bf16.msra.mxu0 %v268
  %360 = vmatprep.subr.bf16.mxu0 0
  %361 = vmatpush1.bf16.msra.mxu0 %v269
  %362 = vmatprep.subr.bf16.mxu0 0
  %363 = vmatpush1.bf16.msra.mxu0 %v270
  %364 = vmatprep.subr.bf16.mxu0 0
  %365 = vmatpush1.bf16.msra.mxu0 %v271
  %366 = vmatprep.mubr.bf16.mxu0 %v289
  %367 = vmatmul.mubr.bf16.gmra.mrb[0].mxu0 %v287
  %v368 = vpop.f32.mrb[0].mxu0
  %v369 = vadd.f32 %v329, %v368
  %v370 = vpop.f32.mrb[0].mxu0
  %v371 = vpop.f32.mrb[0].mxu0
  %v372 = vpop.f32.mrb[0].mxu0
  %373 = vdwg.mxu0
  %v374 = vld [vmem:[%s1] sm:$0xf]
  %v375 = vpack.c.bf16 %v369, %v369
  %vm376 = vcmp.ge.s32.totalorder %v98, 0
  %vm377 = vmand %vm102, %vm376
  %vm378 = vcmp.lt.s32.totalorder %v98, 16
  %vm379 = vmand %vm377, %vm378
  %v380 = vadd.s32 %v109, %v98
  %v381 = vsel %vm379, %v380, 4294967295
  %vm382 = vcmp.eq.s32.totalorder %v32, %v381
  %vm383 = vcmp.eq.s32.totalorder %v33, %v381
  %vm384 = vcmp.eq.s32.totalorder %v34, %v381
  %vm385 = vcmp.eq.s32.totalorder %v35, %v381
  %vm386 = vcmp.eq.s32.totalorder %v36, %v381
  %vm387 = vcmp.eq.s32.totalorder %v37, %v381
  %vm388 = vcmp.eq.s32.totalorder %v38, %v381
  %vm389 = vcmp.eq.s32.totalorder %v39, %v381
  %vm390 = vcmp.eq.s32.totalorder %v40, %v381
  %vm391 = vcmp.eq.s32.totalorder %v41, %v381
  %vm392 = vcmp.eq.s32.totalorder %v42, %v381
  %vm393 = vcmp.eq.s32.totalorder %v43, %v381
  %vm394 = vcmp.eq.s32.totalorder %v44, %v381
  %vm395 = vcmp.eq.s32.totalorder %v45, %v381
  %vm396 = vcmp.eq.s32.totalorder %v46, %v381
  %vm397 = vcmp.eq.s32.totalorder %v47, %v381
  %vm398 = vcmp.eq.s32.totalorder %v48, %v381
  %vm399 = vcmp.eq.s32.totalorder %v49, %v381
  %vm400 = vcmp.eq.s32.totalorder %v50, %v381
  %vm401 = vcmp.eq.s32.totalorder %v51, %v381
  %vm402 = vcmp.eq.s32.totalorder %v52, %v381
  %vm403 = vcmp.eq.s32.totalorder %v53, %v381
  %vm404 = vcmp.eq.s32.totalorder %v54, %v381
  %vm405 = vcmp.eq.s32.totalorder %v55, %v381
  %vm406 = vcmp.eq.s32.totalorder %v56, %v381
  %vm407 = vcmp.eq.s32.totalorder %v57, %v381
  %vm408 = vcmp.eq.s32.totalorder %v58, %v381
  %vm409 = vcmp.eq.s32.totalorder %v59, %v381
  %vm410 = vcmp.eq.s32.totalorder %v60, %v381
  %vm411 = vcmp.eq.s32.totalorder %v61, %v381
  %vm412 = vcmp.eq.s32.totalorder %v62, %v381
  %vm413 = vcmp.eq.s32.totalorder %v63, %v381
  %vm414 = vcmp.eq.s32.totalorder %v64, %v381
  %vm415 = vcmp.eq.s32.totalorder %v65, %v381
  %vm416 = vcmp.eq.s32.totalorder %v66, %v381
  %vm417 = vcmp.eq.s32.totalorder %v67, %v381
  %vm418 = vcmp.eq.s32.totalorder %v68, %v381
  %vm419 = vcmp.eq.s32.totalorder %v69, %v381
  %vm420 = vcmp.eq.s32.totalorder %v70, %v381
  %vm421 = vcmp.eq.s32.totalorder %v71, %v381
  %vm422 = vcmp.eq.s32.totalorder %v72, %v381
  %vm423 = vcmp.eq.s32.totalorder %v73, %v381
  %vm424 = vcmp.eq.s32.totalorder %v74, %v381
  %vm425 = vcmp.eq.s32.totalorder %v75, %v381
  %vm426 = vcmp.eq.s32.totalorder %v76, %v381
  %vm427 = vcmp.eq.s32.totalorder %v77, %v381
  %vm428 = vcmp.eq.s32.totalorder %v78, %v381
  %vm429 = vcmp.eq.s32.totalorder %v79, %v381
  %vm430 = vcmp.eq.s32.totalorder %v80, %v381
  %vm431 = vcmp.eq.s32.totalorder %v81, %v381
  %vm432 = vcmp.eq.s32.totalorder %v82, %v381
  %vm433 = vcmp.eq.s32.totalorder %v83, %v381
  %vm434 = vcmp.eq.s32.totalorder %v84, %v381
  %vm435 = vcmp.eq.s32.totalorder %v85, %v381
  %vm436 = vcmp.eq.s32.totalorder %v86, %v381
  %vm437 = vcmp.eq.s32.totalorder %v87, %v381
  %vm438 = vcmp.eq.s32.totalorder %v88, %v381
  %vm439 = vcmp.eq.s32.totalorder %v89, %v381
  %vm440 = vcmp.eq.s32.totalorder %v90, %v381
  %vm441 = vcmp.eq.s32.totalorder %v91, %v381
  %vm442 = vcmp.eq.s32.totalorder %v92, %v381
  %vm443 = vcmp.eq.s32.totalorder %v93, %v381
  %vm444 = vcmp.eq.s32.totalorder %v94, %v381
  %vm445 = vcmp.eq.s32.totalorder %v95, %v381
  %v446 = vsel %vm382, 1.0, 0.0
  %v447 = vsel %vm383, 1.0, 0.0
  %v448 = vsel %vm384, 1.0, 0.0
  %v449 = vsel %vm385, 1.0, 0.0
  %v450 = vsel %vm386, 1.0, 0.0
  %v451 = vsel %vm387, 1.0, 0.0
  %v452 = vsel %vm388, 1.0, 0.0
  %v453 = vsel %vm389, 1.0, 0.0
  %v454 = vsel %vm390, 1.0, 0.0
  %v455 = vsel %vm391, 1.0, 0.0
  %v456 = vsel %vm392, 1.0, 0.0
  %v457 = vsel %vm393, 1.0, 0.0
  %v458 = vsel %vm394, 1.0, 0.0
  %v459 = vsel %vm395, 1.0, 0.0
  %v460 = vsel %vm396, 1.0, 0.0
  %v461 = vsel %vm397, 1.0, 0.0
  %v462 = vsel %vm398, 1.0, 0.0
  %v463 = vsel %vm399, 1.0, 0.0
  %v464 = vsel %vm400, 1.0, 0.0
  %v465 = vsel %vm401, 1.0, 0.0
  %v466 = vsel %vm402, 1.0, 0.0
  %v467 = vsel %vm403, 1.0, 0.0
  %v468 = vsel %vm404, 1.0, 0.0
  %v469 = vsel %vm405, 1.0, 0.0
  %v470 = vsel %vm406, 1.0, 0.0
  %v471 = vsel %vm407, 1.0, 0.0
  %v472 = vsel %vm408, 1.0, 0.0
  %v473 = vsel %vm409, 1.0, 0.0
  %v474 = vsel %vm410, 1.0, 0.0
  %v475 = vsel %vm411, 1.0, 0.0
  %v476 = vsel %vm412, 1.0, 0.0
  %v477 = vsel %vm413, 1.0, 0.0
  %v478 = vsel %vm414, 1.0, 0.0
  %v479 = vsel %vm415, 1.0, 0.0
  %v480 = vsel %vm416, 1.0, 0.0
  %v481 = vsel %vm417, 1.0, 0.0
  %v482 = vsel %vm418, 1.0, 0.0
  %v483 = vsel %vm419, 1.0, 0.0
  %v484 = vsel %vm420, 1.0, 0.0
  %v485 = vsel %vm421, 1.0, 0.0
  %v486 = vsel %vm422, 1.0, 0.0
  %v487 = vsel %vm423, 1.0, 0.0
  %v488 = vsel %vm424, 1.0, 0.0
  %v489 = vsel %vm425, 1.0, 0.0
  %v490 = vsel %vm426, 1.0, 0.0
  %v491 = vsel %vm427, 1.0, 0.0
  %v492 = vsel %vm428, 1.0, 0.0
  %v493 = vsel %vm429, 1.0, 0.0
  %v494 = vsel %vm430, 1.0, 0.0
  %v495 = vsel %vm431, 1.0, 0.0
  %v496 = vsel %vm432, 1.0, 0.0
  %v497 = vsel %vm433, 1.0, 0.0
  %v498 = vsel %vm434, 1.0, 0.0
  %v499 = vsel %vm435, 1.0, 0.0
  %v500 = vsel %vm436, 1.0, 0.0
  %v501 = vsel %vm437, 1.0, 0.0
  %v502 = vsel %vm438, 1.0, 0.0
  %v503 = vsel %vm439, 1.0, 0.0
  %v504 = vsel %vm440, 1.0, 0.0
  %v505 = vsel %vm441, 1.0, 0.0
  %v506 = vsel %vm442, 1.0, 0.0
  %v507 = vsel %vm443, 1.0, 0.0
  %v508 = vsel %vm444, 1.0, 0.0
  %v509 = vsel %vm445, 1.0, 0.0
  %v510 = vpack.c.bf16 %v447, %v446
  %v511 = vpack.c.bf16 %v449, %v448
  %v512 = vpack.c.bf16 %v451, %v450
  %v513 = vpack.c.bf16 %v453, %v452
  %v514 = vpack.c.bf16 %v455, %v454
  %v515 = vpack.c.bf16 %v457, %v456
  %v516 = vpack.c.bf16 %v459, %v458
  %v517 = vpack.c.bf16 %v461, %v460
  %v518 = vpack.c.bf16 %v463, %v462
  %v519 = vpack.c.bf16 %v465, %v464
  %v520 = vpack.c.bf16 %v467, %v466
  %v521 = vpack.c.bf16 %v469, %v468
  %v522 = vpack.c.bf16 %v471, %v470
  %v523 = vpack.c.bf16 %v473, %v472
  %v524 = vpack.c.bf16 %v475, %v474
  %v525 = vpack.c.bf16 %v477, %v476
  %v526 = vpack.c.bf16 %v479, %v478
  %v527 = vpack.c.bf16 %v481, %v480
  %v528 = vpack.c.bf16 %v483, %v482
  %v529 = vpack.c.bf16 %v485, %v484
  %v530 = vpack.c.bf16 %v487, %v486
  %v531 = vpack.c.bf16 %v489, %v488
  %v532 = vpack.c.bf16 %v491, %v490
  %v533 = vpack.c.bf16 %v493, %v492
  %v534 = vpack.c.bf16 %v495, %v494
  %v535 = vpack.c.bf16 %v497, %v496
  %v536 = vpack.c.bf16 %v499, %v498
  %v537 = vpack.c.bf16 %v501, %v500
  %v538 = vpack.c.bf16 %v503, %v502
  %v539 = vpack.c.bf16 %v505, %v504
  %v540 = vpack.c.bf16 %v507, %v506
  %v541 = vpack.c.bf16 %v509, %v508
  %542 = vmatprep.subr.bf16.mxu0 0
  %543 = vmatpush1.bf16.msra.mxu0 %v510
  %544 = vmatprep.subr.bf16.mxu0 0
  %545 = vmatpush1.bf16.msra.mxu0 %v511
  %546 = vmatprep.subr.bf16.mxu0 0
  %547 = vmatpush1.bf16.msra.mxu0 %v512
  %548 = vmatprep.subr.bf16.mxu0 0
  %549 = vmatpush1.bf16.msra.mxu0 %v513
  %550 = vmatprep.subr.bf16.mxu0 0
  %551 = vmatpush1.bf16.msra.mxu0 %v514
  %552 = vmatprep.subr.bf16.mxu0 0
  %553 = vmatpush1.bf16.msra.mxu0 %v515
  %554 = vmatprep.subr.bf16.mxu0 0
  %555 = vmatpush1.bf16.msra.mxu0 %v516
  %556 = vmatprep.subr.bf16.mxu0 0
  %557 = vmatpush1.bf16.msra.mxu0 %v517
  %558 = vmatprep.subr.bf16.mxu0 0
  %559 = vmatpush1.bf16.msra.mxu0 %v518
  %560 = vmatprep.subr.bf16.mxu0 0
  %561 = vmatpush1.bf16.msra.mxu0 %v519
  %562 = vmatprep.subr.bf16.mxu0 0
  %563 = vmatpush1.bf16.msra.mxu0 %v520
  %564 = vmatprep.subr.bf16.mxu0 0
  %565 = vmatpush1.bf16.msra.mxu0 %v521
  %566 = vmatprep.subr.bf16.mxu0 0
  %567 = vmatpush1.bf16.msra.mxu0 %v522
  %568 = vmatprep.subr.bf16.mxu0 0
  %569 = vmatpush1.bf16.msra.mxu0 %v523
  %570 = vmatprep.subr.bf16.mxu0 0
  %571 = vmatpush1.bf16.msra.mxu0 %v524
  %572 = vmatprep.subr.bf16.mxu0 0
  %573 = vmatpush1.bf16.msra.mxu0 %v525
  %574 = vmatprep.mubr.bf16.mxu0 %v288
  %575 = vmatmul.mubr.bf16.gmra.mrb[0].mxu0 %v280
  %v576 = vpop.f32.mrb[0].mxu0
  %v577 = vadd.f32 0.0, %v576
  %v578 = vpop.f32.mrb[0].mxu0
  %v579 = vpop.f32.mrb[0].mxu0
  %v580 = vpop.f32.mrb[0].mxu0
  %581 = vdwg.mxu0
  %582 = vmatprep.subr.bf16.mxu0 0
  %583 = vmatpush1.bf16.msra.mxu0 %v526
  %584 = vmatprep.subr.bf16.mxu0 0
  %585 = vmatpush1.bf16.msra.mxu0 %v527
  %586 = vmatprep.subr.bf16.mxu0 0
  %587 = vmatpush1.bf16.msra.mxu0 %v528
  %588 = vmatprep.subr.bf16.mxu0 0
  %589 = vmatpush1.bf16.msra.mxu0 %v529
  %590 = vmatprep.subr.bf16.mxu0 0
  %591 = vmatpush1.bf16.msra.mxu0 %v530
  %592 = vmatprep.subr.bf16.mxu0 0
  %593 = vmatpush1.bf16.msra.mxu0 %v531
  %594 = vmatprep.subr.bf16.mxu0 0
  %595 = vmatpush1.bf16.msra.mxu0 %v532
  %596 = vmatprep.subr.bf16.mxu0 0
  %597 = vmatpush1.bf16.msra.mxu0 %v533
  %598 = vmatprep.subr.bf16.mxu0 0
  %599 = vmatpush1.bf16.msra.mxu0 %v534
  %600 = vmatprep.subr.bf16.mxu0 0
  %601 = vmatpush1.bf16.msra.mxu0 %v535
  %602 = vmatprep.subr.bf16.mxu0 0
  %603 = vmatpush1.bf16.msra.mxu0 %v536
  %604 = vmatprep.subr.bf16.mxu0 0
  %605 = vmatpush1.bf16.msra.mxu0 %v537
  %606 = vmatprep.subr.bf16.mxu0 0
  %607 = vmatpush1.bf16.msra.mxu0 %v538
  %608 = vmatprep.subr.bf16.mxu0 0
  %609 = vmatpush1.bf16.msra.mxu0 %v539
  %610 = vmatprep.subr.bf16.mxu0 0
  %611 = vmatpush1.bf16.msra.mxu0 %v540
  %612 = vmatprep.subr.bf16.mxu0 0
  %613 = vmatpush1.bf16.msra.mxu0 %v541
  %614 = vmatprep.mubr.bf16.mxu0 %v289
  %615 = vmatmul.mubr.bf16.gmra.mrb[0].mxu0 %v287
  %v616 = vpop.f32.mrb[0].mxu0
  %v617 = vadd.f32 %v577, %v616
  %v618 = vpop.f32.mrb[0].mxu0
  %v619 = vpop.f32.mrb[0].mxu0
  %v620 = vpop.f32.mrb[0].mxu0
  %621 = vdwg.mxu0
  %s622 = scalar_lea.vmem %s1, 4
  %v623 = vld [vmem:[%s622] sm:$0xf]
  %v624 = vpack.c.bf16 %v617, %v617
  %vm625 = vcmask 23552
  %v627 = vsel %vm625, %v623, 0
  %vm629 = vcmask 1040384
  %vm630 = vcmask 1041408
  %v631 = vsel %vm629, 4294967295, 65535
  %v632 = vsel %vm630, %v631, 0
  %v634 = vand.u32 %v624, %v632
  %636 = vmatprep.subr.bf16.mxu0 0
  %637 = vmatpush1.bf16.msra.mxu0 %v634
  %638 = vmatprep.subr.bf16.mxu0 0
  %639 = vmatpush1.bf16.msra.mxu0 0
  %640 = vmatprep.subr.bf16.mxu0 0
  %641 = vmatpush1.bf16.msra.mxu0 0
  %642 = vmatprep.subr.bf16.mxu0 0
  %643 = vmatpush1.bf16.msra.mxu0 0
  %644 = vmatprep.subr.bf16.mxu0 0
  %645 = vmatpush1.bf16.msra.mxu0 0
  %646 = vmatprep.subr.bf16.mxu0 0
  %647 = vmatpush1.bf16.msra.mxu0 0
  %648 = vmatprep.subr.bf16.mxu0 0
  %649 = vmatpush1.bf16.msra.mxu0 0
  %650 = vmatprep.subr.bf16.mxu0 0
  %651 = vmatpush1.bf16.msra.mxu0 0
  %652 = vmatprep.subr.bf16.mxu0 0
  %653 = vmatpush1.bf16.msra.mxu0 0
  %654 = vmatprep.subr.bf16.mxu0 0
  %655 = vmatpush1.bf16.msra.mxu0 0
  %656 = vmatprep.subr.bf16.mxu0 0
  %657 = vmatpush1.bf16.msra.mxu0 0
  %658 = vmatprep.subr.bf16.mxu0 0
  %659 = vmatpush1.bf16.msra.mxu0 0
  %660 = vmatprep.subr.bf16.mxu0 0
  %661 = vmatpush1.bf16.msra.mxu0 0
  %662 = vmatprep.subr.bf16.mxu0 0
  %663 = vmatpush1.bf16.msra.mxu0 0
  %664 = vmatprep.subr.bf16.mxu0 0
  %665 = vmatpush1.bf16.msra.mxu0 0
  %666 = vmatprep.subr.bf16.mxu0 0
  %667 = vmatpush1.bf16.msra.mxu0 0
  %668 = vmatprep.mubr.bf16.mxu0 0
  %669 = vmatmul.mubr.bf16.gmra.mrb[0].mxu0 %v627
  %v670 = vpop.f32.mrb[0].mxu0
  %v671 = vadd.f32 0.0, %v670
  %v672 = vpop.f32.mrb[0].mxu0
  %v673 = vpop.f32.mrb[0].mxu0
  %v674 = vpop.f32.mrb[0].mxu0
  %675 = vdwg.mxu0
  %v677 = vsel %vm625, %v374, 0
  %v680 = vand.u32 %v375, %v632
  %682 = vmatprep.subr.bf16.mxu0 0
  %683 = vmatpush1.bf16.msra.mxu0 %v680
  %684 = vmatprep.subr.bf16.mxu0 0
  %685 = vmatpush1.bf16.msra.mxu0 0
  %686 = vmatprep.subr.bf16.mxu0 0
  %687 = vmatpush1.bf16.msra.mxu0 0
  %688 = vmatprep.subr.bf16.mxu0 0
  %689 = vmatpush1.bf16.msra.mxu0 0
  %690 = vmatprep.subr.bf16.mxu0 0
  %691 = vmatpush1.bf16.msra.mxu0 0
  %692 = vmatprep.subr.bf16.mxu0 0
  %693 = vmatpush1.bf16.msra.mxu0 0
  %694 = vmatprep.subr.bf16.mxu0 0
  %695 = vmatpush1.bf16.msra.mxu0 0
  %696 = vmatprep.subr.bf16.mxu0 0
  %697 = vmatpush1.bf16.msra.mxu0 0
  %698 = vmatprep.subr.bf16.mxu0 0
  %699 = vmatpush1.bf16.msra.mxu0 0
  %700 = vmatprep.subr.bf16.mxu0 0
  %701 = vmatpush1.bf16.msra.mxu0 0
  %702 = vmatprep.subr.bf16.mxu0 0
  %703 = vmatpush1.bf16.msra.mxu0 0
  %704 = vmatprep.subr.bf16.mxu0 0
  %705 = vmatpush1.bf16.msra.mxu0 0
  %706 = vmatprep.subr.bf16.mxu0 0
  %707 = vmatpush1.bf16.msra.mxu0 0
  %708 = vmatprep.subr.bf16.mxu0 0
  %709 = vmatpush1.bf16.msra.mxu0 0
  %710 = vmatprep.subr.bf16.mxu0 0
  %711 = vmatpush1.bf16.msra.mxu0 0
  %712 = vmatprep.subr.bf16.mxu0 0
  %713 = vmatpush1.bf16.msra.mxu0 0
  %714 = vmatprep.mubr.bf16.mxu0 0
  %715 = vmatmul.mubr.bf16.gmra.mrb[0].mxu0 %v677
  %v716 = vpop.f32.mrb[0].mxu0
  %v717 = vadd.f32 %v671, %v716
  %v718 = vpop.f32.mrb[0].mxu0
  %v719 = vpop.f32.mrb[0].mxu0
  %v720 = vpop.f32.mrb[0].mxu0
  %721 = vdwg.mxu0
  %v722 = vadd.s32 %v98, 1
  %vm723 = vcmp.ge.s32.totalorder %v722, 0
  %vm724 = vmand %vm102, %vm723
  %vm725 = vcmp.lt.s32.totalorder %v722, 16
  %vm726 = vmand %vm724, %vm725
  %v727 = vadd.s32 %v109, %v722
  %v728 = vsel %vm726, %v727, 4294967295
  %vm729 = vcmp.eq.s32.totalorder %v32, %v728
  %vm730 = vcmp.eq.s32.totalorder %v33, %v728
  %vm731 = vcmp.eq.s32.totalorder %v34, %v728
  %vm732 = vcmp.eq.s32.totalorder %v35, %v728
  %vm733 = vcmp.eq.s32.totalorder %v36, %v728
  %vm734 = vcmp.eq.s32.totalorder %v37, %v728
  %vm735 = vcmp.eq.s32.totalorder %v38, %v728
  %vm736 = vcmp.eq.s32.totalorder %v39, %v728
  %vm737 = vcmp.eq.s32.totalorder %v40, %v728
  %vm738 = vcmp.eq.s32.totalorder %v41, %v728
  %vm739 = vcmp.eq.s32.totalorder %v42, %v728
  %vm740 = vcmp.eq.s32.totalorder %v43, %v728
  %vm741 = vcmp.eq.s32.totalorder %v44, %v728
  %vm742 = vcmp.eq.s32.totalorder %v45, %v728
  %vm743 = vcmp.eq.s32.totalorder %v46, %v728
  %vm744 = vcmp.eq.s32.totalorder %v47, %v728
  %vm745 = vcmp.eq.s32.totalorder %v48, %v728
  %vm746 = vcmp.eq.s32.totalorder %v49, %v728
  %vm747 = vcmp.eq.s32.totalorder %v50, %v728
  %vm748 = vcmp.eq.s32.totalorder %v51, %v728
  %vm749 = vcmp.eq.s32.totalorder %v52, %v728
  %vm750 = vcmp.eq.s32.totalorder %v53, %v728
  %vm751 = vcmp.eq.s32.totalorder %v54, %v728
  %vm752 = vcmp.eq.s32.totalorder %v55, %v728
  %vm753 = vcmp.eq.s32.totalorder %v56, %v728
  %vm754 = vcmp.eq.s32.totalorder %v57, %v728
  %vm755 = vcmp.eq.s32.totalorder %v58, %v728
  %vm756 = vcmp.eq.s32.totalorder %v59, %v728
  %vm757 = vcmp.eq.s32.totalorder %v60, %v728
  %vm758 = vcmp.eq.s32.totalorder %v61, %v728
  %vm759 = vcmp.eq.s32.totalorder %v62, %v728
  %vm760 = vcmp.eq.s32.totalorder %v63, %v728
  %vm761 = vcmp.eq.s32.totalorder %v64, %v728
  %vm762 = vcmp.eq.s32.totalorder %v65, %v728
  %vm763 = vcmp.eq.s32.totalorder %v66, %v728
  %vm764 = vcmp.eq.s32.totalorder %v67, %v728
  %vm765 = vcmp.eq.s32.totalorder %v68, %v728
  %vm766 = vcmp.eq.s32.totalorder %v69, %v728
  %vm767 = vcmp.eq.s32.totalorder %v70, %v728
  %vm768 = vcmp.eq.s32.totalorder %v71, %v728
  %vm769 = vcmp.eq.s32.totalorder %v72, %v728
  %vm770 = vcmp.eq.s32.totalorder %v73, %v728
  %vm771 = vcmp.eq.s32.totalorder %v74, %v728
  %vm772 = vcmp.eq.s32.totalorder %v75, %v728
  %vm773 = vcmp.eq.s32.totalorder %v76, %v728
  %vm774 = vcmp.eq.s32.totalorder %v77, %v728
  %vm775 = vcmp.eq.s32.totalorder %v78, %v728
  %vm776 = vcmp.eq.s32.totalorder %v79, %v728
  %vm777 = vcmp.eq.s32.totalorder %v80, %v728
  %vm778 = vcmp.eq.s32.totalorder %v81, %v728
  %vm779 = vcmp.eq.s32.totalorder %v82, %v728
  %vm780 = vcmp.eq.s32.totalorder %v83, %v728
  %vm781 = vcmp.eq.s32.totalorder %v84, %v728
  %vm782 = vcmp.eq.s32.totalorder %v85, %v728
  %vm783 = vcmp.eq.s32.totalorder %v86, %v728
  %vm784 = vcmp.eq.s32.totalorder %v87, %v728
  %vm785 = vcmp.eq.s32.totalorder %v88, %v728
  %vm786 = vcmp.eq.s32.totalorder %v89, %v728
  %vm787 = vcmp.eq.s32.totalorder %v90, %v728
  %vm788 = vcmp.eq.s32.totalorder %v91, %v728
  %vm789 = vcmp.eq.s32.totalorder %v92, %v728
  %vm790 = vcmp.eq.s32.totalorder %v93, %v728
  %vm791 = vcmp.eq.s32.totalorder %v94, %v728
  %vm792 = vcmp.eq.s32.totalorder %v95, %v728
  %v793 = vsel %vm729, 1.0, 0.0
  %v794 = vsel %vm730, 1.0, 0.0
  %v795 = vsel %vm731, 1.0, 0.0
  %v796 = vsel %vm732, 1.0, 0.0
  %v797 = vsel %vm733, 1.0, 0.0
  %v798 = vsel %vm734, 1.0, 0.0
  %v799 = vsel %vm735, 1.0, 0.0
  %v800 = vsel %vm736, 1.0, 0.0
  %v801 = vsel %vm737, 1.0, 0.0
  %v802 = vsel %vm738, 1.0, 0.0
  %v803 = vsel %vm739, 1.0, 0.0
  %v804 = vsel %vm740, 1.0, 0.0
  %v805 = vsel %vm741, 1.0, 0.0
  %v806 = vsel %vm742, 1.0, 0.0
  %v807 = vsel %vm743, 1.0, 0.0
  %v808 = vsel %vm744, 1.0, 0.0
  %v809 = vsel %vm745, 1.0, 0.0
  %v810 = vsel %vm746, 1.0, 0.0
  %v811 = vsel %vm747, 1.0, 0.0
  %v812 = vsel %vm748, 1.0, 0.0
  %v813 = vsel %vm749, 1.0, 0.0
  %v814 = vsel %vm750, 1.0, 0.0
  %v815 = vsel %vm751, 1.0, 0.0
  %v816 = vsel %vm752, 1.0, 0.0
  %v817 = vsel %vm753, 1.0, 0.0
  %v818 = vsel %vm754, 1.0, 0.0
  %v819 = vsel %vm755, 1.0, 0.0
  %v820 = vsel %vm756, 1.0, 0.0
  %v821 = vsel %vm757, 1.0, 0.0
  %v822 = vsel %vm758, 1.0, 0.0
  %v823 = vsel %vm759, 1.0, 0.0
  %v824 = vsel %vm760, 1.0, 0.0
  %v825 = vsel %vm761, 1.0, 0.0
  %v826 = vsel %vm762, 1.0, 0.0
  %v827 = vsel %vm763, 1.0, 0.0
  %v828 = vsel %vm764, 1.0, 0.0
  %v829 = vsel %vm765, 1.0, 0.0
  %v830 = vsel %vm766, 1.0, 0.0
  %v831 = vsel %vm767, 1.0, 0.0
  %v832 = vsel %vm768, 1.0, 0.0
  %v833 = vsel %vm769, 1.0, 0.0
  %v834 = vsel %vm770, 1.0, 0.0
  %v835 = vsel %vm771, 1.0, 0.0
  %v836 = vsel %vm772, 1.0, 0.0
  %v837 = vsel %vm773, 1.0, 0.0
  %v838 = vsel %vm774, 1.0, 0.0
  %v839 = vsel %vm775, 1.0, 0.0
  %v840 = vsel %vm776, 1.0, 0.0
  %v841 = vsel %vm777, 1.0, 0.0
  %v842 = vsel %vm778, 1.0, 0.0
  %v843 = vsel %vm779, 1.0, 0.0
  %v844 = vsel %vm780, 1.0, 0.0
  %v845 = vsel %vm781, 1.0, 0.0
  %v846 = vsel %vm782, 1.0, 0.0
  %v847 = vsel %vm783, 1.0, 0.0
  %v848 = vsel %vm784, 1.0, 0.0
  %v849 = vsel %vm785, 1.0, 0.0
  %v850 = vsel %vm786, 1.0, 0.0
  %v851 = vsel %vm787, 1.0, 0.0
  %v852 = vsel %vm788, 1.0, 0.0
  %v853 = vsel %vm789, 1.0, 0.0
  %v854 = vsel %vm790, 1.0, 0.0
  %v855 = vsel %vm791, 1.0, 0.0
  %v856 = vsel %vm792, 1.0, 0.0
  %v857 = vpack.c.bf16 %v794, %v793
  %v858 = vpack.c.bf16 %v796, %v795
  %v859 = vpack.c.bf16 %v798, %v797
  %v860 = vpack.c.bf16 %v800, %v799
  %v861 = vpack.c.bf16 %v802, %v801
  %v862 = vpack.c.bf16 %v804, %v803
  %v863 = vpack.c.bf16 %v806, %v805
  %v864 = vpack.c.bf16 %v808, %v807
  %v865 = vpack.c.bf16 %v810, %v809
  %v866 = vpack.c.bf16 %v812, %v811
  %v867 = vpack.c.bf16 %v814, %v813
  %v868 = vpack.c.bf16 %v816, %v815
  %v869 = vpack.c.bf16 %v818, %v817
  %v870 = vpack.c.bf16 %v820, %v819
  %v871 = vpack.c.bf16 %v822, %v821
  %v872 = vpack.c.bf16 %v824, %v823
  %v873 = vpack.c.bf16 %v826, %v825
  %v874 = vpack.c.bf16 %v828, %v827
  %v875 = vpack.c.bf16 %v830, %v829
  %v876 = vpack.c.bf16 %v832, %v831
  %v877 = vpack.c.bf16 %v834, %v833
  %v878 = vpack.c.bf16 %v836, %v835
  %v879 = vpack.c.bf16 %v838, %v837
  %v880 = vpack.c.bf16 %v840, %v839
  %v881 = vpack.c.bf16 %v842, %v841
  %v882 = vpack.c.bf16 %v844, %v843
  %v883 = vpack.c.bf16 %v846, %v845
  %v884 = vpack.c.bf16 %v848, %v847
  %v885 = vpack.c.bf16 %v850, %v849
  %v886 = vpack.c.bf16 %v852, %v851
  %v887 = vpack.c.bf16 %v854, %v853
  %v888 = vpack.c.bf16 %v856, %v855
  %889 = vmatprep.subr.bf16.mxu0 0
  %890 = vmatpush1.bf16.msra.mxu0 %v857
  %891 = vmatprep.subr.bf16.mxu0 0
  %892 = vmatpush1.bf16.msra.mxu0 %v858
  %893 = vmatprep.subr.bf16.mxu0 0
  %894 = vmatpush1.bf16.msra.mxu0 %v859
  %895 = vmatprep.subr.bf16.mxu0 0
  %896 = vmatpush1.bf16.msra.mxu0 %v860
  %897 = vmatprep.subr.bf16.mxu0 0
  %898 = vmatpush1.bf16.msra.mxu0 %v861
  %899 = vmatprep.subr.bf16.mxu0 0
  %900 = vmatpush1.bf16.msra.mxu0 %v862
  %901 = vmatprep.subr.bf16.mxu0 0
  %902 = vmatpush1.bf16.msra.mxu0 %v863
  %903 = vmatprep.subr.bf16.mxu0 0
  %904 = vmatpush1.bf16.msra.mxu0 %v864
  %905 = vmatprep.subr.bf16.mxu0 0
  %906 = vmatpush1.bf16.msra.mxu0 %v865
  %907 = vmatprep.subr.bf16.mxu0 0
  %908 = vmatpush1.bf16.msra.mxu0 %v866
  %909 = vmatprep.subr.bf16.mxu0 0
  %910 = vmatpush1.bf16.msra.mxu0 %v867
  %911 = vmatprep.subr.bf16.mxu0 0
  %912 = vmatpush1.bf16.msra.mxu0 %v868
  %913 = vmatprep.subr.bf16.mxu0 0
  %914 = vmatpush1.bf16.msra.mxu0 %v869
  %915 = vmatprep.subr.bf16.mxu0 0
  %916 = vmatpush1.bf16.msra.mxu0 %v870
  %917 = vmatprep.subr.bf16.mxu0 0
  %918 = vmatpush1.bf16.msra.mxu0 %v871
  %919 = vmatprep.subr.bf16.mxu0 0
  %920 = vmatpush1.bf16.msra.mxu0 %v872
  %921 = vmatprep.mubr.bf16.mxu0 %v288
  %922 = vmatmul.mubr.bf16.gmra.mrb[0].mxu0 %v280
  %v923 = vpop.f32.mrb[0].mxu0
  %v924 = vadd.f32 0.0, %v923
  %v925 = vpop.f32.mrb[0].mxu0
  %v926 = vpop.f32.mrb[0].mxu0
  %v927 = vpop.f32.mrb[0].mxu0
  %928 = vdwg.mxu0
  %929 = vmatprep.subr.bf16.mxu0 0
  %930 = vmatpush1.bf16.msra.mxu0 %v873
  %931 = vmatprep.subr.bf16.mxu0 0
  %932 = vmatpush1.bf16.msra.mxu0 %v874
  %933 = vmatprep.subr.bf16.mxu0 0
  %934 = vmatpush1.bf16.msra.mxu0 %v875
  %935 = vmatprep.subr.bf16.mxu0 0
  %936 = vmatpush1.bf16.msra.mxu0 %v876
  %937 = vmatprep.subr.bf16.mxu0 0
  %938 = vmatpush1.bf16.msra.mxu0 %v877
  %939 = vmatprep.subr.bf16.mxu0 0
  %940 = vmatpush1.bf16.msra.mxu0 %v878
  %941 = vmatprep.subr.bf16.mxu0 0
  %942 = vmatpush1.bf16.msra.mxu0 %v879
  %943 = vmatprep.subr.bf16.mxu0 0
  %944 = vmatpush1.bf16.msra.mxu0 %v880
  %945 = vmatprep.subr.bf16.mxu0 0
  %946 = vmatpush1.bf16.msra.mxu0 %v881
  %947 = vmatprep.subr.bf16.mxu0 0
  %948 = vmatpush1.bf16.msra.mxu0 %v882
  %949 = vmatprep.subr.bf16.mxu0 0
  %950 = vmatpush1.bf16.msra.mxu0 %v883
  %951 = vmatprep.subr.bf16.mxu0 0
  %952 = vmatpush1.bf16.msra.mxu0 %v884
  %953 = vmatprep.subr.bf16.mxu0 0
  %954 = vmatpush1.bf16.msra.mxu0 %v885
  %955 = vmatprep.subr.bf16.mxu0 0
  %956 = vmatpush1.bf16.msra.mxu0 %v886
  %957 = vmatprep.subr.bf16.mxu0 0
  %958 = vmatpush1.bf16.msra.mxu0 %v887
  %959 = vmatprep.subr.bf16.mxu0 0
  %960 = vmatpush1.bf16.msra.mxu0 %v888
  %961 = vmatprep.mubr.bf16.mxu0 %v289
  %962 = vmatmul.mubr.bf16.gmra.mrb[0].mxu0 %v287
  %v963 = vpop.f32.mrb[0].mxu0
  %v964 = vadd.f32 %v924, %v963
  %v965 = vpop.f32.mrb[0].mxu0
  %v966 = vpop.f32.mrb[0].mxu0
  %v967 = vpop.f32.mrb[0].mxu0
  %968 = vdwg.mxu0
  %s969 = scalar_lea.vmem %s1, 8
  %v970 = vld [vmem:[%s969] sm:$0xf]
  %v971 = vpack.c.bf16 %v964, %v964
  %v973 = vsel %vm625, %v970, 0
  %v976 = vand.u32 %v971, %v632
  %978 = vmatprep.subr.bf16.mxu0 0
  %979 = vmatpush1.bf16.msra.mxu0 %v976
  %980 = vmatprep.subr.bf16.mxu0 0
  %981 = vmatpush1.bf16.msra.mxu0 0
  %982 = vmatprep.subr.bf16.mxu0 0
  %983 = vmatpush1.bf16.msra.mxu0 0
  %984 = vmatprep.subr.bf16.mxu0 0
  %985 = vmatpush1.bf16.msra.mxu0 0
  %986 = vmatprep.subr.bf16.mxu0 0
  %987 = vmatpush1.bf16.msra.mxu0 0
  %988 = vmatprep.subr.bf16.mxu0 0
  %989 = vmatpush1.bf16.msra.mxu0 0
  %990 = vmatprep.subr.bf16.mxu0 0
  %991 = vmatpush1.bf16.msra.mxu0 0
  %992 = vmatprep.subr.bf16.mxu0 0
  %993 = vmatpush1.bf16.msra.mxu0 0
  %994 = vmatprep.subr.bf16.mxu0 0
  %995 = vmatpush1.bf16.msra.mxu0 0
  %996 = vmatprep.subr.bf16.mxu0 0
  %997 = vmatpush1.bf16.msra.mxu0 0
  %998 = vmatprep.subr.bf16.mxu0 0
  %999 = vmatpush1.bf16.msra.mxu0 0
  %1000 = vmatprep.subr.bf16.mxu0 0
  %1001 = vmatpush1.bf16.msra.mxu0 0
  %1002 = vmatprep.subr.bf16.mxu0 0
  %1003 = vmatpush1.bf16.msra.mxu0 0
  %1004 = vmatprep.subr.bf16.mxu0 0
  %1005 = vmatpush1.bf16.msra.mxu0 0
  %1006 = vmatprep.subr.bf16.mxu0 0
  %1007 = vmatpush1.bf16.msra.mxu0 0
  %1008 = vmatprep.subr.bf16.mxu0 0
  %1009 = vmatpush1.bf16.msra.mxu0 0
  %1010 = vmatprep.mubr.bf16.mxu0 0
  %1011 = vmatmul.mubr.bf16.gmra.mrb[0].mxu0 %v973
  %v1012 = vpop.f32.mrb[0].mxu0
  %v1013 = vadd.f32 0.0, %v1012
  %v1014 = vpop.f32.mrb[0].mxu0
  %v1015 = vpop.f32.mrb[0].mxu0
  %v1016 = vpop.f32.mrb[0].mxu0
  %1017 = vdwg.mxu0
  %v1018 = vadd.f32 %v717, %v1013
  %v1019 = vadd.s32 %v98, 2
  %vm1020 = vcmp.ge.s32.totalorder %v1019, 0
  %vm1021 = vmand %vm102, %vm1020
  %vm1022 = vcmp.lt.s32.totalorder %v1019, 16
  %vm1023 = vmand %vm1021, %vm1022
  %v1024 = vadd.s32 %v109, %v1019
  %v1025 = vsel %vm1023, %v1024, 4294967295
  %vm1026 = vcmp.eq.s32.totalorder %v32, %v1025
  %vm1027 = vcmp.eq.s32.totalorder %v33, %v1025
  %vm1028 = vcmp.eq.s32.totalorder %v34, %v1025
  %vm1029 = vcmp.eq.s32.totalorder %v35, %v1025
  %vm1030 = vcmp.eq.s32.totalorder %v36, %v1025
  %vm1031 = vcmp.eq.s32.totalorder %v37, %v1025
  %vm1032 = vcmp.eq.s32.totalorder %v38, %v1025
  %vm1033 = vcmp.eq.s32.totalorder %v39, %v1025
  %vm1034 = vcmp.eq.s32.totalorder %v40, %v1025
  %vm1035 = vcmp.eq.s32.totalorder %v41, %v1025
  %vm1036 = vcmp.eq.s32.totalorder %v42, %v1025
  %vm1037 = vcmp.eq.s32.totalorder %v43, %v1025
  %vm1038 = vcmp.eq.s32.totalorder %v44, %v1025
  %vm1039 = vcmp.eq.s32.totalorder %v45, %v1025
  %vm1040 = vcmp.eq.s32.totalorder %v46, %v1025
  %vm1041 = vcmp.eq.s32.totalorder %v47, %v1025
  %vm1042 = vcmp.eq.s32.totalorder %v48, %v1025
  %vm1043 = vcmp.eq.s32.totalorder %v49, %v1025
  %vm1044 = vcmp.eq.s32.totalorder %v50, %v1025
  %vm1045 = vcmp.eq.s32.totalorder %v51, %v1025
  %vm1046 = vcmp.eq.s32.totalorder %v52, %v1025
  %vm1047 = vcmp.eq.s32.totalorder %v53, %v1025
  %vm1048 = vcmp.eq.s32.totalorder %v54, %v1025
  %vm1049 = vcmp.eq.s32.totalorder %v55, %v1025
  %vm1050 = vcmp.eq.s32.totalorder %v56, %v1025
  %vm1051 = vcmp.eq.s32.totalorder %v57, %v1025
  %vm1052 = vcmp.eq.s32.totalorder %v58, %v1025
  %vm1053 = vcmp.eq.s32.totalorder %v59, %v1025
  %vm1054 = vcmp.eq.s32.totalorder %v60, %v1025
  %vm1055 = vcmp.eq.s32.totalorder %v61, %v1025
  %vm1056 = vcmp.eq.s32.totalorder %v62, %v1025
  %vm1057 = vcmp.eq.s32.totalorder %v63, %v1025
  %vm1058 = vcmp.eq.s32.totalorder %v64, %v1025
  %vm1059 = vcmp.eq.s32.totalorder %v65, %v1025
  %vm1060 = vcmp.eq.s32.totalorder %v66, %v1025
  %vm1061 = vcmp.eq.s32.totalorder %v67, %v1025
  %vm1062 = vcmp.eq.s32.totalorder %v68, %v1025
  %vm1063 = vcmp.eq.s32.totalorder %v69, %v1025
  %vm1064 = vcmp.eq.s32.totalorder %v70, %v1025
  %vm1065 = vcmp.eq.s32.totalorder %v71, %v1025
  %vm1066 = vcmp.eq.s32.totalorder %v72, %v1025
  %vm1067 = vcmp.eq.s32.totalorder %v73, %v1025
  %vm1068 = vcmp.eq.s32.totalorder %v74, %v1025
  %vm1069 = vcmp.eq.s32.totalorder %v75, %v1025
  %vm1070 = vcmp.eq.s32.totalorder %v76, %v1025
  %vm1071 = vcmp.eq.s32.totalorder %v77, %v1025
  %vm1072 = vcmp.eq.s32.totalorder %v78, %v1025
  %vm1073 = vcmp.eq.s32.totalorder %v79, %v1025
  %vm1074 = vcmp.eq.s32.totalorder %v80, %v1025
  %vm1075 = vcmp.eq.s32.totalorder %v81, %v1025
  %vm1076 = vcmp.eq.s32.totalorder %v82, %v1025
  %vm1077 = vcmp.eq.s32.totalorder %v83, %v1025
  %vm1078 = vcmp.eq.s32.totalorder %v84, %v1025
  %vm1079 = vcmp.eq.s32.totalorder %v85, %v1025
  %vm1080 = vcmp.eq.s32.totalorder %v86, %v1025
  %vm1081 = vcmp.eq.s32.totalorder %v87, %v1025
  %vm1082 = vcmp.eq.s32.totalorder %v88, %v1025
  %vm1083 = vcmp.eq.s32.totalorder %v89, %v1025
  %vm1084 = vcmp.eq.s32.totalorder %v90, %v1025
  %vm1085 = vcmp.eq.s32.totalorder %v91, %v1025
  %vm1086 = vcmp.eq.s32.totalorder %v92, %v1025
  %vm1087 = vcmp.eq.s32.totalorder %v93, %v1025
  %vm1088 = vcmp.eq.s32.totalorder %v94, %v1025
  %vm1089 = vcmp.eq.s32.totalorder %v95, %v1025
  %v1090 = vsel %vm1026, 1.0, 0.0
  %v1091 = vsel %vm1027, 1.0, 0.0
  %v1092 = vsel %vm1028, 1.0, 0.0
  %v1093 = vsel %vm1029, 1.0, 0.0
  %v1094 = vsel %vm1030, 1.0, 0.0
  %v1095 = vsel %vm1031, 1.0, 0.0
  %v1096 = vsel %vm1032, 1.0, 0.0
  %v1097 = vsel %vm1033, 1.0, 0.0
  %v1098 = vsel %vm1034, 1.0, 0.0
  %v1099 = vsel %vm1035, 1.0, 0.0
  %v1100 = vsel %vm1036, 1.0, 0.0
  %v1101 = vsel %vm1037, 1.0, 0.0
  %v1102 = vsel %vm1038, 1.0, 0.0
  %v1103 = vsel %vm1039, 1.0, 0.0
  %v1104 = vsel %vm1040, 1.0, 0.0
  %v1105 = vsel %vm1041, 1.0, 0.0
  %v1106 = vsel %vm1042, 1.0, 0.0
  %v1107 = vsel %vm1043, 1.0, 0.0
  %v1108 = vsel %vm1044, 1.0, 0.0
  %v1109 = vsel %vm1045, 1.0, 0.0
  %v1110 = vsel %vm1046, 1.0, 0.0
  %v1111 = vsel %vm1047, 1.0, 0.0
  %v1112 = vsel %vm1048, 1.0, 0.0
  %v1113 = vsel %vm1049, 1.0, 0.0
  %v1114 = vsel %vm1050, 1.0, 0.0
  %v1115 = vsel %vm1051, 1.0, 0.0
  %v1116 = vsel %vm1052, 1.0, 0.0
  %v1117 = vsel %vm1053, 1.0, 0.0
  %v1118 = vsel %vm1054, 1.0, 0.0
  %v1119 = vsel %vm1055, 1.0, 0.0
  %v1120 = vsel %vm1056, 1.0, 0.0
  %v1121 = vsel %vm1057, 1.0, 0.0
  %v1122 = vsel %vm1058, 1.0, 0.0
  %v1123 = vsel %vm1059, 1.0, 0.0
  %v1124 = vsel %vm1060, 1.0, 0.0
  %v1125 = vsel %vm1061, 1.0, 0.0
  %v1126 = vsel %vm1062, 1.0, 0.0
  %v1127 = vsel %vm1063, 1.0, 0.0
  %v1128 = vsel %vm1064, 1.0, 0.0
  %v1129 = vsel %vm1065, 1.0, 0.0
  %v1130 = vsel %vm1066, 1.0, 0.0
  %v1131 = vsel %vm1067, 1.0, 0.0
  %v1132 = vsel %vm1068, 1.0, 0.0
  %v1133 = vsel %vm1069, 1.0, 0.0
  %v1134 = vsel %vm1070, 1.0, 0.0
  %v1135 = vsel %vm1071, 1.0, 0.0
  %v1136 = vsel %vm1072, 1.0, 0.0
  %v1137 = vsel %vm1073, 1.0, 0.0
  %v1138 = vsel %vm1074, 1.0, 0.0
  %v1139 = vsel %vm1075, 1.0, 0.0
  %v1140 = vsel %vm1076, 1.0, 0.0
  %v1141 = vsel %vm1077, 1.0, 0.0
  %v1142 = vsel %vm1078, 1.0, 0.0
  %v1143 = vsel %vm1079, 1.0, 0.0
  %v1144 = vsel %vm1080, 1.0, 0.0
  %v1145 = vsel %vm1081, 1.0, 0.0
  %v1146 = vsel %vm1082, 1.0, 0.0
  %v1147 = vsel %vm1083, 1.0, 0.0
  %v1148 = vsel %vm1084, 1.0, 0.0
  %v1149 = vsel %vm1085, 1.0, 0.0
  %v1150 = vsel %vm1086, 1.0, 0.0
  %v1151 = vsel %vm1087, 1.0, 0.0
  %v1152 = vsel %vm1088, 1.0, 0.0
  %v1153 = vsel %vm1089, 1.0, 0.0
  %v1154 = vpack.c.bf16 %v1091, %v1090
  %v1155 = vpack.c.bf16 %v1093, %v1092
  %v1156 = vpack.c.bf16 %v1095, %v1094
  %v1157 = vpack.c.bf16 %v1097, %v1096
  %v1158 = vpack.c.bf16 %v1099, %v1098
  %v1159 = vpack.c.bf16 %v1101, %v1100
  %v1160 = vpack.c.bf16 %v1103, %v1102
  %v1161 = vpack.c.bf16 %v1105, %v1104
  %v1162 = vpack.c.bf16 %v1107, %v1106
  %v1163 = vpack.c.bf16 %v1109, %v1108
  %v1164 = vpack.c.bf16 %v1111, %v1110
  %v1165 = vpack.c.bf16 %v1113, %v1112
  %v1166 = vpack.c.bf16 %v1115, %v1114
  %v1167 = vpack.c.bf16 %v1117, %v1116
  %v1168 = vpack.c.bf16 %v1119, %v1118
  %v1169 = vpack.c.bf16 %v1121, %v1120
  %v1170 = vpack.c.bf16 %v1123, %v1122
  %v1171 = vpack.c.bf16 %v1125, %v1124
  %v1172 = vpack.c.bf16 %v1127, %v1126
  %v1173 = vpack.c.bf16 %v1129, %v1128
  %v1174 = vpack.c.bf16 %v1131, %v1130
  %v1175 = vpack.c.bf16 %v1133, %v1132
  %v1176 = vpack.c.bf16 %v1135, %v1134
  %v1177 = vpack.c.bf16 %v1137, %v1136
  %v1178 = vpack.c.bf16 %v1139, %v1138
  %v1179 = vpack.c.bf16 %v1141, %v1140
  %v1180 = vpack.c.bf16 %v1143, %v1142
  %v1181 = vpack.c.bf16 %v1145, %v1144
  %v1182 = vpack.c.bf16 %v1147, %v1146
  %v1183 = vpack.c.bf16 %v1149, %v1148
  %v1184 = vpack.c.bf16 %v1151, %v1150
  %v1185 = vpack.c.bf16 %v1153, %v1152
  %1186 = vmatprep.subr.bf16.mxu0 0
  %1187 = vmatpush1.bf16.msra.mxu0 %v1154
  %1188 = vmatprep.subr.bf16.mxu0 0
  %1189 = vmatpush1.bf16.msra.mxu0 %v1155
  %1190 = vmatprep.subr.bf16.mxu0 0
  %1191 = vmatpush1.bf16.msra.mxu0 %v1156
  %1192 = vmatprep.subr.bf16.mxu0 0
  %1193 = vmatpush1.bf16.msra.mxu0 %v1157
  %1194 = vmatprep.subr.bf16.mxu0 0
  %1195 = vmatpush1.bf16.msra.mxu0 %v1158
  %1196 = vmatprep.subr.bf16.mxu0 0
  %1197 = vmatpush1.bf16.msra.mxu0 %v1159
  %1198 = vmatprep.subr.bf16.mxu0 0
  %1199 = vmatpush1.bf16.msra.mxu0 %v1160
  %1200 = vmatprep.subr.bf16.mxu0 0
  %1201 = vmatpush1.bf16.msra.mxu0 %v1161
  %1202 = vmatprep.subr.bf16.mxu0 0
  %1203 = vmatpush1.bf16.msra.mxu0 %v1162
  %1204 = vmatprep.subr.bf16.mxu0 0
  %1205 = vmatpush1.bf16.msra.mxu0 %v1163
  %1206 = vmatprep.subr.bf16.mxu0 0
  %1207 = vmatpush1.bf16.msra.mxu0 %v1164
  %1208 = vmatprep.subr.bf16.mxu0 0
  %1209 = vmatpush1.bf16.msra.mxu0 %v1165
  %1210 = vmatprep.subr.bf16.mxu0 0
  %1211 = vmatpush1.bf16.msra.mxu0 %v1166
  %1212 = vmatprep.subr.bf16.mxu0 0
  %1213 = vmatpush1.bf16.msra.mxu0 %v1167
  %1214 = vmatprep.subr.bf16.mxu0 0
  %1215 = vmatpush1.bf16.msra.mxu0 %v1168
  %1216 = vmatprep.subr.bf16.mxu0 0
  %1217 = vmatpush1.bf16.msra.mxu0 %v1169
  %1218 = vmatprep.mubr.bf16.mxu0 %v288
  %1219 = vmatmul.mubr.bf16.gmra.mrb[0].mxu0 %v280
  %v1220 = vpop.f32.mrb[0].mxu0
  %v1221 = vadd.f32 0.0, %v1220
  %v1222 = vpop.f32.mrb[0].mxu0
  %v1223 = vpop.f32.mrb[0].mxu0
  %v1224 = vpop.f32.mrb[0].mxu0
  %1225 = vdwg.mxu0
  %1226 = vmatprep.subr.bf16.mxu0 0
  %1227 = vmatpush1.bf16.msra.mxu0 %v1170
  %1228 = vmatprep.subr.bf16.mxu0 0
  %1229 = vmatpush1.bf16.msra.mxu0 %v1171
  %1230 = vmatprep.subr.bf16.mxu0 0
  %1231 = vmatpush1.bf16.msra.mxu0 %v1172
  %1232 = vmatprep.subr.bf16.mxu0 0
  %1233 = vmatpush1.bf16.msra.mxu0 %v1173
  %1234 = vmatprep.subr.bf16.mxu0 0
  %1235 = vmatpush1.bf16.msra.mxu0 %v1174
  %1236 = vmatprep.subr.bf16.mxu0 0
  %1237 = vmatpush1.bf16.msra.mxu0 %v1175
  %1238 = vmatprep.subr.bf16.mxu0 0
  %1239 = vmatpush1.bf16.msra.mxu0 %v1176
  %1240 = vmatprep.subr.bf16.mxu0 0
  %1241 = vmatpush1.bf16.msra.mxu0 %v1177
  %1242 = vmatprep.subr.bf16.mxu0 0
  %1243 = vmatpush1.bf16.msra.mxu0 %v1178
  %1244 = vmatprep.subr.bf16.mxu0 0
  %1245 = vmatpush1.bf16.msra.mxu0 %v1179
  %1246 = vmatprep.subr.bf16.mxu0 0
  %1247 = vmatpush1.bf16.msra.mxu0 %v1180
  %1248 = vmatprep.subr.bf16.mxu0 0
  %1249 = vmatpush1.bf16.msra.mxu0 %v1181
  %1250 = vmatprep.subr.bf16.mxu0 0
  %1251 = vmatpush1.bf16.msra.mxu0 %v1182
  %1252 = vmatprep.subr.bf16.mxu0 0
  %1253 = vmatpush1.bf16.msra.mxu0 %v1183
  %1254 = vmatprep.subr.bf16.mxu0 0
  %1255 = vmatpush1.bf16.msra.mxu0 %v1184
  %1256 = vmatprep.subr.bf16.mxu0 0
  %1257 = vmatpush1.bf16.msra.mxu0 %v1185
  %1258 = vmatprep.mubr.bf16.mxu0 %v289
  %1259 = vmatmul.mubr.bf16.gmra.mrb[0].mxu0 %v287
  %v1260 = vpop.f32.mrb[0].mxu0
  %v1261 = vadd.f32 %v1221, %v1260
  %v1262 = vpop.f32.mrb[0].mxu0
  %v1263 = vpop.f32.mrb[0].mxu0
  %v1264 = vpop.f32.mrb[0].mxu0
  %1265 = vdwg.mxu0
  %s1266 = scalar_lea.vmem %s1, 12
  %v1267 = vld [vmem:[%s1266] sm:$0xf]
  %v1268 = vpack.c.bf16 %v1261, %v1261
  %v1270 = vsel %vm625, %v1267, 0
  %v1273 = vand.u32 %v1268, %v632
  %1275 = vmatprep.subr.bf16.mxu0 0
  %1276 = vmatpush1.bf16.msra.mxu0 %v1273
  %1277 = vmatprep.subr.bf16.mxu0 0
  %1278 = vmatpush1.bf16.msra.mxu0 0
  %1279 = vmatprep.subr.bf16.mxu0 0
  %1280 = vmatpush1.bf16.msra.mxu0 0
  %1281 = vmatprep.subr.bf16.mxu0 0
  %1282 = vmatpush1.bf16.msra.mxu0 0
  %1283 = vmatprep.subr.bf16.mxu0 0
  %1284 = vmatpush1.bf16.msra.mxu0 0
  %1285 = vmatprep.subr.bf16.mxu0 0
  %1286 = vmatpush1.bf16.msra.mxu0 0
  %1287 = vmatprep.subr.bf16.mxu0 0
  %1288 = vmatpush1.bf16.msra.mxu0 0
  %1289 = vmatprep.subr.bf16.mxu0 0
  %1290 = vmatpush1.bf16.msra.mxu0 0
  %1291 = vmatprep.subr.bf16.mxu0 0
  %1292 = vmatpush1.bf16.msra.mxu0 0
  %1293 = vmatprep.subr.bf16.mxu0 0
  %1294 = vmatpush1.bf16.msra.mxu0 0
  %1295 = vmatprep.subr.bf16.mxu0 0
  %1296 = vmatpush1.bf16.msra.mxu0 0
  %1297 = vmatprep.subr.bf16.mxu0 0
  %1298 = vmatpush1.bf16.msra.mxu0 0
  %1299 = vmatprep.subr.bf16.mxu0 0
  %1300 = vmatpush1.bf16.msra.mxu0 0
  %1301 = vmatprep.subr.bf16.mxu0 0
  %1302 = vmatpush1.bf16.msra.mxu0 0
  %1303 = vmatprep.subr.bf16.mxu0 0
  %1304 = vmatpush1.bf16.msra.mxu0 0
  %1305 = vmatprep.subr.bf16.mxu0 0
  %1306 = vmatpush1.bf16.msra.mxu0 0
  %1307 = vmatprep.mubr.bf16.mxu0 0
  %1308 = vmatmul.mubr.bf16.gmra.mrb[0].mxu0 %v1270
  %v1309 = vpop.f32.mrb[0].mxu0
  %v1310 = vadd.f32 0.0, %v1309
  %v1311 = vpop.f32.mrb[0].mxu0
  %v1312 = vpop.f32.mrb[0].mxu0
  %v1313 = vpop.f32.mrb[0].mxu0
  %1314 = vdwg.mxu0
  %v1315 = vadd.f32 %v1018, %v1310
  %vm1316 = vcmp.ge.s32.totalorder %v96, 0
  %vm1317 = vcmp.lt.s32.totalorder %v96, 16
  %vm1318 = vmand %vm1316, %vm1317
  %vm1319 = vmand %vm1318, %vm103
  %vm1320 = vmand %vm1319, %vm105
  %v1321 = vmul.u32 %v96, 16
  %v1322 = vadd.s32 %v107, %v1321
  %v1323 = vadd.s32 %v1322, %v99
  %v1324 = vsel %vm1320, %v1323, 4294967295
  %vm1325 = vcmp.eq.s32.totalorder %v32, %v1324
  %vm1326 = vcmp.eq.s32.totalorder %v33, %v1324
  %vm1327 = vcmp.eq.s32.totalorder %v34, %v1324
  %vm1328 = vcmp.eq.s32.totalorder %v35, %v1324
  %vm1329 = vcmp.eq.s32.totalorder %v36, %v1324
  %vm1330 = vcmp.eq.s32.totalorder %v37, %v1324
  %vm1331 = vcmp.eq.s32.totalorder %v38, %v1324
  %vm1332 = vcmp.eq.s32.totalorder %v39, %v1324
  %vm1333 = vcmp.eq.s32.totalorder %v40, %v1324
  %vm1334 = vcmp.eq.s32.totalorder %v41, %v1324
  %vm1335 = vcmp.eq.s32.totalorder %v42, %v1324
  %vm1336 = vcmp.eq.s32.totalorder %v43, %v1324
  %vm1337 = vcmp.eq.s32.totalorder %v44, %v1324
  %vm1338 = vcmp.eq.s32.totalorder %v45, %v1324
  %vm1339 = vcmp.eq.s32.totalorder %v46, %v1324
  %vm1340 = vcmp.eq.s32.totalorder %v47, %v1324
  %vm1341 = vcmp.eq.s32.totalorder %v48, %v1324
  %vm1342 = vcmp.eq.s32.totalorder %v49, %v1324
  %vm1343 = vcmp.eq.s32.totalorder %v50, %v1324
  %vm1344 = vcmp.eq.s32.totalorder %v51, %v1324
  %vm1345 = vcmp.eq.s32.totalorder %v52, %v1324
  %vm1346 = vcmp.eq.s32.totalorder %v53, %v1324
  %vm1347 = vcmp.eq.s32.totalorder %v54, %v1324
  %vm1348 = vcmp.eq.s32.totalorder %v55, %v1324
  %vm1349 = vcmp.eq.s32.totalorder %v56, %v1324
  %vm1350 = vcmp.eq.s32.totalorder %v57, %v1324
  %vm1351 = vcmp.eq.s32.totalorder %v58, %v1324
  %vm1352 = vcmp.eq.s32.totalorder %v59, %v1324
  %vm1353 = vcmp.eq.s32.totalorder %v60, %v1324
  %vm1354 = vcmp.eq.s32.totalorder %v61, %v1324
  %vm1355 = vcmp.eq.s32.totalorder %v62, %v1324
  %vm1356 = vcmp.eq.s32.totalorder %v63, %v1324
  %vm1357 = vcmp.eq.s32.totalorder %v64, %v1324
  %vm1358 = vcmp.eq.s32.totalorder %v65, %v1324
  %vm1359 = vcmp.eq.s32.totalorder %v66, %v1324
  %vm1360 = vcmp.eq.s32.totalorder %v67, %v1324
  %vm1361 = vcmp.eq.s32.totalorder %v68, %v1324
  %vm1362 = vcmp.eq.s32.totalorder %v69, %v1324
  %vm1363 = vcmp.eq.s32.totalorder %v70, %v1324
  %vm1364 = vcmp.eq.s32.totalorder %v71, %v1324
  %vm1365 = vcmp.eq.s32.totalorder %v72, %v1324
  %vm1366 = vcmp.eq.s32.totalorder %v73, %v1324
  %vm1367 = vcmp.eq.s32.totalorder %v74, %v1324
  %vm1368 = vcmp.eq.s32.totalorder %v75, %v1324
  %vm1369 = vcmp.eq.s32.totalorder %v76, %v1324
  %vm1370 = vcmp.eq.s32.totalorder %v77, %v1324
  %vm1371 = vcmp.eq.s32.totalorder %v78, %v1324
  %vm1372 = vcmp.eq.s32.totalorder %v79, %v1324
  %vm1373 = vcmp.eq.s32.totalorder %v80, %v1324
  %vm1374 = vcmp.eq.s32.totalorder %v81, %v1324
  %vm1375 = vcmp.eq.s32.totalorder %v82, %v1324
  %vm1376 = vcmp.eq.s32.totalorder %v83, %v1324
  %vm1377 = vcmp.eq.s32.totalorder %v84, %v1324
  %vm1378 = vcmp.eq.s32.totalorder %v85, %v1324
  %vm1379 = vcmp.eq.s32.totalorder %v86, %v1324
  %vm1380 = vcmp.eq.s32.totalorder %v87, %v1324
  %vm1381 = vcmp.eq.s32.totalorder %v88, %v1324
  %vm1382 = vcmp.eq.s32.totalorder %v89, %v1324
  %vm1383 = vcmp.eq.s32.totalorder %v90, %v1324
  %vm1384 = vcmp.eq.s32.totalorder %v91, %v1324
  %vm1385 = vcmp.eq.s32.totalorder %v92, %v1324
  %vm1386 = vcmp.eq.s32.totalorder %v93, %v1324
  %vm1387 = vcmp.eq.s32.totalorder %v94, %v1324
  %vm1388 = vcmp.eq.s32.totalorder %v95, %v1324
  %v1389 = vsel %vm1325, 1.0, 0.0
  %v1390 = vsel %vm1326, 1.0, 0.0
  %v1391 = vsel %vm1327, 1.0, 0.0
  %v1392 = vsel %vm1328, 1.0, 0.0
  %v1393 = vsel %vm1329, 1.0, 0.0
  %v1394 = vsel %vm1330, 1.0, 0.0
  %v1395 = vsel %vm1331, 1.0, 0.0
  %v1396 = vsel %vm1332, 1.0, 0.0
  %v1397 = vsel %vm1333, 1.0, 0.0
  %v1398 = vsel %vm1334, 1.0, 0.0
  %v1399 = vsel %vm1335, 1.0, 0.0
  %v1400 = vsel %vm1336, 1.0, 0.0
  %v1401 = vsel %vm1337, 1.0, 0.0
  %v1402 = vsel %vm1338, 1.0, 0.0
  %v1403 = vsel %vm1339, 1.0, 0.0
  %v1404 = vsel %vm1340, 1.0, 0.0
  %v1405 = vsel %vm1341, 1.0, 0.0
  %v1406 = vsel %vm1342, 1.0, 0.0
  %v1407 = vsel %vm1343, 1.0, 0.0
  %v1408 = vsel %vm1344, 1.0, 0.0
  %v1409 = vsel %vm1345, 1.0, 0.0
  %v1410 = vsel %vm1346, 1.0, 0.0
  %v1411 = vsel %vm1347, 1.0, 0.0
  %v1412 = vsel %vm1348, 1.0, 0.0
  %v1413 = vsel %vm1349, 1.0, 0.0
  %v1414 = vsel %vm1350, 1.0, 0.0
  %v1415 = vsel %vm1351, 1.0, 0.0
  %v1416 = vsel %vm1352, 1.0, 0.0
  %v1417 = vsel %vm1353, 1.0, 0.0
  %v1418 = vsel %vm1354, 1.0, 0.0
  %v1419 = vsel %vm1355, 1.0, 0.0
  %v1420 = vsel %vm1356, 1.0, 0.0
  %v1421 = vsel %vm1357, 1.0, 0.0
  %v1422 = vsel %vm1358, 1.0, 0.0
  %v1423 = vsel %vm1359, 1.0, 0.0
  %v1424 = vsel %vm1360, 1.0, 0.0
  %v1425 = vsel %vm1361, 1.0, 0.0
  %v1426 = vsel %vm1362, 1.0, 0.0
  %v1427 = vsel %vm1363, 1.0, 0.0
  %v1428 = vsel %vm1364, 1.0, 0.0
  %v1429 = vsel %vm1365, 1.0, 0.0
  %v1430 = vsel %vm1366, 1.0, 0.0
  %v1431 = vsel %vm1367, 1.0, 0.0
  %v1432 = vsel %vm1368, 1.0, 0.0
  %v1433 = vsel %vm1369, 1.0, 0.0
  %v1434 = vsel %vm1370, 1.0, 0.0
  %v1435 = vsel %vm1371, 1.0, 0.0
  %v1436 = vsel %vm1372, 1.0, 0.0
  %v1437 = vsel %vm1373, 1.0, 0.0
  %v1438 = vsel %vm1374, 1.0, 0.0
  %v1439 = vsel %vm1375, 1.0, 0.0
  %v1440 = vsel %vm1376, 1.0, 0.0
  %v1441 = vsel %vm1377, 1.0, 0.0
  %v1442 = vsel %vm1378, 1.0, 0.0
  %v1443 = vsel %vm1379, 1.0, 0.0
  %v1444 = vsel %vm1380, 1.0, 0.0
  %v1445 = vsel %vm1381, 1.0, 0.0
  %v1446 = vsel %vm1382, 1.0, 0.0
  %v1447 = vsel %vm1383, 1.0, 0.0
  %v1448 = vsel %vm1384, 1.0, 0.0
  %v1449 = vsel %vm1385, 1.0, 0.0
  %v1450 = vsel %vm1386, 1.0, 0.0
  %v1451 = vsel %vm1387, 1.0, 0.0
  %v1452 = vsel %vm1388, 1.0, 0.0
  %v1453 = vpack.c.bf16 %v1390, %v1389
  %v1454 = vpack.c.bf16 %v1392, %v1391
  %v1455 = vpack.c.bf16 %v1394, %v1393
  %v1456 = vpack.c.bf16 %v1396, %v1395
  %v1457 = vpack.c.bf16 %v1398, %v1397
  %v1458 = vpack.c.bf16 %v1400, %v1399
  %v1459 = vpack.c.bf16 %v1402, %v1401
  %v1460 = vpack.c.bf16 %v1404, %v1403
  %v1461 = vpack.c.bf16 %v1406, %v1405
  %v1462 = vpack.c.bf16 %v1408, %v1407
  %v1463 = vpack.c.bf16 %v1410, %v1409
  %v1464 = vpack.c.bf16 %v1412, %v1411
  %v1465 = vpack.c.bf16 %v1414, %v1413
  %v1466 = vpack.c.bf16 %v1416, %v1415
  %v1467 = vpack.c.bf16 %v1418, %v1417
  %v1468 = vpack.c.bf16 %v1420, %v1419
  %v1469 = vpack.c.bf16 %v1422, %v1421
  %v1470 = vpack.c.bf16 %v1424, %v1423
  %v1471 = vpack.c.bf16 %v1426, %v1425
  %v1472 = vpack.c.bf16 %v1428, %v1427
  %v1473 = vpack.c.bf16 %v1430, %v1429
  %v1474 = vpack.c.bf16 %v1432, %v1431
  %v1475 = vpack.c.bf16 %v1434, %v1433
  %v1476 = vpack.c.bf16 %v1436, %v1435
  %v1477 = vpack.c.bf16 %v1438, %v1437
  %v1478 = vpack.c.bf16 %v1440, %v1439
  %v1479 = vpack.c.bf16 %v1442, %v1441
  %v1480 = vpack.c.bf16 %v1444, %v1443
  %v1481 = vpack.c.bf16 %v1446, %v1445
  %v1482 = vpack.c.bf16 %v1448, %v1447
  %v1483 = vpack.c.bf16 %v1450, %v1449
  %v1484 = vpack.c.bf16 %v1452, %v1451
  %1485 = vmatprep.subr.bf16.mxu0 0
  %1486 = vmatpush1.bf16.msra.mxu0 %v1453
  %1487 = vmatprep.subr.bf16.mxu0 0
  %1488 = vmatpush1.bf16.msra.mxu0 %v1454
  %1489 = vmatprep.subr.bf16.mxu0 0
  %1490 = vmatpush1.bf16.msra.mxu0 %v1455
  %1491 = vmatprep.subr.bf16.mxu0 0
  %1492 = vmatpush1.bf16.msra.mxu0 %v1456
  %1493 = vmatprep.subr.bf16.mxu0 0
  %1494 = vmatpush1.bf16.msra.mxu0 %v1457
  %1495 = vmatprep.subr.bf16.mxu0 0
  %1496 = vmatpush1.bf16.msra.mxu0 %v1458
  %1497 = vmatprep.subr.bf16.mxu0 0
  %1498 = vmatpush1.bf16.msra.mxu0 %v1459
  %1499 = vmatprep.subr.bf16.mxu0 0
  %1500 = vmatpush1.bf16.msra.mxu0 %v1460
  %1501 = vmatprep.subr.bf16.mxu0 0
  %1502 = vmatpush1.bf16.msra.mxu0 %v1461
  %1503 = vmatprep.subr.bf16.mxu0 0
  %1504 = vmatpush1.bf16.msra.mxu0 %v1462
  %1505 = vmatprep.subr.bf16.mxu0 0
  %1506 = vmatpush1.bf16.msra.mxu0 %v1463
  %1507 = vmatprep.subr.bf16.mxu0 0
  %1508 = vmatpush1.bf16.msra.mxu0 %v1464
  %1509 = vmatprep.subr.bf16.mxu0 0
  %1510 = vmatpush1.bf16.msra.mxu0 %v1465
  %1511 = vmatprep.subr.bf16.mxu0 0
  %1512 = vmatpush1.bf16.msra.mxu0 %v1466
  %1513 = vmatprep.subr.bf16.mxu0 0
  %1514 = vmatpush1.bf16.msra.mxu0 %v1467
  %1515 = vmatprep.subr.bf16.mxu0 0
  %1516 = vmatpush1.bf16.msra.mxu0 %v1468
  %1517 = vmatprep.mubr.bf16.mxu0 %v288
  %1518 = vmatmul.mubr.bf16.gmra.mrb[0].mxu0 %v280
  %v1519 = vpop.f32.mrb[0].mxu0
  %v1520 = vadd.f32 0.0, %v1519
  %v1521 = vpop.f32.mrb[0].mxu0
  %v1522 = vpop.f32.mrb[0].mxu0
  %v1523 = vpop.f32.mrb[0].mxu0
  %1524 = vdwg.mxu0
  %1525 = vmatprep.subr.bf16.mxu0 0
  %1526 = vmatpush1.bf16.msra.mxu0 %v1469
  %1527 = vmatprep.subr.bf16.mxu0 0
  %1528 = vmatpush1.bf16.msra.mxu0 %v1470
  %1529 = vmatprep.subr.bf16.mxu0 0
  %1530 = vmatpush1.bf16.msra.mxu0 %v1471
  %1531 = vmatprep.subr.bf16.mxu0 0
  %1532 = vmatpush1.bf16.msra.mxu0 %v1472
  %1533 = vmatprep.subr.bf16.mxu0 0
  %1534 = vmatpush1.bf16.msra.mxu0 %v1473
  %1535 = vmatprep.subr.bf16.mxu0 0
  %1536 = vmatpush1.bf16.msra.mxu0 %v1474
  %1537 = vmatprep.subr.bf16.mxu0 0
  %1538 = vmatpush1.bf16.msra.mxu0 %v1475
  %1539 = vmatprep.subr.bf16.mxu0 0
  %1540 = vmatpush1.bf16.msra.mxu0 %v1476
  %1541 = vmatprep.subr.bf16.mxu0 0
  %1542 = vmatpush1.bf16.msra.mxu0 %v1477
  %1543 = vmatprep.subr.bf16.mxu0 0
  %1544 = vmatpush1.bf16.msra.mxu0 %v1478
  %1545 = vmatprep.subr.bf16.mxu0 0
  %1546 = vmatpush1.bf16.msra.mxu0 %v1479
  %1547 = vmatprep.subr.bf16.mxu0 0
  %1548 = vmatpush1.bf16.msra.mxu0 %v1480
  %1549 = vmatprep.subr.bf16.mxu0 0
  %1550 = vmatpush1.bf16.msra.mxu0 %v1481
  %1551 = vmatprep.subr.bf16.mxu0 0
  %1552 = vmatpush1.bf16.msra.mxu0 %v1482
  %1553 = vmatprep.subr.bf16.mxu0 0
  %1554 = vmatpush1.bf16.msra.mxu0 %v1483
  %1555 = vmatprep.subr.bf16.mxu0 0
  %1556 = vmatpush1.bf16.msra.mxu0 %v1484
  %1557 = vmatprep.mubr.bf16.mxu0 %v289
  %1558 = vmatmul.mubr.bf16.gmra.mrb[0].mxu0 %v287
  %v1559 = vpop.f32.mrb[0].mxu0
  %v1560 = vadd.f32 %v1520, %v1559
  %v1561 = vpop.f32.mrb[0].mxu0
  %v1562 = vpop.f32.mrb[0].mxu0
  %v1563 = vpop.f32.mrb[0].mxu0
  %1564 = vdwg.mxu0
  %s1565 = scalar_lea.vmem %s1, 16
  %v1566 = vld [vmem:[%s1565] sm:$0xf]
  %v1567 = vpack.c.bf16 %v1560, %v1560
  %v1569 = vsel %vm625, %v1566, 0
  %v1572 = vand.u32 %v1567, %v632
  %1574 = vmatprep.subr.bf16.mxu0 0
  %1575 = vmatpush1.bf16.msra.mxu0 %v1572
  %1576 = vmatprep.subr.bf16.mxu0 0
  %1577 = vmatpush1.bf16.msra.mxu0 0
  %1578 = vmatprep.subr.bf16.mxu0 0
  %1579 = vmatpush1.bf16.msra.mxu0 0
  %1580 = vmatprep.subr.bf16.mxu0 0
  %1581 = vmatpush1.bf16.msra.mxu0 0
  %1582 = vmatprep.subr.bf16.mxu0 0
  %1583 = vmatpush1.bf16.msra.mxu0 0
  %1584 = vmatprep.subr.bf16.mxu0 0
  %1585 = vmatpush1.bf16.msra.mxu0 0
  %1586 = vmatprep.subr.bf16.mxu0 0
  %1587 = vmatpush1.bf16.msra.mxu0 0
  %1588 = vmatprep.subr.bf16.mxu0 0
  %1589 = vmatpush1.bf16.msra.mxu0 0
  %1590 = vmatprep.subr.bf16.mxu0 0
  %1591 = vmatpush1.bf16.msra.mxu0 0
  %1592 = vmatprep.subr.bf16.mxu0 0
  %1593 = vmatpush1.bf16.msra.mxu0 0
  %1594 = vmatprep.subr.bf16.mxu0 0
  %1595 = vmatpush1.bf16.msra.mxu0 0
  %1596 = vmatprep.subr.bf16.mxu0 0
  %1597 = vmatpush1.bf16.msra.mxu0 0
  %1598 = vmatprep.subr.bf16.mxu0 0
  %1599 = vmatpush1.bf16.msra.mxu0 0
  %1600 = vmatprep.subr.bf16.mxu0 0
  %1601 = vmatpush1.bf16.msra.mxu0 0
  %1602 = vmatprep.subr.bf16.mxu0 0
  %1603 = vmatpush1.bf16.msra.mxu0 0
  %1604 = vmatprep.subr.bf16.mxu0 0
  %1605 = vmatpush1.bf16.msra.mxu0 0
  %1606 = vmatprep.mubr.bf16.mxu0 0
  %1607 = vmatmul.mubr.bf16.gmra.mrb[0].mxu0 %v1569
  %v1608 = vpop.f32.mrb[0].mxu0
  %v1609 = vadd.f32 0.0, %v1608
  %v1610 = vpop.f32.mrb[0].mxu0
  %v1611 = vpop.f32.mrb[0].mxu0
  %v1612 = vpop.f32.mrb[0].mxu0
  %1613 = vdwg.mxu0
  %v1614 = vadd.f32 %v1315, %v1609
  %vm1615 = vmand %vm1318, %vm376
  %vm1616 = vmand %vm1615, %vm378
  %v1617 = vadd.s32 %v1322, %v98
  %v1618 = vsel %vm1616, %v1617, 4294967295
  %vm1619 = vcmp.eq.s32.totalorder %v32, %v1618
  %vm1620 = vcmp.eq.s32.totalorder %v33, %v1618
  %vm1621 = vcmp.eq.s32.totalorder %v34, %v1618
  %vm1622 = vcmp.eq.s32.totalorder %v35, %v1618
  %vm1623 = vcmp.eq.s32.totalorder %v36, %v1618
  %vm1624 = vcmp.eq.s32.totalorder %v37, %v1618
  %vm1625 = vcmp.eq.s32.totalorder %v38, %v1618
  %vm1626 = vcmp.eq.s32.totalorder %v39, %v1618
  %vm1627 = vcmp.eq.s32.totalorder %v40, %v1618
  %vm1628 = vcmp.eq.s32.totalorder %v41, %v1618
  %vm1629 = vcmp.eq.s32.totalorder %v42, %v1618
  %vm1630 = vcmp.eq.s32.totalorder %v43, %v1618
  %vm1631 = vcmp.eq.s32.totalorder %v44, %v1618
  %vm1632 = vcmp.eq.s32.totalorder %v45, %v1618
  %vm1633 = vcmp.eq.s32.totalorder %v46, %v1618
  %vm1634 = vcmp.eq.s32.totalorder %v47, %v1618
  %vm1635 = vcmp.eq.s32.totalorder %v48, %v1618
  %vm1636 = vcmp.eq.s32.totalorder %v49, %v1618
  %vm1637 = vcmp.eq.s32.totalorder %v50, %v1618
  %vm1638 = vcmp.eq.s32.totalorder %v51, %v1618
  %vm1639 = vcmp.eq.s32.totalorder %v52, %v1618
  %vm1640 = vcmp.eq.s32.totalorder %v53, %v1618
  %vm1641 = vcmp.eq.s32.totalorder %v54, %v1618
  %vm1642 = vcmp.eq.s32.totalorder %v55, %v1618
  %vm1643 = vcmp.eq.s32.totalorder %v56, %v1618
  %vm1644 = vcmp.eq.s32.totalorder %v57, %v1618
  %vm1645 = vcmp.eq.s32.totalorder %v58, %v1618
  %vm1646 = vcmp.eq.s32.totalorder %v59, %v1618
  %vm1647 = vcmp.eq.s32.totalorder %v60, %v1618
  %vm1648 = vcmp.eq.s32.totalorder %v61, %v1618
  %vm1649 = vcmp.eq.s32.totalorder %v62, %v1618
  %vm1650 = vcmp.eq.s32.totalorder %v63, %v1618
  %vm1651 = vcmp.eq.s32.totalorder %v64, %v1618
  %vm1652 = vcmp.eq.s32.totalorder %v65, %v1618
  %vm1653 = vcmp.eq.s32.totalorder %v66, %v1618
  %vm1654 = vcmp.eq.s32.totalorder %v67, %v1618
  %vm1655 = vcmp.eq.s32.totalorder %v68, %v1618
  %vm1656 = vcmp.eq.s32.totalorder %v69, %v1618
  %vm1657 = vcmp.eq.s32.totalorder %v70, %v1618
  %vm1658 = vcmp.eq.s32.totalorder %v71, %v1618
  %vm1659 = vcmp.eq.s32.totalorder %v72, %v1618
  %vm1660 = vcmp.eq.s32.totalorder %v73, %v1618
  %vm1661 = vcmp.eq.s32.totalorder %v74, %v1618
  %vm1662 = vcmp.eq.s32.totalorder %v75, %v1618
  %vm1663 = vcmp.eq.s32.totalorder %v76, %v1618
  %vm1664 = vcmp.eq.s32.totalorder %v77, %v1618
  %vm1665 = vcmp.eq.s32.totalorder %v78, %v1618
  %vm1666 = vcmp.eq.s32.totalorder %v79, %v1618
  %vm1667 = vcmp.eq.s32.totalorder %v80, %v1618
  %vm1668 = vcmp.eq.s32.totalorder %v81, %v1618
  %vm1669 = vcmp.eq.s32.totalorder %v82, %v1618
  %vm1670 = vcmp.eq.s32.totalorder %v83, %v1618
  %vm1671 = vcmp.eq.s32.totalorder %v84, %v1618
  %vm1672 = vcmp.eq.s32.totalorder %v85, %v1618
  %vm1673 = vcmp.eq.s32.totalorder %v86, %v1618
  %vm1674 = vcmp.eq.s32.totalorder %v87, %v1618
  %vm1675 = vcmp.eq.s32.totalorder %v88, %v1618
  %vm1676 = vcmp.eq.s32.totalorder %v89, %v1618
  %vm1677 = vcmp.eq.s32.totalorder %v90, %v1618
  %vm1678 = vcmp.eq.s32.totalorder %v91, %v1618
  %vm1679 = vcmp.eq.s32.totalorder %v92, %v1618
  %vm1680 = vcmp.eq.s32.totalorder %v93, %v1618
  %vm1681 = vcmp.eq.s32.totalorder %v94, %v1618
  %vm1682 = vcmp.eq.s32.totalorder %v95, %v1618
  %v1683 = vsel %vm1619, 1.0, 0.0
  %v1684 = vsel %vm1620, 1.0, 0.0
  %v1685 = vsel %vm1621, 1.0, 0.0
  %v1686 = vsel %vm1622, 1.0, 0.0
  %v1687 = vsel %vm1623, 1.0, 0.0
  %v1688 = vsel %vm1624, 1.0, 0.0
  %v1689 = vsel %vm1625, 1.0, 0.0
  %v1690 = vsel %vm1626, 1.0, 0.0
  %v1691 = vsel %vm1627, 1.0, 0.0
  %v1692 = vsel %vm1628, 1.0, 0.0
  %v1693 = vsel %vm1629, 1.0, 0.0
  %v1694 = vsel %vm1630, 1.0, 0.0
  %v1695 = vsel %vm1631, 1.0, 0.0
  %v1696 = vsel %vm1632, 1.0, 0.0
  %v1697 = vsel %vm1633, 1.0, 0.0
  %v1698 = vsel %vm1634, 1.0, 0.0
  %v1699 = vsel %vm1635, 1.0, 0.0
  %v1700 = vsel %vm1636, 1.0, 0.0
  %v1701 = vsel %vm1637, 1.0, 0.0
  %v1702 = vsel %vm1638, 1.0, 0.0
  %v1703 = vsel %vm1639, 1.0, 0.0
  %v1704 = vsel %vm1640, 1.0, 0.0
  %v1705 = vsel %vm1641, 1.0, 0.0
  %v1706 = vsel %vm1642, 1.0, 0.0
  %v1707 = vsel %vm1643, 1.0, 0.0
  %v1708 = vsel %vm1644, 1.0, 0.0
  %v1709 = vsel %vm1645, 1.0, 0.0
  %v1710 = vsel %vm1646, 1.0, 0.0
  %v1711 = vsel %vm1647, 1.0, 0.0
  %v1712 = vsel %vm1648, 1.0, 0.0
  %v1713 = vsel %vm1649, 1.0, 0.0
  %v1714 = vsel %vm1650, 1.0, 0.0
  %v1715 = vsel %vm1651, 1.0, 0.0
  %v1716 = vsel %vm1652, 1.0, 0.0
  %v1717 = vsel %vm1653, 1.0, 0.0
  %v1718 = vsel %vm1654, 1.0, 0.0
  %v1719 = vsel %vm1655, 1.0, 0.0
  %v1720 = vsel %vm1656, 1.0, 0.0
  %v1721 = vsel %vm1657, 1.0, 0.0
  %v1722 = vsel %vm1658, 1.0, 0.0
  %v1723 = vsel %vm1659, 1.0, 0.0
  %v1724 = vsel %vm1660, 1.0, 0.0
  %v1725 = vsel %vm1661, 1.0, 0.0
  %v1726 = vsel %vm1662, 1.0, 0.0
  %v1727 = vsel %vm1663, 1.0, 0.0
  %v1728 = vsel %vm1664, 1.0, 0.0
  %v1729 = vsel %vm1665, 1.0, 0.0
  %v1730 = vsel %vm1666, 1.0, 0.0
  %v1731 = vsel %vm1667, 1.0, 0.0
  %v1732 = vsel %vm1668, 1.0, 0.0
  %v1733 = vsel %vm1669, 1.0, 0.0
  %v1734 = vsel %vm1670, 1.0, 0.0
  %v1735 = vsel %vm1671, 1.0, 0.0
  %v1736 = vsel %vm1672, 1.0, 0.0
  %v1737 = vsel %vm1673, 1.0, 0.0
  %v1738 = vsel %vm1674, 1.0, 0.0
  %v1739 = vsel %vm1675, 1.0, 0.0
  %v1740 = vsel %vm1676, 1.0, 0.0
  %v1741 = vsel %vm1677, 1.0, 0.0
  %v1742 = vsel %vm1678, 1.0, 0.0
  %v1743 = vsel %vm1679, 1.0, 0.0
  %v1744 = vsel %vm1680, 1.0, 0.0
  %v1745 = vsel %vm1681, 1.0, 0.0
  %v1746 = vsel %vm1682, 1.0, 0.0
  %v1747 = vpack.c.bf16 %v1684, %v1683
  %v1748 = vpack.c.bf16 %v1686, %v1685
  %v1749 = vpack.c.bf16 %v1688, %v1687
  %v1750 = vpack.c.bf16 %v1690, %v1689
  %v1751 = vpack.c.bf16 %v1692, %v1691
  %v1752 = vpack.c.bf16 %v1694, %v1693
  %v1753 = vpack.c.bf16 %v1696, %v1695
  %v1754 = vpack.c.bf16 %v1698, %v1697
  %v1755 = vpack.c.bf16 %v1700, %v1699
  %v1756 = vpack.c.bf16 %v1702, %v1701
  %v1757 = vpack.c.bf16 %v1704, %v1703
  %v1758 = vpack.c.bf16 %v1706, %v1705
  %v1759 = vpack.c.bf16 %v1708, %v1707
  %v1760 = vpack.c.bf16 %v1710, %v1709
  %v1761 = vpack.c.bf16 %v1712, %v1711
  %v1762 = vpack.c.bf16 %v1714, %v1713
  %v1763 = vpack.c.bf16 %v1716, %v1715
  %v1764 = vpack.c.bf16 %v1718, %v1717
  %v1765 = vpack.c.bf16 %v1720, %v1719
  %v1766 = vpack.c.bf16 %v1722, %v1721
  %v1767 = vpack.c.bf16 %v1724, %v1723
  %v1768 = vpack.c.bf16 %v1726, %v1725
  %v1769 = vpack.c.bf16 %v1728, %v1727
  %v1770 = vpack.c.bf16 %v1730, %v1729
  %v1771 = vpack.c.bf16 %v1732, %v1731
  %v1772 = vpack.c.bf16 %v1734, %v1733
  %v1773 = vpack.c.bf16 %v1736, %v1735
  %v1774 = vpack.c.bf16 %v1738, %v1737
  %v1775 = vpack.c.bf16 %v1740, %v1739
  %v1776 = vpack.c.bf16 %v1742, %v1741
  %v1777 = vpack.c.bf16 %v1744, %v1743
  %v1778 = vpack.c.bf16 %v1746, %v1745
  %1779 = vmatprep.subr.bf16.mxu0 0
  %1780 = vmatpush1.bf16.msra.mxu0 %v1747
  %1781 = vmatprep.subr.bf16.mxu0 0
  %1782 = vmatpush1.bf16.msra.mxu0 %v1748
  %1783 = vmatprep.subr.bf16.mxu0 0
  %1784 = vmatpush1.bf16.msra.mxu0 %v1749
  %1785 = vmatprep.subr.bf16.mxu0 0
  %1786 = vmatpush1.bf16.msra.mxu0 %v1750
  %1787 = vmatprep.subr.bf16.mxu0 0
  %1788 = vmatpush1.bf16.msra.mxu0 %v1751
  %1789 = vmatprep.subr.bf16.mxu0 0
  %1790 = vmatpush1.bf16.msra.mxu0 %v1752
  %1791 = vmatprep.subr.bf16.mxu0 0
  %1792 = vmatpush1.bf16.msra.mxu0 %v1753
  %1793 = vmatprep.subr.bf16.mxu0 0
  %1794 = vmatpush1.bf16.msra.mxu0 %v1754
  %1795 = vmatprep.subr.bf16.mxu0 0
  %1796 = vmatpush1.bf16.msra.mxu0 %v1755
  %1797 = vmatprep.subr.bf16.mxu0 0
  %1798 = vmatpush1.bf16.msra.mxu0 %v1756
  %1799 = vmatprep.subr.bf16.mxu0 0
  %1800 = vmatpush1.bf16.msra.mxu0 %v1757
  %1801 = vmatprep.subr.bf16.mxu0 0
  %1802 = vmatpush1.bf16.msra.mxu0 %v1758
  %1803 = vmatprep.subr.bf16.mxu0 0
  %1804 = vmatpush1.bf16.msra.mxu0 %v1759
  %1805 = vmatprep.subr.bf16.mxu0 0
  %1806 = vmatpush1.bf16.msra.mxu0 %v1760
  %1807 = vmatprep.subr.bf16.mxu0 0
  %1808 = vmatpush1.bf16.msra.mxu0 %v1761
  %1809 = vmatprep.subr.bf16.mxu0 0
  %1810 = vmatpush1.bf16.msra.mxu0 %v1762
  %1811 = vmatprep.mubr.bf16.mxu0 %v288
  %1812 = vmatmul.mubr.bf16.gmra.mrb[0].mxu0 %v280
  %v1813 = vpop.f32.mrb[0].mxu0
  %v1814 = vadd.f32 0.0, %v1813
  %v1815 = vpop.f32.mrb[0].mxu0
  %v1816 = vpop.f32.mrb[0].mxu0
  %v1817 = vpop.f32.mrb[0].mxu0
  %1818 = vdwg.mxu0
  %1819 = vmatprep.subr.bf16.mxu0 0
  %1820 = vmatpush1.bf16.msra.mxu0 %v1763
  %1821 = vmatprep.subr.bf16.mxu0 0
  %1822 = vmatpush1.bf16.msra.mxu0 %v1764
  %1823 = vmatprep.subr.bf16.mxu0 0
  %1824 = vmatpush1.bf16.msra.mxu0 %v1765
  %1825 = vmatprep.subr.bf16.mxu0 0
  %1826 = vmatpush1.bf16.msra.mxu0 %v1766
  %1827 = vmatprep.subr.bf16.mxu0 0
  %1828 = vmatpush1.bf16.msra.mxu0 %v1767
  %1829 = vmatprep.subr.bf16.mxu0 0
  %1830 = vmatpush1.bf16.msra.mxu0 %v1768
  %1831 = vmatprep.subr.bf16.mxu0 0
  %1832 = vmatpush1.bf16.msra.mxu0 %v1769
  %1833 = vmatprep.subr.bf16.mxu0 0
  %1834 = vmatpush1.bf16.msra.mxu0 %v1770
  %1835 = vmatprep.subr.bf16.mxu0 0
  %1836 = vmatpush1.bf16.msra.mxu0 %v1771
  %1837 = vmatprep.subr.bf16.mxu0 0
  %1838 = vmatpush1.bf16.msra.mxu0 %v1772
  %1839 = vmatprep.subr.bf16.mxu0 0
  %1840 = vmatpush1.bf16.msra.mxu0 %v1773
  %1841 = vmatprep.subr.bf16.mxu0 0
  %1842 = vmatpush1.bf16.msra.mxu0 %v1774
  %1843 = vmatprep.subr.bf16.mxu0 0
  %1844 = vmatpush1.bf16.msra.mxu0 %v1775
  %1845 = vmatprep.subr.bf16.mxu0 0
  %1846 = vmatpush1.bf16.msra.mxu0 %v1776
  %1847 = vmatprep.subr.bf16.mxu0 0
  %1848 = vmatpush1.bf16.msra.mxu0 %v1777
  %1849 = vmatprep.subr.bf16.mxu0 0
  %1850 = vmatpush1.bf16.msra.mxu0 %v1778
  %1851 = vmatprep.mubr.bf16.mxu0 %v289
  %1852 = vmatmul.mubr.bf16.gmra.mrb[0].mxu0 %v287
  %v1853 = vpop.f32.mrb[0].mxu0
  %v1854 = vadd.f32 %v1814, %v1853
  %v1855 = vpop.f32.mrb[0].mxu0
  %v1856 = vpop.f32.mrb[0].mxu0
  %v1857 = vpop.f32.mrb[0].mxu0
  %1858 = vdwg.mxu0
  %s1859 = scalar_lea.vmem %s1, 20
  %v1860 = vld [vmem:[%s1859] sm:$0xf]
  %v1861 = vpack.c.bf16 %v1854, %v1854
  %v1863 = vsel %vm625, %v1860, 0
  %v1866 = vand.u32 %v1861, %v632
  %1868 = vmatprep.subr.bf16.mxu0 0
  %1869 = vmatpush1.bf16.msra.mxu0 %v1866
  %1870 = vmatprep.subr.bf16.mxu0 0
  %1871 = vmatpush1.bf16.msra.mxu0 0
  %1872 = vmatprep.subr.bf16.mxu0 0
  %1873 = vmatpush1.bf16.msra.mxu0 0
  %1874 = vmatprep.subr.bf16.mxu0 0
  %1875 = vmatpush1.bf16.msra.mxu0 0
  %1876 = vmatprep.subr.bf16.mxu0 0
  %1877 = vmatpush1.bf16.msra.mxu0 0
  %1878 = vmatprep.subr.bf16.mxu0 0
  %1879 = vmatpush1.bf16.msra.mxu0 0
  %1880 = vmatprep.subr.bf16.mxu0 0
  %1881 = vmatpush1.bf16.msra.mxu0 0
  %1882 = vmatprep.subr.bf16.mxu0 0
  %1883 = vmatpush1.bf16.msra.mxu0 0
  %1884 = vmatprep.subr.bf16.mxu0 0
  %1885 = vmatpush1.bf16.msra.mxu0 0
  %1886 = vmatprep.subr.bf16.mxu0 0
  %1887 = vmatpush1.bf16.msra.mxu0 0
  %1888 = vmatprep.subr.bf16.mxu0 0
  %1889 = vmatpush1.bf16.msra.mxu0 0
  %1890 = vmatprep.subr.bf16.mxu0 0
  %1891 = vmatpush1.bf16.msra.mxu0 0
  %1892 = vmatprep.subr.bf16.mxu0 0
  %1893 = vmatpush1.bf16.msra.mxu0 0
  %1894 = vmatprep.subr.bf16.mxu0 0
  %1895 = vmatpush1.bf16.msra.mxu0 0
  %1896 = vmatprep.subr.bf16.mxu0 0
  %1897 = vmatpush1.bf16.msra.mxu0 0
  %1898 = vmatprep.subr.bf16.mxu0 0
  %1899 = vmatpush1.bf16.msra.mxu0 0
  %1900 = vmatprep.mubr.bf16.mxu0 0
  %1901 = vmatmul.mubr.bf16.gmra.mrb[0].mxu0 %v1863
  %v1902 = vpop.f32.mrb[0].mxu0
  %v1903 = vadd.f32 0.0, %v1902
  %v1904 = vpop.f32.mrb[0].mxu0
  %v1905 = vpop.f32.mrb[0].mxu0
  %v1906 = vpop.f32.mrb[0].mxu0
  %1907 = vdwg.mxu0
  %v1908 = vadd.f32 %v1614, %v1903
  %vm1909 = vmand %vm1318, %vm723
  %vm1910 = vmand %vm1909, %vm725
  %v1911 = vadd.s32 %v1322, %v722
  %v1912 = vsel %vm1910, %v1911, 4294967295
  %vm1913 = vcmp.eq.s32.totalorder %v32, %v1912
  %vm1914 = vcmp.eq.s32.totalorder %v33, %v1912
  %vm1915 = vcmp.eq.s32.totalorder %v34, %v1912
  %vm1916 = vcmp.eq.s32.totalorder %v35, %v1912
  %vm1917 = vcmp.eq.s32.totalorder %v36, %v1912
  %vm1918 = vcmp.eq.s32.totalorder %v37, %v1912
  %vm1919 = vcmp.eq.s32.totalorder %v38, %v1912
  %vm1920 = vcmp.eq.s32.totalorder %v39, %v1912
  %vm1921 = vcmp.eq.s32.totalorder %v40, %v1912
  %vm1922 = vcmp.eq.s32.totalorder %v41, %v1912
  %vm1923 = vcmp.eq.s32.totalorder %v42, %v1912
  %vm1924 = vcmp.eq.s32.totalorder %v43, %v1912
  %vm1925 = vcmp.eq.s32.totalorder %v44, %v1912
  %vm1926 = vcmp.eq.s32.totalorder %v45, %v1912
  %vm1927 = vcmp.eq.s32.totalorder %v46, %v1912
  %vm1928 = vcmp.eq.s32.totalorder %v47, %v1912
  %vm1929 = vcmp.eq.s32.totalorder %v48, %v1912
  %vm1930 = vcmp.eq.s32.totalorder %v49, %v1912
  %vm1931 = vcmp.eq.s32.totalorder %v50, %v1912
  %vm1932 = vcmp.eq.s32.totalorder %v51, %v1912
  %vm1933 = vcmp.eq.s32.totalorder %v52, %v1912
  %vm1934 = vcmp.eq.s32.totalorder %v53, %v1912
  %vm1935 = vcmp.eq.s32.totalorder %v54, %v1912
  %vm1936 = vcmp.eq.s32.totalorder %v55, %v1912
  %vm1937 = vcmp.eq.s32.totalorder %v56, %v1912
  %vm1938 = vcmp.eq.s32.totalorder %v57, %v1912
  %vm1939 = vcmp.eq.s32.totalorder %v58, %v1912
  %vm1940 = vcmp.eq.s32.totalorder %v59, %v1912
  %vm1941 = vcmp.eq.s32.totalorder %v60, %v1912
  %vm1942 = vcmp.eq.s32.totalorder %v61, %v1912
  %vm1943 = vcmp.eq.s32.totalorder %v62, %v1912
  %vm1944 = vcmp.eq.s32.totalorder %v63, %v1912
  %vm1945 = vcmp.eq.s32.totalorder %v64, %v1912
  %vm1946 = vcmp.eq.s32.totalorder %v65, %v1912
  %vm1947 = vcmp.eq.s32.totalorder %v66, %v1912
  %vm1948 = vcmp.eq.s32.totalorder %v67, %v1912
  %vm1949 = vcmp.eq.s32.totalorder %v68, %v1912
  %vm1950 = vcmp.eq.s32.totalorder %v69, %v1912
  %vm1951 = vcmp.eq.s32.totalorder %v70, %v1912
  %vm1952 = vcmp.eq.s32.totalorder %v71, %v1912
  %vm1953 = vcmp.eq.s32.totalorder %v72, %v1912
  %vm1954 = vcmp.eq.s32.totalorder %v73, %v1912
  %vm1955 = vcmp.eq.s32.totalorder %v74, %v1912
  %vm1956 = vcmp.eq.s32.totalorder %v75, %v1912
  %vm1957 = vcmp.eq.s32.totalorder %v76, %v1912
  %vm1958 = vcmp.eq.s32.totalorder %v77, %v1912
  %vm1959 = vcmp.eq.s32.totalorder %v78, %v1912
  %vm1960 = vcmp.eq.s32.totalorder %v79, %v1912
  %vm1961 = vcmp.eq.s32.totalorder %v80, %v1912
  %vm1962 = vcmp.eq.s32.totalorder %v81, %v1912
  %vm1963 = vcmp.eq.s32.totalorder %v82, %v1912
  %vm1964 = vcmp.eq.s32.totalorder %v83, %v1912
  %vm1965 = vcmp.eq.s32.totalorder %v84, %v1912
  %vm1966 = vcmp.eq.s32.totalorder %v85, %v1912
  %vm1967 = vcmp.eq.s32.totalorder %v86, %v1912
  %vm1968 = vcmp.eq.s32.totalorder %v87, %v1912
  %vm1969 = vcmp.eq.s32.totalorder %v88, %v1912
  %vm1970 = vcmp.eq.s32.totalorder %v89, %v1912
  %vm1971 = vcmp.eq.s32.totalorder %v90, %v1912
  %vm1972 = vcmp.eq.s32.totalorder %v91, %v1912
  %vm1973 = vcmp.eq.s32.totalorder %v92, %v1912
  %vm1974 = vcmp.eq.s32.totalorder %v93, %v1912
  %vm1975 = vcmp.eq.s32.totalorder %v94, %v1912
  %vm1976 = vcmp.eq.s32.totalorder %v95, %v1912
  %v1977 = vsel %vm1913, 1.0, 0.0
  %v1978 = vsel %vm1914, 1.0, 0.0
  %v1979 = vsel %vm1915, 1.0, 0.0
  %v1980 = vsel %vm1916, 1.0, 0.0
  %v1981 = vsel %vm1917, 1.0, 0.0
  %v1982 = vsel %vm1918, 1.0, 0.0
  %v1983 = vsel %vm1919, 1.0, 0.0
  %v1984 = vsel %vm1920, 1.0, 0.0
  %v1985 = vsel %vm1921, 1.0, 0.0
  %v1986 = vsel %vm1922, 1.0, 0.0
  %v1987 = vsel %vm1923, 1.0, 0.0
  %v1988 = vsel %vm1924, 1.0, 0.0
  %v1989 = vsel %vm1925, 1.0, 0.0
  %v1990 = vsel %vm1926, 1.0, 0.0
  %v1991 = vsel %vm1927, 1.0, 0.0
  %v1992 = vsel %vm1928, 1.0, 0.0
  %v1993 = vsel %vm1929, 1.0, 0.0
  %v1994 = vsel %vm1930, 1.0, 0.0
  %v1995 = vsel %vm1931, 1.0, 0.0
  %v1996 = vsel %vm1932, 1.0, 0.0
  %v1997 = vsel %vm1933, 1.0, 0.0
  %v1998 = vsel %vm1934, 1.0, 0.0
  %v1999 = vsel %vm1935, 1.0, 0.0
  %v2000 = vsel %vm1936, 1.0, 0.0
  %v2001 = vsel %vm1937, 1.0, 0.0
  %v2002 = vsel %vm1938, 1.0, 0.0
  %v2003 = vsel %vm1939, 1.0, 0.0
  %v2004 = vsel %vm1940, 1.0, 0.0
  %v2005 = vsel %vm1941, 1.0, 0.0
  %v2006 = vsel %vm1942, 1.0, 0.0
  %v2007 = vsel %vm1943, 1.0, 0.0
  %v2008 = vsel %vm1944, 1.0, 0.0
  %v2009 = vsel %vm1945, 1.0, 0.0
  %v2010 = vsel %vm1946, 1.0, 0.0
  %v2011 = vsel %vm1947, 1.0, 0.0
  %v2012 = vsel %vm1948, 1.0, 0.0
  %v2013 = vsel %vm1949, 1.0, 0.0
  %v2014 = vsel %vm1950, 1.0, 0.0
  %v2015 = vsel %vm1951, 1.0, 0.0
  %v2016 = vsel %vm1952, 1.0, 0.0
  %v2017 = vsel %vm1953, 1.0, 0.0
  %v2018 = vsel %vm1954, 1.0, 0.0
  %v2019 = vsel %vm1955, 1.0, 0.0
  %v2020 = vsel %vm1956, 1.0, 0.0
  %v2021 = vsel %vm1957, 1.0, 0.0
  %v2022 = vsel %vm1958, 1.0, 0.0
  %v2023 = vsel %vm1959, 1.0, 0.0
  %v2024 = vsel %vm1960, 1.0, 0.0
  %v2025 = vsel %vm1961, 1.0, 0.0
  %v2026 = vsel %vm1962, 1.0, 0.0
  %v2027 = vsel %vm1963, 1.0, 0.0
  %v2028 = vsel %vm1964, 1.0, 0.0
  %v2029 = vsel %vm1965, 1.0, 0.0
  %v2030 = vsel %vm1966, 1.0, 0.0
  %v2031 = vsel %vm1967, 1.0, 0.0
  %v2032 = vsel %vm1968, 1.0, 0.0
  %v2033 = vsel %vm1969, 1.0, 0.0
  %v2034 = vsel %vm1970, 1.0, 0.0
  %v2035 = vsel %vm1971, 1.0, 0.0
  %v2036 = vsel %vm1972, 1.0, 0.0
  %v2037 = vsel %vm1973, 1.0, 0.0
  %v2038 = vsel %vm1974, 1.0, 0.0
  %v2039 = vsel %vm1975, 1.0, 0.0
  %v2040 = vsel %vm1976, 1.0, 0.0
  %v2041 = vpack.c.bf16 %v1978, %v1977
  %v2042 = vpack.c.bf16 %v1980, %v1979
  %v2043 = vpack.c.bf16 %v1982, %v1981
  %v2044 = vpack.c.bf16 %v1984, %v1983
  %v2045 = vpack.c.bf16 %v1986, %v1985
  %v2046 = vpack.c.bf16 %v1988, %v1987
  %v2047 = vpack.c.bf16 %v1990, %v1989
  %v2048 = vpack.c.bf16 %v1992, %v1991
  %v2049 = vpack.c.bf16 %v1994, %v1993
  %v2050 = vpack.c.bf16 %v1996, %v1995
  %v2051 = vpack.c.bf16 %v1998, %v1997
  %v2052 = vpack.c.bf16 %v2000, %v1999
  %v2053 = vpack.c.bf16 %v2002, %v2001
  %v2054 = vpack.c.bf16 %v2004, %v2003
  %v2055 = vpack.c.bf16 %v2006, %v2005
  %v2056 = vpack.c.bf16 %v2008, %v2007
  %v2057 = vpack.c.bf16 %v2010, %v2009
  %v2058 = vpack.c.bf16 %v2012, %v2011
  %v2059 = vpack.c.bf16 %v2014, %v2013
  %v2060 = vpack.c.bf16 %v2016, %v2015
  %v2061 = vpack.c.bf16 %v2018, %v2017
  %v2062 = vpack.c.bf16 %v2020, %v2019
  %v2063 = vpack.c.bf16 %v2022, %v2021
  %v2064 = vpack.c.bf16 %v2024, %v2023
  %v2065 = vpack.c.bf16 %v2026, %v2025
  %v2066 = vpack.c.bf16 %v2028, %v2027
  %v2067 = vpack.c.bf16 %v2030, %v2029
  %v2068 = vpack.c.bf16 %v2032, %v2031
  %v2069 = vpack.c.bf16 %v2034, %v2033
  %v2070 = vpack.c.bf16 %v2036, %v2035
  %v2071 = vpack.c.bf16 %v2038, %v2037
  %v2072 = vpack.c.bf16 %v2040, %v2039
  %2073 = vmatprep.subr.bf16.mxu0 0
  %2074 = vmatpush1.bf16.msra.mxu0 %v2041
  %2075 = vmatprep.subr.bf16.mxu0 0
  %2076 = vmatpush1.bf16.msra.mxu0 %v2042
  %2077 = vmatprep.subr.bf16.mxu0 0
  %2078 = vmatpush1.bf16.msra.mxu0 %v2043
  %2079 = vmatprep.subr.bf16.mxu0 0
  %2080 = vmatpush1.bf16.msra.mxu0 %v2044
  %2081 = vmatprep.subr.bf16.mxu0 0
  %2082 = vmatpush1.bf16.msra.mxu0 %v2045
  %2083 = vmatprep.subr.bf16.mxu0 0
  %2084 = vmatpush1.bf16.msra.mxu0 %v2046
  %2085 = vmatprep.subr.bf16.mxu0 0
  %2086 = vmatpush1.bf16.msra.mxu0 %v2047
  %2087 = vmatprep.subr.bf16.mxu0 0
  %2088 = vmatpush1.bf16.msra.mxu0 %v2048
  %2089 = vmatprep.subr.bf16.mxu0 0
  %2090 = vmatpush1.bf16.msra.mxu0 %v2049
  %2091 = vmatprep.subr.bf16.mxu0 0
  %2092 = vmatpush1.bf16.msra.mxu0 %v2050
  %2093 = vmatprep.subr.bf16.mxu0 0
  %2094 = vmatpush1.bf16.msra.mxu0 %v2051
  %2095 = vmatprep.subr.bf16.mxu0 0
  %2096 = vmatpush1.bf16.msra.mxu0 %v2052
  %2097 = vmatprep.subr.bf16.mxu0 0
  %2098 = vmatpush1.bf16.msra.mxu0 %v2053
  %2099 = vmatprep.subr.bf16.mxu0 0
  %2100 = vmatpush1.bf16.msra.mxu0 %v2054
  %2101 = vmatprep.subr.bf16.mxu0 0
  %2102 = vmatpush1.bf16.msra.mxu0 %v2055
  %2103 = vmatprep.subr.bf16.mxu0 0
  %2104 = vmatpush1.bf16.msra.mxu0 %v2056
  %2105 = vmatprep.mubr.bf16.mxu0 %v288
  %2106 = vmatmul.mubr.bf16.gmra.mrb[0].mxu0 %v280
  %v2107 = vpop.f32.mrb[0].mxu0
  %v2108 = vadd.f32 0.0, %v2107
  %v2109 = vpop.f32.mrb[0].mxu0
  %v2110 = vpop.f32.mrb[0].mxu0
  %v2111 = vpop.f32.mrb[0].mxu0
  %2112 = vdwg.mxu0
  %2113 = vmatprep.subr.bf16.mxu0 0
  %2114 = vmatpush1.bf16.msra.mxu0 %v2057
  %2115 = vmatprep.subr.bf16.mxu0 0
  %2116 = vmatpush1.bf16.msra.mxu0 %v2058
  %2117 = vmatprep.subr.bf16.mxu0 0
  %2118 = vmatpush1.bf16.msra.mxu0 %v2059
  %2119 = vmatprep.subr.bf16.mxu0 0
  %2120 = vmatpush1.bf16.msra.mxu0 %v2060
  %2121 = vmatprep.subr.bf16.mxu0 0
  %2122 = vmatpush1.bf16.msra.mxu0 %v2061
  %2123 = vmatprep.subr.bf16.mxu0 0
  %2124 = vmatpush1.bf16.msra.mxu0 %v2062
  %2125 = vmatprep.subr.bf16.mxu0 0
  %2126 = vmatpush1.bf16.msra.mxu0 %v2063
  %2127 = vmatprep.subr.bf16.mxu0 0
  %2128 = vmatpush1.bf16.msra.mxu0 %v2064
  %2129 = vmatprep.subr.bf16.mxu0 0
  %2130 = vmatpush1.bf16.msra.mxu0 %v2065
  %2131 = vmatprep.subr.bf16.mxu0 0
  %2132 = vmatpush1.bf16.msra.mxu0 %v2066
  %2133 = vmatprep.subr.bf16.mxu0 0
  %2134 = vmatpush1.bf16.msra.mxu0 %v2067
  %2135 = vmatprep.subr.bf16.mxu0 0
  %2136 = vmatpush1.bf16.msra.mxu0 %v2068
  %2137 = vmatprep.subr.bf16.mxu0 0
  %2138 = vmatpush1.bf16.msra.mxu0 %v2069
  %2139 = vmatprep.subr.bf16.mxu0 0
  %2140 = vmatpush1.bf16.msra.mxu0 %v2070
  %2141 = vmatprep.subr.bf16.mxu0 0
  %2142 = vmatpush1.bf16.msra.mxu0 %v2071
  %2143 = vmatprep.subr.bf16.mxu0 0
  %2144 = vmatpush1.bf16.msra.mxu0 %v2072
  %2145 = vmatprep.mubr.bf16.mxu0 %v289
  %2146 = vmatmul.mubr.bf16.gmra.mrb[0].mxu0 %v287
  %v2147 = vpop.f32.mrb[0].mxu0
  %v2148 = vadd.f32 %v2108, %v2147
  %v2149 = vpop.f32.mrb[0].mxu0
  %v2150 = vpop.f32.mrb[0].mxu0
  %v2151 = vpop.f32.mrb[0].mxu0
  %2152 = vdwg.mxu0
  %s2153 = scalar_lea.vmem %s1, 24
  %v2154 = vld [vmem:[%s2153] sm:$0xf]
  %v2155 = vpack.c.bf16 %v2148, %v2148
  %v2157 = vsel %vm625, %v2154, 0
  %v2160 = vand.u32 %v2155, %v632
  %2162 = vmatprep.subr.bf16.mxu0 0
  %2163 = vmatpush1.bf16.msra.mxu0 %v2160
  %2164 = vmatprep.subr.bf16.mxu0 0
  %2165 = vmatpush1.bf16.msra.mxu0 0
  %2166 = vmatprep.subr.bf16.mxu0 0
  %2167 = vmatpush1.bf16.msra.mxu0 0
  %2168 = vmatprep.subr.bf16.mxu0 0
  %2169 = vmatpush1.bf16.msra.mxu0 0
  %2170 = vmatprep.subr.bf16.mxu0 0
  %2171 = vmatpush1.bf16.msra.mxu0 0
  %2172 = vmatprep.subr.bf16.mxu0 0
  %2173 = vmatpush1.bf16.msra.mxu0 0
  %2174 = vmatprep.subr.bf16.mxu0 0
  %2175 = vmatpush1.bf16.msra.mxu0 0
  %2176 = vmatprep.subr.bf16.mxu0 0
  %2177 = vmatpush1.bf16.msra.mxu0 0
  %2178 = vmatprep.subr.bf16.mxu0 0
  %2179 = vmatpush1.bf16.msra.mxu0 0
  %2180 = vmatprep.subr.bf16.mxu0 0
  %2181 = vmatpush1.bf16.msra.mxu0 0
  %2182 = vmatprep.subr.bf16.mxu0 0
  %2183 = vmatpush1.bf16.msra.mxu0 0
  %2184 = vmatprep.subr.bf16.mxu0 0
  %2185 = vmatpush1.bf16.msra.mxu0 0
  %2186 = vmatprep.subr.bf16.mxu0 0
  %2187 = vmatpush1.bf16.msra.mxu0 0
  %2188 = vmatprep.subr.bf16.mxu0 0
  %2189 = vmatpush1.bf16.msra.mxu0 0
  %2190 = vmatprep.subr.bf16.mxu0 0
  %2191 = vmatpush1.bf16.msra.mxu0 0
  %2192 = vmatprep.subr.bf16.mxu0 0
  %2193 = vmatpush1.bf16.msra.mxu0 0
  %2194 = vmatprep.mubr.bf16.mxu0 0
  %2195 = vmatmul.mubr.bf16.gmra.mrb[0].mxu0 %v2157
  %v2196 = vpop.f32.mrb[0].mxu0
  %v2197 = vadd.f32 0.0, %v2196
  %v2198 = vpop.f32.mrb[0].mxu0
  %v2199 = vpop.f32.mrb[0].mxu0
  %v2200 = vpop.f32.mrb[0].mxu0
  %2201 = vdwg.mxu0
  %v2202 = vadd.f32 %v1908, %v2197
  %vm2203 = vmand %vm1318, %vm1020
  %vm2204 = vmand %vm2203, %vm1022
  %v2205 = vadd.s32 %v1322, %v1019
  %v2206 = vsel %vm2204, %v2205, 4294967295
  %vm2207 = vcmp.eq.s32.totalorder %v32, %v2206
  %vm2208 = vcmp.eq.s32.totalorder %v33, %v2206
  %vm2209 = vcmp.eq.s32.totalorder %v34, %v2206
  %vm2210 = vcmp.eq.s32.totalorder %v35, %v2206
  %vm2211 = vcmp.eq.s32.totalorder %v36, %v2206
  %vm2212 = vcmp.eq.s32.totalorder %v37, %v2206
  %vm2213 = vcmp.eq.s32.totalorder %v38, %v2206
  %vm2214 = vcmp.eq.s32.totalorder %v39, %v2206
  %vm2215 = vcmp.eq.s32.totalorder %v40, %v2206
  %vm2216 = vcmp.eq.s32.totalorder %v41, %v2206
  %vm2217 = vcmp.eq.s32.totalorder %v42, %v2206
  %vm2218 = vcmp.eq.s32.totalorder %v43, %v2206
  %vm2219 = vcmp.eq.s32.totalorder %v44, %v2206
  %vm2220 = vcmp.eq.s32.totalorder %v45, %v2206
  %vm2221 = vcmp.eq.s32.totalorder %v46, %v2206
  %vm2222 = vcmp.eq.s32.totalorder %v47, %v2206
  %vm2223 = vcmp.eq.s32.totalorder %v48, %v2206
  %vm2224 = vcmp.eq.s32.totalorder %v49, %v2206
  %vm2225 = vcmp.eq.s32.totalorder %v50, %v2206
  %vm2226 = vcmp.eq.s32.totalorder %v51, %v2206
  %vm2227 = vcmp.eq.s32.totalorder %v52, %v2206
  %vm2228 = vcmp.eq.s32.totalorder %v53, %v2206
  %vm2229 = vcmp.eq.s32.totalorder %v54, %v2206
  %vm2230 = vcmp.eq.s32.totalorder %v55, %v2206
  %vm2231 = vcmp.eq.s32.totalorder %v56, %v2206
  %vm2232 = vcmp.eq.s32.totalorder %v57, %v2206
  %vm2233 = vcmp.eq.s32.totalorder %v58, %v2206
  %vm2234 = vcmp.eq.s32.totalorder %v59, %v2206
  %vm2235 = vcmp.eq.s32.totalorder %v60, %v2206
  %vm2236 = vcmp.eq.s32.totalorder %v61, %v2206
  %vm2237 = vcmp.eq.s32.totalorder %v62, %v2206
  %vm2238 = vcmp.eq.s32.totalorder %v63, %v2206
  %vm2239 = vcmp.eq.s32.totalorder %v64, %v2206
  %vm2240 = vcmp.eq.s32.totalorder %v65, %v2206
  %vm2241 = vcmp.eq.s32.totalorder %v66, %v2206
  %vm2242 = vcmp.eq.s32.totalorder %v67, %v2206
  %vm2243 = vcmp.eq.s32.totalorder %v68, %v2206
  %vm2244 = vcmp.eq.s32.totalorder %v69, %v2206
  %vm2245 = vcmp.eq.s32.totalorder %v70, %v2206
  %vm2246 = vcmp.eq.s32.totalorder %v71, %v2206
  %vm2247 = vcmp.eq.s32.totalorder %v72, %v2206
  %vm2248 = vcmp.eq.s32.totalorder %v73, %v2206
  %vm2249 = vcmp.eq.s32.totalorder %v74, %v2206
  %vm2250 = vcmp.eq.s32.totalorder %v75, %v2206
  %vm2251 = vcmp.eq.s32.totalorder %v76, %v2206
  %vm2252 = vcmp.eq.s32.totalorder %v77, %v2206
  %vm2253 = vcmp.eq.s32.totalorder %v78, %v2206
  %vm2254 = vcmp.eq.s32.totalorder %v79, %v2206
  %vm2255 = vcmp.eq.s32.totalorder %v80, %v2206
  %vm2256 = vcmp.eq.s32.totalorder %v81, %v2206
  %vm2257 = vcmp.eq.s32.totalorder %v82, %v2206
  %vm2258 = vcmp.eq.s32.totalorder %v83, %v2206
  %vm2259 = vcmp.eq.s32.totalorder %v84, %v2206
  %vm2260 = vcmp.eq.s32.totalorder %v85, %v2206
  %vm2261 = vcmp.eq.s32.totalorder %v86, %v2206
  %vm2262 = vcmp.eq.s32.totalorder %v87, %v2206
  %vm2263 = vcmp.eq.s32.totalorder %v88, %v2206
  %vm2264 = vcmp.eq.s32.totalorder %v89, %v2206
  %vm2265 = vcmp.eq.s32.totalorder %v90, %v2206
  %vm2266 = vcmp.eq.s32.totalorder %v91, %v2206
  %vm2267 = vcmp.eq.s32.totalorder %v92, %v2206
  %vm2268 = vcmp.eq.s32.totalorder %v93, %v2206
  %vm2269 = vcmp.eq.s32.totalorder %v94, %v2206
  %vm2270 = vcmp.eq.s32.totalorder %v95, %v2206
  %v2271 = vsel %vm2207, 1.0, 0.0
  %v2272 = vsel %vm2208, 1.0, 0.0
  %v2273 = vsel %vm2209, 1.0, 0.0
  %v2274 = vsel %vm2210, 1.0, 0.0
  %v2275 = vsel %vm2211, 1.0, 0.0
  %v2276 = vsel %vm2212, 1.0, 0.0
  %v2277 = vsel %vm2213, 1.0, 0.0
  %v2278 = vsel %vm2214, 1.0, 0.0
  %v2279 = vsel %vm2215, 1.0, 0.0
  %v2280 = vsel %vm2216, 1.0, 0.0
  %v2281 = vsel %vm2217, 1.0, 0.0
  %v2282 = vsel %vm2218, 1.0, 0.0
  %v2283 = vsel %vm2219, 1.0, 0.0
  %v2284 = vsel %vm2220, 1.0, 0.0
  %v2285 = vsel %vm2221, 1.0, 0.0
  %v2286 = vsel %vm2222, 1.0, 0.0
  %v2287 = vsel %vm2223, 1.0, 0.0
  %v2288 = vsel %vm2224, 1.0, 0.0
  %v2289 = vsel %vm2225, 1.0, 0.0
  %v2290 = vsel %vm2226, 1.0, 0.0
  %v2291 = vsel %vm2227, 1.0, 0.0
  %v2292 = vsel %vm2228, 1.0, 0.0
  %v2293 = vsel %vm2229, 1.0, 0.0
  %v2294 = vsel %vm2230, 1.0, 0.0
  %v2295 = vsel %vm2231, 1.0, 0.0
  %v2296 = vsel %vm2232, 1.0, 0.0
  %v2297 = vsel %vm2233, 1.0, 0.0
  %v2298 = vsel %vm2234, 1.0, 0.0
  %v2299 = vsel %vm2235, 1.0, 0.0
  %v2300 = vsel %vm2236, 1.0, 0.0
  %v2301 = vsel %vm2237, 1.0, 0.0
  %v2302 = vsel %vm2238, 1.0, 0.0
  %v2303 = vsel %vm2239, 1.0, 0.0
  %v2304 = vsel %vm2240, 1.0, 0.0
  %v2305 = vsel %vm2241, 1.0, 0.0
  %v2306 = vsel %vm2242, 1.0, 0.0
  %v2307 = vsel %vm2243, 1.0, 0.0
  %v2308 = vsel %vm2244, 1.0, 0.0
  %v2309 = vsel %vm2245, 1.0, 0.0
  %v2310 = vsel %vm2246, 1.0, 0.0
  %v2311 = vsel %vm2247, 1.0, 0.0
  %v2312 = vsel %vm2248, 1.0, 0.0
  %v2313 = vsel %vm2249, 1.0, 0.0
  %v2314 = vsel %vm2250, 1.0, 0.0
  %v2315 = vsel %vm2251, 1.0, 0.0
  %v2316 = vsel %vm2252, 1.0, 0.0
  %v2317 = vsel %vm2253, 1.0, 0.0
  %v2318 = vsel %vm2254, 1.0, 0.0
  %v2319 = vsel %vm2255, 1.0, 0.0
  %v2320 = vsel %vm2256, 1.0, 0.0
  %v2321 = vsel %vm2257, 1.0, 0.0
  %v2322 = vsel %vm2258, 1.0, 0.0
  %v2323 = vsel %vm2259, 1.0, 0.0
  %v2324 = vsel %vm2260, 1.0, 0.0
  %v2325 = vsel %vm2261, 1.0, 0.0
  %v2326 = vsel %vm2262, 1.0, 0.0
  %v2327 = vsel %vm2263, 1.0, 0.0
  %v2328 = vsel %vm2264, 1.0, 0.0
  %v2329 = vsel %vm2265, 1.0, 0.0
  %v2330 = vsel %vm2266, 1.0, 0.0
  %v2331 = vsel %vm2267, 1.0, 0.0
  %v2332 = vsel %vm2268, 1.0, 0.0
  %v2333 = vsel %vm2269, 1.0, 0.0
  %v2334 = vsel %vm2270, 1.0, 0.0
  %v2335 = vpack.c.bf16 %v2272, %v2271
  %v2336 = vpack.c.bf16 %v2274, %v2273
  %v2337 = vpack.c.bf16 %v2276, %v2275
  %v2338 = vpack.c.bf16 %v2278, %v2277
  %v2339 = vpack.c.bf16 %v2280, %v2279
  %v2340 = vpack.c.bf16 %v2282, %v2281
  %v2341 = vpack.c.bf16 %v2284, %v2283
  %v2342 = vpack.c.bf16 %v2286, %v2285
  %v2343 = vpack.c.bf16 %v2288, %v2287
  %v2344 = vpack.c.bf16 %v2290, %v2289
  %v2345 = vpack.c.bf16 %v2292, %v2291
  %v2346 = vpack.c.bf16 %v2294, %v2293
  %v2347 = vpack.c.bf16 %v2296, %v2295
  %v2348 = vpack.c.bf16 %v2298, %v2297
  %v2349 = vpack.c.bf16 %v2300, %v2299
  %v2350 = vpack.c.bf16 %v2302, %v2301
  %v2351 = vpack.c.bf16 %v2304, %v2303
  %v2352 = vpack.c.bf16 %v2306, %v2305
  %v2353 = vpack.c.bf16 %v2308, %v2307
  %v2354 = vpack.c.bf16 %v2310, %v2309
  %v2355 = vpack.c.bf16 %v2312, %v2311
  %v2356 = vpack.c.bf16 %v2314, %v2313
  %v2357 = vpack.c.bf16 %v2316, %v2315
  %v2358 = vpack.c.bf16 %v2318, %v2317
  %v2359 = vpack.c.bf16 %v2320, %v2319
  %v2360 = vpack.c.bf16 %v2322, %v2321
  %v2361 = vpack.c.bf16 %v2324, %v2323
  %v2362 = vpack.c.bf16 %v2326, %v2325
  %v2363 = vpack.c.bf16 %v2328, %v2327
  %v2364 = vpack.c.bf16 %v2330, %v2329
  %v2365 = vpack.c.bf16 %v2332, %v2331
  %v2366 = vpack.c.bf16 %v2334, %v2333
  %2367 = vmatprep.subr.bf16.mxu0 0
  %2368 = vmatpush1.bf16.msra.mxu0 %v2335
  %2369 = vmatprep.subr.bf16.mxu0 0
  %2370 = vmatpush1.bf16.msra.mxu0 %v2336
  %2371 = vmatprep.subr.bf16.mxu0 0
  %2372 = vmatpush1.bf16.msra.mxu0 %v2337
  %2373 = vmatprep.subr.bf16.mxu0 0
  %2374 = vmatpush1.bf16.msra.mxu0 %v2338
  %2375 = vmatprep.subr.bf16.mxu0 0
  %2376 = vmatpush1.bf16.msra.mxu0 %v2339
  %2377 = vmatprep.subr.bf16.mxu0 0
  %2378 = vmatpush1.bf16.msra.mxu0 %v2340
  %2379 = vmatprep.subr.bf16.mxu0 0
  %2380 = vmatpush1.bf16.msra.mxu0 %v2341
  %2381 = vmatprep.subr.bf16.mxu0 0
  %2382 = vmatpush1.bf16.msra.mxu0 %v2342
  %2383 = vmatprep.subr.bf16.mxu0 0
  %2384 = vmatpush1.bf16.msra.mxu0 %v2343
  %2385 = vmatprep.subr.bf16.mxu0 0
  %2386 = vmatpush1.bf16.msra.mxu0 %v2344
  %2387 = vmatprep.subr.bf16.mxu0 0
  %2388 = vmatpush1.bf16.msra.mxu0 %v2345
  %2389 = vmatprep.subr.bf16.mxu0 0
  %2390 = vmatpush1.bf16.msra.mxu0 %v2346
  %2391 = vmatprep.subr.bf16.mxu0 0
  %2392 = vmatpush1.bf16.msra.mxu0 %v2347
  %2393 = vmatprep.subr.bf16.mxu0 0
  %2394 = vmatpush1.bf16.msra.mxu0 %v2348
  %2395 = vmatprep.subr.bf16.mxu0 0
  %2396 = vmatpush1.bf16.msra.mxu0 %v2349
  %2397 = vmatprep.subr.bf16.mxu0 0
  %2398 = vmatpush1.bf16.msra.mxu0 %v2350
  %2399 = vmatprep.mubr.bf16.mxu0 %v288
  %2400 = vmatmul.mubr.bf16.gmra.mrb[0].mxu0 %v280
  %v2401 = vpop.f32.mrb[0].mxu0
  %v2402 = vadd.f32 0.0, %v2401
  %v2403 = vpop.f32.mrb[0].mxu0
  %v2404 = vpop.f32.mrb[0].mxu0
  %v2405 = vpop.f32.mrb[0].mxu0
  %2406 = vdwg.mxu0
  %2407 = vmatprep.subr.bf16.mxu0 0
  %2408 = vmatpush1.bf16.msra.mxu0 %v2351
  %2409 = vmatprep.subr.bf16.mxu0 0
  %2410 = vmatpush1.bf16.msra.mxu0 %v2352
  %2411 = vmatprep.subr.bf16.mxu0 0
  %2412 = vmatpush1.bf16.msra.mxu0 %v2353
  %2413 = vmatprep.subr.bf16.mxu0 0
  %2414 = vmatpush1.bf16.msra.mxu0 %v2354
  %2415 = vmatprep.subr.bf16.mxu0 0
  %2416 = vmatpush1.bf16.msra.mxu0 %v2355
  %2417 = vmatprep.subr.bf16.mxu0 0
  %2418 = vmatpush1.bf16.msra.mxu0 %v2356
  %2419 = vmatprep.subr.bf16.mxu0 0
  %2420 = vmatpush1.bf16.msra.mxu0 %v2357
  %2421 = vmatprep.subr.bf16.mxu0 0
  %2422 = vmatpush1.bf16.msra.mxu0 %v2358
  %2423 = vmatprep.subr.bf16.mxu0 0
  %2424 = vmatpush1.bf16.msra.mxu0 %v2359
  %2425 = vmatprep.subr.bf16.mxu0 0
  %2426 = vmatpush1.bf16.msra.mxu0 %v2360
  %2427 = vmatprep.subr.bf16.mxu0 0
  %2428 = vmatpush1.bf16.msra.mxu0 %v2361
  %2429 = vmatprep.subr.bf16.mxu0 0
  %2430 = vmatpush1.bf16.msra.mxu0 %v2362
  %2431 = vmatprep.subr.bf16.mxu0 0
  %2432 = vmatpush1.bf16.msra.mxu0 %v2363
  %2433 = vmatprep.subr.bf16.mxu0 0
  %2434 = vmatpush1.bf16.msra.mxu0 %v2364
  %2435 = vmatprep.subr.bf16.mxu0 0
  %2436 = vmatpush1.bf16.msra.mxu0 %v2365
  %2437 = vmatprep.subr.bf16.mxu0 0
  %2438 = vmatpush1.bf16.msra.mxu0 %v2366
  %2439 = vmatprep.mubr.bf16.mxu0 %v289
  %2440 = vmatmul.mubr.bf16.gmra.mrb[0].mxu0 %v287
  %v2441 = vpop.f32.mrb[0].mxu0
  %v2442 = vadd.f32 %v2402, %v2441
  %v2443 = vpop.f32.mrb[0].mxu0
  %v2444 = vpop.f32.mrb[0].mxu0
  %v2445 = vpop.f32.mrb[0].mxu0
  %2446 = vdwg.mxu0
  %s2447 = scalar_lea.vmem %s1, 28
  %v2448 = vld [vmem:[%s2447] sm:$0xf]
  %v2449 = vpack.c.bf16 %v2442, %v2442
  %v2451 = vsel %vm625, %v2448, 0
  %v2454 = vand.u32 %v2449, %v632
  %2456 = vmatprep.subr.bf16.mxu0 0
  %2457 = vmatpush1.bf16.msra.mxu0 %v2454
  %2458 = vmatprep.subr.bf16.mxu0 0
  %2459 = vmatpush1.bf16.msra.mxu0 0
  %2460 = vmatprep.subr.bf16.mxu0 0
  %2461 = vmatpush1.bf16.msra.mxu0 0
  %2462 = vmatprep.subr.bf16.mxu0 0
  %2463 = vmatpush1.bf16.msra.mxu0 0
  %2464 = vmatprep.subr.bf16.mxu0 0
  %2465 = vmatpush1.bf16.msra.mxu0 0
  %2466 = vmatprep.subr.bf16.mxu0 0
  %2467 = vmatpush1.bf16.msra.mxu0 0
  %2468 = vmatprep.subr.bf16.mxu0 0
  %2469 = vmatpush1.bf16.msra.mxu0 0
  %2470 = vmatprep.subr.bf16.mxu0 0
  %2471 = vmatpush1.bf16.msra.mxu0 0
  %2472 = vmatprep.subr.bf16.mxu0 0
  %2473 = vmatpush1.bf16.msra.mxu0 0
  %2474 = vmatprep.subr.bf16.mxu0 0
  %2475 = vmatpush1.bf16.msra.mxu0 0
  %2476 = vmatprep.subr.bf16.mxu0 0
  %2477 = vmatpush1.bf16.msra.mxu0 0
  %2478 = vmatprep.subr.bf16.mxu0 0
  %2479 = vmatpush1.bf16.msra.mxu0 0
  %2480 = vmatprep.subr.bf16.mxu0 0
  %2481 = vmatpush1.bf16.msra.mxu0 0
  %2482 = vmatprep.subr.bf16.mxu0 0
  %2483 = vmatpush1.bf16.msra.mxu0 0
  %2484 = vmatprep.subr.bf16.mxu0 0
  %2485 = vmatpush1.bf16.msra.mxu0 0
  %2486 = vmatprep.subr.bf16.mxu0 0
  %2487 = vmatpush1.bf16.msra.mxu0 0
  %2488 = vmatprep.mubr.bf16.mxu0 0
  %2489 = vmatmul.mubr.bf16.gmra.mrb[0].mxu0 %v2451
  %v2490 = vpop.f32.mrb[0].mxu0
  %v2491 = vadd.f32 0.0, %v2490
  %v2492 = vpop.f32.mrb[0].mxu0
  %v2493 = vpop.f32.mrb[0].mxu0
  %v2494 = vpop.f32.mrb[0].mxu0
  %2495 = vdwg.mxu0
  %v2496 = vadd.f32 %v2202, %v2491
  %v2497 = vadd.s32 %v96, 1
  %vm2498 = vcmp.ge.s32.totalorder %v2497, 0
  %vm2499 = vcmp.lt.s32.totalorder %v2497, 16
  %vm2500 = vmand %vm2498, %vm2499
  %vm2501 = vmand %vm2500, %vm103
  %vm2502 = vmand %vm2501, %vm105
  %v2503 = vmul.u32 %v2497, 16
  %v2504 = vadd.s32 %v107, %v2503
  %v2505 = vadd.s32 %v2504, %v99
  %v2506 = vsel %vm2502, %v2505, 4294967295
  %vm2507 = vcmp.eq.s32.totalorder %v32, %v2506
  %vm2508 = vcmp.eq.s32.totalorder %v33, %v2506
  %vm2509 = vcmp.eq.s32.totalorder %v34, %v2506
  %vm2510 = vcmp.eq.s32.totalorder %v35, %v2506
  %vm2511 = vcmp.eq.s32.totalorder %v36, %v2506
  %vm2512 = vcmp.eq.s32.totalorder %v37, %v2506
  %vm2513 = vcmp.eq.s32.totalorder %v38, %v2506
  %vm2514 = vcmp.eq.s32.totalorder %v39, %v2506
  %vm2515 = vcmp.eq.s32.totalorder %v40, %v2506
  %vm2516 = vcmp.eq.s32.totalorder %v41, %v2506
  %vm2517 = vcmp.eq.s32.totalorder %v42, %v2506
  %vm2518 = vcmp.eq.s32.totalorder %v43, %v2506
  %vm2519 = vcmp.eq.s32.totalorder %v44, %v2506
  %vm2520 = vcmp.eq.s32.totalorder %v45, %v2506
  %vm2521 = vcmp.eq.s32.totalorder %v46, %v2506
  %vm2522 = vcmp.eq.s32.totalorder %v47, %v2506
  %vm2523 = vcmp.eq.s32.totalorder %v48, %v2506
  %vm2524 = vcmp.eq.s32.totalorder %v49, %v2506
  %vm2525 = vcmp.eq.s32.totalorder %v50, %v2506
  %vm2526 = vcmp.eq.s32.totalorder %v51, %v2506
  %vm2527 = vcmp.eq.s32.totalorder %v52, %v2506
  %vm2528 = vcmp.eq.s32.totalorder %v53, %v2506
  %vm2529 = vcmp.eq.s32.totalorder %v54, %v2506
  %vm2530 = vcmp.eq.s32.totalorder %v55, %v2506
  %vm2531 = vcmp.eq.s32.totalorder %v56, %v2506
  %vm2532 = vcmp.eq.s32.totalorder %v57, %v2506
  %vm2533 = vcmp.eq.s32.totalorder %v58, %v2506
  %vm2534 = vcmp.eq.s32.totalorder %v59, %v2506
  %vm2535 = vcmp.eq.s32.totalorder %v60, %v2506
  %vm2536 = vcmp.eq.s32.totalorder %v61, %v2506
  %vm2537 = vcmp.eq.s32.totalorder %v62, %v2506
  %vm2538 = vcmp.eq.s32.totalorder %v63, %v2506
  %vm2539 = vcmp.eq.s32.totalorder %v64, %v2506
  %vm2540 = vcmp.eq.s32.totalorder %v65, %v2506
  %vm2541 = vcmp.eq.s32.totalorder %v66, %v2506
  %vm2542 = vcmp.eq.s32.totalorder %v67, %v2506
  %vm2543 = vcmp.eq.s32.totalorder %v68, %v2506
  %vm2544 = vcmp.eq.s32.totalorder %v69, %v2506
  %vm2545 = vcmp.eq.s32.totalorder %v70, %v2506
  %vm2546 = vcmp.eq.s32.totalorder %v71, %v2506
  %vm2547 = vcmp.eq.s32.totalorder %v72, %v2506
  %vm2548 = vcmp.eq.s32.totalorder %v73, %v2506
  %vm2549 = vcmp.eq.s32.totalorder %v74, %v2506
  %vm2550 = vcmp.eq.s32.totalorder %v75, %v2506
  %vm2551 = vcmp.eq.s32.totalorder %v76, %v2506
  %vm2552 = vcmp.eq.s32.totalorder %v77, %v2506
  %vm2553 = vcmp.eq.s32.totalorder %v78, %v2506
  %vm2554 = vcmp.eq.s32.totalorder %v79, %v2506
  %vm2555 = vcmp.eq.s32.totalorder %v80, %v2506
  %vm2556 = vcmp.eq.s32.totalorder %v81, %v2506
  %vm2557 = vcmp.eq.s32.totalorder %v82, %v2506
  %vm2558 = vcmp.eq.s32.totalorder %v83, %v2506
  %vm2559 = vcmp.eq.s32.totalorder %v84, %v2506
  %vm2560 = vcmp.eq.s32.totalorder %v85, %v2506
  %vm2561 = vcmp.eq.s32.totalorder %v86, %v2506
  %vm2562 = vcmp.eq.s32.totalorder %v87, %v2506
  %vm2563 = vcmp.eq.s32.totalorder %v88, %v2506
  %vm2564 = vcmp.eq.s32.totalorder %v89, %v2506
  %vm2565 = vcmp.eq.s32.totalorder %v90, %v2506
  %vm2566 = vcmp.eq.s32.totalorder %v91, %v2506
  %vm2567 = vcmp.eq.s32.totalorder %v92, %v2506
  %vm2568 = vcmp.eq.s32.totalorder %v93, %v2506
  %vm2569 = vcmp.eq.s32.totalorder %v94, %v2506
  %vm2570 = vcmp.eq.s32.totalorder %v95, %v2506
  %v2571 = vsel %vm2507, 1.0, 0.0
  %v2572 = vsel %vm2508, 1.0, 0.0
  %v2573 = vsel %vm2509, 1.0, 0.0
  %v2574 = vsel %vm2510, 1.0, 0.0
  %v2575 = vsel %vm2511, 1.0, 0.0
  %v2576 = vsel %vm2512, 1.0, 0.0
  %v2577 = vsel %vm2513, 1.0, 0.0
  %v2578 = vsel %vm2514, 1.0, 0.0
  %v2579 = vsel %vm2515, 1.0, 0.0
  %v2580 = vsel %vm2516, 1.0, 0.0
  %v2581 = vsel %vm2517, 1.0, 0.0
  %v2582 = vsel %vm2518, 1.0, 0.0
  %v2583 = vsel %vm2519, 1.0, 0.0
  %v2584 = vsel %vm2520, 1.0, 0.0
  %v2585 = vsel %vm2521, 1.0, 0.0
  %v2586 = vsel %vm2522, 1.0, 0.0
  %v2587 = vsel %vm2523, 1.0, 0.0
  %v2588 = vsel %vm2524, 1.0, 0.0
  %v2589 = vsel %vm2525, 1.0, 0.0
  %v2590 = vsel %vm2526, 1.0, 0.0
  %v2591 = vsel %vm2527, 1.0, 0.0
  %v2592 = vsel %vm2528, 1.0, 0.0
  %v2593 = vsel %vm2529, 1.0, 0.0
  %v2594 = vsel %vm2530, 1.0, 0.0
  %v2595 = vsel %vm2531, 1.0, 0.0
  %v2596 = vsel %vm2532, 1.0, 0.0
  %v2597 = vsel %vm2533, 1.0, 0.0
  %v2598 = vsel %vm2534, 1.0, 0.0
  %v2599 = vsel %vm2535, 1.0, 0.0
  %v2600 = vsel %vm2536, 1.0, 0.0
  %v2601 = vsel %vm2537, 1.0, 0.0
  %v2602 = vsel %vm2538, 1.0, 0.0
  %v2603 = vsel %vm2539, 1.0, 0.0
  %v2604 = vsel %vm2540, 1.0, 0.0
  %v2605 = vsel %vm2541, 1.0, 0.0
  %v2606 = vsel %vm2542, 1.0, 0.0
  %v2607 = vsel %vm2543, 1.0, 0.0
  %v2608 = vsel %vm2544, 1.0, 0.0
  %v2609 = vsel %vm2545, 1.0, 0.0
  %v2610 = vsel %vm2546, 1.0, 0.0
  %v2611 = vsel %vm2547, 1.0, 0.0
  %v2612 = vsel %vm2548, 1.0, 0.0
  %v2613 = vsel %vm2549, 1.0, 0.0
  %v2614 = vsel %vm2550, 1.0, 0.0
  %v2615 = vsel %vm2551, 1.0, 0.0
  %v2616 = vsel %vm2552, 1.0, 0.0
  %v2617 = vsel %vm2553, 1.0, 0.0
  %v2618 = vsel %vm2554, 1.0, 0.0
  %v2619 = vsel %vm2555, 1.0, 0.0
  %v2620 = vsel %vm2556, 1.0, 0.0
  %v2621 = vsel %vm2557, 1.0, 0.0
  %v2622 = vsel %vm2558, 1.0, 0.0
  %v2623 = vsel %vm2559, 1.0, 0.0
  %v2624 = vsel %vm2560, 1.0, 0.0
  %v2625 = vsel %vm2561, 1.0, 0.0
  %v2626 = vsel %vm2562, 1.0, 0.0
  %v2627 = vsel %vm2563, 1.0, 0.0
  %v2628 = vsel %vm2564, 1.0, 0.0
  %v2629 = vsel %vm2565, 1.0, 0.0
  %v2630 = vsel %vm2566, 1.0, 0.0
  %v2631 = vsel %vm2567, 1.0, 0.0
  %v2632 = vsel %vm2568, 1.0, 0.0
  %v2633 = vsel %vm2569, 1.0, 0.0
  %v2634 = vsel %vm2570, 1.0, 0.0
  %v2635 = vpack.c.bf16 %v2572, %v2571
  %v2636 = vpack.c.bf16 %v2574, %v2573
  %v2637 = vpack.c.bf16 %v2576, %v2575
  %v2638 = vpack.c.bf16 %v2578, %v2577
  %v2639 = vpack.c.bf16 %v2580, %v2579
  %v2640 = vpack.c.bf16 %v2582, %v2581
  %v2641 = vpack.c.bf16 %v2584, %v2583
  %v2642 = vpack.c.bf16 %v2586, %v2585
  %v2643 = vpack.c.bf16 %v2588, %v2587
  %v2644 = vpack.c.bf16 %v2590, %v2589
  %v2645 = vpack.c.bf16 %v2592, %v2591
  %v2646 = vpack.c.bf16 %v2594, %v2593
  %v2647 = vpack.c.bf16 %v2596, %v2595
  %v2648 = vpack.c.bf16 %v2598, %v2597
  %v2649 = vpack.c.bf16 %v2600, %v2599
  %v2650 = vpack.c.bf16 %v2602, %v2601
  %v2651 = vpack.c.bf16 %v2604, %v2603
  %v2652 = vpack.c.bf16 %v2606, %v2605
  %v2653 = vpack.c.bf16 %v2608, %v2607
  %v2654 = vpack.c.bf16 %v2610, %v2609
  %v2655 = vpack.c.bf16 %v2612, %v2611
  %v2656 = vpack.c.bf16 %v2614, %v2613
  %v2657 = vpack.c.bf16 %v2616, %v2615
  %v2658 = vpack.c.bf16 %v2618, %v2617
  %v2659 = vpack.c.bf16 %v2620, %v2619
  %v2660 = vpack.c.bf16 %v2622, %v2621
  %v2661 = vpack.c.bf16 %v2624, %v2623
  %v2662 = vpack.c.bf16 %v2626, %v2625
  %v2663 = vpack.c.bf16 %v2628, %v2627
  %v2664 = vpack.c.bf16 %v2630, %v2629
  %v2665 = vpack.c.bf16 %v2632, %v2631
  %v2666 = vpack.c.bf16 %v2634, %v2633
  %2667 = vmatprep.subr.bf16.mxu0 0
  %2668 = vmatpush1.bf16.msra.mxu0 %v2635
  %2669 = vmatprep.subr.bf16.mxu0 0
  %2670 = vmatpush1.bf16.msra.mxu0 %v2636
  %2671 = vmatprep.subr.bf16.mxu0 0
  %2672 = vmatpush1.bf16.msra.mxu0 %v2637
  %2673 = vmatprep.subr.bf16.mxu0 0
  %2674 = vmatpush1.bf16.msra.mxu0 %v2638
  %2675 = vmatprep.subr.bf16.mxu0 0
  %2676 = vmatpush1.bf16.msra.mxu0 %v2639
  %2677 = vmatprep.subr.bf16.mxu0 0
  %2678 = vmatpush1.bf16.msra.mxu0 %v2640
  %2679 = vmatprep.subr.bf16.mxu0 0
  %2680 = vmatpush1.bf16.msra.mxu0 %v2641
  %2681 = vmatprep.subr.bf16.mxu0 0
  %2682 = vmatpush1.bf16.msra.mxu0 %v2642
  %2683 = vmatprep.subr.bf16.mxu0 0
  %2684 = vmatpush1.bf16.msra.mxu0 %v2643
  %2685 = vmatprep.subr.bf16.mxu0 0
  %2686 = vmatpush1.bf16.msra.mxu0 %v2644
  %2687 = vmatprep.subr.bf16.mxu0 0
  %2688 = vmatpush1.bf16.msra.mxu0 %v2645
  %2689 = vmatprep.subr.bf16.mxu0 0
  %2690 = vmatpush1.bf16.msra.mxu0 %v2646
  %2691 = vmatprep.subr.bf16.mxu0 0
  %2692 = vmatpush1.bf16.msra.mxu0 %v2647
  %2693 = vmatprep.subr.bf16.mxu0 0
  %2694 = vmatpush1.bf16.msra.mxu0 %v2648
  %2695 = vmatprep.subr.bf16.mxu0 0
  %2696 = vmatpush1.bf16.msra.mxu0 %v2649
  %2697 = vmatprep.subr.bf16.mxu0 0
  %2698 = vmatpush1.bf16.msra.mxu0 %v2650
  %2699 = vmatprep.mubr.bf16.mxu0 %v288
  %2700 = vmatmul.mubr.bf16.gmra.mrb[0].mxu0 %v280
  %v2701 = vpop.f32.mrb[0].mxu0
  %v2702 = vadd.f32 0.0, %v2701
  %v2703 = vpop.f32.mrb[0].mxu0
  %v2704 = vpop.f32.mrb[0].mxu0
  %v2705 = vpop.f32.mrb[0].mxu0
  %2706 = vdwg.mxu0
  %2707 = vmatprep.subr.bf16.mxu0 0
  %2708 = vmatpush1.bf16.msra.mxu0 %v2651
  %2709 = vmatprep.subr.bf16.mxu0 0
  %2710 = vmatpush1.bf16.msra.mxu0 %v2652
  %2711 = vmatprep.subr.bf16.mxu0 0
  %2712 = vmatpush1.bf16.msra.mxu0 %v2653
  %2713 = vmatprep.subr.bf16.mxu0 0
  %2714 = vmatpush1.bf16.msra.mxu0 %v2654
  %2715 = vmatprep.subr.bf16.mxu0 0
  %2716 = vmatpush1.bf16.msra.mxu0 %v2655
  %2717 = vmatprep.subr.bf16.mxu0 0
  %2718 = vmatpush1.bf16.msra.mxu0 %v2656
  %2719 = vmatprep.subr.bf16.mxu0 0
  %2720 = vmatpush1.bf16.msra.mxu0 %v2657
  %2721 = vmatprep.subr.bf16.mxu0 0
  %2722 = vmatpush1.bf16.msra.mxu0 %v2658
  %2723 = vmatprep.subr.bf16.mxu0 0
  %2724 = vmatpush1.bf16.msra.mxu0 %v2659
  %2725 = vmatprep.subr.bf16.mxu0 0
  %2726 = vmatpush1.bf16.msra.mxu0 %v2660
  %2727 = vmatprep.subr.bf16.mxu0 0
  %2728 = vmatpush1.bf16.msra.mxu0 %v2661
  %2729 = vmatprep.subr.bf16.mxu0 0
  %2730 = vmatpush1.bf16.msra.mxu0 %v2662
  %2731 = vmatprep.subr.bf16.mxu0 0
  %2732 = vmatpush1.bf16.msra.mxu0 %v2663
  %2733 = vmatprep.subr.bf16.mxu0 0
  %2734 = vmatpush1.bf16.msra.mxu0 %v2664
  %2735 = vmatprep.subr.bf16.mxu0 0
  %2736 = vmatpush1.bf16.msra.mxu0 %v2665
  %2737 = vmatprep.subr.bf16.mxu0 0
  %2738 = vmatpush1.bf16.msra.mxu0 %v2666
  %2739 = vmatprep.mubr.bf16.mxu0 %v289
  %2740 = vmatmul.mubr.bf16.gmra.mrb[0].mxu0 %v287
  %v2741 = vpop.f32.mrb[0].mxu0
  %v2742 = vadd.f32 %v2702, %v2741
  %v2743 = vpop.f32.mrb[0].mxu0
  %v2744 = vpop.f32.mrb[0].mxu0
  %v2745 = vpop.f32.mrb[0].mxu0
  %2746 = vdwg.mxu0
  %s2747 = scalar_lea.vmem %s1, 32
  %v2748 = vld [vmem:[%s2747] sm:$0xf]
  %v2749 = vpack.c.bf16 %v2742, %v2742
  %v2751 = vsel %vm625, %v2748, 0
  %v2754 = vand.u32 %v2749, %v632
  %2756 = vmatprep.subr.bf16.mxu0 0
  %2757 = vmatpush1.bf16.msra.mxu0 %v2754
  %2758 = vmatprep.subr.bf16.mxu0 0
  %2759 = vmatpush1.bf16.msra.mxu0 0
  %2760 = vmatprep.subr.bf16.mxu0 0
  %2761 = vmatpush1.bf16.msra.mxu0 0
  %2762 = vmatprep.subr.bf16.mxu0 0
  %2763 = vmatpush1.bf16.msra.mxu0 0
  %2764 = vmatprep.subr.bf16.mxu0 0
  %2765 = vmatpush1.bf16.msra.mxu0 0
  %2766 = vmatprep.subr.bf16.mxu0 0
  %2767 = vmatpush1.bf16.msra.mxu0 0
  %2768 = vmatprep.subr.bf16.mxu0 0
  %2769 = vmatpush1.bf16.msra.mxu0 0
  %2770 = vmatprep.subr.bf16.mxu0 0
  %2771 = vmatpush1.bf16.msra.mxu0 0
  %2772 = vmatprep.subr.bf16.mxu0 0
  %2773 = vmatpush1.bf16.msra.mxu0 0
  %2774 = vmatprep.subr.bf16.mxu0 0
  %2775 = vmatpush1.bf16.msra.mxu0 0
  %2776 = vmatprep.subr.bf16.mxu0 0
  %2777 = vmatpush1.bf16.msra.mxu0 0
  %2778 = vmatprep.subr.bf16.mxu0 0
  %2779 = vmatpush1.bf16.msra.mxu0 0
  %2780 = vmatprep.subr.bf16.mxu0 0
  %2781 = vmatpush1.bf16.msra.mxu0 0
  %2782 = vmatprep.subr.bf16.mxu0 0
  %2783 = vmatpush1.bf16.msra.mxu0 0
  %2784 = vmatprep.subr.bf16.mxu0 0
  %2785 = vmatpush1.bf16.msra.mxu0 0
  %2786 = vmatprep.subr.bf16.mxu0 0
  %2787 = vmatpush1.bf16.msra.mxu0 0
  %2788 = vmatprep.mubr.bf16.mxu0 0
  %2789 = vmatmul.mubr.bf16.gmra.mrb[0].mxu0 %v2751
  %v2790 = vpop.f32.mrb[0].mxu0
  %v2791 = vadd.f32 0.0, %v2790
  %v2792 = vpop.f32.mrb[0].mxu0
  %v2793 = vpop.f32.mrb[0].mxu0
  %v2794 = vpop.f32.mrb[0].mxu0
  %2795 = vdwg.mxu0
  %v2796 = vadd.f32 %v2496, %v2791
  %vm2797 = vmand %vm2500, %vm376
  %vm2798 = vmand %vm2797, %vm378
  %v2799 = vadd.s32 %v2504, %v98
  %v2800 = vsel %vm2798, %v2799, 4294967295
  %vm2801 = vcmp.eq.s32.totalorder %v32, %v2800
  %vm2802 = vcmp.eq.s32.totalorder %v33, %v2800
  %vm2803 = vcmp.eq.s32.totalorder %v34, %v2800
  %vm2804 = vcmp.eq.s32.totalorder %v35, %v2800
  %vm2805 = vcmp.eq.s32.totalorder %v36, %v2800
  %vm2806 = vcmp.eq.s32.totalorder %v37, %v2800
  %vm2807 = vcmp.eq.s32.totalorder %v38, %v2800
  %vm2808 = vcmp.eq.s32.totalorder %v39, %v2800
  %vm2809 = vcmp.eq.s32.totalorder %v40, %v2800
  %vm2810 = vcmp.eq.s32.totalorder %v41, %v2800
  %vm2811 = vcmp.eq.s32.totalorder %v42, %v2800
  %vm2812 = vcmp.eq.s32.totalorder %v43, %v2800
  %vm2813 = vcmp.eq.s32.totalorder %v44, %v2800
  %vm2814 = vcmp.eq.s32.totalorder %v45, %v2800
  %vm2815 = vcmp.eq.s32.totalorder %v46, %v2800
  %vm2816 = vcmp.eq.s32.totalorder %v47, %v2800
  %vm2817 = vcmp.eq.s32.totalorder %v48, %v2800
  %vm2818 = vcmp.eq.s32.totalorder %v49, %v2800
  %vm2819 = vcmp.eq.s32.totalorder %v50, %v2800
  %vm2820 = vcmp.eq.s32.totalorder %v51, %v2800
  %vm2821 = vcmp.eq.s32.totalorder %v52, %v2800
  %vm2822 = vcmp.eq.s32.totalorder %v53, %v2800
  %vm2823 = vcmp.eq.s32.totalorder %v54, %v2800
  %vm2824 = vcmp.eq.s32.totalorder %v55, %v2800
  %vm2825 = vcmp.eq.s32.totalorder %v56, %v2800
  %vm2826 = vcmp.eq.s32.totalorder %v57, %v2800
  %vm2827 = vcmp.eq.s32.totalorder %v58, %v2800
  %vm2828 = vcmp.eq.s32.totalorder %v59, %v2800
  %vm2829 = vcmp.eq.s32.totalorder %v60, %v2800
  %vm2830 = vcmp.eq.s32.totalorder %v61, %v2800
  %vm2831 = vcmp.eq.s32.totalorder %v62, %v2800
  %vm2832 = vcmp.eq.s32.totalorder %v63, %v2800
  %vm2833 = vcmp.eq.s32.totalorder %v64, %v2800
  %vm2834 = vcmp.eq.s32.totalorder %v65, %v2800
  %vm2835 = vcmp.eq.s32.totalorder %v66, %v2800
  %vm2836 = vcmp.eq.s32.totalorder %v67, %v2800
  %vm2837 = vcmp.eq.s32.totalorder %v68, %v2800
  %vm2838 = vcmp.eq.s32.totalorder %v69, %v2800
  %vm2839 = vcmp.eq.s32.totalorder %v70, %v2800
  %vm2840 = vcmp.eq.s32.totalorder %v71, %v2800
  %vm2841 = vcmp.eq.s32.totalorder %v72, %v2800
  %vm2842 = vcmp.eq.s32.totalorder %v73, %v2800
  %vm2843 = vcmp.eq.s32.totalorder %v74, %v2800
  %vm2844 = vcmp.eq.s32.totalorder %v75, %v2800
  %vm2845 = vcmp.eq.s32.totalorder %v76, %v2800
  %vm2846 = vcmp.eq.s32.totalorder %v77, %v2800
  %vm2847 = vcmp.eq.s32.totalorder %v78, %v2800
  %vm2848 = vcmp.eq.s32.totalorder %v79, %v2800
  %vm2849 = vcmp.eq.s32.totalorder %v80, %v2800
  %vm2850 = vcmp.eq.s32.totalorder %v81, %v2800
  %vm2851 = vcmp.eq.s32.totalorder %v82, %v2800
  %vm2852 = vcmp.eq.s32.totalorder %v83, %v2800
  %vm2853 = vcmp.eq.s32.totalorder %v84, %v2800
  %vm2854 = vcmp.eq.s32.totalorder %v85, %v2800
  %vm2855 = vcmp.eq.s32.totalorder %v86, %v2800
  %vm2856 = vcmp.eq.s32.totalorder %v87, %v2800
  %vm2857 = vcmp.eq.s32.totalorder %v88, %v2800
  %vm2858 = vcmp.eq.s32.totalorder %v89, %v2800
  %vm2859 = vcmp.eq.s32.totalorder %v90, %v2800
  %vm2860 = vcmp.eq.s32.totalorder %v91, %v2800
  %vm2861 = vcmp.eq.s32.totalorder %v92, %v2800
  %vm2862 = vcmp.eq.s32.totalorder %v93, %v2800
  %vm2863 = vcmp.eq.s32.totalorder %v94, %v2800
  %vm2864 = vcmp.eq.s32.totalorder %v95, %v2800
  %v2865 = vsel %vm2801, 1.0, 0.0
  %v2866 = vsel %vm2802, 1.0, 0.0
  %v2867 = vsel %vm2803, 1.0, 0.0
  %v2868 = vsel %vm2804, 1.0, 0.0
  %v2869 = vsel %vm2805, 1.0, 0.0
  %v2870 = vsel %vm2806, 1.0, 0.0
  %v2871 = vsel %vm2807, 1.0, 0.0
  %v2872 = vsel %vm2808, 1.0, 0.0
  %v2873 = vsel %vm2809, 1.0, 0.0
  %v2874 = vsel %vm2810, 1.0, 0.0
  %v2875 = vsel %vm2811, 1.0, 0.0
  %v2876 = vsel %vm2812, 1.0, 0.0
  %v2877 = vsel %vm2813, 1.0, 0.0
  %v2878 = vsel %vm2814, 1.0, 0.0
  %v2879 = vsel %vm2815, 1.0, 0.0
  %v2880 = vsel %vm2816, 1.0, 0.0
  %v2881 = vsel %vm2817, 1.0, 0.0
  %v2882 = vsel %vm2818, 1.0, 0.0
  %v2883 = vsel %vm2819, 1.0, 0.0
  %v2884 = vsel %vm2820, 1.0, 0.0
  %v2885 = vsel %vm2821, 1.0, 0.0
  %v2886 = vsel %vm2822, 1.0, 0.0
  %v2887 = vsel %vm2823, 1.0, 0.0
  %v2888 = vsel %vm2824, 1.0, 0.0
  %v2889 = vsel %vm2825, 1.0, 0.0
  %v2890 = vsel %vm2826, 1.0, 0.0
  %v2891 = vsel %vm2827, 1.0, 0.0
  %v2892 = vsel %vm2828, 1.0, 0.0
  %v2893 = vsel %vm2829, 1.0, 0.0
  %v2894 = vsel %vm2830, 1.0, 0.0
  %v2895 = vsel %vm2831, 1.0, 0.0
  %v2896 = vsel %vm2832, 1.0, 0.0
  %v2897 = vsel %vm2833, 1.0, 0.0
  %v2898 = vsel %vm2834, 1.0, 0.0
  %v2899 = vsel %vm2835, 1.0, 0.0
  %v2900 = vsel %vm2836, 1.0, 0.0
  %v2901 = vsel %vm2837, 1.0, 0.0
  %v2902 = vsel %vm2838, 1.0, 0.0
  %v2903 = vsel %vm2839, 1.0, 0.0
  %v2904 = vsel %vm2840, 1.0, 0.0
  %v2905 = vsel %vm2841, 1.0, 0.0
  %v2906 = vsel %vm2842, 1.0, 0.0
  %v2907 = vsel %vm2843, 1.0, 0.0
  %v2908 = vsel %vm2844, 1.0, 0.0
  %v2909 = vsel %vm2845, 1.0, 0.0
  %v2910 = vsel %vm2846, 1.0, 0.0
  %v2911 = vsel %vm2847, 1.0, 0.0
  %v2912 = vsel %vm2848, 1.0, 0.0
  %v2913 = vsel %vm2849, 1.0, 0.0
  %v2914 = vsel %vm2850, 1.0, 0.0
  %v2915 = vsel %vm2851, 1.0, 0.0
  %v2916 = vsel %vm2852, 1.0, 0.0
  %v2917 = vsel %vm2853, 1.0, 0.0
  %v2918 = vsel %vm2854, 1.0, 0.0
  %v2919 = vsel %vm2855, 1.0, 0.0
  %v2920 = vsel %vm2856, 1.0, 0.0
  %v2921 = vsel %vm2857, 1.0, 0.0
  %v2922 = vsel %vm2858, 1.0, 0.0
  %v2923 = vsel %vm2859, 1.0, 0.0
  %v2924 = vsel %vm2860, 1.0, 0.0
  %v2925 = vsel %vm2861, 1.0, 0.0
  %v2926 = vsel %vm2862, 1.0, 0.0
  %v2927 = vsel %vm2863, 1.0, 0.0
  %v2928 = vsel %vm2864, 1.0, 0.0
  %v2929 = vpack.c.bf16 %v2866, %v2865
  %v2930 = vpack.c.bf16 %v2868, %v2867
  %v2931 = vpack.c.bf16 %v2870, %v2869
  %v2932 = vpack.c.bf16 %v2872, %v2871
  %v2933 = vpack.c.bf16 %v2874, %v2873
  %v2934 = vpack.c.bf16 %v2876, %v2875
  %v2935 = vpack.c.bf16 %v2878, %v2877
  %v2936 = vpack.c.bf16 %v2880, %v2879
  %v2937 = vpack.c.bf16 %v2882, %v2881
  %v2938 = vpack.c.bf16 %v2884, %v2883
  %v2939 = vpack.c.bf16 %v2886, %v2885
  %v2940 = vpack.c.bf16 %v2888, %v2887
  %v2941 = vpack.c.bf16 %v2890, %v2889
  %v2942 = vpack.c.bf16 %v2892, %v2891
  %v2943 = vpack.c.bf16 %v2894, %v2893
  %v2944 = vpack.c.bf16 %v2896, %v2895
  %v2945 = vpack.c.bf16 %v2898, %v2897
  %v2946 = vpack.c.bf16 %v2900, %v2899
  %v2947 = vpack.c.bf16 %v2902, %v2901
  %v2948 = vpack.c.bf16 %v2904, %v2903
  %v2949 = vpack.c.bf16 %v2906, %v2905
  %v2950 = vpack.c.bf16 %v2908, %v2907
  %v2951 = vpack.c.bf16 %v2910, %v2909
  %v2952 = vpack.c.bf16 %v2912, %v2911
  %v2953 = vpack.c.bf16 %v2914, %v2913
  %v2954 = vpack.c.bf16 %v2916, %v2915
  %v2955 = vpack.c.bf16 %v2918, %v2917
  %v2956 = vpack.c.bf16 %v2920, %v2919
  %v2957 = vpack.c.bf16 %v2922, %v2921
  %v2958 = vpack.c.bf16 %v2924, %v2923
  %v2959 = vpack.c.bf16 %v2926, %v2925
  %v2960 = vpack.c.bf16 %v2928, %v2927
  %2961 = vmatprep.subr.bf16.mxu0 0
  %2962 = vmatpush1.bf16.msra.mxu0 %v2929
  %2963 = vmatprep.subr.bf16.mxu0 0
  %2964 = vmatpush1.bf16.msra.mxu0 %v2930
  %2965 = vmatprep.subr.bf16.mxu0 0
  %2966 = vmatpush1.bf16.msra.mxu0 %v2931
  %2967 = vmatprep.subr.bf16.mxu0 0
  %2968 = vmatpush1.bf16.msra.mxu0 %v2932
  %2969 = vmatprep.subr.bf16.mxu0 0
  %2970 = vmatpush1.bf16.msra.mxu0 %v2933
  %2971 = vmatprep.subr.bf16.mxu0 0
  %2972 = vmatpush1.bf16.msra.mxu0 %v2934
  %2973 = vmatprep.subr.bf16.mxu0 0
  %2974 = vmatpush1.bf16.msra.mxu0 %v2935
  %2975 = vmatprep.subr.bf16.mxu0 0
  %2976 = vmatpush1.bf16.msra.mxu0 %v2936
  %2977 = vmatprep.subr.bf16.mxu0 0
  %2978 = vmatpush1.bf16.msra.mxu0 %v2937
  %2979 = vmatprep.subr.bf16.mxu0 0
  %2980 = vmatpush1.bf16.msra.mxu0 %v2938
  %2981 = vmatprep.subr.bf16.mxu0 0
  %2982 = vmatpush1.bf16.msra.mxu0 %v2939
  %2983 = vmatprep.subr.bf16.mxu0 0
  %2984 = vmatpush1.bf16.msra.mxu0 %v2940
  %2985 = vmatprep.subr.bf16.mxu0 0
  %2986 = vmatpush1.bf16.msra.mxu0 %v2941
  %2987 = vmatprep.subr.bf16.mxu0 0
  %2988 = vmatpush1.bf16.msra.mxu0 %v2942
  %2989 = vmatprep.subr.bf16.mxu0 0
  %2990 = vmatpush1.bf16.msra.mxu0 %v2943
  %2991 = vmatprep.subr.bf16.mxu0 0
  %2992 = vmatpush1.bf16.msra.mxu0 %v2944
  %2993 = vmatprep.mubr.bf16.mxu0 %v288
  %2994 = vmatmul.mubr.bf16.gmra.mrb[0].mxu0 %v280
  %v2995 = vpop.f32.mrb[0].mxu0
  %v2996 = vadd.f32 0.0, %v2995
  %v2997 = vpop.f32.mrb[0].mxu0
  %v2998 = vpop.f32.mrb[0].mxu0
  %v2999 = vpop.f32.mrb[0].mxu0
  %3000 = vdwg.mxu0
  %3001 = vmatprep.subr.bf16.mxu0 0
  %3002 = vmatpush1.bf16.msra.mxu0 %v2945
  %3003 = vmatprep.subr.bf16.mxu0 0
  %3004 = vmatpush1.bf16.msra.mxu0 %v2946
  %3005 = vmatprep.subr.bf16.mxu0 0
  %3006 = vmatpush1.bf16.msra.mxu0 %v2947
  %3007 = vmatprep.subr.bf16.mxu0 0
  %3008 = vmatpush1.bf16.msra.mxu0 %v2948
  %3009 = vmatprep.subr.bf16.mxu0 0
  %3010 = vmatpush1.bf16.msra.mxu0 %v2949
  %3011 = vmatprep.subr.bf16.mxu0 0
  %3012 = vmatpush1.bf16.msra.mxu0 %v2950
  %3013 = vmatprep.subr.bf16.mxu0 0
  %3014 = vmatpush1.bf16.msra.mxu0 %v2951
  %3015 = vmatprep.subr.bf16.mxu0 0
  %3016 = vmatpush1.bf16.msra.mxu0 %v2952
  %3017 = vmatprep.subr.bf16.mxu0 0
  %3018 = vmatpush1.bf16.msra.mxu0 %v2953
  %3019 = vmatprep.subr.bf16.mxu0 0
  %3020 = vmatpush1.bf16.msra.mxu0 %v2954
  %3021 = vmatprep.subr.bf16.mxu0 0
  %3022 = vmatpush1.bf16.msra.mxu0 %v2955
  %3023 = vmatprep.subr.bf16.mxu0 0
  %3024 = vmatpush1.bf16.msra.mxu0 %v2956
  %3025 = vmatprep.subr.bf16.mxu0 0
  %3026 = vmatpush1.bf16.msra.mxu0 %v2957
  %3027 = vmatprep.subr.bf16.mxu0 0
  %3028 = vmatpush1.bf16.msra.mxu0 %v2958
  %3029 = vmatprep.subr.bf16.mxu0 0
  %3030 = vmatpush1.bf16.msra.mxu0 %v2959
  %3031 = vmatprep.subr.bf16.mxu0 0
  %3032 = vmatpush1.bf16.msra.mxu0 %v2960
  %3033 = vmatprep.mubr.bf16.mxu0 %v289
  %3034 = vmatmul.mubr.bf16.gmra.mrb[0].mxu0 %v287
  %v3035 = vpop.f32.mrb[0].mxu0
  %v3036 = vadd.f32 %v2996, %v3035
  %v3037 = vpop.f32.mrb[0].mxu0
  %v3038 = vpop.f32.mrb[0].mxu0
  %v3039 = vpop.f32.mrb[0].mxu0
  %3040 = vdwg.mxu0
  %s3041 = scalar_lea.vmem %s1, 36
  %v3042 = vld [vmem:[%s3041] sm:$0xf]
  %v3043 = vpack.c.bf16 %v3036, %v3036
  %v3045 = vsel %vm625, %v3042, 0
  %v3048 = vand.u32 %v3043, %v632
  %3050 = vmatprep.subr.bf16.mxu0 0
  %3051 = vmatpush1.bf16.msra.mxu0 %v3048
  %3052 = vmatprep.subr.bf16.mxu0 0
  %3053 = vmatpush1.bf16.msra.mxu0 0
  %3054 = vmatprep.subr.bf16.mxu0 0
  %3055 = vmatpush1.bf16.msra.mxu0 0
  %3056 = vmatprep.subr.bf16.mxu0 0
  %3057 = vmatpush1.bf16.msra.mxu0 0
  %3058 = vmatprep.subr.bf16.mxu0 0
  %3059 = vmatpush1.bf16.msra.mxu0 0
  %3060 = vmatprep.subr.bf16.mxu0 0
  %3061 = vmatpush1.bf16.msra.mxu0 0
  %3062 = vmatprep.subr.bf16.mxu0 0
  %3063 = vmatpush1.bf16.msra.mxu0 0
  %3064 = vmatprep.subr.bf16.mxu0 0
  %3065 = vmatpush1.bf16.msra.mxu0 0
  %3066 = vmatprep.subr.bf16.mxu0 0
  %3067 = vmatpush1.bf16.msra.mxu0 0
  %3068 = vmatprep.subr.bf16.mxu0 0
  %3069 = vmatpush1.bf16.msra.mxu0 0
  %3070 = vmatprep.subr.bf16.mxu0 0
  %3071 = vmatpush1.bf16.msra.mxu0 0
  %3072 = vmatprep.subr.bf16.mxu0 0
  %3073 = vmatpush1.bf16.msra.mxu0 0
  %3074 = vmatprep.subr.bf16.mxu0 0
  %3075 = vmatpush1.bf16.msra.mxu0 0
  %3076 = vmatprep.subr.bf16.mxu0 0
  %3077 = vmatpush1.bf16.msra.mxu0 0
  %3078 = vmatprep.subr.bf16.mxu0 0
  %3079 = vmatpush1.bf16.msra.mxu0 0
  %3080 = vmatprep.subr.bf16.mxu0 0
  %3081 = vmatpush1.bf16.msra.mxu0 0
  %3082 = vmatprep.mubr.bf16.mxu0 0
  %3083 = vmatmul.mubr.bf16.gmra.mrb[0].mxu0 %v3045
  %v3084 = vpop.f32.mrb[0].mxu0
  %v3085 = vadd.f32 0.0, %v3084
  %v3086 = vpop.f32.mrb[0].mxu0
  %v3087 = vpop.f32.mrb[0].mxu0
  %v3088 = vpop.f32.mrb[0].mxu0
  %3089 = vdwg.mxu0
  %v3090 = vadd.f32 %v2796, %v3085
  %vm3091 = vmand %vm2500, %vm723
  %vm3092 = vmand %vm3091, %vm725
  %v3093 = vadd.s32 %v2504, %v722
  %v3094 = vsel %vm3092, %v3093, 4294967295
  %vm3095 = vcmp.eq.s32.totalorder %v32, %v3094
  %vm3096 = vcmp.eq.s32.totalorder %v33, %v3094
  %vm3097 = vcmp.eq.s32.totalorder %v34, %v3094
  %vm3098 = vcmp.eq.s32.totalorder %v35, %v3094
  %vm3099 = vcmp.eq.s32.totalorder %v36, %v3094
  %vm3100 = vcmp.eq.s32.totalorder %v37, %v3094
  %vm3101 = vcmp.eq.s32.totalorder %v38, %v3094
  %vm3102 = vcmp.eq.s32.totalorder %v39, %v3094
  %vm3103 = vcmp.eq.s32.totalorder %v40, %v3094
  %vm3104 = vcmp.eq.s32.totalorder %v41, %v3094
  %vm3105 = vcmp.eq.s32.totalorder %v42, %v3094
  %vm3106 = vcmp.eq.s32.totalorder %v43, %v3094
  %vm3107 = vcmp.eq.s32.totalorder %v44, %v3094
  %vm3108 = vcmp.eq.s32.totalorder %v45, %v3094
  %vm3109 = vcmp.eq.s32.totalorder %v46, %v3094
  %vm3110 = vcmp.eq.s32.totalorder %v47, %v3094
  %vm3111 = vcmp.eq.s32.totalorder %v48, %v3094
  %vm3112 = vcmp.eq.s32.totalorder %v49, %v3094
  %vm3113 = vcmp.eq.s32.totalorder %v50, %v3094
  %vm3114 = vcmp.eq.s32.totalorder %v51, %v3094
  %vm3115 = vcmp.eq.s32.totalorder %v52, %v3094
  %vm3116 = vcmp.eq.s32.totalorder %v53, %v3094
  %vm3117 = vcmp.eq.s32.totalorder %v54, %v3094
  %vm3118 = vcmp.eq.s32.totalorder %v55, %v3094
  %vm3119 = vcmp.eq.s32.totalorder %v56, %v3094
  %vm3120 = vcmp.eq.s32.totalorder %v57, %v3094
  %vm3121 = vcmp.eq.s32.totalorder %v58, %v3094
  %vm3122 = vcmp.eq.s32.totalorder %v59, %v3094
  %vm3123 = vcmp.eq.s32.totalorder %v60, %v3094
  %vm3124 = vcmp.eq.s32.totalorder %v61, %v3094
  %vm3125 = vcmp.eq.s32.totalorder %v62, %v3094
  %vm3126 = vcmp.eq.s32.totalorder %v63, %v3094
  %vm3127 = vcmp.eq.s32.totalorder %v64, %v3094
  %vm3128 = vcmp.eq.s32.totalorder %v65, %v3094
  %vm3129 = vcmp.eq.s32.totalorder %v66, %v3094
  %vm3130 = vcmp.eq.s32.totalorder %v67, %v3094
  %vm3131 = vcmp.eq.s32.totalorder %v68, %v3094
  %vm3132 = vcmp.eq.s32.totalorder %v69, %v3094
  %vm3133 = vcmp.eq.s32.totalorder %v70, %v3094
  %vm3134 = vcmp.eq.s32.totalorder %v71, %v3094
  %vm3135 = vcmp.eq.s32.totalorder %v72, %v3094
  %vm3136 = vcmp.eq.s32.totalorder %v73, %v3094
  %vm3137 = vcmp.eq.s32.totalorder %v74, %v3094
  %vm3138 = vcmp.eq.s32.totalorder %v75, %v3094
  %vm3139 = vcmp.eq.s32.totalorder %v76, %v3094
  %vm3140 = vcmp.eq.s32.totalorder %v77, %v3094
  %vm3141 = vcmp.eq.s32.totalorder %v78, %v3094
  %vm3142 = vcmp.eq.s32.totalorder %v79, %v3094
  %vm3143 = vcmp.eq.s32.totalorder %v80, %v3094
  %vm3144 = vcmp.eq.s32.totalorder %v81, %v3094
  %vm3145 = vcmp.eq.s32.totalorder %v82, %v3094
  %vm3146 = vcmp.eq.s32.totalorder %v83, %v3094
  %vm3147 = vcmp.eq.s32.totalorder %v84, %v3094
  %vm3148 = vcmp.eq.s32.totalorder %v85, %v3094
  %vm3149 = vcmp.eq.s32.totalorder %v86, %v3094
  %vm3150 = vcmp.eq.s32.totalorder %v87, %v3094
  %vm3151 = vcmp.eq.s32.totalorder %v88, %v3094
  %vm3152 = vcmp.eq.s32.totalorder %v89, %v3094
  %vm3153 = vcmp.eq.s32.totalorder %v90, %v3094
  %vm3154 = vcmp.eq.s32.totalorder %v91, %v3094
  %vm3155 = vcmp.eq.s32.totalorder %v92, %v3094
  %vm3156 = vcmp.eq.s32.totalorder %v93, %v3094
  %vm3157 = vcmp.eq.s32.totalorder %v94, %v3094
  %vm3158 = vcmp.eq.s32.totalorder %v95, %v3094
  %v3159 = vsel %vm3095, 1.0, 0.0
  %v3160 = vsel %vm3096, 1.0, 0.0
  %v3161 = vsel %vm3097, 1.0, 0.0
  %v3162 = vsel %vm3098, 1.0, 0.0
  %v3163 = vsel %vm3099, 1.0, 0.0
  %v3164 = vsel %vm3100, 1.0, 0.0
  %v3165 = vsel %vm3101, 1.0, 0.0
  %v3166 = vsel %vm3102, 1.0, 0.0
  %v3167 = vsel %vm3103, 1.0, 0.0
  %v3168 = vsel %vm3104, 1.0, 0.0
  %v3169 = vsel %vm3105, 1.0, 0.0
  %v3170 = vsel %vm3106, 1.0, 0.0
  %v3171 = vsel %vm3107, 1.0, 0.0
  %v3172 = vsel %vm3108, 1.0, 0.0
  %v3173 = vsel %vm3109, 1.0, 0.0
  %v3174 = vsel %vm3110, 1.0, 0.0
  %v3175 = vsel %vm3111, 1.0, 0.0
  %v3176 = vsel %vm3112, 1.0, 0.0
  %v3177 = vsel %vm3113, 1.0, 0.0
  %v3178 = vsel %vm3114, 1.0, 0.0
  %v3179 = vsel %vm3115, 1.0, 0.0
  %v3180 = vsel %vm3116, 1.0, 0.0
  %v3181 = vsel %vm3117, 1.0, 0.0
  %v3182 = vsel %vm3118, 1.0, 0.0
  %v3183 = vsel %vm3119, 1.0, 0.0
  %v3184 = vsel %vm3120, 1.0, 0.0
  %v3185 = vsel %vm3121, 1.0, 0.0
  %v3186 = vsel %vm3122, 1.0, 0.0
  %v3187 = vsel %vm3123, 1.0, 0.0
  %v3188 = vsel %vm3124, 1.0, 0.0
  %v3189 = vsel %vm3125, 1.0, 0.0
  %v3190 = vsel %vm3126, 1.0, 0.0
  %v3191 = vsel %vm3127, 1.0, 0.0
  %v3192 = vsel %vm3128, 1.0, 0.0
  %v3193 = vsel %vm3129, 1.0, 0.0
  %v3194 = vsel %vm3130, 1.0, 0.0
  %v3195 = vsel %vm3131, 1.0, 0.0
  %v3196 = vsel %vm3132, 1.0, 0.0
  %v3197 = vsel %vm3133, 1.0, 0.0
  %v3198 = vsel %vm3134, 1.0, 0.0
  %v3199 = vsel %vm3135, 1.0, 0.0
  %v3200 = vsel %vm3136, 1.0, 0.0
  %v3201 = vsel %vm3137, 1.0, 0.0
  %v3202 = vsel %vm3138, 1.0, 0.0
  %v3203 = vsel %vm3139, 1.0, 0.0
  %v3204 = vsel %vm3140, 1.0, 0.0
  %v3205 = vsel %vm3141, 1.0, 0.0
  %v3206 = vsel %vm3142, 1.0, 0.0
  %v3207 = vsel %vm3143, 1.0, 0.0
  %v3208 = vsel %vm3144, 1.0, 0.0
  %v3209 = vsel %vm3145, 1.0, 0.0
  %v3210 = vsel %vm3146, 1.0, 0.0
  %v3211 = vsel %vm3147, 1.0, 0.0
  %v3212 = vsel %vm3148, 1.0, 0.0
  %v3213 = vsel %vm3149, 1.0, 0.0
  %v3214 = vsel %vm3150, 1.0, 0.0
  %v3215 = vsel %vm3151, 1.0, 0.0
  %v3216 = vsel %vm3152, 1.0, 0.0
  %v3217 = vsel %vm3153, 1.0, 0.0
  %v3218 = vsel %vm3154, 1.0, 0.0
  %v3219 = vsel %vm3155, 1.0, 0.0
  %v3220 = vsel %vm3156, 1.0, 0.0
  %v3221 = vsel %vm3157, 1.0, 0.0
  %v3222 = vsel %vm3158, 1.0, 0.0
  %v3223 = vpack.c.bf16 %v3160, %v3159
  %v3224 = vpack.c.bf16 %v3162, %v3161
  %v3225 = vpack.c.bf16 %v3164, %v3163
  %v3226 = vpack.c.bf16 %v3166, %v3165
  %v3227 = vpack.c.bf16 %v3168, %v3167
  %v3228 = vpack.c.bf16 %v3170, %v3169
  %v3229 = vpack.c.bf16 %v3172, %v3171
  %v3230 = vpack.c.bf16 %v3174, %v3173
  %v3231 = vpack.c.bf16 %v3176, %v3175
  %v3232 = vpack.c.bf16 %v3178, %v3177
  %v3233 = vpack.c.bf16 %v3180, %v3179
  %v3234 = vpack.c.bf16 %v3182, %v3181
  %v3235 = vpack.c.bf16 %v3184, %v3183
  %v3236 = vpack.c.bf16 %v3186, %v3185
  %v3237 = vpack.c.bf16 %v3188, %v3187
  %v3238 = vpack.c.bf16 %v3190, %v3189
  %v3239 = vpack.c.bf16 %v3192, %v3191
  %v3240 = vpack.c.bf16 %v3194, %v3193
  %v3241 = vpack.c.bf16 %v3196, %v3195
  %v3242 = vpack.c.bf16 %v3198, %v3197
  %v3243 = vpack.c.bf16 %v3200, %v3199
  %v3244 = vpack.c.bf16 %v3202, %v3201
  %v3245 = vpack.c.bf16 %v3204, %v3203
  %v3246 = vpack.c.bf16 %v3206, %v3205
  %v3247 = vpack.c.bf16 %v3208, %v3207
  %v3248 = vpack.c.bf16 %v3210, %v3209
  %v3249 = vpack.c.bf16 %v3212, %v3211
  %v3250 = vpack.c.bf16 %v3214, %v3213
  %v3251 = vpack.c.bf16 %v3216, %v3215
  %v3252 = vpack.c.bf16 %v3218, %v3217
  %v3253 = vpack.c.bf16 %v3220, %v3219
  %v3254 = vpack.c.bf16 %v3222, %v3221
  %3255 = vmatprep.subr.bf16.mxu0 0
  %3256 = vmatpush1.bf16.msra.mxu0 %v3223
  %3257 = vmatprep.subr.bf16.mxu0 0
  %3258 = vmatpush1.bf16.msra.mxu0 %v3224
  %3259 = vmatprep.subr.bf16.mxu0 0
  %3260 = vmatpush1.bf16.msra.mxu0 %v3225
  %3261 = vmatprep.subr.bf16.mxu0 0
  %3262 = vmatpush1.bf16.msra.mxu0 %v3226
  %3263 = vmatprep.subr.bf16.mxu0 0
  %3264 = vmatpush1.bf16.msra.mxu0 %v3227
  %3265 = vmatprep.subr.bf16.mxu0 0
  %3266 = vmatpush1.bf16.msra.mxu0 %v3228
  %3267 = vmatprep.subr.bf16.mxu0 0
  %3268 = vmatpush1.bf16.msra.mxu0 %v3229
  %3269 = vmatprep.subr.bf16.mxu0 0
  %3270 = vmatpush1.bf16.msra.mxu0 %v3230
  %3271 = vmatprep.subr.bf16.mxu0 0
  %3272 = vmatpush1.bf16.msra.mxu0 %v3231
  %3273 = vmatprep.subr.bf16.mxu0 0
  %3274 = vmatpush1.bf16.msra.mxu0 %v3232
  %3275 = vmatprep.subr.bf16.mxu0 0
  %3276 = vmatpush1.bf16.msra.mxu0 %v3233
  %3277 = vmatprep.subr.bf16.mxu0 0
  %3278 = vmatpush1.bf16.msra.mxu0 %v3234
  %3279 = vmatprep.subr.bf16.mxu0 0
  %3280 = vmatpush1.bf16.msra.mxu0 %v3235
  %3281 = vmatprep.subr.bf16.mxu0 0
  %3282 = vmatpush1.bf16.msra.mxu0 %v3236
  %3283 = vmatprep.subr.bf16.mxu0 0
  %3284 = vmatpush1.bf16.msra.mxu0 %v3237
  %3285 = vmatprep.subr.bf16.mxu0 0
  %3286 = vmatpush1.bf16.msra.mxu0 %v3238
  %3287 = vmatprep.mubr.bf16.mxu0 %v288
  %3288 = vmatmul.mubr.bf16.gmra.mrb[0].mxu0 %v280
  %v3289 = vpop.f32.mrb[0].mxu0
  %v3290 = vadd.f32 0.0, %v3289
  %v3291 = vpop.f32.mrb[0].mxu0
  %v3292 = vpop.f32.mrb[0].mxu0
  %v3293 = vpop.f32.mrb[0].mxu0
  %3294 = vdwg.mxu0
  %3295 = vmatprep.subr.bf16.mxu0 0
  %3296 = vmatpush1.bf16.msra.mxu0 %v3239
  %3297 = vmatprep.subr.bf16.mxu0 0
  %3298 = vmatpush1.bf16.msra.mxu0 %v3240
  %3299 = vmatprep.subr.bf16.mxu0 0
  %3300 = vmatpush1.bf16.msra.mxu0 %v3241
  %3301 = vmatprep.subr.bf16.mxu0 0
  %3302 = vmatpush1.bf16.msra.mxu0 %v3242
  %3303 = vmatprep.subr.bf16.mxu0 0
  %3304 = vmatpush1.bf16.msra.mxu0 %v3243
  %3305 = vmatprep.subr.bf16.mxu0 0
  %3306 = vmatpush1.bf16.msra.mxu0 %v3244
  %3307 = vmatprep.subr.bf16.mxu0 0
  %3308 = vmatpush1.bf16.msra.mxu0 %v3245
  %3309 = vmatprep.subr.bf16.mxu0 0
  %3310 = vmatpush1.bf16.msra.mxu0 %v3246
  %3311 = vmatprep.subr.bf16.mxu0 0
  %3312 = vmatpush1.bf16.msra.mxu0 %v3247
  %3313 = vmatprep.subr.bf16.mxu0 0
  %3314 = vmatpush1.bf16.msra.mxu0 %v3248
  %3315 = vmatprep.subr.bf16.mxu0 0
  %3316 = vmatpush1.bf16.msra.mxu0 %v3249
  %3317 = vmatprep.subr.bf16.mxu0 0
  %3318 = vmatpush1.bf16.msra.mxu0 %v3250
  %3319 = vmatprep.subr.bf16.mxu0 0
  %3320 = vmatpush1.bf16.msra.mxu0 %v3251
  %3321 = vmatprep.subr.bf16.mxu0 0
  %3322 = vmatpush1.bf16.msra.mxu0 %v3252
  %3323 = vmatprep.subr.bf16.mxu0 0
  %3324 = vmatpush1.bf16.msra.mxu0 %v3253
  %3325 = vmatprep.subr.bf16.mxu0 0
  %3326 = vmatpush1.bf16.msra.mxu0 %v3254
  %3327 = vmatprep.mubr.bf16.mxu0 %v289
  %3328 = vmatmul.mubr.bf16.gmra.mrb[0].mxu0 %v287
  %v3329 = vpop.f32.mrb[0].mxu0
  %v3330 = vadd.f32 %v3290, %v3329
  %v3331 = vpop.f32.mrb[0].mxu0
  %v3332 = vpop.f32.mrb[0].mxu0
  %v3333 = vpop.f32.mrb[0].mxu0
  %3334 = vdwg.mxu0
  %s3335 = scalar_lea.vmem %s1, 40
  %v3336 = vld [vmem:[%s3335] sm:$0xf]
  %v3337 = vpack.c.bf16 %v3330, %v3330
  %v3339 = vsel %vm625, %v3336, 0
  %v3342 = vand.u32 %v3337, %v632
  %3344 = vmatprep.subr.bf16.mxu0 0
  %3345 = vmatpush1.bf16.msra.mxu0 %v3342
  %3346 = vmatprep.subr.bf16.mxu0 0
  %3347 = vmatpush1.bf16.msra.mxu0 0
  %3348 = vmatprep.subr.bf16.mxu0 0
  %3349 = vmatpush1.bf16.msra.mxu0 0
  %3350 = vmatprep.subr.bf16.mxu0 0
  %3351 = vmatpush1.bf16.msra.mxu0 0
  %3352 = vmatprep.subr.bf16.mxu0 0
  %3353 = vmatpush1.bf16.msra.mxu0 0
  %3354 = vmatprep.subr.bf16.mxu0 0
  %3355 = vmatpush1.bf16.msra.mxu0 0
  %3356 = vmatprep.subr.bf16.mxu0 0
  %3357 = vmatpush1.bf16.msra.mxu0 0
  %3358 = vmatprep.subr.bf16.mxu0 0
  %3359 = vmatpush1.bf16.msra.mxu0 0
  %3360 = vmatprep.subr.bf16.mxu0 0
  %3361 = vmatpush1.bf16.msra.mxu0 0
  %3362 = vmatprep.subr.bf16.mxu0 0
  %3363 = vmatpush1.bf16.msra.mxu0 0
  %3364 = vmatprep.subr.bf16.mxu0 0
  %3365 = vmatpush1.bf16.msra.mxu0 0
  %3366 = vmatprep.subr.bf16.mxu0 0
  %3367 = vmatpush1.bf16.msra.mxu0 0
  %3368 = vmatprep.subr.bf16.mxu0 0
  %3369 = vmatpush1.bf16.msra.mxu0 0
  %3370 = vmatprep.subr.bf16.mxu0 0
  %3371 = vmatpush1.bf16.msra.mxu0 0
  %3372 = vmatprep.subr.bf16.mxu0 0
  %3373 = vmatpush1.bf16.msra.mxu0 0
  %3374 = vmatprep.subr.bf16.mxu0 0
  %3375 = vmatpush1.bf16.msra.mxu0 0
  %3376 = vmatprep.mubr.bf16.mxu0 0
  %3377 = vmatmul.mubr.bf16.gmra.mrb[0].mxu0 %v3339
  %v3378 = vpop.f32.mrb[0].mxu0
  %v3379 = vadd.f32 0.0, %v3378
  %v3380 = vpop.f32.mrb[0].mxu0
  %v3381 = vpop.f32.mrb[0].mxu0
  %v3382 = vpop.f32.mrb[0].mxu0
  %3383 = vdwg.mxu0
  %v3384 = vadd.f32 %v3090, %v3379
  %vm3385 = vmand %vm2500, %vm1020
  %vm3386 = vmand %vm3385, %vm1022
  %v3387 = vadd.s32 %v2504, %v1019
  %v3388 = vsel %vm3386, %v3387, 4294967295
  %vm3389 = vcmp.eq.s32.totalorder %v32, %v3388
  %vm3390 = vcmp.eq.s32.totalorder %v33, %v3388
  %vm3391 = vcmp.eq.s32.totalorder %v34, %v3388
  %vm3392 = vcmp.eq.s32.totalorder %v35, %v3388
  %vm3393 = vcmp.eq.s32.totalorder %v36, %v3388
  %vm3394 = vcmp.eq.s32.totalorder %v37, %v3388
  %vm3395 = vcmp.eq.s32.totalorder %v38, %v3388
  %vm3396 = vcmp.eq.s32.totalorder %v39, %v3388
  %vm3397 = vcmp.eq.s32.totalorder %v40, %v3388
  %vm3398 = vcmp.eq.s32.totalorder %v41, %v3388
  %vm3399 = vcmp.eq.s32.totalorder %v42, %v3388
  %vm3400 = vcmp.eq.s32.totalorder %v43, %v3388
  %vm3401 = vcmp.eq.s32.totalorder %v44, %v3388
  %vm3402 = vcmp.eq.s32.totalorder %v45, %v3388
  %vm3403 = vcmp.eq.s32.totalorder %v46, %v3388
  %vm3404 = vcmp.eq.s32.totalorder %v47, %v3388
  %vm3405 = vcmp.eq.s32.totalorder %v48, %v3388
  %vm3406 = vcmp.eq.s32.totalorder %v49, %v3388
  %vm3407 = vcmp.eq.s32.totalorder %v50, %v3388
  %vm3408 = vcmp.eq.s32.totalorder %v51, %v3388
  %vm3409 = vcmp.eq.s32.totalorder %v52, %v3388
  %vm3410 = vcmp.eq.s32.totalorder %v53, %v3388
  %vm3411 = vcmp.eq.s32.totalorder %v54, %v3388
  %vm3412 = vcmp.eq.s32.totalorder %v55, %v3388
  %vm3413 = vcmp.eq.s32.totalorder %v56, %v3388
  %vm3414 = vcmp.eq.s32.totalorder %v57, %v3388
  %vm3415 = vcmp.eq.s32.totalorder %v58, %v3388
  %vm3416 = vcmp.eq.s32.totalorder %v59, %v3388
  %vm3417 = vcmp.eq.s32.totalorder %v60, %v3388
  %vm3418 = vcmp.eq.s32.totalorder %v61, %v3388
  %vm3419 = vcmp.eq.s32.totalorder %v62, %v3388
  %vm3420 = vcmp.eq.s32.totalorder %v63, %v3388
  %vm3421 = vcmp.eq.s32.totalorder %v64, %v3388
  %vm3422 = vcmp.eq.s32.totalorder %v65, %v3388
  %vm3423 = vcmp.eq.s32.totalorder %v66, %v3388
  %vm3424 = vcmp.eq.s32.totalorder %v67, %v3388
  %vm3425 = vcmp.eq.s32.totalorder %v68, %v3388
  %vm3426 = vcmp.eq.s32.totalorder %v69, %v3388
  %vm3427 = vcmp.eq.s32.totalorder %v70, %v3388
  %vm3428 = vcmp.eq.s32.totalorder %v71, %v3388
  %vm3429 = vcmp.eq.s32.totalorder %v72, %v3388
  %vm3430 = vcmp.eq.s32.totalorder %v73, %v3388
  %vm3431 = vcmp.eq.s32.totalorder %v74, %v3388
  %vm3432 = vcmp.eq.s32.totalorder %v75, %v3388
  %vm3433 = vcmp.eq.s32.totalorder %v76, %v3388
  %vm3434 = vcmp.eq.s32.totalorder %v77, %v3388
  %vm3435 = vcmp.eq.s32.totalorder %v78, %v3388
  %vm3436 = vcmp.eq.s32.totalorder %v79, %v3388
  %vm3437 = vcmp.eq.s32.totalorder %v80, %v3388
  %vm3438 = vcmp.eq.s32.totalorder %v81, %v3388
  %vm3439 = vcmp.eq.s32.totalorder %v82, %v3388
  %vm3440 = vcmp.eq.s32.totalorder %v83, %v3388
  %vm3441 = vcmp.eq.s32.totalorder %v84, %v3388
  %vm3442 = vcmp.eq.s32.totalorder %v85, %v3388
  %vm3443 = vcmp.eq.s32.totalorder %v86, %v3388
  %vm3444 = vcmp.eq.s32.totalorder %v87, %v3388
  %vm3445 = vcmp.eq.s32.totalorder %v88, %v3388
  %vm3446 = vcmp.eq.s32.totalorder %v89, %v3388
  %vm3447 = vcmp.eq.s32.totalorder %v90, %v3388
  %vm3448 = vcmp.eq.s32.totalorder %v91, %v3388
  %vm3449 = vcmp.eq.s32.totalorder %v92, %v3388
  %vm3450 = vcmp.eq.s32.totalorder %v93, %v3388
  %vm3451 = vcmp.eq.s32.totalorder %v94, %v3388
  %vm3452 = vcmp.eq.s32.totalorder %v95, %v3388
  %v3453 = vsel %vm3389, 1.0, 0.0
  %v3454 = vsel %vm3390, 1.0, 0.0
  %v3455 = vsel %vm3391, 1.0, 0.0
  %v3456 = vsel %vm3392, 1.0, 0.0
  %v3457 = vsel %vm3393, 1.0, 0.0
  %v3458 = vsel %vm3394, 1.0, 0.0
  %v3459 = vsel %vm3395, 1.0, 0.0
  %v3460 = vsel %vm3396, 1.0, 0.0
  %v3461 = vsel %vm3397, 1.0, 0.0
  %v3462 = vsel %vm3398, 1.0, 0.0
  %v3463 = vsel %vm3399, 1.0, 0.0
  %v3464 = vsel %vm3400, 1.0, 0.0
  %v3465 = vsel %vm3401, 1.0, 0.0
  %v3466 = vsel %vm3402, 1.0, 0.0
  %v3467 = vsel %vm3403, 1.0, 0.0
  %v3468 = vsel %vm3404, 1.0, 0.0
  %v3469 = vsel %vm3405, 1.0, 0.0
  %v3470 = vsel %vm3406, 1.0, 0.0
  %v3471 = vsel %vm3407, 1.0, 0.0
  %v3472 = vsel %vm3408, 1.0, 0.0
  %v3473 = vsel %vm3409, 1.0, 0.0
  %v3474 = vsel %vm3410, 1.0, 0.0
  %v3475 = vsel %vm3411, 1.0, 0.0
  %v3476 = vsel %vm3412, 1.0, 0.0
  %v3477 = vsel %vm3413, 1.0, 0.0
  %v3478 = vsel %vm3414, 1.0, 0.0
  %v3479 = vsel %vm3415, 1.0, 0.0
  %v3480 = vsel %vm3416, 1.0, 0.0
  %v3481 = vsel %vm3417, 1.0, 0.0
  %v3482 = vsel %vm3418, 1.0, 0.0
  %v3483 = vsel %vm3419, 1.0, 0.0
  %v3484 = vsel %vm3420, 1.0, 0.0
  %v3485 = vsel %vm3421, 1.0, 0.0
  %v3486 = vsel %vm3422, 1.0, 0.0
  %v3487 = vsel %vm3423, 1.0, 0.0
  %v3488 = vsel %vm3424, 1.0, 0.0
  %v3489 = vsel %vm3425, 1.0, 0.0
  %v3490 = vsel %vm3426, 1.0, 0.0
  %v3491 = vsel %vm3427, 1.0, 0.0
  %v3492 = vsel %vm3428, 1.0, 0.0
  %v3493 = vsel %vm3429, 1.0, 0.0
  %v3494 = vsel %vm3430, 1.0, 0.0
  %v3495 = vsel %vm3431, 1.0, 0.0
  %v3496 = vsel %vm3432, 1.0, 0.0
  %v3497 = vsel %vm3433, 1.0, 0.0
  %v3498 = vsel %vm3434, 1.0, 0.0
  %v3499 = vsel %vm3435, 1.0, 0.0
  %v3500 = vsel %vm3436, 1.0, 0.0
  %v3501 = vsel %vm3437, 1.0, 0.0
  %v3502 = vsel %vm3438, 1.0, 0.0
  %v3503 = vsel %vm3439, 1.0, 0.0
  %v3504 = vsel %vm3440, 1.0, 0.0
  %v3505 = vsel %vm3441, 1.0, 0.0
  %v3506 = vsel %vm3442, 1.0, 0.0
  %v3507 = vsel %vm3443, 1.0, 0.0
  %v3508 = vsel %vm3444, 1.0, 0.0
  %v3509 = vsel %vm3445, 1.0, 0.0
  %v3510 = vsel %vm3446, 1.0, 0.0
  %v3511 = vsel %vm3447, 1.0, 0.0
  %v3512 = vsel %vm3448, 1.0, 0.0
  %v3513 = vsel %vm3449, 1.0, 0.0
  %v3514 = vsel %vm3450, 1.0, 0.0
  %v3515 = vsel %vm3451, 1.0, 0.0
  %v3516 = vsel %vm3452, 1.0, 0.0
  %v3517 = vpack.c.bf16 %v3454, %v3453
  %v3518 = vpack.c.bf16 %v3456, %v3455
  %v3519 = vpack.c.bf16 %v3458, %v3457
  %v3520 = vpack.c.bf16 %v3460, %v3459
  %v3521 = vpack.c.bf16 %v3462, %v3461
  %v3522 = vpack.c.bf16 %v3464, %v3463
  %v3523 = vpack.c.bf16 %v3466, %v3465
  %v3524 = vpack.c.bf16 %v3468, %v3467
  %v3525 = vpack.c.bf16 %v3470, %v3469
  %v3526 = vpack.c.bf16 %v3472, %v3471
  %v3527 = vpack.c.bf16 %v3474, %v3473
  %v3528 = vpack.c.bf16 %v3476, %v3475
  %v3529 = vpack.c.bf16 %v3478, %v3477
  %v3530 = vpack.c.bf16 %v3480, %v3479
  %v3531 = vpack.c.bf16 %v3482, %v3481
  %v3532 = vpack.c.bf16 %v3484, %v3483
  %v3533 = vpack.c.bf16 %v3486, %v3485
  %v3534 = vpack.c.bf16 %v3488, %v3487
  %v3535 = vpack.c.bf16 %v3490, %v3489
  %v3536 = vpack.c.bf16 %v3492, %v3491
  %v3537 = vpack.c.bf16 %v3494, %v3493
  %v3538 = vpack.c.bf16 %v3496, %v3495
  %v3539 = vpack.c.bf16 %v3498, %v3497
  %v3540 = vpack.c.bf16 %v3500, %v3499
  %v3541 = vpack.c.bf16 %v3502, %v3501
  %v3542 = vpack.c.bf16 %v3504, %v3503
  %v3543 = vpack.c.bf16 %v3506, %v3505
  %v3544 = vpack.c.bf16 %v3508, %v3507
  %v3545 = vpack.c.bf16 %v3510, %v3509
  %v3546 = vpack.c.bf16 %v3512, %v3511
  %v3547 = vpack.c.bf16 %v3514, %v3513
  %v3548 = vpack.c.bf16 %v3516, %v3515
  %3549 = vmatprep.subr.bf16.mxu0 0
  %3550 = vmatpush1.bf16.msra.mxu0 %v3517
  %3551 = vmatprep.subr.bf16.mxu0 0
  %3552 = vmatpush1.bf16.msra.mxu0 %v3518
  %3553 = vmatprep.subr.bf16.mxu0 0
  %3554 = vmatpush1.bf16.msra.mxu0 %v3519
  %3555 = vmatprep.subr.bf16.mxu0 0
  %3556 = vmatpush1.bf16.msra.mxu0 %v3520
  %3557 = vmatprep.subr.bf16.mxu0 0
  %3558 = vmatpush1.bf16.msra.mxu0 %v3521
  %3559 = vmatprep.subr.bf16.mxu0 0
  %3560 = vmatpush1.bf16.msra.mxu0 %v3522
  %3561 = vmatprep.subr.bf16.mxu0 0
  %3562 = vmatpush1.bf16.msra.mxu0 %v3523
  %3563 = vmatprep.subr.bf16.mxu0 0
  %3564 = vmatpush1.bf16.msra.mxu0 %v3524
  %3565 = vmatprep.subr.bf16.mxu0 0
  %3566 = vmatpush1.bf16.msra.mxu0 %v3525
  %3567 = vmatprep.subr.bf16.mxu0 0
  %3568 = vmatpush1.bf16.msra.mxu0 %v3526
  %3569 = vmatprep.subr.bf16.mxu0 0
  %3570 = vmatpush1.bf16.msra.mxu0 %v3527
  %3571 = vmatprep.subr.bf16.mxu0 0
  %3572 = vmatpush1.bf16.msra.mxu0 %v3528
  %3573 = vmatprep.subr.bf16.mxu0 0
  %3574 = vmatpush1.bf16.msra.mxu0 %v3529
  %3575 = vmatprep.subr.bf16.mxu0 0
  %3576 = vmatpush1.bf16.msra.mxu0 %v3530
  %3577 = vmatprep.subr.bf16.mxu0 0
  %3578 = vmatpush1.bf16.msra.mxu0 %v3531
  %3579 = vmatprep.subr.bf16.mxu0 0
  %3580 = vmatpush1.bf16.msra.mxu0 %v3532
  %3581 = vmatprep.mubr.bf16.mxu0 %v288
  %3582 = vmatmul.mubr.bf16.gmra.mrb[0].mxu0 %v280
  %v3583 = vpop.f32.mrb[0].mxu0
  %v3584 = vadd.f32 0.0, %v3583
  %v3585 = vpop.f32.mrb[0].mxu0
  %v3586 = vpop.f32.mrb[0].mxu0
  %v3587 = vpop.f32.mrb[0].mxu0
  %3588 = vdwg.mxu0
  %3589 = vmatprep.subr.bf16.mxu0 0
  %3590 = vmatpush1.bf16.msra.mxu0 %v3533
  %3591 = vmatprep.subr.bf16.mxu0 0
  %3592 = vmatpush1.bf16.msra.mxu0 %v3534
  %3593 = vmatprep.subr.bf16.mxu0 0
  %3594 = vmatpush1.bf16.msra.mxu0 %v3535
  %3595 = vmatprep.subr.bf16.mxu0 0
  %3596 = vmatpush1.bf16.msra.mxu0 %v3536
  %3597 = vmatprep.subr.bf16.mxu0 0
  %3598 = vmatpush1.bf16.msra.mxu0 %v3537
  %3599 = vmatprep.subr.bf16.mxu0 0
  %3600 = vmatpush1.bf16.msra.mxu0 %v3538
  %3601 = vmatprep.subr.bf16.mxu0 0
  %3602 = vmatpush1.bf16.msra.mxu0 %v3539
  %3603 = vmatprep.subr.bf16.mxu0 0
  %3604 = vmatpush1.bf16.msra.mxu0 %v3540
  %3605 = vmatprep.subr.bf16.mxu0 0
  %3606 = vmatpush1.bf16.msra.mxu0 %v3541
  %3607 = vmatprep.subr.bf16.mxu0 0
  %3608 = vmatpush1.bf16.msra.mxu0 %v3542
  %3609 = vmatprep.subr.bf16.mxu0 0
  %3610 = vmatpush1.bf16.msra.mxu0 %v3543
  %3611 = vmatprep.subr.bf16.mxu0 0
  %3612 = vmatpush1.bf16.msra.mxu0 %v3544
  %3613 = vmatprep.subr.bf16.mxu0 0
  %3614 = vmatpush1.bf16.msra.mxu0 %v3545
  %3615 = vmatprep.subr.bf16.mxu0 0
  %3616 = vmatpush1.bf16.msra.mxu0 %v3546
  %3617 = vmatprep.subr.bf16.mxu0 0
  %3618 = vmatpush1.bf16.msra.mxu0 %v3547
  %3619 = vmatprep.subr.bf16.mxu0 0
  %3620 = vmatpush1.bf16.msra.mxu0 %v3548
  %3621 = vmatprep.mubr.bf16.mxu0 %v289
  %3622 = vmatmul.mubr.bf16.gmra.mrb[0].mxu0 %v287
  %v3623 = vpop.f32.mrb[0].mxu0
  %v3624 = vadd.f32 %v3584, %v3623
  %v3625 = vpop.f32.mrb[0].mxu0
  %v3626 = vpop.f32.mrb[0].mxu0
  %v3627 = vpop.f32.mrb[0].mxu0
  %3628 = vdwg.mxu0
  %s3629 = scalar_lea.vmem %s1, 44
  %v3630 = vld [vmem:[%s3629] sm:$0xf]
  %v3631 = vpack.c.bf16 %v3624, %v3624
  %v3633 = vsel %vm625, %v3630, 0
  %v3636 = vand.u32 %v3631, %v632
  %3638 = vmatprep.subr.bf16.mxu0 0
  %3639 = vmatpush1.bf16.msra.mxu0 %v3636
  %3640 = vmatprep.subr.bf16.mxu0 0
  %3641 = vmatpush1.bf16.msra.mxu0 0
  %3642 = vmatprep.subr.bf16.mxu0 0
  %3643 = vmatpush1.bf16.msra.mxu0 0
  %3644 = vmatprep.subr.bf16.mxu0 0
  %3645 = vmatpush1.bf16.msra.mxu0 0
  %3646 = vmatprep.subr.bf16.mxu0 0
  %3647 = vmatpush1.bf16.msra.mxu0 0
  %3648 = vmatprep.subr.bf16.mxu0 0
  %3649 = vmatpush1.bf16.msra.mxu0 0
  %3650 = vmatprep.subr.bf16.mxu0 0
  %3651 = vmatpush1.bf16.msra.mxu0 0
  %3652 = vmatprep.subr.bf16.mxu0 0
  %3653 = vmatpush1.bf16.msra.mxu0 0
  %3654 = vmatprep.subr.bf16.mxu0 0
  %3655 = vmatpush1.bf16.msra.mxu0 0
  %3656 = vmatprep.subr.bf16.mxu0 0
  %3657 = vmatpush1.bf16.msra.mxu0 0
  %3658 = vmatprep.subr.bf16.mxu0 0
  %3659 = vmatpush1.bf16.msra.mxu0 0
  %3660 = vmatprep.subr.bf16.mxu0 0
  %3661 = vmatpush1.bf16.msra.mxu0 0
  %3662 = vmatprep.subr.bf16.mxu0 0
  %3663 = vmatpush1.bf16.msra.mxu0 0
  %3664 = vmatprep.subr.bf16.mxu0 0
  %3665 = vmatpush1.bf16.msra.mxu0 0
  %3666 = vmatprep.subr.bf16.mxu0 0
  %3667 = vmatpush1.bf16.msra.mxu0 0
  %3668 = vmatprep.subr.bf16.mxu0 0
  %3669 = vmatpush1.bf16.msra.mxu0 0
  %3670 = vmatprep.mubr.bf16.mxu0 0
  %3671 = vmatmul.mubr.bf16.gmra.mrb[0].mxu0 %v3633
  %v3672 = vpop.f32.mrb[0].mxu0
  %v3673 = vadd.f32 0.0, %v3672
  %v3674 = vpop.f32.mrb[0].mxu0
  %v3675 = vpop.f32.mrb[0].mxu0
  %v3676 = vpop.f32.mrb[0].mxu0
  %3677 = vdwg.mxu0
  %v3678 = vadd.f32 %v3384, %v3673
  %v3679 = vadd.s32 %v96, 2
  %vm3680 = vcmp.ge.s32.totalorder %v3679, 0
  %vm3681 = vcmp.lt.s32.totalorder %v3679, 16
  %vm3682 = vmand %vm3680, %vm3681
  %vm3683 = vmand %vm3682, %vm103
  %vm3684 = vmand %vm3683, %vm105
  %v3685 = vmul.u32 %v3679, 16
  %v3686 = vadd.s32 %v107, %v3685
  %v3687 = vadd.s32 %v3686, %v99
  %v3688 = vsel %vm3684, %v3687, 4294967295
  %vm3689 = vcmp.eq.s32.totalorder %v32, %v3688
  %vm3690 = vcmp.eq.s32.totalorder %v33, %v3688
  %vm3691 = vcmp.eq.s32.totalorder %v34, %v3688
  %vm3692 = vcmp.eq.s32.totalorder %v35, %v3688
  %vm3693 = vcmp.eq.s32.totalorder %v36, %v3688
  %vm3694 = vcmp.eq.s32.totalorder %v37, %v3688
  %vm3695 = vcmp.eq.s32.totalorder %v38, %v3688
  %vm3696 = vcmp.eq.s32.totalorder %v39, %v3688
  %vm3697 = vcmp.eq.s32.totalorder %v40, %v3688
  %vm3698 = vcmp.eq.s32.totalorder %v41, %v3688
  %vm3699 = vcmp.eq.s32.totalorder %v42, %v3688
  %vm3700 = vcmp.eq.s32.totalorder %v43, %v3688
  %vm3701 = vcmp.eq.s32.totalorder %v44, %v3688
  %vm3702 = vcmp.eq.s32.totalorder %v45, %v3688
  %vm3703 = vcmp.eq.s32.totalorder %v46, %v3688
  %vm3704 = vcmp.eq.s32.totalorder %v47, %v3688
  %vm3705 = vcmp.eq.s32.totalorder %v48, %v3688
  %vm3706 = vcmp.eq.s32.totalorder %v49, %v3688
  %vm3707 = vcmp.eq.s32.totalorder %v50, %v3688
  %vm3708 = vcmp.eq.s32.totalorder %v51, %v3688
  %vm3709 = vcmp.eq.s32.totalorder %v52, %v3688
  %vm3710 = vcmp.eq.s32.totalorder %v53, %v3688
  %vm3711 = vcmp.eq.s32.totalorder %v54, %v3688
  %vm3712 = vcmp.eq.s32.totalorder %v55, %v3688
  %vm3713 = vcmp.eq.s32.totalorder %v56, %v3688
  %vm3714 = vcmp.eq.s32.totalorder %v57, %v3688
  %vm3715 = vcmp.eq.s32.totalorder %v58, %v3688
  %vm3716 = vcmp.eq.s32.totalorder %v59, %v3688
  %vm3717 = vcmp.eq.s32.totalorder %v60, %v3688
  %vm3718 = vcmp.eq.s32.totalorder %v61, %v3688
  %vm3719 = vcmp.eq.s32.totalorder %v62, %v3688
  %vm3720 = vcmp.eq.s32.totalorder %v63, %v3688
  %vm3721 = vcmp.eq.s32.totalorder %v64, %v3688
  %vm3722 = vcmp.eq.s32.totalorder %v65, %v3688
  %vm3723 = vcmp.eq.s32.totalorder %v66, %v3688
  %vm3724 = vcmp.eq.s32.totalorder %v67, %v3688
  %vm3725 = vcmp.eq.s32.totalorder %v68, %v3688
  %vm3726 = vcmp.eq.s32.totalorder %v69, %v3688
  %vm3727 = vcmp.eq.s32.totalorder %v70, %v3688
  %vm3728 = vcmp.eq.s32.totalorder %v71, %v3688
  %vm3729 = vcmp.eq.s32.totalorder %v72, %v3688
  %vm3730 = vcmp.eq.s32.totalorder %v73, %v3688
  %vm3731 = vcmp.eq.s32.totalorder %v74, %v3688
  %vm3732 = vcmp.eq.s32.totalorder %v75, %v3688
  %vm3733 = vcmp.eq.s32.totalorder %v76, %v3688
  %vm3734 = vcmp.eq.s32.totalorder %v77, %v3688
  %vm3735 = vcmp.eq.s32.totalorder %v78, %v3688
  %vm3736 = vcmp.eq.s32.totalorder %v79, %v3688
  %vm3737 = vcmp.eq.s32.totalorder %v80, %v3688
  %vm3738 = vcmp.eq.s32.totalorder %v81, %v3688
  %vm3739 = vcmp.eq.s32.totalorder %v82, %v3688
  %vm3740 = vcmp.eq.s32.totalorder %v83, %v3688
  %vm3741 = vcmp.eq.s32.totalorder %v84, %v3688
  %vm3742 = vcmp.eq.s32.totalorder %v85, %v3688
  %vm3743 = vcmp.eq.s32.totalorder %v86, %v3688
  %vm3744 = vcmp.eq.s32.totalorder %v87, %v3688
  %vm3745 = vcmp.eq.s32.totalorder %v88, %v3688
  %vm3746 = vcmp.eq.s32.totalorder %v89, %v3688
  %vm3747 = vcmp.eq.s32.totalorder %v90, %v3688
  %vm3748 = vcmp.eq.s32.totalorder %v91, %v3688
  %vm3749 = vcmp.eq.s32.totalorder %v92, %v3688
  %vm3750 = vcmp.eq.s32.totalorder %v93, %v3688
  %vm3751 = vcmp.eq.s32.totalorder %v94, %v3688
  %vm3752 = vcmp.eq.s32.totalorder %v95, %v3688
  %v3753 = vsel %vm3689, 1.0, 0.0
  %v3754 = vsel %vm3690, 1.0, 0.0
  %v3755 = vsel %vm3691, 1.0, 0.0
  %v3756 = vsel %vm3692, 1.0, 0.0
  %v3757 = vsel %vm3693, 1.0, 0.0
  %v3758 = vsel %vm3694, 1.0, 0.0
  %v3759 = vsel %vm3695, 1.0, 0.0
  %v3760 = vsel %vm3696, 1.0, 0.0
  %v3761 = vsel %vm3697, 1.0, 0.0
  %v3762 = vsel %vm3698, 1.0, 0.0
  %v3763 = vsel %vm3699, 1.0, 0.0
  %v3764 = vsel %vm3700, 1.0, 0.0
  %v3765 = vsel %vm3701, 1.0, 0.0
  %v3766 = vsel %vm3702, 1.0, 0.0
  %v3767 = vsel %vm3703, 1.0, 0.0
  %v3768 = vsel %vm3704, 1.0, 0.0
  %v3769 = vsel %vm3705, 1.0, 0.0
  %v3770 = vsel %vm3706, 1.0, 0.0
  %v3771 = vsel %vm3707, 1.0, 0.0
  %v3772 = vsel %vm3708, 1.0, 0.0
  %v3773 = vsel %vm3709, 1.0, 0.0
  %v3774 = vsel %vm3710, 1.0, 0.0
  %v3775 = vsel %vm3711, 1.0, 0.0
  %v3776 = vsel %vm3712, 1.0, 0.0
  %v3777 = vsel %vm3713, 1.0, 0.0
  %v3778 = vsel %vm3714, 1.0, 0.0
  %v3779 = vsel %vm3715, 1.0, 0.0
  %v3780 = vsel %vm3716, 1.0, 0.0
  %v3781 = vsel %vm3717, 1.0, 0.0
  %v3782 = vsel %vm3718, 1.0, 0.0
  %v3783 = vsel %vm3719, 1.0, 0.0
  %v3784 = vsel %vm3720, 1.0, 0.0
  %v3785 = vsel %vm3721, 1.0, 0.0
  %v3786 = vsel %vm3722, 1.0, 0.0
  %v3787 = vsel %vm3723, 1.0, 0.0
  %v3788 = vsel %vm3724, 1.0, 0.0
  %v3789 = vsel %vm3725, 1.0, 0.0
  %v3790 = vsel %vm3726, 1.0, 0.0
  %v3791 = vsel %vm3727, 1.0, 0.0
  %v3792 = vsel %vm3728, 1.0, 0.0
  %v3793 = vsel %vm3729, 1.0, 0.0
  %v3794 = vsel %vm3730, 1.0, 0.0
  %v3795 = vsel %vm3731, 1.0, 0.0
  %v3796 = vsel %vm3732, 1.0, 0.0
  %v3797 = vsel %vm3733, 1.0, 0.0
  %v3798 = vsel %vm3734, 1.0, 0.0
  %v3799 = vsel %vm3735, 1.0, 0.0
  %v3800 = vsel %vm3736, 1.0, 0.0
  %v3801 = vsel %vm3737, 1.0, 0.0
  %v3802 = vsel %vm3738, 1.0, 0.0
  %v3803 = vsel %vm3739, 1.0, 0.0
  %v3804 = vsel %vm3740, 1.0, 0.0
  %v3805 = vsel %vm3741, 1.0, 0.0
  %v3806 = vsel %vm3742, 1.0, 0.0
  %v3807 = vsel %vm3743, 1.0, 0.0
  %v3808 = vsel %vm3744, 1.0, 0.0
  %v3809 = vsel %vm3745, 1.0, 0.0
  %v3810 = vsel %vm3746, 1.0, 0.0
  %v3811 = vsel %vm3747, 1.0, 0.0
  %v3812 = vsel %vm3748, 1.0, 0.0
  %v3813 = vsel %vm3749, 1.0, 0.0
  %v3814 = vsel %vm3750, 1.0, 0.0
  %v3815 = vsel %vm3751, 1.0, 0.0
  %v3816 = vsel %vm3752, 1.0, 0.0
  %v3817 = vpack.c.bf16 %v3754, %v3753
  %v3818 = vpack.c.bf16 %v3756, %v3755
  %v3819 = vpack.c.bf16 %v3758, %v3757
  %v3820 = vpack.c.bf16 %v3760, %v3759
  %v3821 = vpack.c.bf16 %v3762, %v3761
  %v3822 = vpack.c.bf16 %v3764, %v3763
  %v3823 = vpack.c.bf16 %v3766, %v3765
  %v3824 = vpack.c.bf16 %v3768, %v3767
  %v3825 = vpack.c.bf16 %v3770, %v3769
  %v3826 = vpack.c.bf16 %v3772, %v3771
  %v3827 = vpack.c.bf16 %v3774, %v3773
  %v3828 = vpack.c.bf16 %v3776, %v3775
  %v3829 = vpack.c.bf16 %v3778, %v3777
  %v3830 = vpack.c.bf16 %v3780, %v3779
  %v3831 = vpack.c.bf16 %v3782, %v3781
  %v3832 = vpack.c.bf16 %v3784, %v3783
  %v3833 = vpack.c.bf16 %v3786, %v3785
  %v3834 = vpack.c.bf16 %v3788, %v3787
  %v3835 = vpack.c.bf16 %v3790, %v3789
  %v3836 = vpack.c.bf16 %v3792, %v3791
  %v3837 = vpack.c.bf16 %v3794, %v3793
  %v3838 = vpack.c.bf16 %v3796, %v3795
  %v3839 = vpack.c.bf16 %v3798, %v3797
  %v3840 = vpack.c.bf16 %v3800, %v3799
  %v3841 = vpack.c.bf16 %v3802, %v3801
  %v3842 = vpack.c.bf16 %v3804, %v3803
  %v3843 = vpack.c.bf16 %v3806, %v3805
  %v3844 = vpack.c.bf16 %v3808, %v3807
  %v3845 = vpack.c.bf16 %v3810, %v3809
  %v3846 = vpack.c.bf16 %v3812, %v3811
  %v3847 = vpack.c.bf16 %v3814, %v3813
  %v3848 = vpack.c.bf16 %v3816, %v3815
  %3849 = vmatprep.subr.bf16.mxu0 0
  %3850 = vmatpush1.bf16.msra.mxu0 %v3817
  %3851 = vmatprep.subr.bf16.mxu0 0
  %3852 = vmatpush1.bf16.msra.mxu0 %v3818
  %3853 = vmatprep.subr.bf16.mxu0 0
  %3854 = vmatpush1.bf16.msra.mxu0 %v3819
  %3855 = vmatprep.subr.bf16.mxu0 0
  %3856 = vmatpush1.bf16.msra.mxu0 %v3820
  %3857 = vmatprep.subr.bf16.mxu0 0
  %3858 = vmatpush1.bf16.msra.mxu0 %v3821
  %3859 = vmatprep.subr.bf16.mxu0 0
  %3860 = vmatpush1.bf16.msra.mxu0 %v3822
  %3861 = vmatprep.subr.bf16.mxu0 0
  %3862 = vmatpush1.bf16.msra.mxu0 %v3823
  %3863 = vmatprep.subr.bf16.mxu0 0
  %3864 = vmatpush1.bf16.msra.mxu0 %v3824
  %3865 = vmatprep.subr.bf16.mxu0 0
  %3866 = vmatpush1.bf16.msra.mxu0 %v3825
  %3867 = vmatprep.subr.bf16.mxu0 0
  %3868 = vmatpush1.bf16.msra.mxu0 %v3826
  %3869 = vmatprep.subr.bf16.mxu0 0
  %3870 = vmatpush1.bf16.msra.mxu0 %v3827
  %3871 = vmatprep.subr.bf16.mxu0 0
  %3872 = vmatpush1.bf16.msra.mxu0 %v3828
  %3873 = vmatprep.subr.bf16.mxu0 0
  %3874 = vmatpush1.bf16.msra.mxu0 %v3829
  %3875 = vmatprep.subr.bf16.mxu0 0
  %3876 = vmatpush1.bf16.msra.mxu0 %v3830
  %3877 = vmatprep.subr.bf16.mxu0 0
  %3878 = vmatpush1.bf16.msra.mxu0 %v3831
  %3879 = vmatprep.subr.bf16.mxu0 0
  %3880 = vmatpush1.bf16.msra.mxu0 %v3832
  %3881 = vmatprep.mubr.bf16.mxu0 %v288
  %3882 = vmatmul.mubr.bf16.gmra.mrb[0].mxu0 %v280
  %v3883 = vpop.f32.mrb[0].mxu0
  %v3884 = vadd.f32 0.0, %v3883
  %v3885 = vpop.f32.mrb[0].mxu0
  %v3886 = vpop.f32.mrb[0].mxu0
  %v3887 = vpop.f32.mrb[0].mxu0
  %3888 = vdwg.mxu0
  %3889 = vmatprep.subr.bf16.mxu0 0
  %3890 = vmatpush1.bf16.msra.mxu0 %v3833
  %3891 = vmatprep.subr.bf16.mxu0 0
  %3892 = vmatpush1.bf16.msra.mxu0 %v3834
  %3893 = vmatprep.subr.bf16.mxu0 0
  %3894 = vmatpush1.bf16.msra.mxu0 %v3835
  %3895 = vmatprep.subr.bf16.mxu0 0
  %3896 = vmatpush1.bf16.msra.mxu0 %v3836
  %3897 = vmatprep.subr.bf16.mxu0 0
  %3898 = vmatpush1.bf16.msra.mxu0 %v3837
  %3899 = vmatprep.subr.bf16.mxu0 0
  %3900 = vmatpush1.bf16.msra.mxu0 %v3838
  %3901 = vmatprep.subr.bf16.mxu0 0
  %3902 = vmatpush1.bf16.msra.mxu0 %v3839
  %3903 = vmatprep.subr.bf16.mxu0 0
  %3904 = vmatpush1.bf16.msra.mxu0 %v3840
  %3905 = vmatprep.subr.bf16.mxu0 0
  %3906 = vmatpush1.bf16.msra.mxu0 %v3841
  %3907 = vmatprep.subr.bf16.mxu0 0
  %3908 = vmatpush1.bf16.msra.mxu0 %v3842
  %3909 = vmatprep.subr.bf16.mxu0 0
  %3910 = vmatpush1.bf16.msra.mxu0 %v3843
  %3911 = vmatprep.subr.bf16.mxu0 0
  %3912 = vmatpush1.bf16.msra.mxu0 %v3844
  %3913 = vmatprep.subr.bf16.mxu0 0
  %3914 = vmatpush1.bf16.msra.mxu0 %v3845
  %3915 = vmatprep.subr.bf16.mxu0 0
  %3916 = vmatpush1.bf16.msra.mxu0 %v3846
  %3917 = vmatprep.subr.bf16.mxu0 0
  %3918 = vmatpush1.bf16.msra.mxu0 %v3847
  %3919 = vmatprep.subr.bf16.mxu0 0
  %3920 = vmatpush1.bf16.msra.mxu0 %v3848
  %3921 = vmatprep.mubr.bf16.mxu0 %v289
  %3922 = vmatmul.mubr.bf16.gmra.mrb[0].mxu0 %v287
  %v3923 = vpop.f32.mrb[0].mxu0
  %v3924 = vadd.f32 %v3884, %v3923
  %v3925 = vpop.f32.mrb[0].mxu0
  %v3926 = vpop.f32.mrb[0].mxu0
  %v3927 = vpop.f32.mrb[0].mxu0
  %3928 = vdwg.mxu0
  %s3929 = scalar_lea.vmem %s1, 48
  %v3930 = vld [vmem:[%s3929] sm:$0xf]
  %v3931 = vpack.c.bf16 %v3924, %v3924
  %v3933 = vsel %vm625, %v3930, 0
  %v3936 = vand.u32 %v3931, %v632
  %3938 = vmatprep.subr.bf16.mxu0 0
  %3939 = vmatpush1.bf16.msra.mxu0 %v3936
  %3940 = vmatprep.subr.bf16.mxu0 0
  %3941 = vmatpush1.bf16.msra.mxu0 0
  %3942 = vmatprep.subr.bf16.mxu0 0
  %3943 = vmatpush1.bf16.msra.mxu0 0
  %3944 = vmatprep.subr.bf16.mxu0 0
  %3945 = vmatpush1.bf16.msra.mxu0 0
  %3946 = vmatprep.subr.bf16.mxu0 0
  %3947 = vmatpush1.bf16.msra.mxu0 0
  %3948 = vmatprep.subr.bf16.mxu0 0
  %3949 = vmatpush1.bf16.msra.mxu0 0
  %3950 = vmatprep.subr.bf16.mxu0 0
  %3951 = vmatpush1.bf16.msra.mxu0 0
  %3952 = vmatprep.subr.bf16.mxu0 0
  %3953 = vmatpush1.bf16.msra.mxu0 0
  %3954 = vmatprep.subr.bf16.mxu0 0
  %3955 = vmatpush1.bf16.msra.mxu0 0
  %3956 = vmatprep.subr.bf16.mxu0 0
  %3957 = vmatpush1.bf16.msra.mxu0 0
  %3958 = vmatprep.subr.bf16.mxu0 0
  %3959 = vmatpush1.bf16.msra.mxu0 0
  %3960 = vmatprep.subr.bf16.mxu0 0
  %3961 = vmatpush1.bf16.msra.mxu0 0
  %3962 = vmatprep.subr.bf16.mxu0 0
  %3963 = vmatpush1.bf16.msra.mxu0 0
  %3964 = vmatprep.subr.bf16.mxu0 0
  %3965 = vmatpush1.bf16.msra.mxu0 0
  %3966 = vmatprep.subr.bf16.mxu0 0
  %3967 = vmatpush1.bf16.msra.mxu0 0
  %3968 = vmatprep.subr.bf16.mxu0 0
  %3969 = vmatpush1.bf16.msra.mxu0 0
  %3970 = vmatprep.mubr.bf16.mxu0 0
  %3971 = vmatmul.mubr.bf16.gmra.mrb[0].mxu0 %v3933
  %v3972 = vpop.f32.mrb[0].mxu0
  %v3973 = vadd.f32 0.0, %v3972
  %v3974 = vpop.f32.mrb[0].mxu0
  %v3975 = vpop.f32.mrb[0].mxu0
  %v3976 = vpop.f32.mrb[0].mxu0
  %3977 = vdwg.mxu0
  %v3978 = vadd.f32 %v3678, %v3973
  %vm3979 = vmand %vm3682, %vm376
  %vm3980 = vmand %vm3979, %vm378
  %v3981 = vadd.s32 %v3686, %v98
  %v3982 = vsel %vm3980, %v3981, 4294967295
  %vm3983 = vcmp.eq.s32.totalorder %v32, %v3982
  %vm3984 = vcmp.eq.s32.totalorder %v33, %v3982
  %vm3985 = vcmp.eq.s32.totalorder %v34, %v3982
  %vm3986 = vcmp.eq.s32.totalorder %v35, %v3982
  %vm3987 = vcmp.eq.s32.totalorder %v36, %v3982
  %vm3988 = vcmp.eq.s32.totalorder %v37, %v3982
  %vm3989 = vcmp.eq.s32.totalorder %v38, %v3982
  %vm3990 = vcmp.eq.s32.totalorder %v39, %v3982
  %vm3991 = vcmp.eq.s32.totalorder %v40, %v3982
  %vm3992 = vcmp.eq.s32.totalorder %v41, %v3982
  %vm3993 = vcmp.eq.s32.totalorder %v42, %v3982
  %vm3994 = vcmp.eq.s32.totalorder %v43, %v3982
  %vm3995 = vcmp.eq.s32.totalorder %v44, %v3982
  %vm3996 = vcmp.eq.s32.totalorder %v45, %v3982
  %vm3997 = vcmp.eq.s32.totalorder %v46, %v3982
  %vm3998 = vcmp.eq.s32.totalorder %v47, %v3982
  %vm3999 = vcmp.eq.s32.totalorder %v48, %v3982
  %vm4000 = vcmp.eq.s32.totalorder %v49, %v3982
  %vm4001 = vcmp.eq.s32.totalorder %v50, %v3982
  %vm4002 = vcmp.eq.s32.totalorder %v51, %v3982
  %vm4003 = vcmp.eq.s32.totalorder %v52, %v3982
  %vm4004 = vcmp.eq.s32.totalorder %v53, %v3982
  %vm4005 = vcmp.eq.s32.totalorder %v54, %v3982
  %vm4006 = vcmp.eq.s32.totalorder %v55, %v3982
  %vm4007 = vcmp.eq.s32.totalorder %v56, %v3982
  %vm4008 = vcmp.eq.s32.totalorder %v57, %v3982
  %vm4009 = vcmp.eq.s32.totalorder %v58, %v3982
  %vm4010 = vcmp.eq.s32.totalorder %v59, %v3982
  %vm4011 = vcmp.eq.s32.totalorder %v60, %v3982
  %vm4012 = vcmp.eq.s32.totalorder %v61, %v3982
  %vm4013 = vcmp.eq.s32.totalorder %v62, %v3982
  %vm4014 = vcmp.eq.s32.totalorder %v63, %v3982
  %vm4015 = vcmp.eq.s32.totalorder %v64, %v3982
  %vm4016 = vcmp.eq.s32.totalorder %v65, %v3982
  %vm4017 = vcmp.eq.s32.totalorder %v66, %v3982
  %vm4018 = vcmp.eq.s32.totalorder %v67, %v3982
  %vm4019 = vcmp.eq.s32.totalorder %v68, %v3982
  %vm4020 = vcmp.eq.s32.totalorder %v69, %v3982
  %vm4021 = vcmp.eq.s32.totalorder %v70, %v3982
  %vm4022 = vcmp.eq.s32.totalorder %v71, %v3982
  %vm4023 = vcmp.eq.s32.totalorder %v72, %v3982
  %vm4024 = vcmp.eq.s32.totalorder %v73, %v3982
  %vm4025 = vcmp.eq.s32.totalorder %v74, %v3982
  %vm4026 = vcmp.eq.s32.totalorder %v75, %v3982
  %vm4027 = vcmp.eq.s32.totalorder %v76, %v3982
  %vm4028 = vcmp.eq.s32.totalorder %v77, %v3982
  %vm4029 = vcmp.eq.s32.totalorder %v78, %v3982
  %vm4030 = vcmp.eq.s32.totalorder %v79, %v3982
  %vm4031 = vcmp.eq.s32.totalorder %v80, %v3982
  %vm4032 = vcmp.eq.s32.totalorder %v81, %v3982
  %vm4033 = vcmp.eq.s32.totalorder %v82, %v3982
  %vm4034 = vcmp.eq.s32.totalorder %v83, %v3982
  %vm4035 = vcmp.eq.s32.totalorder %v84, %v3982
  %vm4036 = vcmp.eq.s32.totalorder %v85, %v3982
  %vm4037 = vcmp.eq.s32.totalorder %v86, %v3982
  %vm4038 = vcmp.eq.s32.totalorder %v87, %v3982
  %vm4039 = vcmp.eq.s32.totalorder %v88, %v3982
  %vm4040 = vcmp.eq.s32.totalorder %v89, %v3982
  %vm4041 = vcmp.eq.s32.totalorder %v90, %v3982
  %vm4042 = vcmp.eq.s32.totalorder %v91, %v3982
  %vm4043 = vcmp.eq.s32.totalorder %v92, %v3982
  %vm4044 = vcmp.eq.s32.totalorder %v93, %v3982
  %vm4045 = vcmp.eq.s32.totalorder %v94, %v3982
  %vm4046 = vcmp.eq.s32.totalorder %v95, %v3982
  %v4047 = vsel %vm3983, 1.0, 0.0
  %v4048 = vsel %vm3984, 1.0, 0.0
  %v4049 = vsel %vm3985, 1.0, 0.0
  %v4050 = vsel %vm3986, 1.0, 0.0
  %v4051 = vsel %vm3987, 1.0, 0.0
  %v4052 = vsel %vm3988, 1.0, 0.0
  %v4053 = vsel %vm3989, 1.0, 0.0
  %v4054 = vsel %vm3990, 1.0, 0.0
  %v4055 = vsel %vm3991, 1.0, 0.0
  %v4056 = vsel %vm3992, 1.0, 0.0
  %v4057 = vsel %vm3993, 1.0, 0.0
  %v4058 = vsel %vm3994, 1.0, 0.0
  %v4059 = vsel %vm3995, 1.0, 0.0
  %v4060 = vsel %vm3996, 1.0, 0.0
  %v4061 = vsel %vm3997, 1.0, 0.0
  %v4062 = vsel %vm3998, 1.0, 0.0
  %v4063 = vsel %vm3999, 1.0, 0.0
  %v4064 = vsel %vm4000, 1.0, 0.0
  %v4065 = vsel %vm4001, 1.0, 0.0
  %v4066 = vsel %vm4002, 1.0, 0.0
  %v4067 = vsel %vm4003, 1.0, 0.0
  %v4068 = vsel %vm4004, 1.0, 0.0
  %v4069 = vsel %vm4005, 1.0, 0.0
  %v4070 = vsel %vm4006, 1.0, 0.0
  %v4071 = vsel %vm4007, 1.0, 0.0
  %v4072 = vsel %vm4008, 1.0, 0.0
  %v4073 = vsel %vm4009, 1.0, 0.0
  %v4074 = vsel %vm4010, 1.0, 0.0
  %v4075 = vsel %vm4011, 1.0, 0.0
  %v4076 = vsel %vm4012, 1.0, 0.0
  %v4077 = vsel %vm4013, 1.0, 0.0
  %v4078 = vsel %vm4014, 1.0, 0.0
  %v4079 = vsel %vm4015, 1.0, 0.0
  %v4080 = vsel %vm4016, 1.0, 0.0
  %v4081 = vsel %vm4017, 1.0, 0.0
  %v4082 = vsel %vm4018, 1.0, 0.0
  %v4083 = vsel %vm4019, 1.0, 0.0
  %v4084 = vsel %vm4020, 1.0, 0.0
  %v4085 = vsel %vm4021, 1.0, 0.0
  %v4086 = vsel %vm4022, 1.0, 0.0
  %v4087 = vsel %vm4023, 1.0, 0.0
  %v4088 = vsel %vm4024, 1.0, 0.0
  %v4089 = vsel %vm4025, 1.0, 0.0
  %v4090 = vsel %vm4026, 1.0, 0.0
  %v4091 = vsel %vm4027, 1.0, 0.0
  %v4092 = vsel %vm4028, 1.0, 0.0
  %v4093 = vsel %vm4029, 1.0, 0.0
  %v4094 = vsel %vm4030, 1.0, 0.0
  %v4095 = vsel %vm4031, 1.0, 0.0
  %v4096 = vsel %vm4032, 1.0, 0.0
  %v4097 = vsel %vm4033, 1.0, 0.0
  %v4098 = vsel %vm4034, 1.0, 0.0
  %v4099 = vsel %vm4035, 1.0, 0.0
  %v4100 = vsel %vm4036, 1.0, 0.0
  %v4101 = vsel %vm4037, 1.0, 0.0
  %v4102 = vsel %vm4038, 1.0, 0.0
  %v4103 = vsel %vm4039, 1.0, 0.0
  %v4104 = vsel %vm4040, 1.0, 0.0
  %v4105 = vsel %vm4041, 1.0, 0.0
  %v4106 = vsel %vm4042, 1.0, 0.0
  %v4107 = vsel %vm4043, 1.0, 0.0
  %v4108 = vsel %vm4044, 1.0, 0.0
  %v4109 = vsel %vm4045, 1.0, 0.0
  %v4110 = vsel %vm4046, 1.0, 0.0
  %v4111 = vpack.c.bf16 %v4048, %v4047
  %v4112 = vpack.c.bf16 %v4050, %v4049
  %v4113 = vpack.c.bf16 %v4052, %v4051
  %v4114 = vpack.c.bf16 %v4054, %v4053
  %v4115 = vpack.c.bf16 %v4056, %v4055
  %v4116 = vpack.c.bf16 %v4058, %v4057
  %v4117 = vpack.c.bf16 %v4060, %v4059
  %v4118 = vpack.c.bf16 %v4062, %v4061
  %v4119 = vpack.c.bf16 %v4064, %v4063
  %v4120 = vpack.c.bf16 %v4066, %v4065
  %v4121 = vpack.c.bf16 %v4068, %v4067
  %v4122 = vpack.c.bf16 %v4070, %v4069
  %v4123 = vpack.c.bf16 %v4072, %v4071
  %v4124 = vpack.c.bf16 %v4074, %v4073
  %v4125 = vpack.c.bf16 %v4076, %v4075
  %v4126 = vpack.c.bf16 %v4078, %v4077
  %v4127 = vpack.c.bf16 %v4080, %v4079
  %v4128 = vpack.c.bf16 %v4082, %v4081
  %v4129 = vpack.c.bf16 %v4084, %v4083
  %v4130 = vpack.c.bf16 %v4086, %v4085
  %v4131 = vpack.c.bf16 %v4088, %v4087
  %v4132 = vpack.c.bf16 %v4090, %v4089
  %v4133 = vpack.c.bf16 %v4092, %v4091
  %v4134 = vpack.c.bf16 %v4094, %v4093
  %v4135 = vpack.c.bf16 %v4096, %v4095
  %v4136 = vpack.c.bf16 %v4098, %v4097
  %v4137 = vpack.c.bf16 %v4100, %v4099
  %v4138 = vpack.c.bf16 %v4102, %v4101
  %v4139 = vpack.c.bf16 %v4104, %v4103
  %v4140 = vpack.c.bf16 %v4106, %v4105
  %v4141 = vpack.c.bf16 %v4108, %v4107
  %v4142 = vpack.c.bf16 %v4110, %v4109
  %4143 = vmatprep.subr.bf16.mxu0 0
  %4144 = vmatpush1.bf16.msra.mxu0 %v4111
  %4145 = vmatprep.subr.bf16.mxu0 0
  %4146 = vmatpush1.bf16.msra.mxu0 %v4112
  %4147 = vmatprep.subr.bf16.mxu0 0
  %4148 = vmatpush1.bf16.msra.mxu0 %v4113
  %4149 = vmatprep.subr.bf16.mxu0 0
  %4150 = vmatpush1.bf16.msra.mxu0 %v4114
  %4151 = vmatprep.subr.bf16.mxu0 0
  %4152 = vmatpush1.bf16.msra.mxu0 %v4115
  %4153 = vmatprep.subr.bf16.mxu0 0
  %4154 = vmatpush1.bf16.msra.mxu0 %v4116
  %4155 = vmatprep.subr.bf16.mxu0 0
  %4156 = vmatpush1.bf16.msra.mxu0 %v4117
  %4157 = vmatprep.subr.bf16.mxu0 0
  %4158 = vmatpush1.bf16.msra.mxu0 %v4118
  %4159 = vmatprep.subr.bf16.mxu0 0
  %4160 = vmatpush1.bf16.msra.mxu0 %v4119
  %4161 = vmatprep.subr.bf16.mxu0 0
  %4162 = vmatpush1.bf16.msra.mxu0 %v4120
  %4163 = vmatprep.subr.bf16.mxu0 0
  %4164 = vmatpush1.bf16.msra.mxu0 %v4121
  %4165 = vmatprep.subr.bf16.mxu0 0
  %4166 = vmatpush1.bf16.msra.mxu0 %v4122
  %4167 = vmatprep.subr.bf16.mxu0 0
  %4168 = vmatpush1.bf16.msra.mxu0 %v4123
  %4169 = vmatprep.subr.bf16.mxu0 0
  %4170 = vmatpush1.bf16.msra.mxu0 %v4124
  %4171 = vmatprep.subr.bf16.mxu0 0
  %4172 = vmatpush1.bf16.msra.mxu0 %v4125
  %4173 = vmatprep.subr.bf16.mxu0 0
  %4174 = vmatpush1.bf16.msra.mxu0 %v4126
  %4175 = vmatprep.mubr.bf16.mxu0 %v288
  %4176 = vmatmul.mubr.bf16.gmra.mrb[0].mxu0 %v280
  %v4177 = vpop.f32.mrb[0].mxu0
  %v4178 = vadd.f32 0.0, %v4177
  %v4179 = vpop.f32.mrb[0].mxu0
  %v4180 = vpop.f32.mrb[0].mxu0
  %v4181 = vpop.f32.mrb[0].mxu0
  %4182 = vdwg.mxu0
  %4183 = vmatprep.subr.bf16.mxu0 0
  %4184 = vmatpush1.bf16.msra.mxu0 %v4127
  %4185 = vmatprep.subr.bf16.mxu0 0
  %4186 = vmatpush1.bf16.msra.mxu0 %v4128
  %4187 = vmatprep.subr.bf16.mxu0 0
  %4188 = vmatpush1.bf16.msra.mxu0 %v4129
  %4189 = vmatprep.subr.bf16.mxu0 0
  %4190 = vmatpush1.bf16.msra.mxu0 %v4130
  %4191 = vmatprep.subr.bf16.mxu0 0
  %4192 = vmatpush1.bf16.msra.mxu0 %v4131
  %4193 = vmatprep.subr.bf16.mxu0 0
  %4194 = vmatpush1.bf16.msra.mxu0 %v4132
  %4195 = vmatprep.subr.bf16.mxu0 0
  %4196 = vmatpush1.bf16.msra.mxu0 %v4133
  %4197 = vmatprep.subr.bf16.mxu0 0
  %4198 = vmatpush1.bf16.msra.mxu0 %v4134
  %4199 = vmatprep.subr.bf16.mxu0 0
  %4200 = vmatpush1.bf16.msra.mxu0 %v4135
  %4201 = vmatprep.subr.bf16.mxu0 0
  %4202 = vmatpush1.bf16.msra.mxu0 %v4136
  %4203 = vmatprep.subr.bf16.mxu0 0
  %4204 = vmatpush1.bf16.msra.mxu0 %v4137
  %4205 = vmatprep.subr.bf16.mxu0 0
  %4206 = vmatpush1.bf16.msra.mxu0 %v4138
  %4207 = vmatprep.subr.bf16.mxu0 0
  %4208 = vmatpush1.bf16.msra.mxu0 %v4139
  %4209 = vmatprep.subr.bf16.mxu0 0
  %4210 = vmatpush1.bf16.msra.mxu0 %v4140
  %4211 = vmatprep.subr.bf16.mxu0 0
  %4212 = vmatpush1.bf16.msra.mxu0 %v4141
  %4213 = vmatprep.subr.bf16.mxu0 0
  %4214 = vmatpush1.bf16.msra.mxu0 %v4142
  %4215 = vmatprep.mubr.bf16.mxu0 %v289
  %4216 = vmatmul.mubr.bf16.gmra.mrb[0].mxu0 %v287
  %v4217 = vpop.f32.mrb[0].mxu0
  %v4218 = vadd.f32 %v4178, %v4217
  %v4219 = vpop.f32.mrb[0].mxu0
  %v4220 = vpop.f32.mrb[0].mxu0
  %v4221 = vpop.f32.mrb[0].mxu0
  %4222 = vdwg.mxu0
  %s4223 = scalar_lea.vmem %s1, 52
  %v4224 = vld [vmem:[%s4223] sm:$0xf]
  %v4225 = vpack.c.bf16 %v4218, %v4218
  %v4227 = vsel %vm625, %v4224, 0
  %v4230 = vand.u32 %v4225, %v632
  %4232 = vmatprep.subr.bf16.mxu0 0
  %4233 = vmatpush1.bf16.msra.mxu0 %v4230
  %4234 = vmatprep.subr.bf16.mxu0 0
  %4235 = vmatpush1.bf16.msra.mxu0 0
  %4236 = vmatprep.subr.bf16.mxu0 0
  %4237 = vmatpush1.bf16.msra.mxu0 0
  %4238 = vmatprep.subr.bf16.mxu0 0
  %4239 = vmatpush1.bf16.msra.mxu0 0
  %4240 = vmatprep.subr.bf16.mxu0 0
  %4241 = vmatpush1.bf16.msra.mxu0 0
  %4242 = vmatprep.subr.bf16.mxu0 0
  %4243 = vmatpush1.bf16.msra.mxu0 0
  %4244 = vmatprep.subr.bf16.mxu0 0
  %4245 = vmatpush1.bf16.msra.mxu0 0
  %4246 = vmatprep.subr.bf16.mxu0 0
  %4247 = vmatpush1.bf16.msra.mxu0 0
  %4248 = vmatprep.subr.bf16.mxu0 0
  %4249 = vmatpush1.bf16.msra.mxu0 0
  %4250 = vmatprep.subr.bf16.mxu0 0
  %4251 = vmatpush1.bf16.msra.mxu0 0
  %4252 = vmatprep.subr.bf16.mxu0 0
  %4253 = vmatpush1.bf16.msra.mxu0 0
  %4254 = vmatprep.subr.bf16.mxu0 0
  %4255 = vmatpush1.bf16.msra.mxu0 0
  %4256 = vmatprep.subr.bf16.mxu0 0
  %4257 = vmatpush1.bf16.msra.mxu0 0
  %4258 = vmatprep.subr.bf16.mxu0 0
  %4259 = vmatpush1.bf16.msra.mxu0 0
  %4260 = vmatprep.subr.bf16.mxu0 0
  %4261 = vmatpush1.bf16.msra.mxu0 0
  %4262 = vmatprep.subr.bf16.mxu0 0
  %4263 = vmatpush1.bf16.msra.mxu0 0
  %4264 = vmatprep.mubr.bf16.mxu0 0
  %4265 = vmatmul.mubr.bf16.gmra.mrb[0].mxu0 %v4227
  %v4266 = vpop.f32.mrb[0].mxu0
  %v4267 = vadd.f32 0.0, %v4266
  %v4268 = vpop.f32.mrb[0].mxu0
  %v4269 = vpop.f32.mrb[0].mxu0
  %v4270 = vpop.f32.mrb[0].mxu0
  %4271 = vdwg.mxu0
  %v4272 = vadd.f32 %v3978, %v4267
  %vm4273 = vmand %vm3682, %vm723
  %vm4274 = vmand %vm4273, %vm725
  %v4275 = vadd.s32 %v3686, %v722
  %v4276 = vsel %vm4274, %v4275, 4294967295
  %vm4277 = vcmp.eq.s32.totalorder %v32, %v4276
  %vm4278 = vcmp.eq.s32.totalorder %v33, %v4276
  %vm4279 = vcmp.eq.s32.totalorder %v34, %v4276
  %vm4280 = vcmp.eq.s32.totalorder %v35, %v4276
  %vm4281 = vcmp.eq.s32.totalorder %v36, %v4276
  %vm4282 = vcmp.eq.s32.totalorder %v37, %v4276
  %vm4283 = vcmp.eq.s32.totalorder %v38, %v4276
  %vm4284 = vcmp.eq.s32.totalorder %v39, %v4276
  %vm4285 = vcmp.eq.s32.totalorder %v40, %v4276
  %vm4286 = vcmp.eq.s32.totalorder %v41, %v4276
  %vm4287 = vcmp.eq.s32.totalorder %v42, %v4276
  %vm4288 = vcmp.eq.s32.totalorder %v43, %v4276
  %vm4289 = vcmp.eq.s32.totalorder %v44, %v4276
  %vm4290 = vcmp.eq.s32.totalorder %v45, %v4276
  %vm4291 = vcmp.eq.s32.totalorder %v46, %v4276
  %vm4292 = vcmp.eq.s32.totalorder %v47, %v4276
  %vm4293 = vcmp.eq.s32.totalorder %v48, %v4276
  %vm4294 = vcmp.eq.s32.totalorder %v49, %v4276
  %vm4295 = vcmp.eq.s32.totalorder %v50, %v4276
  %vm4296 = vcmp.eq.s32.totalorder %v51, %v4276
  %vm4297 = vcmp.eq.s32.totalorder %v52, %v4276
  %vm4298 = vcmp.eq.s32.totalorder %v53, %v4276
  %vm4299 = vcmp.eq.s32.totalorder %v54, %v4276
  %vm4300 = vcmp.eq.s32.totalorder %v55, %v4276
  %vm4301 = vcmp.eq.s32.totalorder %v56, %v4276
  %vm4302 = vcmp.eq.s32.totalorder %v57, %v4276
  %vm4303 = vcmp.eq.s32.totalorder %v58, %v4276
  %vm4304 = vcmp.eq.s32.totalorder %v59, %v4276
  %vm4305 = vcmp.eq.s32.totalorder %v60, %v4276
  %vm4306 = vcmp.eq.s32.totalorder %v61, %v4276
  %vm4307 = vcmp.eq.s32.totalorder %v62, %v4276
  %vm4308 = vcmp.eq.s32.totalorder %v63, %v4276
  %vm4309 = vcmp.eq.s32.totalorder %v64, %v4276
  %vm4310 = vcmp.eq.s32.totalorder %v65, %v4276
  %vm4311 = vcmp.eq.s32.totalorder %v66, %v4276
  %vm4312 = vcmp.eq.s32.totalorder %v67, %v4276
  %vm4313 = vcmp.eq.s32.totalorder %v68, %v4276
  %vm4314 = vcmp.eq.s32.totalorder %v69, %v4276
  %vm4315 = vcmp.eq.s32.totalorder %v70, %v4276
  %vm4316 = vcmp.eq.s32.totalorder %v71, %v4276
  %vm4317 = vcmp.eq.s32.totalorder %v72, %v4276
  %vm4318 = vcmp.eq.s32.totalorder %v73, %v4276
  %vm4319 = vcmp.eq.s32.totalorder %v74, %v4276
  %vm4320 = vcmp.eq.s32.totalorder %v75, %v4276
  %vm4321 = vcmp.eq.s32.totalorder %v76, %v4276
  %vm4322 = vcmp.eq.s32.totalorder %v77, %v4276
  %vm4323 = vcmp.eq.s32.totalorder %v78, %v4276
  %vm4324 = vcmp.eq.s32.totalorder %v79, %v4276
  %vm4325 = vcmp.eq.s32.totalorder %v80, %v4276
  %vm4326 = vcmp.eq.s32.totalorder %v81, %v4276
  %vm4327 = vcmp.eq.s32.totalorder %v82, %v4276
  %vm4328 = vcmp.eq.s32.totalorder %v83, %v4276
  %vm4329 = vcmp.eq.s32.totalorder %v84, %v4276
  %vm4330 = vcmp.eq.s32.totalorder %v85, %v4276
  %vm4331 = vcmp.eq.s32.totalorder %v86, %v4276
  %vm4332 = vcmp.eq.s32.totalorder %v87, %v4276
  %vm4333 = vcmp.eq.s32.totalorder %v88, %v4276
  %vm4334 = vcmp.eq.s32.totalorder %v89, %v4276
  %vm4335 = vcmp.eq.s32.totalorder %v90, %v4276
  %vm4336 = vcmp.eq.s32.totalorder %v91, %v4276
  %vm4337 = vcmp.eq.s32.totalorder %v92, %v4276
  %vm4338 = vcmp.eq.s32.totalorder %v93, %v4276
  %vm4339 = vcmp.eq.s32.totalorder %v94, %v4276
  %vm4340 = vcmp.eq.s32.totalorder %v95, %v4276
  %v4341 = vsel %vm4277, 1.0, 0.0
  %v4342 = vsel %vm4278, 1.0, 0.0
  %v4343 = vsel %vm4279, 1.0, 0.0
  %v4344 = vsel %vm4280, 1.0, 0.0
  %v4345 = vsel %vm4281, 1.0, 0.0
  %v4346 = vsel %vm4282, 1.0, 0.0
  %v4347 = vsel %vm4283, 1.0, 0.0
  %v4348 = vsel %vm4284, 1.0, 0.0
  %v4349 = vsel %vm4285, 1.0, 0.0
  %v4350 = vsel %vm4286, 1.0, 0.0
  %v4351 = vsel %vm4287, 1.0, 0.0
  %v4352 = vsel %vm4288, 1.0, 0.0
  %v4353 = vsel %vm4289, 1.0, 0.0
  %v4354 = vsel %vm4290, 1.0, 0.0
  %v4355 = vsel %vm4291, 1.0, 0.0
  %v4356 = vsel %vm4292, 1.0, 0.0
  %v4357 = vsel %vm4293, 1.0, 0.0
  %v4358 = vsel %vm4294, 1.0, 0.0
  %v4359 = vsel %vm4295, 1.0, 0.0
  %v4360 = vsel %vm4296, 1.0, 0.0
  %v4361 = vsel %vm4297, 1.0, 0.0
  %v4362 = vsel %vm4298, 1.0, 0.0
  %v4363 = vsel %vm4299, 1.0, 0.0
  %v4364 = vsel %vm4300, 1.0, 0.0
  %v4365 = vsel %vm4301, 1.0, 0.0
  %v4366 = vsel %vm4302, 1.0, 0.0
  %v4367 = vsel %vm4303, 1.0, 0.0
  %v4368 = vsel %vm4304, 1.0, 0.0
  %v4369 = vsel %vm4305, 1.0, 0.0
  %v4370 = vsel %vm4306, 1.0, 0.0
  %v4371 = vsel %vm4307, 1.0, 0.0
  %v4372 = vsel %vm4308, 1.0, 0.0
  %v4373 = vsel %vm4309, 1.0, 0.0
  %v4374 = vsel %vm4310, 1.0, 0.0
  %v4375 = vsel %vm4311, 1.0, 0.0
  %v4376 = vsel %vm4312, 1.0, 0.0
  %v4377 = vsel %vm4313, 1.0, 0.0
  %v4378 = vsel %vm4314, 1.0, 0.0
  %v4379 = vsel %vm4315, 1.0, 0.0
  %v4380 = vsel %vm4316, 1.0, 0.0
  %v4381 = vsel %vm4317, 1.0, 0.0
  %v4382 = vsel %vm4318, 1.0, 0.0
  %v4383 = vsel %vm4319, 1.0, 0.0
  %v4384 = vsel %vm4320, 1.0, 0.0
  %v4385 = vsel %vm4321, 1.0, 0.0
  %v4386 = vsel %vm4322, 1.0, 0.0
  %v4387 = vsel %vm4323, 1.0, 0.0
  %v4388 = vsel %vm4324, 1.0, 0.0
  %v4389 = vsel %vm4325, 1.0, 0.0
  %v4390 = vsel %vm4326, 1.0, 0.0
  %v4391 = vsel %vm4327, 1.0, 0.0
  %v4392 = vsel %vm4328, 1.0, 0.0
  %v4393 = vsel %vm4329, 1.0, 0.0
  %v4394 = vsel %vm4330, 1.0, 0.0
  %v4395 = vsel %vm4331, 1.0, 0.0
  %v4396 = vsel %vm4332, 1.0, 0.0
  %v4397 = vsel %vm4333, 1.0, 0.0
  %v4398 = vsel %vm4334, 1.0, 0.0
  %v4399 = vsel %vm4335, 1.0, 0.0
  %v4400 = vsel %vm4336, 1.0, 0.0
  %v4401 = vsel %vm4337, 1.0, 0.0
  %v4402 = vsel %vm4338, 1.0, 0.0
  %v4403 = vsel %vm4339, 1.0, 0.0
  %v4404 = vsel %vm4340, 1.0, 0.0
  %v4405 = vpack.c.bf16 %v4342, %v4341
  %v4406 = vpack.c.bf16 %v4344, %v4343
  %v4407 = vpack.c.bf16 %v4346, %v4345
  %v4408 = vpack.c.bf16 %v4348, %v4347
  %v4409 = vpack.c.bf16 %v4350, %v4349
  %v4410 = vpack.c.bf16 %v4352, %v4351
  %v4411 = vpack.c.bf16 %v4354, %v4353
  %v4412 = vpack.c.bf16 %v4356, %v4355
  %v4413 = vpack.c.bf16 %v4358, %v4357
  %v4414 = vpack.c.bf16 %v4360, %v4359
  %v4415 = vpack.c.bf16 %v4362, %v4361
  %v4416 = vpack.c.bf16 %v4364, %v4363
  %v4417 = vpack.c.bf16 %v4366, %v4365
  %v4418 = vpack.c.bf16 %v4368, %v4367
  %v4419 = vpack.c.bf16 %v4370, %v4369
  %v4420 = vpack.c.bf16 %v4372, %v4371
  %v4421 = vpack.c.bf16 %v4374, %v4373
  %v4422 = vpack.c.bf16 %v4376, %v4375
  %v4423 = vpack.c.bf16 %v4378, %v4377
  %v4424 = vpack.c.bf16 %v4380, %v4379
  %v4425 = vpack.c.bf16 %v4382, %v4381
  %v4426 = vpack.c.bf16 %v4384, %v4383
  %v4427 = vpack.c.bf16 %v4386, %v4385
  %v4428 = vpack.c.bf16 %v4388, %v4387
  %v4429 = vpack.c.bf16 %v4390, %v4389
  %v4430 = vpack.c.bf16 %v4392, %v4391
  %v4431 = vpack.c.bf16 %v4394, %v4393
  %v4432 = vpack.c.bf16 %v4396, %v4395
  %v4433 = vpack.c.bf16 %v4398, %v4397
  %v4434 = vpack.c.bf16 %v4400, %v4399
  %v4435 = vpack.c.bf16 %v4402, %v4401
  %v4436 = vpack.c.bf16 %v4404, %v4403
  %4437 = vmatprep.subr.bf16.mxu0 0
  %4438 = vmatpush1.bf16.msra.mxu0 %v4405
  %4439 = vmatprep.subr.bf16.mxu0 0
  %4440 = vmatpush1.bf16.msra.mxu0 %v4406
  %4441 = vmatprep.subr.bf16.mxu0 0
  %4442 = vmatpush1.bf16.msra.mxu0 %v4407
  %4443 = vmatprep.subr.bf16.mxu0 0
  %4444 = vmatpush1.bf16.msra.mxu0 %v4408
  %4445 = vmatprep.subr.bf16.mxu0 0
  %4446 = vmatpush1.bf16.msra.mxu0 %v4409
  %4447 = vmatprep.subr.bf16.mxu0 0
  %4448 = vmatpush1.bf16.msra.mxu0 %v4410
  %4449 = vmatprep.subr.bf16.mxu0 0
  %4450 = vmatpush1.bf16.msra.mxu0 %v4411
  %4451 = vmatprep.subr.bf16.mxu0 0
  %4452 = vmatpush1.bf16.msra.mxu0 %v4412
  %4453 = vmatprep.subr.bf16.mxu0 0
  %4454 = vmatpush1.bf16.msra.mxu0 %v4413
  %4455 = vmatprep.subr.bf16.mxu0 0
  %4456 = vmatpush1.bf16.msra.mxu0 %v4414
  %4457 = vmatprep.subr.bf16.mxu0 0
  %4458 = vmatpush1.bf16.msra.mxu0 %v4415
  %4459 = vmatprep.subr.bf16.mxu0 0
  %4460 = vmatpush1.bf16.msra.mxu0 %v4416
  %4461 = vmatprep.subr.bf16.mxu0 0
  %4462 = vmatpush1.bf16.msra.mxu0 %v4417
  %4463 = vmatprep.subr.bf16.mxu0 0
  %4464 = vmatpush1.bf16.msra.mxu0 %v4418
  %4465 = vmatprep.subr.bf16.mxu0 0
  %4466 = vmatpush1.bf16.msra.mxu0 %v4419
  %4467 = vmatprep.subr.bf16.mxu0 0
  %4468 = vmatpush1.bf16.msra.mxu0 %v4420
  %4469 = vmatprep.mubr.bf16.mxu0 %v288
  %4470 = vmatmul.mubr.bf16.gmra.mrb[0].mxu0 %v280
  %v4471 = vpop.f32.mrb[0].mxu0
  %v4472 = vadd.f32 0.0, %v4471
  %v4473 = vpop.f32.mrb[0].mxu0
  %v4474 = vpop.f32.mrb[0].mxu0
  %v4475 = vpop.f32.mrb[0].mxu0
  %4476 = vdwg.mxu0
  %4477 = vmatprep.subr.bf16.mxu0 0
  %4478 = vmatpush1.bf16.msra.mxu0 %v4421
  %4479 = vmatprep.subr.bf16.mxu0 0
  %4480 = vmatpush1.bf16.msra.mxu0 %v4422
  %4481 = vmatprep.subr.bf16.mxu0 0
  %4482 = vmatpush1.bf16.msra.mxu0 %v4423
  %4483 = vmatprep.subr.bf16.mxu0 0
  %4484 = vmatpush1.bf16.msra.mxu0 %v4424
  %4485 = vmatprep.subr.bf16.mxu0 0
  %4486 = vmatpush1.bf16.msra.mxu0 %v4425
  %4487 = vmatprep.subr.bf16.mxu0 0
  %4488 = vmatpush1.bf16.msra.mxu0 %v4426
  %4489 = vmatprep.subr.bf16.mxu0 0
  %4490 = vmatpush1.bf16.msra.mxu0 %v4427
  %4491 = vmatprep.subr.bf16.mxu0 0
  %4492 = vmatpush1.bf16.msra.mxu0 %v4428
  %4493 = vmatprep.subr.bf16.mxu0 0
  %4494 = vmatpush1.bf16.msra.mxu0 %v4429
  %4495 = vmatprep.subr.bf16.mxu0 0
  %4496 = vmatpush1.bf16.msra.mxu0 %v4430
  %4497 = vmatprep.subr.bf16.mxu0 0
  %4498 = vmatpush1.bf16.msra.mxu0 %v4431
  %4499 = vmatprep.subr.bf16.mxu0 0
  %4500 = vmatpush1.bf16.msra.mxu0 %v4432
  %4501 = vmatprep.subr.bf16.mxu0 0
  %4502 = vmatpush1.bf16.msra.mxu0 %v4433
  %4503 = vmatprep.subr.bf16.mxu0 0
  %4504 = vmatpush1.bf16.msra.mxu0 %v4434
  %4505 = vmatprep.subr.bf16.mxu0 0
  %4506 = vmatpush1.bf16.msra.mxu0 %v4435
  %4507 = vmatprep.subr.bf16.mxu0 0
  %4508 = vmatpush1.bf16.msra.mxu0 %v4436
  %4509 = vmatprep.mubr.bf16.mxu0 %v289
  %4510 = vmatmul.mubr.bf16.gmra.mrb[0].mxu0 %v287
  %v4511 = vpop.f32.mrb[0].mxu0
  %v4512 = vadd.f32 %v4472, %v4511
  %v4513 = vpop.f32.mrb[0].mxu0
  %v4514 = vpop.f32.mrb[0].mxu0
  %v4515 = vpop.f32.mrb[0].mxu0
  %4516 = vdwg.mxu0
  %s4517 = scalar_lea.vmem %s1, 56
  %v4518 = vld [vmem:[%s4517] sm:$0xf]
  %v4519 = vpack.c.bf16 %v4512, %v4512
  %v4521 = vsel %vm625, %v4518, 0
  %v4524 = vand.u32 %v4519, %v632
  %4526 = vmatprep.subr.bf16.mxu0 0
  %4527 = vmatpush1.bf16.msra.mxu0 %v4524
  %4528 = vmatprep.subr.bf16.mxu0 0
  %4529 = vmatpush1.bf16.msra.mxu0 0
  %4530 = vmatprep.subr.bf16.mxu0 0
  %4531 = vmatpush1.bf16.msra.mxu0 0
  %4532 = vmatprep.subr.bf16.mxu0 0
  %4533 = vmatpush1.bf16.msra.mxu0 0
  %4534 = vmatprep.subr.bf16.mxu0 0
  %4535 = vmatpush1.bf16.msra.mxu0 0
  %4536 = vmatprep.subr.bf16.mxu0 0
  %4537 = vmatpush1.bf16.msra.mxu0 0
  %4538 = vmatprep.subr.bf16.mxu0 0
  %4539 = vmatpush1.bf16.msra.mxu0 0
  %4540 = vmatprep.subr.bf16.mxu0 0
  %4541 = vmatpush1.bf16.msra.mxu0 0
  %4542 = vmatprep.subr.bf16.mxu0 0
  %4543 = vmatpush1.bf16.msra.mxu0 0
  %4544 = vmatprep.subr.bf16.mxu0 0
  %4545 = vmatpush1.bf16.msra.mxu0 0
  %4546 = vmatprep.subr.bf16.mxu0 0
  %4547 = vmatpush1.bf16.msra.mxu0 0
  %4548 = vmatprep.subr.bf16.mxu0 0
  %4549 = vmatpush1.bf16.msra.mxu0 0
  %4550 = vmatprep.subr.bf16.mxu0 0
  %4551 = vmatpush1.bf16.msra.mxu0 0
  %4552 = vmatprep.subr.bf16.mxu0 0
  %4553 = vmatpush1.bf16.msra.mxu0 0
  %4554 = vmatprep.subr.bf16.mxu0 0
  %4555 = vmatpush1.bf16.msra.mxu0 0
  %4556 = vmatprep.subr.bf16.mxu0 0
  %4557 = vmatpush1.bf16.msra.mxu0 0
  %4558 = vmatprep.mubr.bf16.mxu0 0
  %4559 = vmatmul.mubr.bf16.gmra.mrb[0].mxu0 %v4521
  %v4560 = vpop.f32.mrb[0].mxu0
  %v4561 = vadd.f32 0.0, %v4560
  %v4562 = vpop.f32.mrb[0].mxu0
  %v4563 = vpop.f32.mrb[0].mxu0
  %v4564 = vpop.f32.mrb[0].mxu0
  %4565 = vdwg.mxu0
  %v4566 = vadd.f32 %v4272, %v4561
  %vm4567 = vmand %vm3682, %vm1020
  %vm4568 = vmand %vm4567, %vm1022
  %v4569 = vadd.s32 %v3686, %v1019
  %v4570 = vsel %vm4568, %v4569, 4294967295
  %vm4571 = vcmp.eq.s32.totalorder %v32, %v4570
  %vm4572 = vcmp.eq.s32.totalorder %v33, %v4570
  %vm4573 = vcmp.eq.s32.totalorder %v34, %v4570
  %vm4574 = vcmp.eq.s32.totalorder %v35, %v4570
  %vm4575 = vcmp.eq.s32.totalorder %v36, %v4570
  %vm4576 = vcmp.eq.s32.totalorder %v37, %v4570
  %vm4577 = vcmp.eq.s32.totalorder %v38, %v4570
  %vm4578 = vcmp.eq.s32.totalorder %v39, %v4570
  %vm4579 = vcmp.eq.s32.totalorder %v40, %v4570
  %vm4580 = vcmp.eq.s32.totalorder %v41, %v4570
  %vm4581 = vcmp.eq.s32.totalorder %v42, %v4570
  %vm4582 = vcmp.eq.s32.totalorder %v43, %v4570
  %vm4583 = vcmp.eq.s32.totalorder %v44, %v4570
  %vm4584 = vcmp.eq.s32.totalorder %v45, %v4570
  %vm4585 = vcmp.eq.s32.totalorder %v46, %v4570
  %vm4586 = vcmp.eq.s32.totalorder %v47, %v4570
  %vm4587 = vcmp.eq.s32.totalorder %v48, %v4570
  %vm4588 = vcmp.eq.s32.totalorder %v49, %v4570
  %vm4589 = vcmp.eq.s32.totalorder %v50, %v4570
  %vm4590 = vcmp.eq.s32.totalorder %v51, %v4570
  %vm4591 = vcmp.eq.s32.totalorder %v52, %v4570
  %vm4592 = vcmp.eq.s32.totalorder %v53, %v4570
  %vm4593 = vcmp.eq.s32.totalorder %v54, %v4570
  %vm4594 = vcmp.eq.s32.totalorder %v55, %v4570
  %vm4595 = vcmp.eq.s32.totalorder %v56, %v4570
  %vm4596 = vcmp.eq.s32.totalorder %v57, %v4570
  %vm4597 = vcmp.eq.s32.totalorder %v58, %v4570
  %vm4598 = vcmp.eq.s32.totalorder %v59, %v4570
  %vm4599 = vcmp.eq.s32.totalorder %v60, %v4570
  %vm4600 = vcmp.eq.s32.totalorder %v61, %v4570
  %vm4601 = vcmp.eq.s32.totalorder %v62, %v4570
  %vm4602 = vcmp.eq.s32.totalorder %v63, %v4570
  %vm4603 = vcmp.eq.s32.totalorder %v64, %v4570
  %vm4604 = vcmp.eq.s32.totalorder %v65, %v4570
  %vm4605 = vcmp.eq.s32.totalorder %v66, %v4570
  %vm4606 = vcmp.eq.s32.totalorder %v67, %v4570
  %vm4607 = vcmp.eq.s32.totalorder %v68, %v4570
  %vm4608 = vcmp.eq.s32.totalorder %v69, %v4570
  %vm4609 = vcmp.eq.s32.totalorder %v70, %v4570
  %vm4610 = vcmp.eq.s32.totalorder %v71, %v4570
  %vm4611 = vcmp.eq.s32.totalorder %v72, %v4570
  %vm4612 = vcmp.eq.s32.totalorder %v73, %v4570
  %vm4613 = vcmp.eq.s32.totalorder %v74, %v4570
  %vm4614 = vcmp.eq.s32.totalorder %v75, %v4570
  %vm4615 = vcmp.eq.s32.totalorder %v76, %v4570
  %vm4616 = vcmp.eq.s32.totalorder %v77, %v4570
  %vm4617 = vcmp.eq.s32.totalorder %v78, %v4570
  %vm4618 = vcmp.eq.s32.totalorder %v79, %v4570
  %vm4619 = vcmp.eq.s32.totalorder %v80, %v4570
  %vm4620 = vcmp.eq.s32.totalorder %v81, %v4570
  %vm4621 = vcmp.eq.s32.totalorder %v82, %v4570
  %vm4622 = vcmp.eq.s32.totalorder %v83, %v4570
  %vm4623 = vcmp.eq.s32.totalorder %v84, %v4570
  %vm4624 = vcmp.eq.s32.totalorder %v85, %v4570
  %vm4625 = vcmp.eq.s32.totalorder %v86, %v4570
  %vm4626 = vcmp.eq.s32.totalorder %v87, %v4570
  %vm4627 = vcmp.eq.s32.totalorder %v88, %v4570
  %vm4628 = vcmp.eq.s32.totalorder %v89, %v4570
  %vm4629 = vcmp.eq.s32.totalorder %v90, %v4570
  %vm4630 = vcmp.eq.s32.totalorder %v91, %v4570
  %vm4631 = vcmp.eq.s32.totalorder %v92, %v4570
  %vm4632 = vcmp.eq.s32.totalorder %v93, %v4570
  %vm4633 = vcmp.eq.s32.totalorder %v94, %v4570
  %vm4634 = vcmp.eq.s32.totalorder %v95, %v4570
  %v4635 = vsel %vm4571, 1.0, 0.0
  %v4636 = vsel %vm4572, 1.0, 0.0
  %v4637 = vsel %vm4573, 1.0, 0.0
  %v4638 = vsel %vm4574, 1.0, 0.0
  %v4639 = vsel %vm4575, 1.0, 0.0
  %v4640 = vsel %vm4576, 1.0, 0.0
  %v4641 = vsel %vm4577, 1.0, 0.0
  %v4642 = vsel %vm4578, 1.0, 0.0
  %v4643 = vsel %vm4579, 1.0, 0.0
  %v4644 = vsel %vm4580, 1.0, 0.0
  %v4645 = vsel %vm4581, 1.0, 0.0
  %v4646 = vsel %vm4582, 1.0, 0.0
  %v4647 = vsel %vm4583, 1.0, 0.0
  %v4648 = vsel %vm4584, 1.0, 0.0
  %v4649 = vsel %vm4585, 1.0, 0.0
  %v4650 = vsel %vm4586, 1.0, 0.0
  %v4651 = vsel %vm4587, 1.0, 0.0
  %v4652 = vsel %vm4588, 1.0, 0.0
  %v4653 = vsel %vm4589, 1.0, 0.0
  %v4654 = vsel %vm4590, 1.0, 0.0
  %v4655 = vsel %vm4591, 1.0, 0.0
  %v4656 = vsel %vm4592, 1.0, 0.0
  %v4657 = vsel %vm4593, 1.0, 0.0
  %v4658 = vsel %vm4594, 1.0, 0.0
  %v4659 = vsel %vm4595, 1.0, 0.0
  %v4660 = vsel %vm4596, 1.0, 0.0
  %v4661 = vsel %vm4597, 1.0, 0.0
  %v4662 = vsel %vm4598, 1.0, 0.0
  %v4663 = vsel %vm4599, 1.0, 0.0
  %v4664 = vsel %vm4600, 1.0, 0.0
  %v4665 = vsel %vm4601, 1.0, 0.0
  %v4666 = vsel %vm4602, 1.0, 0.0
  %v4667 = vsel %vm4603, 1.0, 0.0
  %v4668 = vsel %vm4604, 1.0, 0.0
  %v4669 = vsel %vm4605, 1.0, 0.0
  %v4670 = vsel %vm4606, 1.0, 0.0
  %v4671 = vsel %vm4607, 1.0, 0.0
  %v4672 = vsel %vm4608, 1.0, 0.0
  %v4673 = vsel %vm4609, 1.0, 0.0
  %v4674 = vsel %vm4610, 1.0, 0.0
  %v4675 = vsel %vm4611, 1.0, 0.0
  %v4676 = vsel %vm4612, 1.0, 0.0
  %v4677 = vsel %vm4613, 1.0, 0.0
  %v4678 = vsel %vm4614, 1.0, 0.0
  %v4679 = vsel %vm4615, 1.0, 0.0
  %v4680 = vsel %vm4616, 1.0, 0.0
  %v4681 = vsel %vm4617, 1.0, 0.0
  %v4682 = vsel %vm4618, 1.0, 0.0
  %v4683 = vsel %vm4619, 1.0, 0.0
  %v4684 = vsel %vm4620, 1.0, 0.0
  %v4685 = vsel %vm4621, 1.0, 0.0
  %v4686 = vsel %vm4622, 1.0, 0.0
  %v4687 = vsel %vm4623, 1.0, 0.0
  %v4688 = vsel %vm4624, 1.0, 0.0
  %v4689 = vsel %vm4625, 1.0, 0.0
  %v4690 = vsel %vm4626, 1.0, 0.0
  %v4691 = vsel %vm4627, 1.0, 0.0
  %v4692 = vsel %vm4628, 1.0, 0.0
  %v4693 = vsel %vm4629, 1.0, 0.0
  %v4694 = vsel %vm4630, 1.0, 0.0
  %v4695 = vsel %vm4631, 1.0, 0.0
  %v4696 = vsel %vm4632, 1.0, 0.0
  %v4697 = vsel %vm4633, 1.0, 0.0
  %v4698 = vsel %vm4634, 1.0, 0.0
  %v4699 = vpack.c.bf16 %v4636, %v4635
  %v4700 = vpack.c.bf16 %v4638, %v4637
  %v4701 = vpack.c.bf16 %v4640, %v4639
  %v4702 = vpack.c.bf16 %v4642, %v4641
  %v4703 = vpack.c.bf16 %v4644, %v4643
  %v4704 = vpack.c.bf16 %v4646, %v4645
  %v4705 = vpack.c.bf16 %v4648, %v4647
  %v4706 = vpack.c.bf16 %v4650, %v4649
  %v4707 = vpack.c.bf16 %v4652, %v4651
  %v4708 = vpack.c.bf16 %v4654, %v4653
  %v4709 = vpack.c.bf16 %v4656, %v4655
  %v4710 = vpack.c.bf16 %v4658, %v4657
  %v4711 = vpack.c.bf16 %v4660, %v4659
  %v4712 = vpack.c.bf16 %v4662, %v4661
  %v4713 = vpack.c.bf16 %v4664, %v4663
  %v4714 = vpack.c.bf16 %v4666, %v4665
  %v4715 = vpack.c.bf16 %v4668, %v4667
  %v4716 = vpack.c.bf16 %v4670, %v4669
  %v4717 = vpack.c.bf16 %v4672, %v4671
  %v4718 = vpack.c.bf16 %v4674, %v4673
  %v4719 = vpack.c.bf16 %v4676, %v4675
  %v4720 = vpack.c.bf16 %v4678, %v4677
  %v4721 = vpack.c.bf16 %v4680, %v4679
  %v4722 = vpack.c.bf16 %v4682, %v4681
  %v4723 = vpack.c.bf16 %v4684, %v4683
  %v4724 = vpack.c.bf16 %v4686, %v4685
  %v4725 = vpack.c.bf16 %v4688, %v4687
  %v4726 = vpack.c.bf16 %v4690, %v4689
  %v4727 = vpack.c.bf16 %v4692, %v4691
  %v4728 = vpack.c.bf16 %v4694, %v4693
  %v4729 = vpack.c.bf16 %v4696, %v4695
  %v4730 = vpack.c.bf16 %v4698, %v4697
  %4731 = vmatprep.subr.bf16.mxu0 0
  %4732 = vmatpush1.bf16.msra.mxu0 %v4699
  %4733 = vmatprep.subr.bf16.mxu0 0
  %4734 = vmatpush1.bf16.msra.mxu0 %v4700
  %4735 = vmatprep.subr.bf16.mxu0 0
  %4736 = vmatpush1.bf16.msra.mxu0 %v4701
  %4737 = vmatprep.subr.bf16.mxu0 0
  %4738 = vmatpush1.bf16.msra.mxu0 %v4702
  %4739 = vmatprep.subr.bf16.mxu0 0
  %4740 = vmatpush1.bf16.msra.mxu0 %v4703
  %4741 = vmatprep.subr.bf16.mxu0 0
  %4742 = vmatpush1.bf16.msra.mxu0 %v4704
  %4743 = vmatprep.subr.bf16.mxu0 0
  %4744 = vmatpush1.bf16.msra.mxu0 %v4705
  %4745 = vmatprep.subr.bf16.mxu0 0
  %4746 = vmatpush1.bf16.msra.mxu0 %v4706
  %4747 = vmatprep.subr.bf16.mxu0 0
  %4748 = vmatpush1.bf16.msra.mxu0 %v4707
  %4749 = vmatprep.subr.bf16.mxu0 0
  %4750 = vmatpush1.bf16.msra.mxu0 %v4708
  %4751 = vmatprep.subr.bf16.mxu0 0
  %4752 = vmatpush1.bf16.msra.mxu0 %v4709
  %4753 = vmatprep.subr.bf16.mxu0 0
  %4754 = vmatpush1.bf16.msra.mxu0 %v4710
  %4755 = vmatprep.subr.bf16.mxu0 0
  %4756 = vmatpush1.bf16.msra.mxu0 %v4711
  %4757 = vmatprep.subr.bf16.mxu0 0
  %4758 = vmatpush1.bf16.msra.mxu0 %v4712
  %4759 = vmatprep.subr.bf16.mxu0 0
  %4760 = vmatpush1.bf16.msra.mxu0 %v4713
  %4761 = vmatprep.subr.bf16.mxu0 0
  %4762 = vmatpush1.bf16.msra.mxu0 %v4714
  %4763 = vmatprep.mubr.bf16.mxu0 %v288
  %4764 = vmatmul.mubr.bf16.gmra.mrb[0].mxu0 %v280
  %v4765 = vpop.f32.mrb[0].mxu0
  %v4766 = vadd.f32 0.0, %v4765
  %v4767 = vpop.f32.mrb[0].mxu0
  %v4768 = vpop.f32.mrb[0].mxu0
  %v4769 = vpop.f32.mrb[0].mxu0
  %4770 = vdwg.mxu0
  %4771 = vmatprep.subr.bf16.mxu0 0
  %4772 = vmatpush1.bf16.msra.mxu0 %v4715
  %4773 = vmatprep.subr.bf16.mxu0 0
  %4774 = vmatpush1.bf16.msra.mxu0 %v4716
  %4775 = vmatprep.subr.bf16.mxu0 0
  %4776 = vmatpush1.bf16.msra.mxu0 %v4717
  %4777 = vmatprep.subr.bf16.mxu0 0
  %4778 = vmatpush1.bf16.msra.mxu0 %v4718
  %4779 = vmatprep.subr.bf16.mxu0 0
  %4780 = vmatpush1.bf16.msra.mxu0 %v4719
  %4781 = vmatprep.subr.bf16.mxu0 0
  %4782 = vmatpush1.bf16.msra.mxu0 %v4720
  %4783 = vmatprep.subr.bf16.mxu0 0
  %4784 = vmatpush1.bf16.msra.mxu0 %v4721
  %4785 = vmatprep.subr.bf16.mxu0 0
  %4786 = vmatpush1.bf16.msra.mxu0 %v4722
  %4787 = vmatprep.subr.bf16.mxu0 0
  %4788 = vmatpush1.bf16.msra.mxu0 %v4723
  %4789 = vmatprep.subr.bf16.mxu0 0
  %4790 = vmatpush1.bf16.msra.mxu0 %v4724
  %4791 = vmatprep.subr.bf16.mxu0 0
  %4792 = vmatpush1.bf16.msra.mxu0 %v4725
  %4793 = vmatprep.subr.bf16.mxu0 0
  %4794 = vmatpush1.bf16.msra.mxu0 %v4726
  %4795 = vmatprep.subr.bf16.mxu0 0
  %4796 = vmatpush1.bf16.msra.mxu0 %v4727
  %4797 = vmatprep.subr.bf16.mxu0 0
  %4798 = vmatpush1.bf16.msra.mxu0 %v4728
  %4799 = vmatprep.subr.bf16.mxu0 0
  %4800 = vmatpush1.bf16.msra.mxu0 %v4729
  %4801 = vmatprep.subr.bf16.mxu0 0
  %4802 = vmatpush1.bf16.msra.mxu0 %v4730
  %4803 = vmatprep.mubr.bf16.mxu0 %v289
  %4804 = vmatmul.mubr.bf16.gmra.mrb[0].mxu0 %v287
  %v4805 = vpop.f32.mrb[0].mxu0
  %v4806 = vadd.f32 %v4766, %v4805
  %v4807 = vpop.f32.mrb[0].mxu0
  %v4808 = vpop.f32.mrb[0].mxu0
  %v4809 = vpop.f32.mrb[0].mxu0
  %4810 = vdwg.mxu0
  %s4811 = scalar_lea.vmem %s1, 60
  %v4812 = vld [vmem:[%s4811] sm:$0xf]
  %v4813 = vpack.c.bf16 %v4806, %v4806
  %v4815 = vsel %vm625, %v4812, 0
  %v4818 = vand.u32 %v4813, %v632
  %4820 = vmatprep.subr.bf16.mxu0 0
  %4821 = vmatpush1.bf16.msra.mxu0 %v4818
  %4822 = vmatprep.subr.bf16.mxu0 0
  %4823 = vmatpush1.bf16.msra.mxu0 0
  %4824 = vmatprep.subr.bf16.mxu0 0
  %4825 = vmatpush1.bf16.msra.mxu0 0
  %4826 = vmatprep.subr.bf16.mxu0 0
  %4827 = vmatpush1.bf16.msra.mxu0 0
  %4828 = vmatprep.subr.bf16.mxu0 0
  %4829 = vmatpush1.bf16.msra.mxu0 0
  %4830 = vmatprep.subr.bf16.mxu0 0
  %4831 = vmatpush1.bf16.msra.mxu0 0
  %4832 = vmatprep.subr.bf16.mxu0 0
  %4833 = vmatpush1.bf16.msra.mxu0 0
  %4834 = vmatprep.subr.bf16.mxu0 0
  %4835 = vmatpush1.bf16.msra.mxu0 0
  %4836 = vmatprep.subr.bf16.mxu0 0
  %4837 = vmatpush1.bf16.msra.mxu0 0
  %4838 = vmatprep.subr.bf16.mxu0 0
  %4839 = vmatpush1.bf16.msra.mxu0 0
  %4840 = vmatprep.subr.bf16.mxu0 0
  %4841 = vmatpush1.bf16.msra.mxu0 0
  %4842 = vmatprep.subr.bf16.mxu0 0
  %4843 = vmatpush1.bf16.msra.mxu0 0
  %4844 = vmatprep.subr.bf16.mxu0 0
  %4845 = vmatpush1.bf16.msra.mxu0 0
  %4846 = vmatprep.subr.bf16.mxu0 0
  %4847 = vmatpush1.bf16.msra.mxu0 0
  %4848 = vmatprep.subr.bf16.mxu0 0
  %4849 = vmatpush1.bf16.msra.mxu0 0
  %4850 = vmatprep.subr.bf16.mxu0 0
  %4851 = vmatpush1.bf16.msra.mxu0 0
  %4852 = vmatprep.mubr.bf16.mxu0 0
  %4853 = vmatmul.mubr.bf16.gmra.mrb[0].mxu0 %v4815
  %v4854 = vpop.f32.mrb[0].mxu0
  %v4855 = vadd.f32 0.0, %v4854
  %v4856 = vpop.f32.mrb[0].mxu0
  %v4857 = vpop.f32.mrb[0].mxu0
  %v4858 = vpop.f32.mrb[0].mxu0
  %4859 = vdwg.mxu0
  %v4860 = vadd.f32 %v4566, %v4855
  %vm4861 = vcmp.gt.f32.partialorder %v4860, 0.0
  %v4862 = vmul.f32 %v4860, 0.2
  %v4863 = vsel %vm4861, %v4860, %v4862
  %v4864 = vpack.c.bf16 %v4863, %v4863
  %v4865 = vand.u32 %v26, 3
  %v4866 = vshra.s32 %v26, 2
  %v4867 = vand.u32 %v4866, 3
  %v4868 = vshra.s32 %v26, 4
  %v4869 = vmul.u32 %v4867, 2
  %v4870 = vadd.s32 %v4869, 4294967295
  %v4871 = vmul.u32 %v4865, 2
  %v4872 = vadd.s32 %v4871, 4294967295
  %vm4873 = vcmp.ge.s32.totalorder %v4870, 0
  %vm4874 = vcmp.lt.s32.totalorder %v4870, 8
  %vm4875 = vmand %vm4873, %vm4874
  %vm4876 = vcmp.ge.s32.totalorder %v4872, 0
  %vm4877 = vmand %vm4875, %vm4876
  %vm4878 = vcmp.lt.s32.totalorder %v4872, 8
  %vm4879 = vmand %vm4877, %vm4878
  %v4880 = vmul.u32 %v4868, 64
  %v4881 = vmul.u32 %v4870, 8
  %v4882 = vadd.s32 %v4880, %v4881
  %v4883 = vadd.s32 %v4882, %v4872
  %v4884 = vsel %vm4879, %v4883, 4294967295
  %vm4885 = vcmp.eq.s32.totalorder %v32, %v4884
  %vm4886 = vcmp.eq.s32.totalorder %v33, %v4884
  %vm4887 = vcmp.eq.s32.totalorder %v34, %v4884
  %vm4888 = vcmp.eq.s32.totalorder %v35, %v4884
  %vm4889 = vcmp.eq.s32.totalorder %v36, %v4884
  %vm4890 = vcmp.eq.s32.totalorder %v37, %v4884
  %vm4891 = vcmp.eq.s32.totalorder %v38, %v4884
  %vm4892 = vcmp.eq.s32.totalorder %v39, %v4884
  %vm4893 = vcmp.eq.s32.totalorder %v40, %v4884
  %vm4894 = vcmp.eq.s32.totalorder %v41, %v4884
  %vm4895 = vcmp.eq.s32.totalorder %v42, %v4884
  %vm4896 = vcmp.eq.s32.totalorder %v43, %v4884
  %vm4897 = vcmp.eq.s32.totalorder %v44, %v4884
  %vm4898 = vcmp.eq.s32.totalorder %v45, %v4884
  %vm4899 = vcmp.eq.s32.totalorder %v46, %v4884
  %vm4900 = vcmp.eq.s32.totalorder %v47, %v4884
  %v4901 = vsel %vm4885, 1.0, 0.0
  %v4902 = vsel %vm4886, 1.0, 0.0
  %v4903 = vsel %vm4887, 1.0, 0.0
  %v4904 = vsel %vm4888, 1.0, 0.0
  %v4905 = vsel %vm4889, 1.0, 0.0
  %v4906 = vsel %vm4890, 1.0, 0.0
  %v4907 = vsel %vm4891, 1.0, 0.0
  %v4908 = vsel %vm4892, 1.0, 0.0
  %v4909 = vsel %vm4893, 1.0, 0.0
  %v4910 = vsel %vm4894, 1.0, 0.0
  %v4911 = vsel %vm4895, 1.0, 0.0
  %v4912 = vsel %vm4896, 1.0, 0.0
  %v4913 = vsel %vm4897, 1.0, 0.0
  %v4914 = vsel %vm4898, 1.0, 0.0
  %v4915 = vsel %vm4899, 1.0, 0.0
  %v4916 = vsel %vm4900, 1.0, 0.0
  %v4917 = vpack.c.bf16 %v4902, %v4901
  %v4918 = vpack.c.bf16 %v4904, %v4903
  %v4919 = vpack.c.bf16 %v4906, %v4905
  %v4920 = vpack.c.bf16 %v4908, %v4907
  %v4921 = vpack.c.bf16 %v4910, %v4909
  %v4922 = vpack.c.bf16 %v4912, %v4911
  %v4923 = vpack.c.bf16 %v4914, %v4913
  %v4924 = vpack.c.bf16 %v4916, %v4915
  %4925 = vmatprep.subr.bf16.mxu0 0
  %4926 = vmatpush1.bf16.msra.mxu0 %v4917
  %4927 = vmatprep.subr.bf16.mxu0 0
  %4928 = vmatpush1.bf16.msra.mxu0 %v4918
  %4929 = vmatprep.subr.bf16.mxu0 0
  %4930 = vmatpush1.bf16.msra.mxu0 %v4919
  %4931 = vmatprep.subr.bf16.mxu0 0
  %4932 = vmatpush1.bf16.msra.mxu0 %v4920
  %4933 = vmatprep.subr.bf16.mxu0 0
  %4934 = vmatpush1.bf16.msra.mxu0 %v4921
  %4935 = vmatprep.subr.bf16.mxu0 0
  %4936 = vmatpush1.bf16.msra.mxu0 %v4922
  %4937 = vmatprep.subr.bf16.mxu0 0
  %4938 = vmatpush1.bf16.msra.mxu0 %v4923
  %4939 = vmatprep.subr.bf16.mxu0 0
  %4940 = vmatpush1.bf16.msra.mxu0 %v4924
  %4941 = vmatprep.subr.bf16.mxu0 0
  %4942 = vmatpush1.bf16.msra.mxu0 0
  %4943 = vmatprep.subr.bf16.mxu0 0
  %4944 = vmatpush1.bf16.msra.mxu0 0
  %4945 = vmatprep.subr.bf16.mxu0 0
  %4946 = vmatpush1.bf16.msra.mxu0 0
  %4947 = vmatprep.subr.bf16.mxu0 0
  %4948 = vmatpush1.bf16.msra.mxu0 0
  %4949 = vmatprep.subr.bf16.mxu0 0
  %4950 = vmatpush1.bf16.msra.mxu0 0
  %4951 = vmatprep.subr.bf16.mxu0 0
  %4952 = vmatpush1.bf16.msra.mxu0 0
  %4953 = vmatprep.subr.bf16.mxu0 0
  %4954 = vmatpush1.bf16.msra.mxu0 0
  %4955 = vmatprep.subr.bf16.mxu0 0
  %4956 = vmatpush1.bf16.msra.mxu0 0
  %4957 = vmatprep.mubr.bf16.mxu0 0
  %4958 = vmatmul.mubr.bf16.gmra.mrb[0].mxu0 %v4864
  %v4959 = vpop.f32.mrb[0].mxu0
  %v4960 = vadd.f32 0.0, %v4959
  %v4961 = vpop.f32.mrb[0].mxu0
  %v4962 = vpop.f32.mrb[0].mxu0
  %v4963 = vpop.f32.mrb[0].mxu0
  %4964 = vdwg.mxu0
  %v4965 = vld [vmem:[%s2] sm:$0xf]
  %v4966 = vld [vmem:[%s2 + $0x4] sm:$0xf]
  %v4967 = vpack.c.bf16 %v4960, %v4960
  %vm4968 = vcmp.ge.s32.totalorder %v4871, 0
  %vm4969 = vmand %vm4875, %vm4968
  %vm4970 = vcmp.lt.s32.totalorder %v4871, 8
  %vm4971 = vmand %vm4969, %vm4970
  %v4972 = vadd.s32 %v4882, %v4871
  %v4973 = vsel %vm4971, %v4972, 4294967295
  %vm4974 = vcmp.eq.s32.totalorder %v32, %v4973
  %vm4975 = vcmp.eq.s32.totalorder %v33, %v4973
  %vm4976 = vcmp.eq.s32.totalorder %v34, %v4973
  %vm4977 = vcmp.eq.s32.totalorder %v35, %v4973
  %vm4978 = vcmp.eq.s32.totalorder %v36, %v4973
  %vm4979 = vcmp.eq.s32.totalorder %v37, %v4973
  %vm4980 = vcmp.eq.s32.totalorder %v38, %v4973
  %vm4981 = vcmp.eq.s32.totalorder %v39, %v4973
  %vm4982 = vcmp.eq.s32.totalorder %v40, %v4973
  %vm4983 = vcmp.eq.s32.totalorder %v41, %v4973
  %vm4984 = vcmp.eq.s32.totalorder %v42, %v4973
  %vm4985 = vcmp.eq.s32.totalorder %v43, %v4973
  %vm4986 = vcmp.eq.s32.totalorder %v44, %v4973
  %vm4987 = vcmp.eq.s32.totalorder %v45, %v4973
  %vm4988 = vcmp.eq.s32.totalorder %v46, %v4973
  %vm4989 = vcmp.eq.s32.totalorder %v47, %v4973
  %v4990 = vsel %vm4974, 1.0, 0.0
  %v4991 = vsel %vm4975, 1.0, 0.0
  %v4992 = vsel %vm4976, 1.0, 0.0
  %v4993 = vsel %vm4977, 1.0, 0.0
  %v4994 = vsel %vm4978, 1.0, 0.0
  %v4995 = vsel %vm4979, 1.0, 0.0
  %v4996 = vsel %vm4980, 1.0, 0.0
  %v4997 = vsel %vm4981, 1.0, 0.0
  %v4998 = vsel %vm4982, 1.0, 0.0
  %v4999 = vsel %vm4983, 1.0, 0.0
  %v5000 = vsel %vm4984, 1.0, 0.0
  %v5001 = vsel %vm4985, 1.0, 0.0
  %v5002 = vsel %vm4986, 1.0, 0.0
  %v5003 = vsel %vm4987, 1.0, 0.0
  %v5004 = vsel %vm4988, 1.0, 0.0
  %v5005 = vsel %vm4989, 1.0, 0.0
  %v5006 = vpack.c.bf16 %v4991, %v4990
  %v5007 = vpack.c.bf16 %v4993, %v4992
  %v5008 = vpack.c.bf16 %v4995, %v4994
  %v5009 = vpack.c.bf16 %v4997, %v4996
  %v5010 = vpack.c.bf16 %v4999, %v4998
  %v5011 = vpack.c.bf16 %v5001, %v5000
  %v5012 = vpack.c.bf16 %v5003, %v5002
  %v5013 = vpack.c.bf16 %v5005, %v5004
  %5014 = vmatprep.subr.bf16.mxu0 0
  %5015 = vmatpush1.bf16.msra.mxu0 %v5006
  %5016 = vmatprep.subr.bf16.mxu0 0
  %5017 = vmatpush1.bf16.msra.mxu0 %v5007
  %5018 = vmatprep.subr.bf16.mxu0 0
  %5019 = vmatpush1.bf16.msra.mxu0 %v5008
  %5020 = vmatprep.subr.bf16.mxu0 0
  %5021 = vmatpush1.bf16.msra.mxu0 %v5009
  %5022 = vmatprep.subr.bf16.mxu0 0
  %5023 = vmatpush1.bf16.msra.mxu0 %v5010
  %5024 = vmatprep.subr.bf16.mxu0 0
  %5025 = vmatpush1.bf16.msra.mxu0 %v5011
  %5026 = vmatprep.subr.bf16.mxu0 0
  %5027 = vmatpush1.bf16.msra.mxu0 %v5012
  %5028 = vmatprep.subr.bf16.mxu0 0
  %5029 = vmatpush1.bf16.msra.mxu0 %v5013
  %5030 = vmatprep.subr.bf16.mxu0 0
  %5031 = vmatpush1.bf16.msra.mxu0 0
  %5032 = vmatprep.subr.bf16.mxu0 0
  %5033 = vmatpush1.bf16.msra.mxu0 0
  %5034 = vmatprep.subr.bf16.mxu0 0
  %5035 = vmatpush1.bf16.msra.mxu0 0
  %5036 = vmatprep.subr.bf16.mxu0 0
  %5037 = vmatpush1.bf16.msra.mxu0 0
  %5038 = vmatprep.subr.bf16.mxu0 0
  %5039 = vmatpush1.bf16.msra.mxu0 0
  %5040 = vmatprep.subr.bf16.mxu0 0
  %5041 = vmatpush1.bf16.msra.mxu0 0
  %5042 = vmatprep.subr.bf16.mxu0 0
  %5043 = vmatpush1.bf16.msra.mxu0 0
  %5044 = vmatprep.subr.bf16.mxu0 0
  %5045 = vmatpush1.bf16.msra.mxu0 0
  %5046 = vmatprep.mubr.bf16.mxu0 0
  %5047 = vmatmul.mubr.bf16.gmra.mrb[0].mxu0 %v4864
  %v5048 = vpop.f32.mrb[0].mxu0
  %v5049 = vadd.f32 0.0, %v5048
  %v5050 = vpop.f32.mrb[0].mxu0
  %v5051 = vpop.f32.mrb[0].mxu0
  %v5052 = vpop.f32.mrb[0].mxu0
  %5053 = vdwg.mxu0
  %s5054 = scalar_lea.vmem %s2, 8
  %v5055 = vld [vmem:[%s5054] sm:$0xf]
  %v5056 = vld [vmem:[%s5054 + $0x4] sm:$0xf]
  %v5057 = vpack.c.bf16 %v5049, %v5049
  %v5060 = vunpack.c.l.b16 %v5055
  %v5061 = vunpack.c.l.b16 %v5056
  %v5062 = vpack.c.b16 %v5061, %v5060
  %vm5063 = vcmask 64512
  %v5065 = vsel %vm5063, %v5062, 0
  %vm5067 = vcmask 1043456
  %v5069 = vsel %vm5067, %v5057, 0
  %5071 = vmatprep.subr.bf16.mxu0 0
  %5072 = vmatpush1.bf16.msra.mxu0 %v5069
  %5073 = vmatprep.subr.bf16.mxu0 0
  %5074 = vmatpush1.bf16.msra.mxu0 0
  %5075 = vmatprep.subr.bf16.mxu0 0
  %5076 = vmatpush1.bf16.msra.mxu0 0
  %5077 = vmatprep.subr.bf16.mxu0 0
  %5078 = vmatpush1.bf16.msra.mxu0 0
  %5079 = vmatprep.subr.bf16.mxu0 0
  %5080 = vmatpush1.bf16.msra.mxu0 0
  %5081 = vmatprep.subr.bf16.mxu0 0
  %5082 = vmatpush1.bf16.msra.mxu0 0
  %5083 = vmatprep.subr.bf16.mxu0 0
  %5084 = vmatpush1.bf16.msra.mxu0 0
  %5085 = vmatprep.subr.bf16.mxu0 0
  %5086 = vmatpush1.bf16.msra.mxu0 0
  %5087 = vmatprep.subr.bf16.mxu0 0
  %5088 = vmatpush1.bf16.msra.mxu0 0
  %5089 = vmatprep.subr.bf16.mxu0 0
  %5090 = vmatpush1.bf16.msra.mxu0 0
  %5091 = vmatprep.subr.bf16.mxu0 0
  %5092 = vmatpush1.bf16.msra.mxu0 0
  %5093 = vmatprep.subr.bf16.mxu0 0
  %5094 = vmatpush1.bf16.msra.mxu0 0
  %5095 = vmatprep.subr.bf16.mxu0 0
  %5096 = vmatpush1.bf16.msra.mxu0 0
  %5097 = vmatprep.subr.bf16.mxu0 0
  %5098 = vmatpush1.bf16.msra.mxu0 0
  %5099 = vmatprep.subr.bf16.mxu0 0
  %5100 = vmatpush1.bf16.msra.mxu0 0
  %5101 = vmatprep.subr.bf16.mxu0 0
  %5102 = vmatpush1.bf16.msra.mxu0 0
  %5103 = vmatprep.mubr.bf16.mxu0 0
  %5104 = vmatmul.mubr.bf16.gmra.mrb[0].mxu0 %v5065
  %v5105 = vpop.f32.mrb[0].mxu0
  %v5106 = vadd.f32 0.0, %v5105
  %v5107 = vpop.f32.mrb[0].mxu0
  %v5108 = vpop.f32.mrb[0].mxu0
  %v5109 = vadd.f32 0.0, %v5108
  %v5110 = vpop.f32.mrb[0].mxu0
  %5111 = vdwg.mxu0
  %v5114 = vunpack.c.l.b16 %v4965
  %v5115 = vunpack.c.l.b16 %v4966
  %v5116 = vpack.c.b16 %v5115, %v5114
  %v5118 = vsel %vm5063, %v5116, 0
  %v5121 = vsel %vm5067, %v4967, 0
  %5123 = vmatprep.subr.bf16.mxu0 0
  %5124 = vmatpush1.bf16.msra.mxu0 %v5121
  %5125 = vmatprep.subr.bf16.mxu0 0
  %5126 = vmatpush1.bf16.msra.mxu0 0
  %5127 = vmatprep.subr.bf16.mxu0 0
  %5128 = vmatpush1.bf16.msra.mxu0 0
  %5129 = vmatprep.subr.bf16.mxu0 0
  %5130 = vmatpush1.bf16.msra.mxu0 0
  %5131 = vmatprep.subr.bf16.mxu0 0
  %5132 = vmatpush1.bf16.msra.mxu0 0
  %5133 = vmatprep.subr.bf16.mxu0 0
  %5134 = vmatpush1.bf16.msra.mxu0 0
  %5135 = vmatprep.subr.bf16.mxu0 0
  %5136 = vmatpush1.bf16.msra.mxu0 0
  %5137 = vmatprep.subr.bf16.mxu0 0
  %5138 = vmatpush1.bf16.msra.mxu0 0
  %5139 = vmatprep.subr.bf16.mxu0 0
  %5140 = vmatpush1.bf16.msra.mxu0 0
  %5141 = vmatprep.subr.bf16.mxu0 0
  %5142 = vmatpush1.bf16.msra.mxu0 0
  %5143 = vmatprep.subr.bf16.mxu0 0
  %5144 = vmatpush1.bf16.msra.mxu0 0
  %5145 = vmatprep.subr.bf16.mxu0 0
  %5146 = vmatpush1.bf16.msra.mxu0 0
  %5147 = vmatprep.subr.bf16.mxu0 0
  %5148 = vmatpush1.bf16.msra.mxu0 0
  %5149 = vmatprep.subr.bf16.mxu0 0
  %5150 = vmatpush1.bf16.msra.mxu0 0
  %5151 = vmatprep.subr.bf16.mxu0 0
  %5152 = vmatpush1.bf16.msra.mxu0 0
  %5153 = vmatprep.subr.bf16.mxu0 0
  %5154 = vmatpush1.bf16.msra.mxu0 0
  %5155 = vmatprep.mubr.bf16.mxu0 0
  %5156 = vmatmul.mubr.bf16.gmra.mrb[0].mxu0 %v5118
  %v5157 = vpop.f32.mrb[0].mxu0
  %v5158 = vadd.f32 %v5106, %v5157
  %v5159 = vpop.f32.mrb[0].mxu0
  %v5160 = vpop.f32.mrb[0].mxu0
  %v5161 = vadd.f32 %v5109, %v5160
  %v5162 = vpop.f32.mrb[0].mxu0
  %5163 = vdwg.mxu0
  %v5164 = vadd.s32 %v4871, 1
  %vm5165 = vcmp.ge.s32.totalorder %v5164, 0
  %vm5166 = vmand %vm4875, %vm5165
  %vm5167 = vcmp.lt.s32.totalorder %v5164, 8
  %vm5168 = vmand %vm5166, %vm5167
  %v5169 = vadd.s32 %v4882, %v5164
  %v5170 = vsel %vm5168, %v5169, 4294967295
  %vm5171 = vcmp.eq.s32.totalorder %v32, %v5170
  %vm5172 = vcmp.eq.s32.totalorder %v33, %v5170
  %vm5173 = vcmp.eq.s32.totalorder %v34, %v5170
  %vm5174 = vcmp.eq.s32.totalorder %v35, %v5170
  %vm5175 = vcmp.eq.s32.totalorder %v36, %v5170
  %vm5176 = vcmp.eq.s32.totalorder %v37, %v5170
  %vm5177 = vcmp.eq.s32.totalorder %v38, %v5170
  %vm5178 = vcmp.eq.s32.totalorder %v39, %v5170
  %vm5179 = vcmp.eq.s32.totalorder %v40, %v5170
  %vm5180 = vcmp.eq.s32.totalorder %v41, %v5170
  %vm5181 = vcmp.eq.s32.totalorder %v42, %v5170
  %vm5182 = vcmp.eq.s32.totalorder %v43, %v5170
  %vm5183 = vcmp.eq.s32.totalorder %v44, %v5170
  %vm5184 = vcmp.eq.s32.totalorder %v45, %v5170
  %vm5185 = vcmp.eq.s32.totalorder %v46, %v5170
  %vm5186 = vcmp.eq.s32.totalorder %v47, %v5170
  %v5187 = vsel %vm5171, 1.0, 0.0
  %v5188 = vsel %vm5172, 1.0, 0.0
  %v5189 = vsel %vm5173, 1.0, 0.0
  %v5190 = vsel %vm5174, 1.0, 0.0
  %v5191 = vsel %vm5175, 1.0, 0.0
  %v5192 = vsel %vm5176, 1.0, 0.0
  %v5193 = vsel %vm5177, 1.0, 0.0
  %v5194 = vsel %vm5178, 1.0, 0.0
  %v5195 = vsel %vm5179, 1.0, 0.0
  %v5196 = vsel %vm5180, 1.0, 0.0
  %v5197 = vsel %vm5181, 1.0, 0.0
  %v5198 = vsel %vm5182, 1.0, 0.0
  %v5199 = vsel %vm5183, 1.0, 0.0
  %v5200 = vsel %vm5184, 1.0, 0.0
  %v5201 = vsel %vm5185, 1.0, 0.0
  %v5202 = vsel %vm5186, 1.0, 0.0
  %v5203 = vpack.c.bf16 %v5188, %v5187
  %v5204 = vpack.c.bf16 %v5190, %v5189
  %v5205 = vpack.c.bf16 %v5192, %v5191
  %v5206 = vpack.c.bf16 %v5194, %v5193
  %v5207 = vpack.c.bf16 %v5196, %v5195
  %v5208 = vpack.c.bf16 %v5198, %v5197
  %v5209 = vpack.c.bf16 %v5200, %v5199
  %v5210 = vpack.c.bf16 %v5202, %v5201
  %5211 = vmatprep.subr.bf16.mxu0 0
  %5212 = vmatpush1.bf16.msra.mxu0 %v5203
  %5213 = vmatprep.subr.bf16.mxu0 0
  %5214 = vmatpush1.bf16.msra.mxu0 %v5204
  %5215 = vmatprep.subr.bf16.mxu0 0
  %5216 = vmatpush1.bf16.msra.mxu0 %v5205
  %5217 = vmatprep.subr.bf16.mxu0 0
  %5218 = vmatpush1.bf16.msra.mxu0 %v5206
  %5219 = vmatprep.subr.bf16.mxu0 0
  %5220 = vmatpush1.bf16.msra.mxu0 %v5207
  %5221 = vmatprep.subr.bf16.mxu0 0
  %5222 = vmatpush1.bf16.msra.mxu0 %v5208
  %5223 = vmatprep.subr.bf16.mxu0 0
  %5224 = vmatpush1.bf16.msra.mxu0 %v5209
  %5225 = vmatprep.subr.bf16.mxu0 0
  %5226 = vmatpush1.bf16.msra.mxu0 %v5210
  %5227 = vmatprep.subr.bf16.mxu0 0
  %5228 = vmatpush1.bf16.msra.mxu0 0
  %5229 = vmatprep.subr.bf16.mxu0 0
  %5230 = vmatpush1.bf16.msra.mxu0 0
  %5231 = vmatprep.subr.bf16.mxu0 0
  %5232 = vmatpush1.bf16.msra.mxu0 0
  %5233 = vmatprep.subr.bf16.mxu0 0
  %5234 = vmatpush1.bf16.msra.mxu0 0
  %5235 = vmatprep.subr.bf16.mxu0 0
  %5236 = vmatpush1.bf16.msra.mxu0 0
  %5237 = vmatprep.subr.bf16.mxu0 0
  %5238 = vmatpush1.bf16.msra.mxu0 0
  %5239 = vmatprep.subr.bf16.mxu0 0
  %5240 = vmatpush1.bf16.msra.mxu0 0
  %5241 = vmatprep.subr.bf16.mxu0 0
  %5242 = vmatpush1.bf16.msra.mxu0 0
  %5243 = vmatprep.mubr.bf16.mxu0 0
  %5244 = vmatmul.mubr.bf16.gmra.mrb[0].mxu0 %v4864
  %v5245 = vpop.f32.mrb[0].mxu0
  %v5246 = vadd.f32 0.0, %v5245
  %v5247 = vpop.f32.mrb[0].mxu0
  %v5248 = vpop.f32.mrb[0].mxu0
  %v5249 = vpop.f32.mrb[0].mxu0
  %5250 = vdwg.mxu0
  %s5251 = scalar_lea.vmem %s2, 16
  %v5252 = vld [vmem:[%s5251] sm:$0xf]
  %v5253 = vld [vmem:[%s5251 + $0x4] sm:$0xf]
  %v5254 = vpack.c.bf16 %v5246, %v5246
  %v5257 = vunpack.c.l.b16 %v5252
  %v5258 = vunpack.c.l.b16 %v5253
  %v5259 = vpack.c.b16 %v5258, %v5257
  %v5261 = vsel %vm5063, %v5259, 0
  %v5264 = vsel %vm5067, %v5254, 0
  %5266 = vmatprep.subr.bf16.mxu0 0
  %5267 = vmatpush1.bf16.msra.mxu0 %v5264
  %5268 = vmatprep.subr.bf16.mxu0 0
  %5269 = vmatpush1.bf16.msra.mxu0 0
  %5270 = vmatprep.subr.bf16.mxu0 0
  %5271 = vmatpush1.bf16.msra.mxu0 0
  %5272 = vmatprep.subr.bf16.mxu0 0
  %5273 = vmatpush1.bf16.msra.mxu0 0
  %5274 = vmatprep.subr.bf16.mxu0 0
  %5275 = vmatpush1.bf16.msra.mxu0 0
  %5276 = vmatprep.subr.bf16.mxu0 0
  %5277 = vmatpush1.bf16.msra.mxu0 0
  %5278 = vmatprep.subr.bf16.mxu0 0
  %5279 = vmatpush1.bf16.msra.mxu0 0
  %5280 = vmatprep.subr.bf16.mxu0 0
  %5281 = vmatpush1.bf16.msra.mxu0 0
  %5282 = vmatprep.subr.bf16.mxu0 0
  %5283 = vmatpush1.bf16.msra.mxu0 0
  %5284 = vmatprep.subr.bf16.mxu0 0
  %5285 = vmatpush1.bf16.msra.mxu0 0
  %5286 = vmatprep.subr.bf16.mxu0 0
  %5287 = vmatpush1.bf16.msra.mxu0 0
  %5288 = vmatprep.subr.bf16.mxu0 0
  %5289 = vmatpush1.bf16.msra.mxu0 0
  %5290 = vmatprep.subr.bf16.mxu0 0
  %5291 = vmatpush1.bf16.msra.mxu0 0
  %5292 = vmatprep.subr.bf16.mxu0 0
  %5293 = vmatpush1.bf16.msra.mxu0 0
  %5294 = vmatprep.subr.bf16.mxu0 0
  %5295 = vmatpush1.bf16.msra.mxu0 0
  %5296 = vmatprep.subr.bf16.mxu0 0
  %5297 = vmatpush1.bf16.msra.mxu0 0
  %5298 = vmatprep.mubr.bf16.mxu0 0
  %5299 = vmatmul.mubr.bf16.gmra.mrb[0].mxu0 %v5261
  %v5300 = vpop.f32.mrb[0].mxu0
  %v5301 = vadd.f32 0.0, %v5300
  %v5302 = vpop.f32.mrb[0].mxu0
  %v5303 = vpop.f32.mrb[0].mxu0
  %v5304 = vadd.f32 0.0, %v5303
  %v5305 = vpop.f32.mrb[0].mxu0
  %5306 = vdwg.mxu0
  %v5307 = vadd.f32 %v5158, %v5301
  %v5308 = vadd.f32 %v5161, %v5304
  %v5309 = vadd.s32 %v4871, 2
  %vm5310 = vcmp.ge.s32.totalorder %v5309, 0
  %vm5311 = vmand %vm4875, %vm5310
  %vm5312 = vcmp.lt.s32.totalorder %v5309, 8
  %vm5313 = vmand %vm5311, %vm5312
  %v5314 = vadd.s32 %v4882, %v5309
  %v5315 = vsel %vm5313, %v5314, 4294967295
  %vm5316 = vcmp.eq.s32.totalorder %v32, %v5315
  %vm5317 = vcmp.eq.s32.totalorder %v33, %v5315
  %vm5318 = vcmp.eq.s32.totalorder %v34, %v5315
  %vm5319 = vcmp.eq.s32.totalorder %v35, %v5315
  %vm5320 = vcmp.eq.s32.totalorder %v36, %v5315
  %vm5321 = vcmp.eq.s32.totalorder %v37, %v5315
  %vm5322 = vcmp.eq.s32.totalorder %v38, %v5315
  %vm5323 = vcmp.eq.s32.totalorder %v39, %v5315
  %vm5324 = vcmp.eq.s32.totalorder %v40, %v5315
  %vm5325 = vcmp.eq.s32.totalorder %v41, %v5315
  %vm5326 = vcmp.eq.s32.totalorder %v42, %v5315
  %vm5327 = vcmp.eq.s32.totalorder %v43, %v5315
  %vm5328 = vcmp.eq.s32.totalorder %v44, %v5315
  %vm5329 = vcmp.eq.s32.totalorder %v45, %v5315
  %vm5330 = vcmp.eq.s32.totalorder %v46, %v5315
  %vm5331 = vcmp.eq.s32.totalorder %v47, %v5315
  %v5332 = vsel %vm5316, 1.0, 0.0
  %v5333 = vsel %vm5317, 1.0, 0.0
  %v5334 = vsel %vm5318, 1.0, 0.0
  %v5335 = vsel %vm5319, 1.0, 0.0
  %v5336 = vsel %vm5320, 1.0, 0.0
  %v5337 = vsel %vm5321, 1.0, 0.0
  %v5338 = vsel %vm5322, 1.0, 0.0
  %v5339 = vsel %vm5323, 1.0, 0.0
  %v5340 = vsel %vm5324, 1.0, 0.0
  %v5341 = vsel %vm5325, 1.0, 0.0
  %v5342 = vsel %vm5326, 1.0, 0.0
  %v5343 = vsel %vm5327, 1.0, 0.0
  %v5344 = vsel %vm5328, 1.0, 0.0
  %v5345 = vsel %vm5329, 1.0, 0.0
  %v5346 = vsel %vm5330, 1.0, 0.0
  %v5347 = vsel %vm5331, 1.0, 0.0
  %v5348 = vpack.c.bf16 %v5333, %v5332
  %v5349 = vpack.c.bf16 %v5335, %v5334
  %v5350 = vpack.c.bf16 %v5337, %v5336
  %v5351 = vpack.c.bf16 %v5339, %v5338
  %v5352 = vpack.c.bf16 %v5341, %v5340
  %v5353 = vpack.c.bf16 %v5343, %v5342
  %v5354 = vpack.c.bf16 %v5345, %v5344
  %v5355 = vpack.c.bf16 %v5347, %v5346
  %5356 = vmatprep.subr.bf16.mxu0 0
  %5357 = vmatpush1.bf16.msra.mxu0 %v5348
  %5358 = vmatprep.subr.bf16.mxu0 0
  %5359 = vmatpush1.bf16.msra.mxu0 %v5349
  %5360 = vmatprep.subr.bf16.mxu0 0
  %5361 = vmatpush1.bf16.msra.mxu0 %v5350
  %5362 = vmatprep.subr.bf16.mxu0 0
  %5363 = vmatpush1.bf16.msra.mxu0 %v5351
  %5364 = vmatprep.subr.bf16.mxu0 0
  %5365 = vmatpush1.bf16.msra.mxu0 %v5352
  %5366 = vmatprep.subr.bf16.mxu0 0
  %5367 = vmatpush1.bf16.msra.mxu0 %v5353
  %5368 = vmatprep.subr.bf16.mxu0 0
  %5369 = vmatpush1.bf16.msra.mxu0 %v5354
  %5370 = vmatprep.subr.bf16.mxu0 0
  %5371 = vmatpush1.bf16.msra.mxu0 %v5355
  %5372 = vmatprep.subr.bf16.mxu0 0
  %5373 = vmatpush1.bf16.msra.mxu0 0
  %5374 = vmatprep.subr.bf16.mxu0 0
  %5375 = vmatpush1.bf16.msra.mxu0 0
  %5376 = vmatprep.subr.bf16.mxu0 0
  %5377 = vmatpush1.bf16.msra.mxu0 0
  %5378 = vmatprep.subr.bf16.mxu0 0
  %5379 = vmatpush1.bf16.msra.mxu0 0
  %5380 = vmatprep.subr.bf16.mxu0 0
  %5381 = vmatpush1.bf16.msra.mxu0 0
  %5382 = vmatprep.subr.bf16.mxu0 0
  %5383 = vmatpush1.bf16.msra.mxu0 0
  %5384 = vmatprep.subr.bf16.mxu0 0
  %5385 = vmatpush1.bf16.msra.mxu0 0
  %5386 = vmatprep.subr.bf16.mxu0 0
  %5387 = vmatpush1.bf16.msra.mxu0 0
  %5388 = vmatprep.mubr.bf16.mxu0 0
  %5389 = vmatmul.mubr.bf16.gmra.mrb[0].mxu0 %v4864
  %v5390 = vpop.f32.mrb[0].mxu0
  %v5391 = vadd.f32 0.0, %v5390
  %v5392 = vpop.f32.mrb[0].mxu0
  %v5393 = vpop.f32.mrb[0].mxu0
  %v5394 = vpop.f32.mrb[0].mxu0
  %5395 = vdwg.mxu0
  %s5396 = scalar_lea.vmem %s2, 24
  %v5397 = vld [vmem:[%s5396] sm:$0xf]
  %v5398 = vld [vmem:[%s5396 + $0x4] sm:$0xf]
  %v5399 = vpack.c.bf16 %v5391, %v5391
  %v5402 = vunpack.c.l.b16 %v5397
  %v5403 = vunpack.c.l.b16 %v5398
  %v5404 = vpack.c.b16 %v5403, %v5402
  %v5406 = vsel %vm5063, %v5404, 0
  %v5409 = vsel %vm5067, %v5399, 0
  %5411 = vmatprep.subr.bf16.mxu0 0
  %5412 = vmatpush1.bf16.msra.mxu0 %v5409
  %5413 = vmatprep.subr.bf16.mxu0 0
  %5414 = vmatpush1.bf16.msra.mxu0 0
  %5415 = vmatprep.subr.bf16.mxu0 0
  %5416 = vmatpush1.bf16.msra.mxu0 0
  %5417 = vmatprep.subr.bf16.mxu0 0
  %5418 = vmatpush1.bf16.msra.mxu0 0
  %5419 = vmatprep.subr.bf16.mxu0 0
  %5420 = vmatpush1.bf16.msra.mxu0 0
  %5421 = vmatprep.subr.bf16.mxu0 0
  %5422 = vmatpush1.bf16.msra.mxu0 0
  %5423 = vmatprep.subr.bf16.mxu0 0
  %5424 = vmatpush1.bf16.msra.mxu0 0
  %5425 = vmatprep.subr.bf16.mxu0 0
  %5426 = vmatpush1.bf16.msra.mxu0 0
  %5427 = vmatprep.subr.bf16.mxu0 0
  %5428 = vmatpush1.bf16.msra.mxu0 0
  %5429 = vmatprep.subr.bf16.mxu0 0
  %5430 = vmatpush1.bf16.msra.mxu0 0
  %5431 = vmatprep.subr.bf16.mxu0 0
  %5432 = vmatpush1.bf16.msra.mxu0 0
  %5433 = vmatprep.subr.bf16.mxu0 0
  %5434 = vmatpush1.bf16.msra.mxu0 0
  %5435 = vmatprep.subr.bf16.mxu0 0
  %5436 = vmatpush1.bf16.msra.mxu0 0
  %5437 = vmatprep.subr.bf16.mxu0 0
  %5438 = vmatpush1.bf16.msra.mxu0 0
  %5439 = vmatprep.subr.bf16.mxu0 0
  %5440 = vmatpush1.bf16.msra.mxu0 0
  %5441 = vmatprep.subr.bf16.mxu0 0
  %5442 = vmatpush1.bf16.msra.mxu0 0
  %5443 = vmatprep.mubr.bf16.mxu0 0
  %5444 = vmatmul.mubr.bf16.gmra.mrb[0].mxu0 %v5406
  %v5445 = vpop.f32.mrb[0].mxu0
  %v5446 = vadd.f32 0.0, %v5445
  %v5447 = vpop.f32.mrb[0].mxu0
  %v5448 = vpop.f32.mrb[0].mxu0
  %v5449 = vadd.f32 0.0, %v5448
  %v5450 = vpop.f32.mrb[0].mxu0
  %5451 = vdwg.mxu0
  %v5452 = vadd.f32 %v5307, %v5446
  %v5453 = vadd.f32 %v5308, %v5449
  %vm5454 = vcmp.ge.s32.totalorder %v4869, 0
  %vm5455 = vcmp.lt.s32.totalorder %v4869, 8
  %vm5456 = vmand %vm5454, %vm5455
  %vm5457 = vmand %vm5456, %vm4876
  %vm5458 = vmand %vm5457, %vm4878
  %v5459 = vmul.u32 %v4869, 8
  %v5460 = vadd.s32 %v4880, %v5459
  %v5461 = vadd.s32 %v5460, %v4872
  %v5462 = vsel %vm5458, %v5461, 4294967295
  %vm5463 = vcmp.eq.s32.totalorder %v32, %v5462
  %vm5464 = vcmp.eq.s32.totalorder %v33, %v5462
  %vm5465 = vcmp.eq.s32.totalorder %v34, %v5462
  %vm5466 = vcmp.eq.s32.totalorder %v35, %v5462
  %vm5467 = vcmp.eq.s32.totalorder %v36, %v5462
  %vm5468 = vcmp.eq.s32.totalorder %v37, %v5462
  %vm5469 = vcmp.eq.s32.totalorder %v38, %v5462
  %vm5470 = vcmp.eq.s32.totalorder %v39, %v5462
  %vm5471 = vcmp.eq.s32.totalorder %v40, %v5462
  %vm5472 = vcmp.eq.s32.totalorder %v41, %v5462
  %vm5473 = vcmp.eq.s32.totalorder %v42, %v5462
  %vm5474 = vcmp.eq.s32.totalorder %v43, %v5462
  %vm5475 = vcmp.eq.s32.totalorder %v44, %v5462
  %vm5476 = vcmp.eq.s32.totalorder %v45, %v5462
  %vm5477 = vcmp.eq.s32.totalorder %v46, %v5462
  %vm5478 = vcmp.eq.s32.totalorder %v47, %v5462
  %v5479 = vsel %vm5463, 1.0, 0.0
  %v5480 = vsel %vm5464, 1.0, 0.0
  %v5481 = vsel %vm5465, 1.0, 0.0
  %v5482 = vsel %vm5466, 1.0, 0.0
  %v5483 = vsel %vm5467, 1.0, 0.0
  %v5484 = vsel %vm5468, 1.0, 0.0
  %v5485 = vsel %vm5469, 1.0, 0.0
  %v5486 = vsel %vm5470, 1.0, 0.0
  %v5487 = vsel %vm5471, 1.0, 0.0
  %v5488 = vsel %vm5472, 1.0, 0.0
  %v5489 = vsel %vm5473, 1.0, 0.0
  %v5490 = vsel %vm5474, 1.0, 0.0
  %v5491 = vsel %vm5475, 1.0, 0.0
  %v5492 = vsel %vm5476, 1.0, 0.0
  %v5493 = vsel %vm5477, 1.0, 0.0
  %v5494 = vsel %vm5478, 1.0, 0.0
  %v5495 = vpack.c.bf16 %v5480, %v5479
  %v5496 = vpack.c.bf16 %v5482, %v5481
  %v5497 = vpack.c.bf16 %v5484, %v5483
  %v5498 = vpack.c.bf16 %v5486, %v5485
  %v5499 = vpack.c.bf16 %v5488, %v5487
  %v5500 = vpack.c.bf16 %v5490, %v5489
  %v5501 = vpack.c.bf16 %v5492, %v5491
  %v5502 = vpack.c.bf16 %v5494, %v5493
  %5503 = vmatprep.subr.bf16.mxu0 0
  %5504 = vmatpush1.bf16.msra.mxu0 %v5495
  %5505 = vmatprep.subr.bf16.mxu0 0
  %5506 = vmatpush1.bf16.msra.mxu0 %v5496
  %5507 = vmatprep.subr.bf16.mxu0 0
  %5508 = vmatpush1.bf16.msra.mxu0 %v5497
  %5509 = vmatprep.subr.bf16.mxu0 0
  %5510 = vmatpush1.bf16.msra.mxu0 %v5498
  %5511 = vmatprep.subr.bf16.mxu0 0
  %5512 = vmatpush1.bf16.msra.mxu0 %v5499
  %5513 = vmatprep.subr.bf16.mxu0 0
  %5514 = vmatpush1.bf16.msra.mxu0 %v5500
  %5515 = vmatprep.subr.bf16.mxu0 0
  %5516 = vmatpush1.bf16.msra.mxu0 %v5501
  %5517 = vmatprep.subr.bf16.mxu0 0
  %5518 = vmatpush1.bf16.msra.mxu0 %v5502
  %5519 = vmatprep.subr.bf16.mxu0 0
  %5520 = vmatpush1.bf16.msra.mxu0 0
  %5521 = vmatprep.subr.bf16.mxu0 0
  %5522 = vmatpush1.bf16.msra.mxu0 0
  %5523 = vmatprep.subr.bf16.mxu0 0
  %5524 = vmatpush1.bf16.msra.mxu0 0
  %5525 = vmatprep.subr.bf16.mxu0 0
  %5526 = vmatpush1.bf16.msra.mxu0 0
  %5527 = vmatprep.subr.bf16.mxu0 0
  %5528 = vmatpush1.bf16.msra.mxu0 0
  %5529 = vmatprep.subr.bf16.mxu0 0
  %5530 = vmatpush1.bf16.msra.mxu0 0
  %5531 = vmatprep.subr.bf16.mxu0 0
  %5532 = vmatpush1.bf16.msra.mxu0 0
  %5533 = vmatprep.subr.bf16.mxu0 0
  %5534 = vmatpush1.bf16.msra.mxu0 0
  %5535 = vmatprep.mubr.bf16.mxu0 0
  %5536 = vmatmul.mubr.bf16.gmra.mrb[0].mxu0 %v4864
  %v5537 = vpop.f32.mrb[0].mxu0
  %v5538 = vadd.f32 0.0, %v5537
  %v5539 = vpop.f32.mrb[0].mxu0
  %v5540 = vpop.f32.mrb[0].mxu0
  %v5541 = vpop.f32.mrb[0].mxu0
  %5542 = vdwg.mxu0
  %s5543 = scalar_lea.vmem %s2, 32
  %v5544 = vld [vmem:[%s5543] sm:$0xf]
  %v5545 = vld [vmem:[%s5543 + $0x4] sm:$0xf]
  %v5546 = vpack.c.bf16 %v5538, %v5538
  %v5549 = vunpack.c.l.b16 %v5544
  %v5550 = vunpack.c.l.b16 %v5545
  %v5551 = vpack.c.b16 %v5550, %v5549
  %v5553 = vsel %vm5063, %v5551, 0
  %v5556 = vsel %vm5067, %v5546, 0
  %5558 = vmatprep.subr.bf16.mxu0 0
  %5559 = vmatpush1.bf16.msra.mxu0 %v5556
  %5560 = vmatprep.subr.bf16.mxu0 0
  %5561 = vmatpush1.bf16.msra.mxu0 0
  %5562 = vmatprep.subr.bf16.mxu0 0
  %5563 = vmatpush1.bf16.msra.mxu0 0
  %5564 = vmatprep.subr.bf16.mxu0 0
  %5565 = vmatpush1.bf16.msra.mxu0 0
  %5566 = vmatprep.subr.bf16.mxu0 0
  %5567 = vmatpush1.bf16.msra.mxu0 0
  %5568 = vmatprep.subr.bf16.mxu0 0
  %5569 = vmatpush1.bf16.msra.mxu0 0
  %5570 = vmatprep.subr.bf16.mxu0 0
  %5571 = vmatpush1.bf16.msra.mxu0 0
  %5572 = vmatprep.subr.bf16.mxu0 0
  %5573 = vmatpush1.bf16.msra.mxu0 0
  %5574 = vmatprep.subr.bf16.mxu0 0
  %5575 = vmatpush1.bf16.msra.mxu0 0
  %5576 = vmatprep.subr.bf16.mxu0 0
  %5577 = vmatpush1.bf16.msra.mxu0 0
  %5578 = vmatprep.subr.bf16.mxu0 0
  %5579 = vmatpush1.bf16.msra.mxu0 0
  %5580 = vmatprep.subr.bf16.mxu0 0
  %5581 = vmatpush1.bf16.msra.mxu0 0
  %5582 = vmatprep.subr.bf16.mxu0 0
  %5583 = vmatpush1.bf16.msra.mxu0 0
  %5584 = vmatprep.subr.bf16.mxu0 0
  %5585 = vmatpush1.bf16.msra.mxu0 0
  %5586 = vmatprep.subr.bf16.mxu0 0
  %5587 = vmatpush1.bf16.msra.mxu0 0
  %5588 = vmatprep.subr.bf16.mxu0 0
  %5589 = vmatpush1.bf16.msra.mxu0 0
  %5590 = vmatprep.mubr.bf16.mxu0 0
  %5591 = vmatmul.mubr.bf16.gmra.mrb[0].mxu0 %v5553
  %v5592 = vpop.f32.mrb[0].mxu0
  %v5593 = vadd.f32 0.0, %v5592
  %v5594 = vpop.f32.mrb[0].mxu0
  %v5595 = vpop.f32.mrb[0].mxu0
  %v5596 = vadd.f32 0.0, %v5595
  %v5597 = vpop.f32.mrb[0].mxu0
  %5598 = vdwg.mxu0
  %v5599 = vadd.f32 %v5452, %v5593
  %v5600 = vadd.f32 %v5453, %v5596
  %vm5601 = vmand %vm5456, %vm4968
  %vm5602 = vmand %vm5601, %vm4970
  %v5603 = vadd.s32 %v5460, %v4871
  %v5604 = vsel %vm5602, %v5603, 4294967295
  %vm5605 = vcmp.eq.s32.totalorder %v32, %v5604
  %vm5606 = vcmp.eq.s32.totalorder %v33, %v5604
  %vm5607 = vcmp.eq.s32.totalorder %v34, %v5604
  %vm5608 = vcmp.eq.s32.totalorder %v35, %v5604
  %vm5609 = vcmp.eq.s32.totalorder %v36, %v5604
  %vm5610 = vcmp.eq.s32.totalorder %v37, %v5604
  %vm5611 = vcmp.eq.s32.totalorder %v38, %v5604
  %vm5612 = vcmp.eq.s32.totalorder %v39, %v5604
  %vm5613 = vcmp.eq.s32.totalorder %v40, %v5604
  %vm5614 = vcmp.eq.s32.totalorder %v41, %v5604
  %vm5615 = vcmp.eq.s32.totalorder %v42, %v5604
  %vm5616 = vcmp.eq.s32.totalorder %v43, %v5604
  %vm5617 = vcmp.eq.s32.totalorder %v44, %v5604
  %vm5618 = vcmp.eq.s32.totalorder %v45, %v5604
  %vm5619 = vcmp.eq.s32.totalorder %v46, %v5604
  %vm5620 = vcmp.eq.s32.totalorder %v47, %v5604
  %v5621 = vsel %vm5605, 1.0, 0.0
  %v5622 = vsel %vm5606, 1.0, 0.0
  %v5623 = vsel %vm5607, 1.0, 0.0
  %v5624 = vsel %vm5608, 1.0, 0.0
  %v5625 = vsel %vm5609, 1.0, 0.0
  %v5626 = vsel %vm5610, 1.0, 0.0
  %v5627 = vsel %vm5611, 1.0, 0.0
  %v5628 = vsel %vm5612, 1.0, 0.0
  %v5629 = vsel %vm5613, 1.0, 0.0
  %v5630 = vsel %vm5614, 1.0, 0.0
  %v5631 = vsel %vm5615, 1.0, 0.0
  %v5632 = vsel %vm5616, 1.0, 0.0
  %v5633 = vsel %vm5617, 1.0, 0.0
  %v5634 = vsel %vm5618, 1.0, 0.0
  %v5635 = vsel %vm5619, 1.0, 0.0
  %v5636 = vsel %vm5620, 1.0, 0.0
  %v5637 = vpack.c.bf16 %v5622, %v5621
  %v5638 = vpack.c.bf16 %v5624, %v5623
  %v5639 = vpack.c.bf16 %v5626, %v5625
  %v5640 = vpack.c.bf16 %v5628, %v5627
  %v5641 = vpack.c.bf16 %v5630, %v5629
  %v5642 = vpack.c.bf16 %v5632, %v5631
  %v5643 = vpack.c.bf16 %v5634, %v5633
  %v5644 = vpack.c.bf16 %v5636, %v5635
  %5645 = vmatprep.subr.bf16.mxu0 0
  %5646 = vmatpush1.bf16.msra.mxu0 %v5637
  %5647 = vmatprep.subr.bf16.mxu0 0
  %5648 = vmatpush1.bf16.msra.mxu0 %v5638
  %5649 = vmatprep.subr.bf16.mxu0 0
  %5650 = vmatpush1.bf16.msra.mxu0 %v5639
  %5651 = vmatprep.subr.bf16.mxu0 0
  %5652 = vmatpush1.bf16.msra.mxu0 %v5640
  %5653 = vmatprep.subr.bf16.mxu0 0
  %5654 = vmatpush1.bf16.msra.mxu0 %v5641
  %5655 = vmatprep.subr.bf16.mxu0 0
  %5656 = vmatpush1.bf16.msra.mxu0 %v5642
  %5657 = vmatprep.subr.bf16.mxu0 0
  %5658 = vmatpush1.bf16.msra.mxu0 %v5643
  %5659 = vmatprep.subr.bf16.mxu0 0
  %5660 = vmatpush1.bf16.msra.mxu0 %v5644
  %5661 = vmatprep.subr.bf16.mxu0 0
  %5662 = vmatpush1.bf16.msra.mxu0 0
  %5663 = vmatprep.subr.bf16.mxu0 0
  %5664 = vmatpush1.bf16.msra.mxu0 0
  %5665 = vmatprep.subr.bf16.mxu0 0
  %5666 = vmatpush1.bf16.msra.mxu0 0
  %5667 = vmatprep.subr.bf16.mxu0 0
  %5668 = vmatpush1.bf16.msra.mxu0 0
  %5669 = vmatprep.subr.bf16.mxu0 0
  %5670 = vmatpush1.bf16.msra.mxu0 0
  %5671 = vmatprep.subr.bf16.mxu0 0
  %5672 = vmatpush1.bf16.msra.mxu0 0
  %5673 = vmatprep.subr.bf16.mxu0 0
  %5674 = vmatpush1.bf16.msra.mxu0 0
  %5675 = vmatprep.subr.bf16.mxu0 0
  %5676 = vmatpush1.bf16.msra.mxu0 0
  %5677 = vmatprep.mubr.bf16.mxu0 0
  %5678 = vmatmul.mubr.bf16.gmra.mrb[0].mxu0 %v4864
  %v5679 = vpop.f32.mrb[0].mxu0
  %v5680 = vadd.f32 0.0, %v5679
  %v5681 = vpop.f32.mrb[0].mxu0
  %v5682 = vpop.f32.mrb[0].mxu0
  %v5683 = vpop.f32.mrb[0].mxu0
  %5684 = vdwg.mxu0
  %s5685 = scalar_lea.vmem %s2, 40
  %v5686 = vld [vmem:[%s5685] sm:$0xf]
  %v5687 = vld [vmem:[%s5685 + $0x4] sm:$0xf]
  %v5688 = vpack.c.bf16 %v5680, %v5680
  %v5691 = vunpack.c.l.b16 %v5686
  %v5692 = vunpack.c.l.b16 %v5687
  %v5693 = vpack.c.b16 %v5692, %v5691
  %v5695 = vsel %vm5063, %v5693, 0
  %v5698 = vsel %vm5067, %v5688, 0
  %5700 = vmatprep.subr.bf16.mxu0 0
  %5701 = vmatpush1.bf16.msra.mxu0 %v5698
  %5702 = vmatprep.subr.bf16.mxu0 0
  %5703 = vmatpush1.bf16.msra.mxu0 0
  %5704 = vmatprep.subr.bf16.mxu0 0
  %5705 = vmatpush1.bf16.msra.mxu0 0
  %5706 = vmatprep.subr.bf16.mxu0 0
  %5707 = vmatpush1.bf16.msra.mxu0 0
  %5708 = vmatprep.subr.bf16.mxu0 0
  %5709 = vmatpush1.bf16.msra.mxu0 0
  %5710 = vmatprep.subr.bf16.mxu0 0
  %5711 = vmatpush1.bf16.msra.mxu0 0
  %5712 = vmatprep.subr.bf16.mxu0 0
  %5713 = vmatpush1.bf16.msra.mxu0 0
  %5714 = vmatprep.subr.bf16.mxu0 0
  %5715 = vmatpush1.bf16.msra.mxu0 0
  %5716 = vmatprep.subr.bf16.mxu0 0
  %5717 = vmatpush1.bf16.msra.mxu0 0
  %5718 = vmatprep.subr.bf16.mxu0 0
  %5719 = vmatpush1.bf16.msra.mxu0 0
  %5720 = vmatprep.subr.bf16.mxu0 0
  %5721 = vmatpush1.bf16.msra.mxu0 0
  %5722 = vmatprep.subr.bf16.mxu0 0
  %5723 = vmatpush1.bf16.msra.mxu0 0
  %5724 = vmatprep.subr.bf16.mxu0 0
  %5725 = vmatpush1.bf16.msra.mxu0 0
  %5726 = vmatprep.subr.bf16.mxu0 0
  %5727 = vmatpush1.bf16.msra.mxu0 0
  %5728 = vmatprep.subr.bf16.mxu0 0
  %5729 = vmatpush1.bf16.msra.mxu0 0
  %5730 = vmatprep.subr.bf16.mxu0 0
  %5731 = vmatpush1.bf16.msra.mxu0 0
  %5732 = vmatprep.mubr.bf16.mxu0 0
  %5733 = vmatmul.mubr.bf16.gmra.mrb[0].mxu0 %v5695
  %v5734 = vpop.f32.mrb[0].mxu0
  %v5735 = vadd.f32 0.0, %v5734
  %v5736 = vpop.f32.mrb[0].mxu0
  %v5737 = vpop.f32.mrb[0].mxu0
  %v5738 = vadd.f32 0.0, %v5737
  %v5739 = vpop.f32.mrb[0].mxu0
  %5740 = vdwg.mxu0
  %v5741 = vadd.f32 %v5599, %v5735
  %v5742 = vadd.f32 %v5600, %v5738
  %vm5743 = vmand %vm5456, %vm5165
  %vm5744 = vmand %vm5743, %vm5167
  %v5745 = vadd.s32 %v5460, %v5164
  %v5746 = vsel %vm5744, %v5745, 4294967295
  %vm5747 = vcmp.eq.s32.totalorder %v32, %v5746
  %vm5748 = vcmp.eq.s32.totalorder %v33, %v5746
  %vm5749 = vcmp.eq.s32.totalorder %v34, %v5746
  %vm5750 = vcmp.eq.s32.totalorder %v35, %v5746
  %vm5751 = vcmp.eq.s32.totalorder %v36, %v5746
  %vm5752 = vcmp.eq.s32.totalorder %v37, %v5746
  %vm5753 = vcmp.eq.s32.totalorder %v38, %v5746
  %vm5754 = vcmp.eq.s32.totalorder %v39, %v5746
  %vm5755 = vcmp.eq.s32.totalorder %v40, %v5746
  %vm5756 = vcmp.eq.s32.totalorder %v41, %v5746
  %vm5757 = vcmp.eq.s32.totalorder %v42, %v5746
  %vm5758 = vcmp.eq.s32.totalorder %v43, %v5746
  %vm5759 = vcmp.eq.s32.totalorder %v44, %v5746
  %vm5760 = vcmp.eq.s32.totalorder %v45, %v5746
  %vm5761 = vcmp.eq.s32.totalorder %v46, %v5746
  %vm5762 = vcmp.eq.s32.totalorder %v47, %v5746
  %v5763 = vsel %vm5747, 1.0, 0.0
  %v5764 = vsel %vm5748, 1.0, 0.0
  %v5765 = vsel %vm5749, 1.0, 0.0
  %v5766 = vsel %vm5750, 1.0, 0.0
  %v5767 = vsel %vm5751, 1.0, 0.0
  %v5768 = vsel %vm5752, 1.0, 0.0
  %v5769 = vsel %vm5753, 1.0, 0.0
  %v5770 = vsel %vm5754, 1.0, 0.0
  %v5771 = vsel %vm5755, 1.0, 0.0
  %v5772 = vsel %vm5756, 1.0, 0.0
  %v5773 = vsel %vm5757, 1.0, 0.0
  %v5774 = vsel %vm5758, 1.0, 0.0
  %v5775 = vsel %vm5759, 1.0, 0.0
  %v5776 = vsel %vm5760, 1.0, 0.0
  %v5777 = vsel %vm5761, 1.0, 0.0
  %v5778 = vsel %vm5762, 1.0, 0.0
  %v5779 = vpack.c.bf16 %v5764, %v5763
  %v5780 = vpack.c.bf16 %v5766, %v5765
  %v5781 = vpack.c.bf16 %v5768, %v5767
  %v5782 = vpack.c.bf16 %v5770, %v5769
  %v5783 = vpack.c.bf16 %v5772, %v5771
  %v5784 = vpack.c.bf16 %v5774, %v5773
  %v5785 = vpack.c.bf16 %v5776, %v5775
  %v5786 = vpack.c.bf16 %v5778, %v5777
  %5787 = vmatprep.subr.bf16.mxu0 0
  %5788 = vmatpush1.bf16.msra.mxu0 %v5779
  %5789 = vmatprep.subr.bf16.mxu0 0
  %5790 = vmatpush1.bf16.msra.mxu0 %v5780
  %5791 = vmatprep.subr.bf16.mxu0 0
  %5792 = vmatpush1.bf16.msra.mxu0 %v5781
  %5793 = vmatprep.subr.bf16.mxu0 0
  %5794 = vmatpush1.bf16.msra.mxu0 %v5782
  %5795 = vmatprep.subr.bf16.mxu0 0
  %5796 = vmatpush1.bf16.msra.mxu0 %v5783
  %5797 = vmatprep.subr.bf16.mxu0 0
  %5798 = vmatpush1.bf16.msra.mxu0 %v5784
  %5799 = vmatprep.subr.bf16.mxu0 0
  %5800 = vmatpush1.bf16.msra.mxu0 %v5785
  %5801 = vmatprep.subr.bf16.mxu0 0
  %5802 = vmatpush1.bf16.msra.mxu0 %v5786
  %5803 = vmatprep.subr.bf16.mxu0 0
  %5804 = vmatpush1.bf16.msra.mxu0 0
  %5805 = vmatprep.subr.bf16.mxu0 0
  %5806 = vmatpush1.bf16.msra.mxu0 0
  %5807 = vmatprep.subr.bf16.mxu0 0
  %5808 = vmatpush1.bf16.msra.mxu0 0
  %5809 = vmatprep.subr.bf16.mxu0 0
  %5810 = vmatpush1.bf16.msra.mxu0 0
  %5811 = vmatprep.subr.bf16.mxu0 0
  %5812 = vmatpush1.bf16.msra.mxu0 0
  %5813 = vmatprep.subr.bf16.mxu0 0
  %5814 = vmatpush1.bf16.msra.mxu0 0
  %5815 = vmatprep.subr.bf16.mxu0 0
  %5816 = vmatpush1.bf16.msra.mxu0 0
  %5817 = vmatprep.subr.bf16.mxu0 0
  %5818 = vmatpush1.bf16.msra.mxu0 0
  %5819 = vmatprep.mubr.bf16.mxu0 0
  %5820 = vmatmul.mubr.bf16.gmra.mrb[0].mxu0 %v4864
  %v5821 = vpop.f32.mrb[0].mxu0
  %v5822 = vadd.f32 0.0, %v5821
  %v5823 = vpop.f32.mrb[0].mxu0
  %v5824 = vpop.f32.mrb[0].mxu0
  %v5825 = vpop.f32.mrb[0].mxu0
  %5826 = vdwg.mxu0
  %s5827 = scalar_lea.vmem %s2, 48
  %v5828 = vld [vmem:[%s5827] sm:$0xf]
  %v5829 = vld [vmem:[%s5827 + $0x4] sm:$0xf]
  %v5830 = vpack.c.bf16 %v5822, %v5822
  %v5833 = vunpack.c.l.b16 %v5828
  %v5834 = vunpack.c.l.b16 %v5829
  %v5835 = vpack.c.b16 %v5834, %v5833
  %v5837 = vsel %vm5063, %v5835, 0
  %v5840 = vsel %vm5067, %v5830, 0
  %5842 = vmatprep.subr.bf16.mxu0 0
  %5843 = vmatpush1.bf16.msra.mxu0 %v5840
  %5844 = vmatprep.subr.bf16.mxu0 0
  %5845 = vmatpush1.bf16.msra.mxu0 0
  %5846 = vmatprep.subr.bf16.mxu0 0
  %5847 = vmatpush1.bf16.msra.mxu0 0
  %5848 = vmatprep.subr.bf16.mxu0 0
  %5849 = vmatpush1.bf16.msra.mxu0 0
  %5850 = vmatprep.subr.bf16.mxu0 0
  %5851 = vmatpush1.bf16.msra.mxu0 0
  %5852 = vmatprep.subr.bf16.mxu0 0
  %5853 = vmatpush1.bf16.msra.mxu0 0
  %5854 = vmatprep.subr.bf16.mxu0 0
  %5855 = vmatpush1.bf16.msra.mxu0 0
  %5856 = vmatprep.subr.bf16.mxu0 0
  %5857 = vmatpush1.bf16.msra.mxu0 0
  %5858 = vmatprep.subr.bf16.mxu0 0
  %5859 = vmatpush1.bf16.msra.mxu0 0
  %5860 = vmatprep.subr.bf16.mxu0 0
  %5861 = vmatpush1.bf16.msra.mxu0 0
  %5862 = vmatprep.subr.bf16.mxu0 0
  %5863 = vmatpush1.bf16.msra.mxu0 0
  %5864 = vmatprep.subr.bf16.mxu0 0
  %5865 = vmatpush1.bf16.msra.mxu0 0
  %5866 = vmatprep.subr.bf16.mxu0 0
  %5867 = vmatpush1.bf16.msra.mxu0 0
  %5868 = vmatprep.subr.bf16.mxu0 0
  %5869 = vmatpush1.bf16.msra.mxu0 0
  %5870 = vmatprep.subr.bf16.mxu0 0
  %5871 = vmatpush1.bf16.msra.mxu0 0
  %5872 = vmatprep.subr.bf16.mxu0 0
  %5873 = vmatpush1.bf16.msra.mxu0 0
  %5874 = vmatprep.mubr.bf16.mxu0 0
  %5875 = vmatmul.mubr.bf16.gmra.mrb[0].mxu0 %v5837
  %v5876 = vpop.f32.mrb[0].mxu0
  %v5877 = vadd.f32 0.0, %v5876
  %v5878 = vpop.f32.mrb[0].mxu0
  %v5879 = vpop.f32.mrb[0].mxu0
  %v5880 = vadd.f32 0.0, %v5879
  %v5881 = vpop.f32.mrb[0].mxu0
  %5882 = vdwg.mxu0
  %v5883 = vadd.f32 %v5741, %v5877
  %v5884 = vadd.f32 %v5742, %v5880
  %vm5885 = vmand %vm5456, %vm5310
  %vm5886 = vmand %vm5885, %vm5312
  %v5887 = vadd.s32 %v5460, %v5309
  %v5888 = vsel %vm5886, %v5887, 4294967295
  %vm5889 = vcmp.eq.s32.totalorder %v32, %v5888
  %vm5890 = vcmp.eq.s32.totalorder %v33, %v5888
  %vm5891 = vcmp.eq.s32.totalorder %v34, %v5888
  %vm5892 = vcmp.eq.s32.totalorder %v35, %v5888
  %vm5893 = vcmp.eq.s32.totalorder %v36, %v5888
  %vm5894 = vcmp.eq.s32.totalorder %v37, %v5888
  %vm5895 = vcmp.eq.s32.totalorder %v38, %v5888
  %vm5896 = vcmp.eq.s32.totalorder %v39, %v5888
  %vm5897 = vcmp.eq.s32.totalorder %v40, %v5888
  %vm5898 = vcmp.eq.s32.totalorder %v41, %v5888
  %vm5899 = vcmp.eq.s32.totalorder %v42, %v5888
  %vm5900 = vcmp.eq.s32.totalorder %v43, %v5888
  %vm5901 = vcmp.eq.s32.totalorder %v44, %v5888
  %vm5902 = vcmp.eq.s32.totalorder %v45, %v5888
  %vm5903 = vcmp.eq.s32.totalorder %v46, %v5888
  %vm5904 = vcmp.eq.s32.totalorder %v47, %v5888
  %v5905 = vsel %vm5889, 1.0, 0.0
  %v5906 = vsel %vm5890, 1.0, 0.0
  %v5907 = vsel %vm5891, 1.0, 0.0
  %v5908 = vsel %vm5892, 1.0, 0.0
  %v5909 = vsel %vm5893, 1.0, 0.0
  %v5910 = vsel %vm5894, 1.0, 0.0
  %v5911 = vsel %vm5895, 1.0, 0.0
  %v5912 = vsel %vm5896, 1.0, 0.0
  %v5913 = vsel %vm5897, 1.0, 0.0
  %v5914 = vsel %vm5898, 1.0, 0.0
  %v5915 = vsel %vm5899, 1.0, 0.0
  %v5916 = vsel %vm5900, 1.0, 0.0
  %v5917 = vsel %vm5901, 1.0, 0.0
  %v5918 = vsel %vm5902, 1.0, 0.0
  %v5919 = vsel %vm5903, 1.0, 0.0
  %v5920 = vsel %vm5904, 1.0, 0.0
  %v5921 = vpack.c.bf16 %v5906, %v5905
  %v5922 = vpack.c.bf16 %v5908, %v5907
  %v5923 = vpack.c.bf16 %v5910, %v5909
  %v5924 = vpack.c.bf16 %v5912, %v5911
  %v5925 = vpack.c.bf16 %v5914, %v5913
  %v5926 = vpack.c.bf16 %v5916, %v5915
  %v5927 = vpack.c.bf16 %v5918, %v5917
  %v5928 = vpack.c.bf16 %v5920, %v5919
  %5929 = vmatprep.subr.bf16.mxu0 0
  %5930 = vmatpush1.bf16.msra.mxu0 %v5921
  %5931 = vmatprep.subr.bf16.mxu0 0
  %5932 = vmatpush1.bf16.msra.mxu0 %v5922
  %5933 = vmatprep.subr.bf16.mxu0 0
  %5934 = vmatpush1.bf16.msra.mxu0 %v5923
  %5935 = vmatprep.subr.bf16.mxu0 0
  %5936 = vmatpush1.bf16.msra.mxu0 %v5924
  %5937 = vmatprep.subr.bf16.mxu0 0
  %5938 = vmatpush1.bf16.msra.mxu0 %v5925
  %5939 = vmatprep.subr.bf16.mxu0 0
  %5940 = vmatpush1.bf16.msra.mxu0 %v5926
  %5941 = vmatprep.subr.bf16.mxu0 0
  %5942 = vmatpush1.bf16.msra.mxu0 %v5927
  %5943 = vmatprep.subr.bf16.mxu0 0
  %5944 = vmatpush1.bf16.msra.mxu0 %v5928
  %5945 = vmatprep.subr.bf16.mxu0 0
  %5946 = vmatpush1.bf16.msra.mxu0 0
  %5947 = vmatprep.subr.bf16.mxu0 0
  %5948 = vmatpush1.bf16.msra.mxu0 0
  %5949 = vmatprep.subr.bf16.mxu0 0
  %5950 = vmatpush1.bf16.msra.mxu0 0
  %5951 = vmatprep.subr.bf16.mxu0 0
  %5952 = vmatpush1.bf16.msra.mxu0 0
  %5953 = vmatprep.subr.bf16.mxu0 0
  %5954 = vmatpush1.bf16.msra.mxu0 0
  %5955 = vmatprep.subr.bf16.mxu0 0
  %5956 = vmatpush1.bf16.msra.mxu0 0
  %5957 = vmatprep.subr.bf16.mxu0 0
  %5958 = vmatpush1.bf16.msra.mxu0 0
  %5959 = vmatprep.subr.bf16.mxu0 0
  %5960 = vmatpush1.bf16.msra.mxu0 0
  %5961 = vmatprep.mubr.bf16.mxu0 0
  %5962 = vmatmul.mubr.bf16.gmra.mrb[0].mxu0 %v4864
  %v5963 = vpop.f32.mrb[0].mxu0
  %v5964 = vadd.f32 0.0, %v5963
  %v5965 = vpop.f32.mrb[0].mxu0
  %v5966 = vpop.f32.mrb[0].mxu0
  %v5967 = vpop.f32.mrb[0].mxu0
  %5968 = vdwg.mxu0
  %s5969 = scalar_lea.vmem %s2, 56
  %v5970 = vld [vmem:[%s5969] sm:$0xf]
  %v5971 = vld [vmem:[%s5969 + $0x4] sm:$0xf]
  %v5972 = vpack.c.bf16 %v5964, %v5964
  %v5975 = vunpack.c.l.b16 %v5970
  %v5976 = vunpack.c.l.b16 %v5971
  %v5977 = vpack.c.b16 %v5976, %v5975
  %v5979 = vsel %vm5063, %v5977, 0
  %v5982 = vsel %vm5067, %v5972, 0
  %5984 = vmatprep.subr.bf16.mxu0 0
  %5985 = vmatpush1.bf16.msra.mxu0 %v5982
  %5986 = vmatprep.subr.bf16.mxu0 0
  %5987 = vmatpush1.bf16.msra.mxu0 0
  %5988 = vmatprep.subr.bf16.mxu0 0
  %5989 = vmatpush1.bf16.msra.mxu0 0
  %5990 = vmatprep.subr.bf16.mxu0 0
  %5991 = vmatpush1.bf16.msra.mxu0 0
  %5992 = vmatprep.subr.bf16.mxu0 0
  %5993 = vmatpush1.bf16.msra.mxu0 0
  %5994 = vmatprep.subr.bf16.mxu0 0
  %5995 = vmatpush1.bf16.msra.mxu0 0
  %5996 = vmatprep.subr.bf16.mxu0 0
  %5997 = vmatpush1.bf16.msra.mxu0 0
  %5998 = vmatprep.subr.bf16.mxu0 0
  %5999 = vmatpush1.bf16.msra.mxu0 0
  %6000 = vmatprep.subr.bf16.mxu0 0
  %6001 = vmatpush1.bf16.msra.mxu0 0
  %6002 = vmatprep.subr.bf16.mxu0 0
  %6003 = vmatpush1.bf16.msra.mxu0 0
  %6004 = vmatprep.subr.bf16.mxu0 0
  %6005 = vmatpush1.bf16.msra.mxu0 0
  %6006 = vmatprep.subr.bf16.mxu0 0
  %6007 = vmatpush1.bf16.msra.mxu0 0
  %6008 = vmatprep.subr.bf16.mxu0 0
  %6009 = vmatpush1.bf16.msra.mxu0 0
  %6010 = vmatprep.subr.bf16.mxu0 0
  %6011 = vmatpush1.bf16.msra.mxu0 0
  %6012 = vmatprep.subr.bf16.mxu0 0
  %6013 = vmatpush1.bf16.msra.mxu0 0
  %6014 = vmatprep.subr.bf16.mxu0 0
  %6015 = vmatpush1.bf16.msra.mxu0 0
  %6016 = vmatprep.mubr.bf16.mxu0 0
  %6017 = vmatmul.mubr.bf16.gmra.mrb[0].mxu0 %v5979
  %v6018 = vpop.f32.mrb[0].mxu0
  %v6019 = vadd.f32 0.0, %v6018
  %v6020 = vpop.f32.mrb[0].mxu0
  %v6021 = vpop.f32.mrb[0].mxu0
  %v6022 = vadd.f32 0.0, %v6021
  %v6023 = vpop.f32.mrb[0].mxu0
  %6024 = vdwg.mxu0
  %v6025 = vadd.f32 %v5883, %v6019
  %v6026 = vadd.f32 %v5884, %v6022
  %v6027 = vadd.s32 %v4869, 1
  %vm6028 = vcmp.ge.s32.totalorder %v6027, 0
  %vm6029 = vcmp.lt.s32.totalorder %v6027, 8
  %vm6030 = vmand %vm6028, %vm6029
  %vm6031 = vmand %vm6030, %vm4876
  %vm6032 = vmand %vm6031, %vm4878
  %v6033 = vmul.u32 %v6027, 8
  %v6034 = vadd.s32 %v4880, %v6033
  %v6035 = vadd.s32 %v6034, %v4872
  %v6036 = vsel %vm6032, %v6035, 4294967295
  %vm6037 = vcmp.eq.s32.totalorder %v32, %v6036
  %vm6038 = vcmp.eq.s32.totalorder %v33, %v6036
  %vm6039 = vcmp.eq.s32.totalorder %v34, %v6036
  %vm6040 = vcmp.eq.s32.totalorder %v35, %v6036
  %vm6041 = vcmp.eq.s32.totalorder %v36, %v6036
  %vm6042 = vcmp.eq.s32.totalorder %v37, %v6036
  %vm6043 = vcmp.eq.s32.totalorder %v38, %v6036
  %vm6044 = vcmp.eq.s32.totalorder %v39, %v6036
  %vm6045 = vcmp.eq.s32.totalorder %v40, %v6036
  %vm6046 = vcmp.eq.s32.totalorder %v41, %v6036
  %vm6047 = vcmp.eq.s32.totalorder %v42, %v6036
  %vm6048 = vcmp.eq.s32.totalorder %v43, %v6036
  %vm6049 = vcmp.eq.s32.totalorder %v44, %v6036
  %vm6050 = vcmp.eq.s32.totalorder %v45, %v6036
  %vm6051 = vcmp.eq.s32.totalorder %v46, %v6036
  %vm6052 = vcmp.eq.s32.totalorder %v47, %v6036
  %v6053 = vsel %vm6037, 1.0, 0.0
  %v6054 = vsel %vm6038, 1.0, 0.0
  %v6055 = vsel %vm6039, 1.0, 0.0
  %v6056 = vsel %vm6040, 1.0, 0.0
  %v6057 = vsel %vm6041, 1.0, 0.0
  %v6058 = vsel %vm6042, 1.0, 0.0
  %v6059 = vsel %vm6043, 1.0, 0.0
  %v6060 = vsel %vm6044, 1.0, 0.0
  %v6061 = vsel %vm6045, 1.0, 0.0
  %v6062 = vsel %vm6046, 1.0, 0.0
  %v6063 = vsel %vm6047, 1.0, 0.0
  %v6064 = vsel %vm6048, 1.0, 0.0
  %v6065 = vsel %vm6049, 1.0, 0.0
  %v6066 = vsel %vm6050, 1.0, 0.0
  %v6067 = vsel %vm6051, 1.0, 0.0
  %v6068 = vsel %vm6052, 1.0, 0.0
  %v6069 = vpack.c.bf16 %v6054, %v6053
  %v6070 = vpack.c.bf16 %v6056, %v6055
  %v6071 = vpack.c.bf16 %v6058, %v6057
  %v6072 = vpack.c.bf16 %v6060, %v6059
  %v6073 = vpack.c.bf16 %v6062, %v6061
  %v6074 = vpack.c.bf16 %v6064, %v6063
  %v6075 = vpack.c.bf16 %v6066, %v6065
  %v6076 = vpack.c.bf16 %v6068, %v6067
  %6077 = vmatprep.subr.bf16.mxu0 0
  %6078 = vmatpush1.bf16.msra.mxu0 %v6069
  %6079 = vmatprep.subr.bf16.mxu0 0
  %6080 = vmatpush1.bf16.msra.mxu0 %v6070
  %6081 = vmatprep.subr.bf16.mxu0 0
  %6082 = vmatpush1.bf16.msra.mxu0 %v6071
  %6083 = vmatprep.subr.bf16.mxu0 0
  %6084 = vmatpush1.bf16.msra.mxu0 %v6072
  %6085 = vmatprep.subr.bf16.mxu0 0
  %6086 = vmatpush1.bf16.msra.mxu0 %v6073
  %6087 = vmatprep.subr.bf16.mxu0 0
  %6088 = vmatpush1.bf16.msra.mxu0 %v6074
  %6089 = vmatprep.subr.bf16.mxu0 0
  %6090 = vmatpush1.bf16.msra.mxu0 %v6075
  %6091 = vmatprep.subr.bf16.mxu0 0
  %6092 = vmatpush1.bf16.msra.mxu0 %v6076
  %6093 = vmatprep.subr.bf16.mxu0 0
  %6094 = vmatpush1.bf16.msra.mxu0 0
  %6095 = vmatprep.subr.bf16.mxu0 0
  %6096 = vmatpush1.bf16.msra.mxu0 0
  %6097 = vmatprep.subr.bf16.mxu0 0
  %6098 = vmatpush1.bf16.msra.mxu0 0
  %6099 = vmatprep.subr.bf16.mxu0 0
  %6100 = vmatpush1.bf16.msra.mxu0 0
  %6101 = vmatprep.subr.bf16.mxu0 0
  %6102 = vmatpush1.bf16.msra.mxu0 0
  %6103 = vmatprep.subr.bf16.mxu0 0
  %6104 = vmatpush1.bf16.msra.mxu0 0
  %6105 = vmatprep.subr.bf16.mxu0 0
  %6106 = vmatpush1.bf16.msra.mxu0 0
  %6107 = vmatprep.subr.bf16.mxu0 0
  %6108 = vmatpush1.bf16.msra.mxu0 0
  %6109 = vmatprep.mubr.bf16.mxu0 0
  %6110 = vmatmul.mubr.bf16.gmra.mrb[0].mxu0 %v4864
  %v6111 = vpop.f32.mrb[0].mxu0
  %v6112 = vadd.f32 0.0, %v6111
  %v6113 = vpop.f32.mrb[0].mxu0
  %v6114 = vpop.f32.mrb[0].mxu0
  %v6115 = vpop.f32.mrb[0].mxu0
  %6116 = vdwg.mxu0
  %s6117 = scalar_lea.vmem %s2, 64
  %v6118 = vld [vmem:[%s6117] sm:$0xf]
  %v6119 = vld [vmem:[%s6117 + $0x4] sm:$0xf]
  %v6120 = vpack.c.bf16 %v6112, %v6112
  %v6123 = vunpack.c.l.b16 %v6118
  %v6124 = vunpack.c.l.b16 %v6119
  %v6125 = vpack.c.b16 %v6124, %v6123
  %v6127 = vsel %vm5063, %v6125, 0
  %v6130 = vsel %vm5067, %v6120, 0
  %6132 = vmatprep.subr.bf16.mxu0 0
  %6133 = vmatpush1.bf16.msra.mxu0 %v6130
  %6134 = vmatprep.subr.bf16.mxu0 0
  %6135 = vmatpush1.bf16.msra.mxu0 0
  %6136 = vmatprep.subr.bf16.mxu0 0
  %6137 = vmatpush1.bf16.msra.mxu0 0
  %6138 = vmatprep.subr.bf16.mxu0 0
  %6139 = vmatpush1.bf16.msra.mxu0 0
  %6140 = vmatprep.subr.bf16.mxu0 0
  %6141 = vmatpush1.bf16.msra.mxu0 0
  %6142 = vmatprep.subr.bf16.mxu0 0
  %6143 = vmatpush1.bf16.msra.mxu0 0
  %6144 = vmatprep.subr.bf16.mxu0 0
  %6145 = vmatpush1.bf16.msra.mxu0 0
  %6146 = vmatprep.subr.bf16.mxu0 0
  %6147 = vmatpush1.bf16.msra.mxu0 0
  %6148 = vmatprep.subr.bf16.mxu0 0
  %6149 = vmatpush1.bf16.msra.mxu0 0
  %6150 = vmatprep.subr.bf16.mxu0 0
  %6151 = vmatpush1.bf16.msra.mxu0 0
  %6152 = vmatprep.subr.bf16.mxu0 0
  %6153 = vmatpush1.bf16.msra.mxu0 0
  %6154 = vmatprep.subr.bf16.mxu0 0
  %6155 = vmatpush1.bf16.msra.mxu0 0
  %6156 = vmatprep.subr.bf16.mxu0 0
  %6157 = vmatpush1.bf16.msra.mxu0 0
  %6158 = vmatprep.subr.bf16.mxu0 0
  %6159 = vmatpush1.bf16.msra.mxu0 0
  %6160 = vmatprep.subr.bf16.mxu0 0
  %6161 = vmatpush1.bf16.msra.mxu0 0
  %6162 = vmatprep.subr.bf16.mxu0 0
  %6163 = vmatpush1.bf16.msra.mxu0 0
  %6164 = vmatprep.mubr.bf16.mxu0 0
  %6165 = vmatmul.mubr.bf16.gmra.mrb[0].mxu0 %v6127
  %v6166 = vpop.f32.mrb[0].mxu0
  %v6167 = vadd.f32 0.0, %v6166
  %v6168 = vpop.f32.mrb[0].mxu0
  %v6169 = vpop.f32.mrb[0].mxu0
  %v6170 = vadd.f32 0.0, %v6169
  %v6171 = vpop.f32.mrb[0].mxu0
  %6172 = vdwg.mxu0
  %v6173 = vadd.f32 %v6025, %v6167
  %v6174 = vadd.f32 %v6026, %v6170
  %vm6175 = vmand %vm6030, %vm4968
  %vm6176 = vmand %vm6175, %vm4970
  %v6177 = vadd.s32 %v6034, %v4871
  %v6178 = vsel %vm6176, %v6177, 4294967295
  %vm6179 = vcmp.eq.s32.totalorder %v32, %v6178
  %vm6180 = vcmp.eq.s32.totalorder %v33, %v6178
  %vm6181 = vcmp.eq.s32.totalorder %v34, %v6178
  %vm6182 = vcmp.eq.s32.totalorder %v35, %v6178
  %vm6183 = vcmp.eq.s32.totalorder %v36, %v6178
  %vm6184 = vcmp.eq.s32.totalorder %v37, %v6178
  %vm6185 = vcmp.eq.s32.totalorder %v38, %v6178
  %vm6186 = vcmp.eq.s32.totalorder %v39, %v6178
  %vm6187 = vcmp.eq.s32.totalorder %v40, %v6178
  %vm6188 = vcmp.eq.s32.totalorder %v41, %v6178
  %vm6189 = vcmp.eq.s32.totalorder %v42, %v6178
  %vm6190 = vcmp.eq.s32.totalorder %v43, %v6178
  %vm6191 = vcmp.eq.s32.totalorder %v44, %v6178
  %vm6192 = vcmp.eq.s32.totalorder %v45, %v6178
  %vm6193 = vcmp.eq.s32.totalorder %v46, %v6178
  %vm6194 = vcmp.eq.s32.totalorder %v47, %v6178
  %v6195 = vsel %vm6179, 1.0, 0.0
  %v6196 = vsel %vm6180, 1.0, 0.0
  %v6197 = vsel %vm6181, 1.0, 0.0
  %v6198 = vsel %vm6182, 1.0, 0.0
  %v6199 = vsel %vm6183, 1.0, 0.0
  %v6200 = vsel %vm6184, 1.0, 0.0
  %v6201 = vsel %vm6185, 1.0, 0.0
  %v6202 = vsel %vm6186, 1.0, 0.0
  %v6203 = vsel %vm6187, 1.0, 0.0
  %v6204 = vsel %vm6188, 1.0, 0.0
  %v6205 = vsel %vm6189, 1.0, 0.0
  %v6206 = vsel %vm6190, 1.0, 0.0
  %v6207 = vsel %vm6191, 1.0, 0.0
  %v6208 = vsel %vm6192, 1.0, 0.0
  %v6209 = vsel %vm6193, 1.0, 0.0
  %v6210 = vsel %vm6194, 1.0, 0.0
  %v6211 = vpack.c.bf16 %v6196, %v6195
  %v6212 = vpack.c.bf16 %v6198, %v6197
  %v6213 = vpack.c.bf16 %v6200, %v6199
  %v6214 = vpack.c.bf16 %v6202, %v6201
  %v6215 = vpack.c.bf16 %v6204, %v6203
  %v6216 = vpack.c.bf16 %v6206, %v6205
  %v6217 = vpack.c.bf16 %v6208, %v6207
  %v6218 = vpack.c.bf16 %v6210, %v6209
  %6219 = vmatprep.subr.bf16.mxu0 0
  %6220 = vmatpush1.bf16.msra.mxu0 %v6211
  %6221 = vmatprep.subr.bf16.mxu0 0
  %6222 = vmatpush1.bf16.msra.mxu0 %v6212
  %6223 = vmatprep.subr.bf16.mxu0 0
  %6224 = vmatpush1.bf16.msra.mxu0 %v6213
  %6225 = vmatprep.subr.bf16.mxu0 0
  %6226 = vmatpush1.bf16.msra.mxu0 %v6214
  %6227 = vmatprep.subr.bf16.mxu0 0
  %6228 = vmatpush1.bf16.msra.mxu0 %v6215
  %6229 = vmatprep.subr.bf16.mxu0 0
  %6230 = vmatpush1.bf16.msra.mxu0 %v6216
  %6231 = vmatprep.subr.bf16.mxu0 0
  %6232 = vmatpush1.bf16.msra.mxu0 %v6217
  %6233 = vmatprep.subr.bf16.mxu0 0
  %6234 = vmatpush1.bf16.msra.mxu0 %v6218
  %6235 = vmatprep.subr.bf16.mxu0 0
  %6236 = vmatpush1.bf16.msra.mxu0 0
  %6237 = vmatprep.subr.bf16.mxu0 0
  %6238 = vmatpush1.bf16.msra.mxu0 0
  %6239 = vmatprep.subr.bf16.mxu0 0
  %6240 = vmatpush1.bf16.msra.mxu0 0
  %6241 = vmatprep.subr.bf16.mxu0 0
  %6242 = vmatpush1.bf16.msra.mxu0 0
  %6243 = vmatprep.subr.bf16.mxu0 0
  %6244 = vmatpush1.bf16.msra.mxu0 0
  %6245 = vmatprep.subr.bf16.mxu0 0
  %6246 = vmatpush1.bf16.msra.mxu0 0
  %6247 = vmatprep.subr.bf16.mxu0 0
  %6248 = vmatpush1.bf16.msra.mxu0 0
  %6249 = vmatprep.subr.bf16.mxu0 0
  %6250 = vmatpush1.bf16.msra.mxu0 0
  %6251 = vmatprep.mubr.bf16.mxu0 0
  %6252 = vmatmul.mubr.bf16.gmra.mrb[0].mxu0 %v4864
  %v6253 = vpop.f32.mrb[0].mxu0
  %v6254 = vadd.f32 0.0, %v6253
  %v6255 = vpop.f32.mrb[0].mxu0
  %v6256 = vpop.f32.mrb[0].mxu0
  %v6257 = vpop.f32.mrb[0].mxu0
  %6258 = vdwg.mxu0
  %s6259 = scalar_lea.vmem %s2, 72
  %v6260 = vld [vmem:[%s6259] sm:$0xf]
  %v6261 = vld [vmem:[%s6259 + $0x4] sm:$0xf]
  %v6262 = vpack.c.bf16 %v6254, %v6254
  %v6265 = vunpack.c.l.b16 %v6260
  %v6266 = vunpack.c.l.b16 %v6261
  %v6267 = vpack.c.b16 %v6266, %v6265
  %v6269 = vsel %vm5063, %v6267, 0
  %v6272 = vsel %vm5067, %v6262, 0
  %6274 = vmatprep.subr.bf16.mxu0 0
  %6275 = vmatpush1.bf16.msra.mxu0 %v6272
  %6276 = vmatprep.subr.bf16.mxu0 0
  %6277 = vmatpush1.bf16.msra.mxu0 0
  %6278 = vmatprep.subr.bf16.mxu0 0
  %6279 = vmatpush1.bf16.msra.mxu0 0
  %6280 = vmatprep.subr.bf16.mxu0 0
  %6281 = vmatpush1.bf16.msra.mxu0 0
  %6282 = vmatprep.subr.bf16.mxu0 0
  %6283 = vmatpush1.bf16.msra.mxu0 0
  %6284 = vmatprep.subr.bf16.mxu0 0
  %6285 = vmatpush1.bf16.msra.mxu0 0
  %6286 = vmatprep.subr.bf16.mxu0 0
  %6287 = vmatpush1.bf16.msra.mxu0 0
  %6288 = vmatprep.subr.bf16.mxu0 0
  %6289 = vmatpush1.bf16.msra.mxu0 0
  %6290 = vmatprep.subr.bf16.mxu0 0
  %6291 = vmatpush1.bf16.msra.mxu0 0
  %6292 = vmatprep.subr.bf16.mxu0 0
  %6293 = vmatpush1.bf16.msra.mxu0 0
  %6294 = vmatprep.subr.bf16.mxu0 0
  %6295 = vmatpush1.bf16.msra.mxu0 0
  %6296 = vmatprep.subr.bf16.mxu0 0
  %6297 = vmatpush1.bf16.msra.mxu0 0
  %6298 = vmatprep.subr.bf16.mxu0 0
  %6299 = vmatpush1.bf16.msra.mxu0 0
  %6300 = vmatprep.subr.bf16.mxu0 0
  %6301 = vmatpush1.bf16.msra.mxu0 0
  %6302 = vmatprep.subr.bf16.mxu0 0
  %6303 = vmatpush1.bf16.msra.mxu0 0
  %6304 = vmatprep.subr.bf16.mxu0 0
  %6305 = vmatpush1.bf16.msra.mxu0 0
  %6306 = vmatprep.mubr.bf16.mxu0 0
  %6307 = vmatmul.mubr.bf16.gmra.mrb[0].mxu0 %v6269
  %v6308 = vpop.f32.mrb[0].mxu0
  %v6309 = vadd.f32 0.0, %v6308
  %v6310 = vpop.f32.mrb[0].mxu0
  %v6311 = vpop.f32.mrb[0].mxu0
  %v6312 = vadd.f32 0.0, %v6311
  %v6313 = vpop.f32.mrb[0].mxu0
  %6314 = vdwg.mxu0
  %v6315 = vadd.f32 %v6173, %v6309
  %v6316 = vadd.f32 %v6174, %v6312
  %vm6317 = vmand %vm6030, %vm5165
  %vm6318 = vmand %vm6317, %vm5167
  %v6319 = vadd.s32 %v6034, %v5164
  %v6320 = vsel %vm6318, %v6319, 4294967295
  %vm6321 = vcmp.eq.s32.totalorder %v32, %v6320
  %vm6322 = vcmp.eq.s32.totalorder %v33, %v6320
  %vm6323 = vcmp.eq.s32.totalorder %v34, %v6320
  %vm6324 = vcmp.eq.s32.totalorder %v35, %v6320
  %vm6325 = vcmp.eq.s32.totalorder %v36, %v6320
  %vm6326 = vcmp.eq.s32.totalorder %v37, %v6320
  %vm6327 = vcmp.eq.s32.totalorder %v38, %v6320
  %vm6328 = vcmp.eq.s32.totalorder %v39, %v6320
  %vm6329 = vcmp.eq.s32.totalorder %v40, %v6320
  %vm6330 = vcmp.eq.s32.totalorder %v41, %v6320
  %vm6331 = vcmp.eq.s32.totalorder %v42, %v6320
  %vm6332 = vcmp.eq.s32.totalorder %v43, %v6320
  %vm6333 = vcmp.eq.s32.totalorder %v44, %v6320
  %vm6334 = vcmp.eq.s32.totalorder %v45, %v6320
  %vm6335 = vcmp.eq.s32.totalorder %v46, %v6320
  %vm6336 = vcmp.eq.s32.totalorder %v47, %v6320
  %v6337 = vsel %vm6321, 1.0, 0.0
  %v6338 = vsel %vm6322, 1.0, 0.0
  %v6339 = vsel %vm6323, 1.0, 0.0
  %v6340 = vsel %vm6324, 1.0, 0.0
  %v6341 = vsel %vm6325, 1.0, 0.0
  %v6342 = vsel %vm6326, 1.0, 0.0
  %v6343 = vsel %vm6327, 1.0, 0.0
  %v6344 = vsel %vm6328, 1.0, 0.0
  %v6345 = vsel %vm6329, 1.0, 0.0
  %v6346 = vsel %vm6330, 1.0, 0.0
  %v6347 = vsel %vm6331, 1.0, 0.0
  %v6348 = vsel %vm6332, 1.0, 0.0
  %v6349 = vsel %vm6333, 1.0, 0.0
  %v6350 = vsel %vm6334, 1.0, 0.0
  %v6351 = vsel %vm6335, 1.0, 0.0
  %v6352 = vsel %vm6336, 1.0, 0.0
  %v6353 = vpack.c.bf16 %v6338, %v6337
  %v6354 = vpack.c.bf16 %v6340, %v6339
  %v6355 = vpack.c.bf16 %v6342, %v6341
  %v6356 = vpack.c.bf16 %v6344, %v6343
  %v6357 = vpack.c.bf16 %v6346, %v6345
  %v6358 = vpack.c.bf16 %v6348, %v6347
  %v6359 = vpack.c.bf16 %v6350, %v6349
  %v6360 = vpack.c.bf16 %v6352, %v6351
  %6361 = vmatprep.subr.bf16.mxu0 0
  %6362 = vmatpush1.bf16.msra.mxu0 %v6353
  %6363 = vmatprep.subr.bf16.mxu0 0
  %6364 = vmatpush1.bf16.msra.mxu0 %v6354
  %6365 = vmatprep.subr.bf16.mxu0 0
  %6366 = vmatpush1.bf16.msra.mxu0 %v6355
  %6367 = vmatprep.subr.bf16.mxu0 0
  %6368 = vmatpush1.bf16.msra.mxu0 %v6356
  %6369 = vmatprep.subr.bf16.mxu0 0
  %6370 = vmatpush1.bf16.msra.mxu0 %v6357
  %6371 = vmatprep.subr.bf16.mxu0 0
  %6372 = vmatpush1.bf16.msra.mxu0 %v6358
  %6373 = vmatprep.subr.bf16.mxu0 0
  %6374 = vmatpush1.bf16.msra.mxu0 %v6359
  %6375 = vmatprep.subr.bf16.mxu0 0
  %6376 = vmatpush1.bf16.msra.mxu0 %v6360
  %6377 = vmatprep.subr.bf16.mxu0 0
  %6378 = vmatpush1.bf16.msra.mxu0 0
  %6379 = vmatprep.subr.bf16.mxu0 0
  %6380 = vmatpush1.bf16.msra.mxu0 0
  %6381 = vmatprep.subr.bf16.mxu0 0
  %6382 = vmatpush1.bf16.msra.mxu0 0
  %6383 = vmatprep.subr.bf16.mxu0 0
  %6384 = vmatpush1.bf16.msra.mxu0 0
  %6385 = vmatprep.subr.bf16.mxu0 0
  %6386 = vmatpush1.bf16.msra.mxu0 0
  %6387 = vmatprep.subr.bf16.mxu0 0
  %6388 = vmatpush1.bf16.msra.mxu0 0
  %6389 = vmatprep.subr.bf16.mxu0 0
  %6390 = vmatpush1.bf16.msra.mxu0 0
  %6391 = vmatprep.subr.bf16.mxu0 0
  %6392 = vmatpush1.bf16.msra.mxu0 0
  %6393 = vmatprep.mubr.bf16.mxu0 0
  %6394 = vmatmul.mubr.bf16.gmra.mrb[0].mxu0 %v4864
  %v6395 = vpop.f32.mrb[0].mxu0
  %v6396 = vadd.f32 0.0, %v6395
  %v6397 = vpop.f32.mrb[0].mxu0
  %v6398 = vpop.f32.mrb[0].mxu0
  %v6399 = vpop.f32.mrb[0].mxu0
  %6400 = vdwg.mxu0
  %s6401 = scalar_lea.vmem %s2, 80
  %v6402 = vld [vmem:[%s6401] sm:$0xf]
  %v6403 = vld [vmem:[%s6401 + $0x4] sm:$0xf]
  %v6404 = vpack.c.bf16 %v6396, %v6396
  %v6407 = vunpack.c.l.b16 %v6402
  %v6408 = vunpack.c.l.b16 %v6403
  %v6409 = vpack.c.b16 %v6408, %v6407
  %v6411 = vsel %vm5063, %v6409, 0
  %v6414 = vsel %vm5067, %v6404, 0
  %6416 = vmatprep.subr.bf16.mxu0 0
  %6417 = vmatpush1.bf16.msra.mxu0 %v6414
  %6418 = vmatprep.subr.bf16.mxu0 0
  %6419 = vmatpush1.bf16.msra.mxu0 0
  %6420 = vmatprep.subr.bf16.mxu0 0
  %6421 = vmatpush1.bf16.msra.mxu0 0
  %6422 = vmatprep.subr.bf16.mxu0 0
  %6423 = vmatpush1.bf16.msra.mxu0 0
  %6424 = vmatprep.subr.bf16.mxu0 0
  %6425 = vmatpush1.bf16.msra.mxu0 0
  %6426 = vmatprep.subr.bf16.mxu0 0
  %6427 = vmatpush1.bf16.msra.mxu0 0
  %6428 = vmatprep.subr.bf16.mxu0 0
  %6429 = vmatpush1.bf16.msra.mxu0 0
  %6430 = vmatprep.subr.bf16.mxu0 0
  %6431 = vmatpush1.bf16.msra.mxu0 0
  %6432 = vmatprep.subr.bf16.mxu0 0
  %6433 = vmatpush1.bf16.msra.mxu0 0
  %6434 = vmatprep.subr.bf16.mxu0 0
  %6435 = vmatpush1.bf16.msra.mxu0 0
  %6436 = vmatprep.subr.bf16.mxu0 0
  %6437 = vmatpush1.bf16.msra.mxu0 0
  %6438 = vmatprep.subr.bf16.mxu0 0
  %6439 = vmatpush1.bf16.msra.mxu0 0
  %6440 = vmatprep.subr.bf16.mxu0 0
  %6441 = vmatpush1.bf16.msra.mxu0 0
  %6442 = vmatprep.subr.bf16.mxu0 0
  %6443 = vmatpush1.bf16.msra.mxu0 0
  %6444 = vmatprep.subr.bf16.mxu0 0
  %6445 = vmatpush1.bf16.msra.mxu0 0
  %6446 = vmatprep.subr.bf16.mxu0 0
  %6447 = vmatpush1.bf16.msra.mxu0 0
  %6448 = vmatprep.mubr.bf16.mxu0 0
  %6449 = vmatmul.mubr.bf16.gmra.mrb[0].mxu0 %v6411
  %v6450 = vpop.f32.mrb[0].mxu0
  %v6451 = vadd.f32 0.0, %v6450
  %v6452 = vpop.f32.mrb[0].mxu0
  %v6453 = vpop.f32.mrb[0].mxu0
  %v6454 = vadd.f32 0.0, %v6453
  %v6455 = vpop.f32.mrb[0].mxu0
  %6456 = vdwg.mxu0
  %v6457 = vadd.f32 %v6315, %v6451
  %v6458 = vadd.f32 %v6316, %v6454
  %vm6459 = vmand %vm6030, %vm5310
  %vm6460 = vmand %vm6459, %vm5312
  %v6461 = vadd.s32 %v6034, %v5309
  %v6462 = vsel %vm6460, %v6461, 4294967295
  %vm6463 = vcmp.eq.s32.totalorder %v32, %v6462
  %vm6464 = vcmp.eq.s32.totalorder %v33, %v6462
  %vm6465 = vcmp.eq.s32.totalorder %v34, %v6462
  %vm6466 = vcmp.eq.s32.totalorder %v35, %v6462
  %vm6467 = vcmp.eq.s32.totalorder %v36, %v6462
  %vm6468 = vcmp.eq.s32.totalorder %v37, %v6462
  %vm6469 = vcmp.eq.s32.totalorder %v38, %v6462
  %vm6470 = vcmp.eq.s32.totalorder %v39, %v6462
  %vm6471 = vcmp.eq.s32.totalorder %v40, %v6462
  %vm6472 = vcmp.eq.s32.totalorder %v41, %v6462
  %vm6473 = vcmp.eq.s32.totalorder %v42, %v6462
  %vm6474 = vcmp.eq.s32.totalorder %v43, %v6462
  %vm6475 = vcmp.eq.s32.totalorder %v44, %v6462
  %vm6476 = vcmp.eq.s32.totalorder %v45, %v6462
  %vm6477 = vcmp.eq.s32.totalorder %v46, %v6462
  %vm6478 = vcmp.eq.s32.totalorder %v47, %v6462
  %v6479 = vsel %vm6463, 1.0, 0.0
  %v6480 = vsel %vm6464, 1.0, 0.0
  %v6481 = vsel %vm6465, 1.0, 0.0
  %v6482 = vsel %vm6466, 1.0, 0.0
  %v6483 = vsel %vm6467, 1.0, 0.0
  %v6484 = vsel %vm6468, 1.0, 0.0
  %v6485 = vsel %vm6469, 1.0, 0.0
  %v6486 = vsel %vm6470, 1.0, 0.0
  %v6487 = vsel %vm6471, 1.0, 0.0
  %v6488 = vsel %vm6472, 1.0, 0.0
  %v6489 = vsel %vm6473, 1.0, 0.0
  %v6490 = vsel %vm6474, 1.0, 0.0
  %v6491 = vsel %vm6475, 1.0, 0.0
  %v6492 = vsel %vm6476, 1.0, 0.0
  %v6493 = vsel %vm6477, 1.0, 0.0
  %v6494 = vsel %vm6478, 1.0, 0.0
  %v6495 = vpack.c.bf16 %v6480, %v6479
  %v6496 = vpack.c.bf16 %v6482, %v6481
  %v6497 = vpack.c.bf16 %v6484, %v6483
  %v6498 = vpack.c.bf16 %v6486, %v6485
  %v6499 = vpack.c.bf16 %v6488, %v6487
  %v6500 = vpack.c.bf16 %v6490, %v6489
  %v6501 = vpack.c.bf16 %v6492, %v6491
  %v6502 = vpack.c.bf16 %v6494, %v6493
  %6503 = vmatprep.subr.bf16.mxu0 0
  %6504 = vmatpush1.bf16.msra.mxu0 %v6495
  %6505 = vmatprep.subr.bf16.mxu0 0
  %6506 = vmatpush1.bf16.msra.mxu0 %v6496
  %6507 = vmatprep.subr.bf16.mxu0 0
  %6508 = vmatpush1.bf16.msra.mxu0 %v6497
  %6509 = vmatprep.subr.bf16.mxu0 0
  %6510 = vmatpush1.bf16.msra.mxu0 %v6498
  %6511 = vmatprep.subr.bf16.mxu0 0
  %6512 = vmatpush1.bf16.msra.mxu0 %v6499
  %6513 = vmatprep.subr.bf16.mxu0 0
  %6514 = vmatpush1.bf16.msra.mxu0 %v6500
  %6515 = vmatprep.subr.bf16.mxu0 0
  %6516 = vmatpush1.bf16.msra.mxu0 %v6501
  %6517 = vmatprep.subr.bf16.mxu0 0
  %6518 = vmatpush1.bf16.msra.mxu0 %v6502
  %6519 = vmatprep.subr.bf16.mxu0 0
  %6520 = vmatpush1.bf16.msra.mxu0 0
  %6521 = vmatprep.subr.bf16.mxu0 0
  %6522 = vmatpush1.bf16.msra.mxu0 0
  %6523 = vmatprep.subr.bf16.mxu0 0
  %6524 = vmatpush1.bf16.msra.mxu0 0
  %6525 = vmatprep.subr.bf16.mxu0 0
  %6526 = vmatpush1.bf16.msra.mxu0 0
  %6527 = vmatprep.subr.bf16.mxu0 0
  %6528 = vmatpush1.bf16.msra.mxu0 0
  %6529 = vmatprep.subr.bf16.mxu0 0
  %6530 = vmatpush1.bf16.msra.mxu0 0
  %6531 = vmatprep.subr.bf16.mxu0 0
  %6532 = vmatpush1.bf16.msra.mxu0 0
  %6533 = vmatprep.subr.bf16.mxu0 0
  %6534 = vmatpush1.bf16.msra.mxu0 0
  %6535 = vmatprep.mubr.bf16.mxu0 0
  %6536 = vmatmul.mubr.bf16.gmra.mrb[0].mxu0 %v4864
  %v6537 = vpop.f32.mrb[0].mxu0
  %v6538 = vadd.f32 0.0, %v6537
  %v6539 = vpop.f32.mrb[0].mxu0
  %v6540 = vpop.f32.mrb[0].mxu0
  %v6541 = vpop.f32.mrb[0].mxu0
  %6542 = vdwg.mxu0
  %s6543 = scalar_lea.vmem %s2, 88
  %v6544 = vld [vmem:[%s6543] sm:$0xf]
  %v6545 = vld [vmem:[%s6543 + $0x4] sm:$0xf]
  %v6546 = vpack.c.bf16 %v6538, %v6538
  %v6549 = vunpack.c.l.b16 %v6544
  %v6550 = vunpack.c.l.b16 %v6545
  %v6551 = vpack.c.b16 %v6550, %v6549
  %v6553 = vsel %vm5063, %v6551, 0
  %v6556 = vsel %vm5067, %v6546, 0
  %6558 = vmatprep.subr.bf16.mxu0 0
  %6559 = vmatpush1.bf16.msra.mxu0 %v6556
  %6560 = vmatprep.subr.bf16.mxu0 0
  %6561 = vmatpush1.bf16.msra.mxu0 0
  %6562 = vmatprep.subr.bf16.mxu0 0
  %6563 = vmatpush1.bf16.msra.mxu0 0
  %6564 = vmatprep.subr.bf16.mxu0 0
  %6565 = vmatpush1.bf16.msra.mxu0 0
  %6566 = vmatprep.subr.bf16.mxu0 0
  %6567 = vmatpush1.bf16.msra.mxu0 0
  %6568 = vmatprep.subr.bf16.mxu0 0
  %6569 = vmatpush1.bf16.msra.mxu0 0
  %6570 = vmatprep.subr.bf16.mxu0 0
  %6571 = vmatpush1.bf16.msra.mxu0 0
  %6572 = vmatprep.subr.bf16.mxu0 0
  %6573 = vmatpush1.bf16.msra.mxu0 0
  %6574 = vmatprep.subr.bf16.mxu0 0
  %6575 = vmatpush1.bf16.msra.mxu0 0
  %6576 = vmatprep.subr.bf16.mxu0 0
  %6577 = vmatpush1.bf16.msra.mxu0 0
  %6578 = vmatprep.subr.bf16.mxu0 0
  %6579 = vmatpush1.bf16.msra.mxu0 0
  %6580 = vmatprep.subr.bf16.mxu0 0
  %6581 = vmatpush1.bf16.msra.mxu0 0
  %6582 = vmatprep.subr.bf16.mxu0 0
  %6583 = vmatpush1.bf16.msra.mxu0 0
  %6584 = vmatprep.subr.bf16.mxu0 0
  %6585 = vmatpush1.bf16.msra.mxu0 0
  %6586 = vmatprep.subr.bf16.mxu0 0
  %6587 = vmatpush1.bf16.msra.mxu0 0
  %6588 = vmatprep.subr.bf16.mxu0 0
  %6589 = vmatpush1.bf16.msra.mxu0 0
  %6590 = vmatprep.mubr.bf16.mxu0 0
  %6591 = vmatmul.mubr.bf16.gmra.mrb[0].mxu0 %v6553
  %v6592 = vpop.f32.mrb[0].mxu0
  %v6593 = vadd.f32 0.0, %v6592
  %v6594 = vpop.f32.mrb[0].mxu0
  %v6595 = vpop.f32.mrb[0].mxu0
  %v6596 = vadd.f32 0.0, %v6595
  %v6597 = vpop.f32.mrb[0].mxu0
  %6598 = vdwg.mxu0
  %v6599 = vadd.f32 %v6457, %v6593
  %v6600 = vadd.f32 %v6458, %v6596
  %v6601 = vadd.s32 %v4869, 2
  %vm6602 = vcmp.ge.s32.totalorder %v6601, 0
  %vm6603 = vcmp.lt.s32.totalorder %v6601, 8
  %vm6604 = vmand %vm6602, %vm6603
  %vm6605 = vmand %vm6604, %vm4876
  %vm6606 = vmand %vm6605, %vm4878
  %v6607 = vmul.u32 %v6601, 8
  %v6608 = vadd.s32 %v4880, %v6607
  %v6609 = vadd.s32 %v6608, %v4872
  %v6610 = vsel %vm6606, %v6609, 4294967295
  %vm6611 = vcmp.eq.s32.totalorder %v32, %v6610
  %vm6612 = vcmp.eq.s32.totalorder %v33, %v6610
  %vm6613 = vcmp.eq.s32.totalorder %v34, %v6610
  %vm6614 = vcmp.eq.s32.totalorder %v35, %v6610
  %vm6615 = vcmp.eq.s32.totalorder %v36, %v6610
  %vm6616 = vcmp.eq.s32.totalorder %v37, %v6610
  %vm6617 = vcmp.eq.s32.totalorder %v38, %v6610
  %vm6618 = vcmp.eq.s32.totalorder %v39, %v6610
  %vm6619 = vcmp.eq.s32.totalorder %v40, %v6610
  %vm6620 = vcmp.eq.s32.totalorder %v41, %v6610
  %vm6621 = vcmp.eq.s32.totalorder %v42, %v6610
  %vm6622 = vcmp.eq.s32.totalorder %v43, %v6610
  %vm6623 = vcmp.eq.s32.totalorder %v44, %v6610
  %vm6624 = vcmp.eq.s32.totalorder %v45, %v6610
  %vm6625 = vcmp.eq.s32.totalorder %v46, %v6610
  %vm6626 = vcmp.eq.s32.totalorder %v47, %v6610
  %v6627 = vsel %vm6611, 1.0, 0.0
  %v6628 = vsel %vm6612, 1.0, 0.0
  %v6629 = vsel %vm6613, 1.0, 0.0
  %v6630 = vsel %vm6614, 1.0, 0.0
  %v6631 = vsel %vm6615, 1.0, 0.0
  %v6632 = vsel %vm6616, 1.0, 0.0
  %v6633 = vsel %vm6617, 1.0, 0.0
  %v6634 = vsel %vm6618, 1.0, 0.0
  %v6635 = vsel %vm6619, 1.0, 0.0
  %v6636 = vsel %vm6620, 1.0, 0.0
  %v6637 = vsel %vm6621, 1.0, 0.0
  %v6638 = vsel %vm6622, 1.0, 0.0
  %v6639 = vsel %vm6623, 1.0, 0.0
  %v6640 = vsel %vm6624, 1.0, 0.0
  %v6641 = vsel %vm6625, 1.0, 0.0
  %v6642 = vsel %vm6626, 1.0, 0.0
  %v6643 = vpack.c.bf16 %v6628, %v6627
  %v6644 = vpack.c.bf16 %v6630, %v6629
  %v6645 = vpack.c.bf16 %v6632, %v6631
  %v6646 = vpack.c.bf16 %v6634, %v6633
  %v6647 = vpack.c.bf16 %v6636, %v6635
  %v6648 = vpack.c.bf16 %v6638, %v6637
  %v6649 = vpack.c.bf16 %v6640, %v6639
  %v6650 = vpack.c.bf16 %v6642, %v6641
  %6651 = vmatprep.subr.bf16.mxu0 0
  %6652 = vmatpush1.bf16.msra.mxu0 %v6643
  %6653 = vmatprep.subr.bf16.mxu0 0
  %6654 = vmatpush1.bf16.msra.mxu0 %v6644
  %6655 = vmatprep.subr.bf16.mxu0 0
  %6656 = vmatpush1.bf16.msra.mxu0 %v6645
  %6657 = vmatprep.subr.bf16.mxu0 0
  %6658 = vmatpush1.bf16.msra.mxu0 %v6646
  %6659 = vmatprep.subr.bf16.mxu0 0
  %6660 = vmatpush1.bf16.msra.mxu0 %v6647
  %6661 = vmatprep.subr.bf16.mxu0 0
  %6662 = vmatpush1.bf16.msra.mxu0 %v6648
  %6663 = vmatprep.subr.bf16.mxu0 0
  %6664 = vmatpush1.bf16.msra.mxu0 %v6649
  %6665 = vmatprep.subr.bf16.mxu0 0
  %6666 = vmatpush1.bf16.msra.mxu0 %v6650
  %6667 = vmatprep.subr.bf16.mxu0 0
  %6668 = vmatpush1.bf16.msra.mxu0 0
  %6669 = vmatprep.subr.bf16.mxu0 0
  %6670 = vmatpush1.bf16.msra.mxu0 0
  %6671 = vmatprep.subr.bf16.mxu0 0
  %6672 = vmatpush1.bf16.msra.mxu0 0
  %6673 = vmatprep.subr.bf16.mxu0 0
  %6674 = vmatpush1.bf16.msra.mxu0 0
  %6675 = vmatprep.subr.bf16.mxu0 0
  %6676 = vmatpush1.bf16.msra.mxu0 0
  %6677 = vmatprep.subr.bf16.mxu0 0
  %6678 = vmatpush1.bf16.msra.mxu0 0
  %6679 = vmatprep.subr.bf16.mxu0 0
  %6680 = vmatpush1.bf16.msra.mxu0 0
  %6681 = vmatprep.subr.bf16.mxu0 0
  %6682 = vmatpush1.bf16.msra.mxu0 0
  %6683 = vmatprep.mubr.bf16.mxu0 0
  %6684 = vmatmul.mubr.bf16.gmra.mrb[0].mxu0 %v4864
  %v6685 = vpop.f32.mrb[0].mxu0
  %v6686 = vadd.f32 0.0, %v6685
  %v6687 = vpop.f32.mrb[0].mxu0
  %v6688 = vpop.f32.mrb[0].mxu0
  %v6689 = vpop.f32.mrb[0].mxu0
  %6690 = vdwg.mxu0
  %s6691 = scalar_lea.vmem %s2, 96
  %v6692 = vld [vmem:[%s6691] sm:$0xf]
  %v6693 = vld [vmem:[%s6691 + $0x4] sm:$0xf]
  %v6694 = vpack.c.bf16 %v6686, %v6686
  %v6697 = vunpack.c.l.b16 %v6692
  %v6698 = vunpack.c.l.b16 %v6693
  %v6699 = vpack.c.b16 %v6698, %v6697
  %v6701 = vsel %vm5063, %v6699, 0
  %v6704 = vsel %vm5067, %v6694, 0
  %6706 = vmatprep.subr.bf16.mxu0 0
  %6707 = vmatpush1.bf16.msra.mxu0 %v6704
  %6708 = vmatprep.subr.bf16.mxu0 0
  %6709 = vmatpush1.bf16.msra.mxu0 0
  %6710 = vmatprep.subr.bf16.mxu0 0
  %6711 = vmatpush1.bf16.msra.mxu0 0
  %6712 = vmatprep.subr.bf16.mxu0 0
  %6713 = vmatpush1.bf16.msra.mxu0 0
  %6714 = vmatprep.subr.bf16.mxu0 0
  %6715 = vmatpush1.bf16.msra.mxu0 0
  %6716 = vmatprep.subr.bf16.mxu0 0
  %6717 = vmatpush1.bf16.msra.mxu0 0
  %6718 = vmatprep.subr.bf16.mxu0 0
  %6719 = vmatpush1.bf16.msra.mxu0 0
  %6720 = vmatprep.subr.bf16.mxu0 0
  %6721 = vmatpush1.bf16.msra.mxu0 0
  %6722 = vmatprep.subr.bf16.mxu0 0
  %6723 = vmatpush1.bf16.msra.mxu0 0
  %6724 = vmatprep.subr.bf16.mxu0 0
  %6725 = vmatpush1.bf16.msra.mxu0 0
  %6726 = vmatprep.subr.bf16.mxu0 0
  %6727 = vmatpush1.bf16.msra.mxu0 0
  %6728 = vmatprep.subr.bf16.mxu0 0
  %6729 = vmatpush1.bf16.msra.mxu0 0
  %6730 = vmatprep.subr.bf16.mxu0 0
  %6731 = vmatpush1.bf16.msra.mxu0 0
  %6732 = vmatprep.subr.bf16.mxu0 0
  %6733 = vmatpush1.bf16.msra.mxu0 0
  %6734 = vmatprep.subr.bf16.mxu0 0
  %6735 = vmatpush1.bf16.msra.mxu0 0
  %6736 = vmatprep.subr.bf16.mxu0 0
  %6737 = vmatpush1.bf16.msra.mxu0 0
  %6738 = vmatprep.mubr.bf16.mxu0 0
  %6739 = vmatmul.mubr.bf16.gmra.mrb[0].mxu0 %v6701
  %v6740 = vpop.f32.mrb[0].mxu0
  %v6741 = vadd.f32 0.0, %v6740
  %v6742 = vpop.f32.mrb[0].mxu0
  %v6743 = vpop.f32.mrb[0].mxu0
  %v6744 = vadd.f32 0.0, %v6743
  %v6745 = vpop.f32.mrb[0].mxu0
  %6746 = vdwg.mxu0
  %v6747 = vadd.f32 %v6599, %v6741
  %v6748 = vadd.f32 %v6600, %v6744
  %vm6749 = vmand %vm6604, %vm4968
  %vm6750 = vmand %vm6749, %vm4970
  %v6751 = vadd.s32 %v6608, %v4871
  %v6752 = vsel %vm6750, %v6751, 4294967295
  %vm6753 = vcmp.eq.s32.totalorder %v32, %v6752
  %vm6754 = vcmp.eq.s32.totalorder %v33, %v6752
  %vm6755 = vcmp.eq.s32.totalorder %v34, %v6752
  %vm6756 = vcmp.eq.s32.totalorder %v35, %v6752
  %vm6757 = vcmp.eq.s32.totalorder %v36, %v6752
  %vm6758 = vcmp.eq.s32.totalorder %v37, %v6752
  %vm6759 = vcmp.eq.s32.totalorder %v38, %v6752
  %vm6760 = vcmp.eq.s32.totalorder %v39, %v6752
  %vm6761 = vcmp.eq.s32.totalorder %v40, %v6752
  %vm6762 = vcmp.eq.s32.totalorder %v41, %v6752
  %vm6763 = vcmp.eq.s32.totalorder %v42, %v6752
  %vm6764 = vcmp.eq.s32.totalorder %v43, %v6752
  %vm6765 = vcmp.eq.s32.totalorder %v44, %v6752
  %vm6766 = vcmp.eq.s32.totalorder %v45, %v6752
  %vm6767 = vcmp.eq.s32.totalorder %v46, %v6752
  %vm6768 = vcmp.eq.s32.totalorder %v47, %v6752
  %v6769 = vsel %vm6753, 1.0, 0.0
  %v6770 = vsel %vm6754, 1.0, 0.0
  %v6771 = vsel %vm6755, 1.0, 0.0
  %v6772 = vsel %vm6756, 1.0, 0.0
  %v6773 = vsel %vm6757, 1.0, 0.0
  %v6774 = vsel %vm6758, 1.0, 0.0
  %v6775 = vsel %vm6759, 1.0, 0.0
  %v6776 = vsel %vm6760, 1.0, 0.0
  %v6777 = vsel %vm6761, 1.0, 0.0
  %v6778 = vsel %vm6762, 1.0, 0.0
  %v6779 = vsel %vm6763, 1.0, 0.0
  %v6780 = vsel %vm6764, 1.0, 0.0
  %v6781 = vsel %vm6765, 1.0, 0.0
  %v6782 = vsel %vm6766, 1.0, 0.0
  %v6783 = vsel %vm6767, 1.0, 0.0
  %v6784 = vsel %vm6768, 1.0, 0.0
  %v6785 = vpack.c.bf16 %v6770, %v6769
  %v6786 = vpack.c.bf16 %v6772, %v6771
  %v6787 = vpack.c.bf16 %v6774, %v6773
  %v6788 = vpack.c.bf16 %v6776, %v6775
  %v6789 = vpack.c.bf16 %v6778, %v6777
  %v6790 = vpack.c.bf16 %v6780, %v6779
  %v6791 = vpack.c.bf16 %v6782, %v6781
  %v6792 = vpack.c.bf16 %v6784, %v6783
  %6793 = vmatprep.subr.bf16.mxu0 0
  %6794 = vmatpush1.bf16.msra.mxu0 %v6785
  %6795 = vmatprep.subr.bf16.mxu0 0
  %6796 = vmatpush1.bf16.msra.mxu0 %v6786
  %6797 = vmatprep.subr.bf16.mxu0 0
  %6798 = vmatpush1.bf16.msra.mxu0 %v6787
  %6799 = vmatprep.subr.bf16.mxu0 0
  %6800 = vmatpush1.bf16.msra.mxu0 %v6788
  %6801 = vmatprep.subr.bf16.mxu0 0
  %6802 = vmatpush1.bf16.msra.mxu0 %v6789
  %6803 = vmatprep.subr.bf16.mxu0 0
  %6804 = vmatpush1.bf16.msra.mxu0 %v6790
  %6805 = vmatprep.subr.bf16.mxu0 0
  %6806 = vmatpush1.bf16.msra.mxu0 %v6791
  %6807 = vmatprep.subr.bf16.mxu0 0
  %6808 = vmatpush1.bf16.msra.mxu0 %v6792
  %6809 = vmatprep.subr.bf16.mxu0 0
  %6810 = vmatpush1.bf16.msra.mxu0 0
  %6811 = vmatprep.subr.bf16.mxu0 0
  %6812 = vmatpush1.bf16.msra.mxu0 0
  %6813 = vmatprep.subr.bf16.mxu0 0
  %6814 = vmatpush1.bf16.msra.mxu0 0
  %6815 = vmatprep.subr.bf16.mxu0 0
  %6816 = vmatpush1.bf16.msra.mxu0 0
  %6817 = vmatprep.subr.bf16.mxu0 0
  %6818 = vmatpush1.bf16.msra.mxu0 0
  %6819 = vmatprep.subr.bf16.mxu0 0
  %6820 = vmatpush1.bf16.msra.mxu0 0
  %6821 = vmatprep.subr.bf16.mxu0 0
  %6822 = vmatpush1.bf16.msra.mxu0 0
  %6823 = vmatprep.subr.bf16.mxu0 0
  %6824 = vmatpush1.bf16.msra.mxu0 0
  %6825 = vmatprep.mubr.bf16.mxu0 0
  %6826 = vmatmul.mubr.bf16.gmra.mrb[0].mxu0 %v4864
  %v6827 = vpop.f32.mrb[0].mxu0
  %v6828 = vadd.f32 0.0, %v6827
  %v6829 = vpop.f32.mrb[0].mxu0
  %v6830 = vpop.f32.mrb[0].mxu0
  %v6831 = vpop.f32.mrb[0].mxu0
  %6832 = vdwg.mxu0
  %s6833 = scalar_lea.vmem %s2, 104
  %v6834 = vld [vmem:[%s6833] sm:$0xf]
  %v6835 = vld [vmem:[%s6833 + $0x4] sm:$0xf]
  %v6836 = vpack.c.bf16 %v6828, %v6828
  %v6839 = vunpack.c.l.b16 %v6834
  %v6840 = vunpack.c.l.b16 %v6835
  %v6841 = vpack.c.b16 %v6840, %v6839
  %v6843 = vsel %vm5063, %v6841, 0
  %v6846 = vsel %vm5067, %v6836, 0
  %6848 = vmatprep.subr.bf16.mxu0 0
  %6849 = vmatpush1.bf16.msra.mxu0 %v6846
  %6850 = vmatprep.subr.bf16.mxu0 0
  %6851 = vmatpush1.bf16.msra.mxu0 0
  %6852 = vmatprep.subr.bf16.mxu0 0
  %6853 = vmatpush1.bf16.msra.mxu0 0
  %6854 = vmatprep.subr.bf16.mxu0 0
  %6855 = vmatpush1.bf16.msra.mxu0 0
  %6856 = vmatprep.subr.bf16.mxu0 0
  %6857 = vmatpush1.bf16.msra.mxu0 0
  %6858 = vmatprep.subr.bf16.mxu0 0
  %6859 = vmatpush1.bf16.msra.mxu0 0
  %6860 = vmatprep.subr.bf16.mxu0 0
  %6861 = vmatpush1.bf16.msra.mxu0 0
  %6862 = vmatprep.subr.bf16.mxu0 0
  %6863 = vmatpush1.bf16.msra.mxu0 0
  %6864 = vmatprep.subr.bf16.mxu0 0
  %6865 = vmatpush1.bf16.msra.mxu0 0
  %6866 = vmatprep.subr.bf16.mxu0 0
  %6867 = vmatpush1.bf16.msra.mxu0 0
  %6868 = vmatprep.subr.bf16.mxu0 0
  %6869 = vmatpush1.bf16.msra.mxu0 0
  %6870 = vmatprep.subr.bf16.mxu0 0
  %6871 = vmatpush1.bf16.msra.mxu0 0
  %6872 = vmatprep.subr.bf16.mxu0 0
  %6873 = vmatpush1.bf16.msra.mxu0 0
  %6874 = vmatprep.subr.bf16.mxu0 0
  %6875 = vmatpush1.bf16.msra.mxu0 0
  %6876 = vmatprep.subr.bf16.mxu0 0
  %6877 = vmatpush1.bf16.msra.mxu0 0
  %6878 = vmatprep.subr.bf16.mxu0 0
  %6879 = vmatpush1.bf16.msra.mxu0 0
  %6880 = vmatprep.mubr.bf16.mxu0 0
  %6881 = vmatmul.mubr.bf16.gmra.mrb[0].mxu0 %v6843
  %v6882 = vpop.f32.mrb[0].mxu0
  %v6883 = vadd.f32 0.0, %v6882
  %v6884 = vpop.f32.mrb[0].mxu0
  %v6885 = vpop.f32.mrb[0].mxu0
  %v6886 = vadd.f32 0.0, %v6885
  %v6887 = vpop.f32.mrb[0].mxu0
  %6888 = vdwg.mxu0
  %v6889 = vadd.f32 %v6747, %v6883
  %v6890 = vadd.f32 %v6748, %v6886
  %vm6891 = vmand %vm6604, %vm5165
  %vm6892 = vmand %vm6891, %vm5167
  %v6893 = vadd.s32 %v6608, %v5164
  %v6894 = vsel %vm6892, %v6893, 4294967295
  %vm6895 = vcmp.eq.s32.totalorder %v32, %v6894
  %vm6896 = vcmp.eq.s32.totalorder %v33, %v6894
  %vm6897 = vcmp.eq.s32.totalorder %v34, %v6894
  %vm6898 = vcmp.eq.s32.totalorder %v35, %v6894
  %vm6899 = vcmp.eq.s32.totalorder %v36, %v6894
  %vm6900 = vcmp.eq.s32.totalorder %v37, %v6894
  %vm6901 = vcmp.eq.s32.totalorder %v38, %v6894
  %vm6902 = vcmp.eq.s32.totalorder %v39, %v6894
  %vm6903 = vcmp.eq.s32.totalorder %v40, %v6894
  %vm6904 = vcmp.eq.s32.totalorder %v41, %v6894
  %vm6905 = vcmp.eq.s32.totalorder %v42, %v6894
  %vm6906 = vcmp.eq.s32.totalorder %v43, %v6894
  %vm6907 = vcmp.eq.s32.totalorder %v44, %v6894
  %vm6908 = vcmp.eq.s32.totalorder %v45, %v6894
  %vm6909 = vcmp.eq.s32.totalorder %v46, %v6894
  %vm6910 = vcmp.eq.s32.totalorder %v47, %v6894
  %v6911 = vsel %vm6895, 1.0, 0.0
  %v6912 = vsel %vm6896, 1.0, 0.0
  %v6913 = vsel %vm6897, 1.0, 0.0
  %v6914 = vsel %vm6898, 1.0, 0.0
  %v6915 = vsel %vm6899, 1.0, 0.0
  %v6916 = vsel %vm6900, 1.0, 0.0
  %v6917 = vsel %vm6901, 1.0, 0.0
  %v6918 = vsel %vm6902, 1.0, 0.0
  %v6919 = vsel %vm6903, 1.0, 0.0
  %v6920 = vsel %vm6904, 1.0, 0.0
  %v6921 = vsel %vm6905, 1.0, 0.0
  %v6922 = vsel %vm6906, 1.0, 0.0
  %v6923 = vsel %vm6907, 1.0, 0.0
  %v6924 = vsel %vm6908, 1.0, 0.0
  %v6925 = vsel %vm6909, 1.0, 0.0
  %v6926 = vsel %vm6910, 1.0, 0.0
  %v6927 = vpack.c.bf16 %v6912, %v6911
  %v6928 = vpack.c.bf16 %v6914, %v6913
  %v6929 = vpack.c.bf16 %v6916, %v6915
  %v6930 = vpack.c.bf16 %v6918, %v6917
  %v6931 = vpack.c.bf16 %v6920, %v6919
  %v6932 = vpack.c.bf16 %v6922, %v6921
  %v6933 = vpack.c.bf16 %v6924, %v6923
  %v6934 = vpack.c.bf16 %v6926, %v6925
  %6935 = vmatprep.subr.bf16.mxu0 0
  %6936 = vmatpush1.bf16.msra.mxu0 %v6927
  %6937 = vmatprep.subr.bf16.mxu0 0
  %6938 = vmatpush1.bf16.msra.mxu0 %v6928
  %6939 = vmatprep.subr.bf16.mxu0 0
  %6940 = vmatpush1.bf16.msra.mxu0 %v6929
  %6941 = vmatprep.subr.bf16.mxu0 0
  %6942 = vmatpush1.bf16.msra.mxu0 %v6930
  %6943 = vmatprep.subr.bf16.mxu0 0
  %6944 = vmatpush1.bf16.msra.mxu0 %v6931
  %6945 = vmatprep.subr.bf16.mxu0 0
  %6946 = vmatpush1.bf16.msra.mxu0 %v6932
  %6947 = vmatprep.subr.bf16.mxu0 0
  %6948 = vmatpush1.bf16.msra.mxu0 %v6933
  %6949 = vmatprep.subr.bf16.mxu0 0
  %6950 = vmatpush1.bf16.msra.mxu0 %v6934
  %6951 = vmatprep.subr.bf16.mxu0 0
  %6952 = vmatpush1.bf16.msra.mxu0 0
  %6953 = vmatprep.subr.bf16.mxu0 0
  %6954 = vmatpush1.bf16.msra.mxu0 0
  %6955 = vmatprep.subr.bf16.mxu0 0
  %6956 = vmatpush1.bf16.msra.mxu0 0
  %6957 = vmatprep.subr.bf16.mxu0 0
  %6958 = vmatpush1.bf16.msra.mxu0 0
  %6959 = vmatprep.subr.bf16.mxu0 0
  %6960 = vmatpush1.bf16.msra.mxu0 0
  %6961 = vmatprep.subr.bf16.mxu0 0
  %6962 = vmatpush1.bf16.msra.mxu0 0
  %6963 = vmatprep.subr.bf16.mxu0 0
  %6964 = vmatpush1.bf16.msra.mxu0 0
  %6965 = vmatprep.subr.bf16.mxu0 0
  %6966 = vmatpush1.bf16.msra.mxu0 0
  %6967 = vmatprep.mubr.bf16.mxu0 0
  %6968 = vmatmul.mubr.bf16.gmra.mrb[0].mxu0 %v4864
  %v6969 = vpop.f32.mrb[0].mxu0
  %v6970 = vadd.f32 0.0, %v6969
  %v6971 = vpop.f32.mrb[0].mxu0
  %v6972 = vpop.f32.mrb[0].mxu0
  %v6973 = vpop.f32.mrb[0].mxu0
  %6974 = vdwg.mxu0
  %s6975 = scalar_lea.vmem %s2, 112
  %v6976 = vld [vmem:[%s6975] sm:$0xf]
  %v6977 = vld [vmem:[%s6975 + $0x4] sm:$0xf]
  %v6978 = vpack.c.bf16 %v6970, %v6970
  %v6981 = vunpack.c.l.b16 %v6976
  %v6982 = vunpack.c.l.b16 %v6977
  %v6983 = vpack.c.b16 %v6982, %v6981
  %v6985 = vsel %vm5063, %v6983, 0
  %v6988 = vsel %vm5067, %v6978, 0
  %6990 = vmatprep.subr.bf16.mxu0 0
  %6991 = vmatpush1.bf16.msra.mxu0 %v6988
  %6992 = vmatprep.subr.bf16.mxu0 0
  %6993 = vmatpush1.bf16.msra.mxu0 0
  %6994 = vmatprep.subr.bf16.mxu0 0
  %6995 = vmatpush1.bf16.msra.mxu0 0
  %6996 = vmatprep.subr.bf16.mxu0 0
  %6997 = vmatpush1.bf16.msra.mxu0 0
  %6998 = vmatprep.subr.bf16.mxu0 0
  %6999 = vmatpush1.bf16.msra.mxu0 0
  %7000 = vmatprep.subr.bf16.mxu0 0
  %7001 = vmatpush1.bf16.msra.mxu0 0
  %7002 = vmatprep.subr.bf16.mxu0 0
  %7003 = vmatpush1.bf16.msra.mxu0 0
  %7004 = vmatprep.subr.bf16.mxu0 0
  %7005 = vmatpush1.bf16.msra.mxu0 0
  %7006 = vmatprep.subr.bf16.mxu0 0
  %7007 = vmatpush1.bf16.msra.mxu0 0
  %7008 = vmatprep.subr.bf16.mxu0 0
  %7009 = vmatpush1.bf16.msra.mxu0 0
  %7010 = vmatprep.subr.bf16.mxu0 0
  %7011 = vmatpush1.bf16.msra.mxu0 0
  %7012 = vmatprep.subr.bf16.mxu0 0
  %7013 = vmatpush1.bf16.msra.mxu0 0
  %7014 = vmatprep.subr.bf16.mxu0 0
  %7015 = vmatpush1.bf16.msra.mxu0 0
  %7016 = vmatprep.subr.bf16.mxu0 0
  %7017 = vmatpush1.bf16.msra.mxu0 0
  %7018 = vmatprep.subr.bf16.mxu0 0
  %7019 = vmatpush1.bf16.msra.mxu0 0
  %7020 = vmatprep.subr.bf16.mxu0 0
  %7021 = vmatpush1.bf16.msra.mxu0 0
  %7022 = vmatprep.mubr.bf16.mxu0 0
  %7023 = vmatmul.mubr.bf16.gmra.mrb[0].mxu0 %v6985
  %v7024 = vpop.f32.mrb[0].mxu0
  %v7025 = vadd.f32 0.0, %v7024
  %v7026 = vpop.f32.mrb[0].mxu0
  %v7027 = vpop.f32.mrb[0].mxu0
  %v7028 = vadd.f32 0.0, %v7027
  %v7029 = vpop.f32.mrb[0].mxu0
  %7030 = vdwg.mxu0
  %v7031 = vadd.f32 %v6889, %v7025
  %v7032 = vadd.f32 %v6890, %v7028
  %vm7033 = vmand %vm6604, %vm5310
  %vm7034 = vmand %vm7033, %vm5312
  %v7035 = vadd.s32 %v6608, %v5309
  %v7036 = vsel %vm7034, %v7035, 4294967295
  %vm7037 = vcmp.eq.s32.totalorder %v32, %v7036
  %vm7038 = vcmp.eq.s32.totalorder %v33, %v7036
  %vm7039 = vcmp.eq.s32.totalorder %v34, %v7036
  %vm7040 = vcmp.eq.s32.totalorder %v35, %v7036
  %vm7041 = vcmp.eq.s32.totalorder %v36, %v7036
  %vm7042 = vcmp.eq.s32.totalorder %v37, %v7036
  %vm7043 = vcmp.eq.s32.totalorder %v38, %v7036
  %vm7044 = vcmp.eq.s32.totalorder %v39, %v7036
  %vm7045 = vcmp.eq.s32.totalorder %v40, %v7036
  %vm7046 = vcmp.eq.s32.totalorder %v41, %v7036
  %vm7047 = vcmp.eq.s32.totalorder %v42, %v7036
  %vm7048 = vcmp.eq.s32.totalorder %v43, %v7036
  %vm7049 = vcmp.eq.s32.totalorder %v44, %v7036
  %vm7050 = vcmp.eq.s32.totalorder %v45, %v7036
  %vm7051 = vcmp.eq.s32.totalorder %v46, %v7036
  %vm7052 = vcmp.eq.s32.totalorder %v47, %v7036
  %v7053 = vsel %vm7037, 1.0, 0.0
  %v7054 = vsel %vm7038, 1.0, 0.0
  %v7055 = vsel %vm7039, 1.0, 0.0
  %v7056 = vsel %vm7040, 1.0, 0.0
  %v7057 = vsel %vm7041, 1.0, 0.0
  %v7058 = vsel %vm7042, 1.0, 0.0
  %v7059 = vsel %vm7043, 1.0, 0.0
  %v7060 = vsel %vm7044, 1.0, 0.0
  %v7061 = vsel %vm7045, 1.0, 0.0
  %v7062 = vsel %vm7046, 1.0, 0.0
  %v7063 = vsel %vm7047, 1.0, 0.0
  %v7064 = vsel %vm7048, 1.0, 0.0
  %v7065 = vsel %vm7049, 1.0, 0.0
  %v7066 = vsel %vm7050, 1.0, 0.0
  %v7067 = vsel %vm7051, 1.0, 0.0
  %v7068 = vsel %vm7052, 1.0, 0.0
  %v7069 = vpack.c.bf16 %v7054, %v7053
  %v7070 = vpack.c.bf16 %v7056, %v7055
  %v7071 = vpack.c.bf16 %v7058, %v7057
  %v7072 = vpack.c.bf16 %v7060, %v7059
  %v7073 = vpack.c.bf16 %v7062, %v7061
  %v7074 = vpack.c.bf16 %v7064, %v7063
  %v7075 = vpack.c.bf16 %v7066, %v7065
  %v7076 = vpack.c.bf16 %v7068, %v7067
  %7077 = vmatprep.subr.bf16.mxu0 0
  %7078 = vmatpush1.bf16.msra.mxu0 %v7069
  %7079 = vmatprep.subr.bf16.mxu0 0
  %7080 = vmatpush1.bf16.msra.mxu0 %v7070
  %7081 = vmatprep.subr.bf16.mxu0 0
  %7082 = vmatpush1.bf16.msra.mxu0 %v7071
  %7083 = vmatprep.subr.bf16.mxu0 0
  %7084 = vmatpush1.bf16.msra.mxu0 %v7072
  %7085 = vmatprep.subr.bf16.mxu0 0
  %7086 = vmatpush1.bf16.msra.mxu0 %v7073
  %7087 = vmatprep.subr.bf16.mxu0 0
  %7088 = vmatpush1.bf16.msra.mxu0 %v7074
  %7089 = vmatprep.subr.bf16.mxu0 0
  %7090 = vmatpush1.bf16.msra.mxu0 %v7075
  %7091 = vmatprep.subr.bf16.mxu0 0
  %7092 = vmatpush1.bf16.msra.mxu0 %v7076
  %7093 = vmatprep.subr.bf16.mxu0 0
  %7094 = vmatpush1.bf16.msra.mxu0 0
  %7095 = vmatprep.subr.bf16.mxu0 0
  %7096 = vmatpush1.bf16.msra.mxu0 0
  %7097 = vmatprep.subr.bf16.mxu0 0
  %7098 = vmatpush1.bf16.msra.mxu0 0
  %7099 = vmatprep.subr.bf16.mxu0 0
  %7100 = vmatpush1.bf16.msra.mxu0 0
  %7101 = vmatprep.subr.bf16.mxu0 0
  %7102 = vmatpush1.bf16.msra.mxu0 0
  %7103 = vmatprep.subr.bf16.mxu0 0
  %7104 = vmatpush1.bf16.msra.mxu0 0
  %7105 = vmatprep.subr.bf16.mxu0 0
  %7106 = vmatpush1.bf16.msra.mxu0 0
  %7107 = vmatprep.subr.bf16.mxu0 0
  %7108 = vmatpush1.bf16.msra.mxu0 0
  %7109 = vmatprep.mubr.bf16.mxu0 0
  %7110 = vmatmul.mubr.bf16.gmra.mrb[0].mxu0 %v4864
  %v7111 = vpop.f32.mrb[0].mxu0
  %v7112 = vadd.f32 0.0, %v7111
  %v7113 = vpop.f32.mrb[0].mxu0
  %v7114 = vpop.f32.mrb[0].mxu0
  %v7115 = vpop.f32.mrb[0].mxu0
  %7116 = vdwg.mxu0
  %s7117 = scalar_lea.vmem %s2, 120
  %v7118 = vld [vmem:[%s7117] sm:$0xf]
  %v7119 = vld [vmem:[%s7117 + $0x4] sm:$0xf]
  %v7120 = vpack.c.bf16 %v7112, %v7112
  %v7123 = vunpack.c.l.b16 %v7118
  %v7124 = vunpack.c.l.b16 %v7119
  %v7125 = vpack.c.b16 %v7124, %v7123
  %v7127 = vsel %vm5063, %v7125, 0
  %v7130 = vsel %vm5067, %v7120, 0
  %7132 = vmatprep.subr.bf16.mxu0 0
  %7133 = vmatpush1.bf16.msra.mxu0 %v7130
  %7134 = vmatprep.subr.bf16.mxu0 0
  %7135 = vmatpush1.bf16.msra.mxu0 0
  %7136 = vmatprep.subr.bf16.mxu0 0
  %7137 = vmatpush1.bf16.msra.mxu0 0
  %7138 = vmatprep.subr.bf16.mxu0 0
  %7139 = vmatpush1.bf16.msra.mxu0 0
  %7140 = vmatprep.subr.bf16.mxu0 0
  %7141 = vmatpush1.bf16.msra.mxu0 0
  %7142 = vmatprep.subr.bf16.mxu0 0
  %7143 = vmatpush1.bf16.msra.mxu0 0
  %7144 = vmatprep.subr.bf16.mxu0 0
  %7145 = vmatpush1.bf16.msra.mxu0 0
  %7146 = vmatprep.subr.bf16.mxu0 0
  %7147 = vmatpush1.bf16.msra.mxu0 0
  %7148 = vmatprep.subr.bf16.mxu0 0
  %7149 = vmatpush1.bf16.msra.mxu0 0
  %7150 = vmatprep.subr.bf16.mxu0 0
  %7151 = vmatpush1.bf16.msra.mxu0 0
  %7152 = vmatprep.subr.bf16.mxu0 0
  %7153 = vmatpush1.bf16.msra.mxu0 0
  %7154 = vmatprep.subr.bf16.mxu0 0
  %7155 = vmatpush1.bf16.msra.mxu0 0
  %7156 = vmatprep.subr.bf16.mxu0 0
  %7157 = vmatpush1.bf16.msra.mxu0 0
  %7158 = vmatprep.subr.bf16.mxu0 0
  %7159 = vmatpush1.bf16.msra.mxu0 0
  %7160 = vmatprep.subr.bf16.mxu0 0
  %7161 = vmatpush1.bf16.msra.mxu0 0
  %7162 = vmatprep.subr.bf16.mxu0 0
  %7163 = vmatpush1.bf16.msra.mxu0 0
  %7164 = vmatprep.mubr.bf16.mxu0 0
  %7165 = vmatmul.mubr.bf16.gmra.mrb[0].mxu0 %v7127
  %v7166 = vpop.f32.mrb[0].mxu0
  %v7167 = vadd.f32 0.0, %v7166
  %v7168 = vpop.f32.mrb[0].mxu0
  %v7169 = vpop.f32.mrb[0].mxu0
  %v7170 = vadd.f32 0.0, %v7169
  %v7171 = vpop.f32.mrb[0].mxu0
  %7172 = vdwg.mxu0
  %v7173 = vadd.f32 %v7031, %v7167
  %v7174 = vadd.f32 %v7032, %v7170
  %v7175 = vld [vmem:[%s3] sm:$0xff]
  %v7176 = vld [vmem:[%s3 + $0x8] sm:$0xff]
  %v7177 = vld [vmem:[%s4] sm:$0xff]
  %v7178 = vld [vmem:[%s4 + $0x8] sm:$0xff]
  %vm7179 = vcmask 261120
  %v7180 = vsel %vm7179, %v7173, 0.0
  %7181 = vadd.xlane.f32.xlu0 %v7180
  %v7182 = vpop.xlane.xlu0 %7181
  %v7183 = vsel %vm7179, %v7174, 0.0
  %7184 = vadd.xlane.f32.xlu0 %v7183
  %v7185 = vpop.xlane.xlu0 %7184
  %v7186 = vrcp.pop 32.0
  %v7187 = vmul.f32 %v7182, %v7186
  %v7188 = vmul.f32 %v7185, %v7186
  %v7189 = vsub.f32 %v7173, %v7187
  %v7190 = vsub.f32 %v7174, %v7188
  %v7191 = vmul.f32 %v7189, %v7189
  %v7192 = vmul.f32 %v7190, %v7190
  %v7193 = vsel %vm7179, %v7191, 0.0
  %7194 = vadd.xlane.f32.xlu0 %v7193
  %v7195 = vpop.xlane.xlu0 %7194
  %v7196 = vsel %vm7179, %v7192, 0.0
  %7197 = vadd.xlane.f32.xlu0 %v7196
  %v7198 = vpop.xlane.xlu0 %7197
  %v7199 = vmul.f32 %v7195, %v7186
  %v7200 = vmul.f32 %v7198, %v7186
  %v7201 = vadd.f32 %v7199, 1e-05
  %v7202 = vadd.f32 %v7200, 1e-05
  %v7203 = vrsqrt.pop %v7201
  %v7204 = vrsqrt.pop %v7202
  %v7205 = vmul.f32 %v7189, %v7203
  %v7206 = vmul.f32 %v7190, %v7204
  %7208 = vset.pattern.permute.xlu0 0
  %7209 = vperm.xlu0 %7208, %v7175
  %v7210 = vpop.permute.xlu0 %7209
  %7213 = vset.pattern.permute.xlu0 0
  %7214 = vperm.xlu0 %7213, %v7176
  %v7215 = vpop.permute.xlu0 %7214
  %v7217 = vmul.f32 %v7205, %v7210
  %v7218 = vmul.f32 %v7206, %v7215
  %7220 = vset.pattern.permute.xlu0 0
  %7221 = vperm.xlu0 %7220, %v7177
  %v7222 = vpop.permute.xlu0 %7221
  %7225 = vset.pattern.permute.xlu0 0
  %7226 = vperm.xlu0 %7225, %v7178
  %v7227 = vpop.permute.xlu0 %7226
  %v7229 = vadd.f32 %v7217, %v7222
  %v7230 = vadd.f32 %v7218, %v7227
  %vm7231 = vcmp.gt.f32.partialorder %v7229, 0.0
  %vm7232 = vcmp.gt.f32.partialorder %v7230, 0.0
  %v7233 = vmul.f32 %v7229, 0.2
  %v7234 = vmul.f32 %v7230, 0.2
  %v7235 = vsel %vm7231, %v7229, %v7233
  %v7236 = vsel %vm7232, %v7230, %v7234
  %v7237 = vld [vmem:[%s5] sm:$0xff]
  %v7238 = vld [vmem:[%s5 + $0x8] sm:$0xff]
  %v7239 = vmul.f32 %v7235, %v7237
  %v7240 = vmul.f32 %v7236, %v7238
  %v7241 = vsel %vm7179, %v7239, 0.0
  %v7242 = vsel %vm7179, %v7240, 0.0
  %v7243 = vadd.f32 %v7241, %v7242
  %v7244 = vrot.slane %v7243, 4
  %v7245 = vadd.f32 %v7243, %v7244
  %v7246 = vrot.slane %v7245, 2
  %v7247 = vadd.f32 %v7245, %v7246
  %v7248 = vrot.slane %v7247, 1
  %v7249 = vadd.f32 %v7247, %v7248
  %vm7250 = vcmp.eq.s32.totalorder %v4868, %v32
  %v7251 = vsel %vm7250, %v7249, 0.0
  %vm7252 = vcmask 254976
  %v7253 = vsel %vm7252, %v7251, 0.0
  %7254 = vadd.xlane.f32.xlu0 %v7253
  %v7255 = vpop.xlane.xlu0 %7254
  %v7256 = vsub.f32 0.0, %v7255
  %v7257 = vmul.f32 %v7256, 1.442695
  %v7258 = vpow.pop %v7257
  %v7259 = vadd.f32 %v7258, 1.0
  %v7260 = vrcp.pop %v7259
  %vm7261 = vcmask 1024
  %7262 = vst.msk [vmem:[%s6] sm:$0x3] %vm7261, %v7260
  // Predicated region
  $region26: #{_lambda_.1} parent=0 // pred_check
    _
  $region27: #{_lambda_.1} parent=0 // pred_check_branch
    %7264 = sbr.rel (0) target = $region29
  $region28: #{_lambda_.1} parent=0 // pred_region
    _
  $region29: #{_lambda_.1} parent=0 // pred_fallthru
    _
  // Predicated region
  $region30: #{_lambda_.1} parent=0 // pred_check
    _
  $region31: #{_lambda_.1} parent=0 // pred_check_branch
    %7266 = sbr.rel (0) target = $region33
  $region32: #{_lambda_.1} parent=0 // pred_region
    _
  $region33: #{_lambda_.1} parent=0 // pred_fallthru
    _

</llo_original>
